<compile_context>
chip_gen: v5e
topology: v5e:2x2
jax: 0.10.0
libtpu: 0.0.40
codegen_flags: <defaults>
</compile_context>

<pallas_src>
import jax
import jax.numpy as jnp
from jax.experimental import pallas as pl
from jax.experimental.pallas import tpu as pltpu

EPS = 1e-5
LANES = 128  # lane-dense channel padding


# ------------------------------ Pallas kernel ------------------------------ #
def _make_kernel(R, RG, PADG, WP, CP, m_valid):
    """Build the fused residual-block kernel for fixed (static) geometry.

    Layout: activations are stored "flat padded NHWC":
      row r = ((n * (H+2) + h) * (W+2) + w),  channels on the 128-wide lane axis.
    With this layout a 3x3 tap (kh, kw) is a pure row shift by (kh-1)*(W+2)+(kw-1),
    so each tap is a contiguous 2-D row-slice matmul. PADG guard rows on each side
    keep all tap slices in-bounds; border rows are masked out of BN stats and zeroed
    before feeding conv2 (they ARE conv2's zero padding).
    """
    inv_m = 1.0 / float(m_valid)

    def bn_stats(y, mask):
        # One-pass masked batch statistics (biased variance), all in f32.
        ym = y * mask
        s1 = jnp.sum(ym, axis=0, keepdims=True)
        s2 = jnp.sum(ym * y, axis=0, keepdims=True)
        mean = s1 * inv_m
        var = jnp.maximum(s2 * inv_m - mean * mean, 0.0)
        return mean, jax.lax.rsqrt(var + EPS)

    def kernel(xg_ref, mask_ref, w1_ref, w2_ref, wd_ref, bn_ref, o_ref, o1_ref):
        mask = mask_ref[...]                                   # (R, 1)
        g1, be1 = bn_ref[0:1, :], bn_ref[1:2, :]
        g2, be2 = bn_ref[2:3, :], bn_ref[3:4, :]
        gd, bed = bn_ref[4:5, :], bn_ref[5:6, :]

        # ---- conv1 (3x3, pad=1): 9 row-shifted matmuls on the compact x ----
        y1 = jnp.zeros((R, CP), jnp.float32)
        for t in range(9):
            kh, kw = divmod(t, 3)
            s = PADG + (kh - 1) * WP + (kw - 1)
            y1 = y1 + jnp.dot(xg_ref[s:s + R, :], w1_ref[t],
                              preferred_element_type=jnp.float32)
        m1, r1 = bn_stats(y1, mask)
        # BN + ReLU; mask zeroes the spatial-padding rows (= conv2's zero pad).
        out1 = jnp.maximum((y1 - m1) * r1 * g1 + be1, 0.0) * mask

        # conv1 result stays entirely in VMEM scratch (guard rows zeroed).
        o1_ref[0:PADG, :] = jnp.zeros((PADG, CP), jnp.float32)
        o1_ref[PADG + R:RG, :] = jnp.zeros((PADG, CP), jnp.float32)
        o1_ref[PADG:PADG + R, :] = out1

        # ---- conv2 (3x3, pad=1) on the VMEM-resident out1 ----
        y2 = jnp.zeros((R, CP), jnp.float32)
        for t in range(9):
            kh, kw = divmod(t, 3)
            s = PADG + (kh - 1) * WP + (kw - 1)
            y2 = y2 + jnp.dot(o1_ref[s:s + R, :], w2_ref[t],
                              preferred_element_type=jnp.float32)
        m2, r2 = bn_stats(y2, mask)

        # ---- downsample: 1x1 conv reuses the already-resident x (center tap) ----
        yd = jnp.dot(xg_ref[PADG:PADG + R, :], wd_ref[...],
                     preferred_element_type=jnp.float32)
        md, rd = bn_stats(yd, mask)

        # ---- BN both branches, residual add, final ReLU ----
        out = (y2 - m2) * r2 * g2 + be2 + (yd - md) * rd * gd + bed
        o_ref[...] = jnp.maximum(out, 0.0)

    return kernel


# ------------------------------ JAX wrapper --------------------------------- #
def residual_block_pallas(x_nchw, p):
    N, Cin, H, W = x_nchw.shape
    Cout = p["w1"].shape[0]
    CP = LANES
    Hp, Wp = H + 2, W + 2
    R = N * Hp * Wp                              # flat padded rows
    PADG = ((Wp + 1 + 7) // 8) * 8               # guard rows (>= max tap offset)
    RG = R + 2 * PADG
    m_valid = N * H * W                          # rows that count for BN stats

    # Compact activation: NHWC, spatially padded, flattened, with guard rows.
    x_nhwc = jnp.transpose(x_nchw, (0, 2, 3, 1)).astype(jnp.float32)
    xp = jnp.pad(x_nhwc, ((0, 0), (1, 1), (1, 1), (0, 0)))
    xg = jnp.pad(xp.reshape(R, Cin), ((PADG, PADG), (0, 0)))      # (RG, Cin)

    # 1.0 on real pixels, 0.0 on spatial-padding rows.
    mask = jnp.pad(jnp.ones((N, H, W), jnp.float32),
                   ((0, 0), (1, 1), (1, 1))).reshape(R, 1)        # (R, 1)

    def pack3x3(w, cin_pack):
        # (Cout, Cin, 3, 3) -> (9, cin_pack, CP), zero-padded, tap t = kh*3+kw
        cout, cin = w.shape[0], w.shape[1]
        wm = jnp.transpose(w, (2, 3, 1, 0)).reshape(9, cin, cout)
        return jnp.pad(wm, ((0, 0), (0, cin_pack - cin),
                            (0, CP - cout))).astype(jnp.float32)

    w1p = pack3x3(p["w1"], Cin)                                   # (9, Cin, 128)
    w2p = pack3x3(p["w2"], CP)                                    # (9, 128, 128)
    wdp = jnp.pad(jnp.transpose(p["wd"], (2, 3, 1, 0)).reshape(Cin, Cout),
                  ((0, 0), (0, CP - Cout))).astype(jnp.float32)   # (Cin, 128)

    # All per-channel BN params packed into one (8, 128) block.
    bnp = jnp.pad(jnp.stack([p["g1"], p["be1"], p["g2"], p["be2"],
                             p["gd"], p["bed"]]).astype(jnp.float32),
                  ((0, 2), (0, CP - Cout)))                       # (8, 128)

    # NOTE: conv biases b1/b2/bd are intentionally NOT passed — they are exactly
    # cancelled by training-mode BN mean subtraction.

    args = [xg, mask, w1p, w2p, wdp, bnp]
    kernel = _make_kernel(R, RG, PADG, Wp, CP, m_valid)

    out_flat = pl.pallas_call(
        kernel,
        out_shape=jax.ShapeDtypeStruct((R, CP), jnp.float32),
        grid=(1,),
        in_specs=[pl.BlockSpec(a.shape, lambda i, _nd=a.ndim: (0,) * _nd)
                  for a in args],
        out_specs=pl.BlockSpec((R, CP), lambda i: (0, 0)),
        scratch_shapes=[pltpu.VMEM((RG, CP), jnp.float32)],       # out1 lives here
        compiler_params=pltpu.CompilerParams(
            dimension_semantics=("arbitrary",),
            vmem_limit_bytes=32 * 1024 * 1024),
    )(*args)

    # Drop spatial padding rows and lane padding, back to NCHW.
    out = out_flat.reshape(N, Hp, Wp, CP)[:, 1:H + 1, 1:W + 1, :Cout]
    return jnp.transpose(out, (0, 3, 1, 2))


# ---------------------------- pure-JAX reference ---------------------------- #
def residual_block_ref(x, p):
    def conv(x, w, b, pad):
        y = jax.lax.conv_general_dilated(
            x, w, (1, 1), [(pad, pad), (pad, pad)],
            dimension_numbers=("NCHW", "OIHW", "NCHW"))
        return y + b[None, :, None, None]

    def bn(x, g, b):
        mean = x.mean(axis=(0, 2, 3), keepdims=True)
        var = ((x - mean) ** 2).mean(axis=(0, 2, 3), keepdims=True)
        return (x - mean) / jnp.sqrt(var + EPS) * g[None, :, None, None] \
            + b[None, :, None, None]

    out = jax.nn.relu(bn(conv(x, p["w1"], p["b1"], 1), p["g1"], p["be1"]))
    out = bn(conv(out, p["w2"], p["b2"], 1), p["g2"], p["be2"])
    res = bn(conv(x, p["wd"], p["bd"], 0), p["gd"], p["bed"])
    return jax.nn.relu(out + res)


# ----------------------------------- main ----------------------------------- #
if __name__ == "__main__":
    N, Cin, Cout, H, W = 2, 4, 8, 16, 16

    key = jax.random.PRNGKey(0)
    kx, k1, kb1, k2, kb2, kd, kbd = jax.random.split(key, 7)

    x = jax.random.normal(kx, (N, Cin, H, W), jnp.float32)

    params = dict(
        w1=jax.random.normal(k1, (Cout, Cin, 3, 3), jnp.float32) * 0.1,
        b1=jax.random.normal(kb1, (Cout,), jnp.float32) * 0.1,
        g1=jnp.ones((Cout,), jnp.float32), be1=jnp.zeros((Cout,), jnp.float32),
        w2=jax.random.normal(k2, (Cout, Cout, 3, 3), jnp.float32) * 0.1,
        b2=jax.random.normal(kb2, (Cout,), jnp.float32) * 0.1,
        g2=jnp.ones((Cout,), jnp.float32), be2=jnp.zeros((Cout,), jnp.float32),
        wd=jax.random.normal(kd, (Cout, Cin, 1, 1), jnp.float32) * 0.1,
        bd=jax.random.normal(kbd, (Cout,), jnp.float32) * 0.1,
        gd=jnp.ones((Cout,), jnp.float32), bed=jnp.zeros((Cout,), jnp.float32),
    )

    out = jax.block_until_ready(residual_block_pallas(x, params))
    ref = jax.block_until_ready(residual_block_ref(x, params))

    assert out.shape == (N, Cout, H, W), out.shape
    max_err = float(jnp.max(jnp.abs(out - ref)))
    assert max_err < 1e-3, f"max abs error too large: {max_err}"

    print("KERNEL_OK")
</pallas_src>

<mosaic_0001>
module attributes {stable_mosaic.version = 11 : i64} {
  func.func @kernel(%arg0: i32, %arg1: memref<696x4xf32, #tpu.memory_space<vmem>>, %arg2: memref<648x1xf32, #tpu.memory_space<vmem>>, %arg3: memref<9x4x128xf32, #tpu.memory_space<vmem>>, %arg4: memref<9x128x128xf32, #tpu.memory_space<vmem>>, %arg5: memref<4x128xf32, #tpu.memory_space<vmem>>, %arg6: memref<8x128xf32, #tpu.memory_space<vmem>>, %arg7: memref<648x128xf32, #tpu.memory_space<vmem>>, %arg8: memref<696x128xf32, #tpu.memory_space<vmem>>) attributes {dimension_semantics = [#tpu.dimension_semantics<arbitrary>], iteration_bounds = array<i64: 1>, scalar_prefetch = 0 : i64, scratch_operands = 1 : i64, tpu.core_type = #tpu.core_type<tc>, window_params = [{pipeline_mode = #tpu.pipeline_mode<synchronous>, transform_indices = @transform_0, window_bounds = array<i64: 696, 4>}, {pipeline_mode = #tpu.pipeline_mode<synchronous>, transform_indices = @transform_1, window_bounds = array<i64: 648, 1>}, {pipeline_mode = #tpu.pipeline_mode<synchronous>, transform_indices = @transform_2, window_bounds = array<i64: 9, 4, 128>}, {pipeline_mode = #tpu.pipeline_mode<synchronous>, transform_indices = @transform_3, window_bounds = array<i64: 9, 128, 128>}, {pipeline_mode = #tpu.pipeline_mode<synchronous>, transform_indices = @transform_4, window_bounds = array<i64: 4, 128>}, {pipeline_mode = #tpu.pipeline_mode<synchronous>, transform_indices = @transform_5, window_bounds = array<i64: 8, 128>}, {pipeline_mode = #tpu.pipeline_mode<synchronous>, transform_indices = @transform_6, window_bounds = array<i64: 648, 128>}]} {
    %c0 = arith.constant 0 : index
    %c0_0 = arith.constant 0 : index
    %0 = vector.load %arg2[%c0, %c0_0] : memref<648x1xf32, #tpu.memory_space<vmem>>, vector<648x1xf32>
    %c0_1 = arith.constant 0 : index
    %c0_2 = arith.constant 0 : index
    %1 = vector.load %arg6[%c0_1, %c0_2] : memref<8x128xf32, #tpu.memory_space<vmem>>, vector<1x128xf32>
    %c1 = arith.constant 1 : index
    %c0_3 = arith.constant 0 : index
    %2 = vector.load %arg6[%c1, %c0_3] : memref<8x128xf32, #tpu.memory_space<vmem>>, vector<1x128xf32>
    %c2 = arith.constant 2 : index
    %c0_4 = arith.constant 0 : index
    %3 = vector.load %arg6[%c2, %c0_4] : memref<8x128xf32, #tpu.memory_space<vmem>>, vector<1x128xf32>
    %c3 = arith.constant 3 : index
    %c0_5 = arith.constant 0 : index
    %4 = vector.load %arg6[%c3, %c0_5] : memref<8x128xf32, #tpu.memory_space<vmem>>, vector<1x128xf32>
    %c4 = arith.constant 4 : index
    %c0_6 = arith.constant 0 : index
    %5 = vector.load %arg6[%c4, %c0_6] : memref<8x128xf32, #tpu.memory_space<vmem>>, vector<1x128xf32>
    %c5 = arith.constant 5 : index
    %c0_7 = arith.constant 0 : index
    %6 = vector.load %arg6[%c5, %c0_7] : memref<8x128xf32, #tpu.memory_space<vmem>>, vector<1x128xf32>
    %cst = arith.constant 0.000000e+00 : f32
    %7 = vector.broadcast %cst : f32 to vector<648x128xf32>
    %c5_8 = arith.constant 5 : index
    %c0_9 = arith.constant 0 : index
    %8 = vector.load %arg1[%c5_8, %c0_9] : memref<696x4xf32, #tpu.memory_space<vmem>>, vector<648x4xf32>
    %c0_10 = arith.constant 0 : index
    %c0_11 = arith.constant 0 : index
    %c0_12 = arith.constant 0 : index
    %9 = vector.load %arg3[%c0_10, %c0_11, %c0_12] : memref<9x4x128xf32, #tpu.memory_space<vmem>>, vector<1x4x128xf32>
    %10 = vector.shape_cast %9 : vector<1x4x128xf32> to vector<4x128xf32>
    %cst_13 = arith.constant dense<0.000000e+00> : vector<648x128xf32>
    %11 = tpu.matmul %8, %10, %cst_13 {dimension_numbers = #tpu.dot_dimension_numbers<[1], [0], [0], [1], [0, 0, 1, 1], [], []>} : vector<648x4xf32>, vector<4x128xf32>, vector<648x128xf32> -> vector<648x128xf32>
    %12 = arith.addf %7, %11 : vector<648x128xf32>
    %c6 = arith.constant 6 : index
    %c0_14 = arith.constant 0 : index
    %13 = vector.load %arg1[%c6, %c0_14] : memref<696x4xf32, #tpu.memory_space<vmem>>, vector<648x4xf32>
    %c1_15 = arith.constant 1 : index
    %c0_16 = arith.constant 0 : index
    %c0_17 = arith.constant 0 : index
    %14 = vector.load %arg3[%c1_15, %c0_16, %c0_17] : memref<9x4x128xf32, #tpu.memory_space<vmem>>, vector<1x4x128xf32>
    %15 = vector.shape_cast %14 : vector<1x4x128xf32> to vector<4x128xf32>
    %cst_18 = arith.constant dense<0.000000e+00> : vector<648x128xf32>
    %16 = tpu.matmul %13, %15, %cst_18 {dimension_numbers = #tpu.dot_dimension_numbers<[1], [0], [0], [1], [0, 0, 1, 1], [], []>} : vector<648x4xf32>, vector<4x128xf32>, vector<648x128xf32> -> vector<648x128xf32>
    %17 = arith.addf %12, %16 : vector<648x128xf32>
    %c7 = arith.constant 7 : index
    %c0_19 = arith.constant 0 : index
    %18 = vector.load %arg1[%c7, %c0_19] : memref<696x4xf32, #tpu.memory_space<vmem>>, vector<648x4xf32>
    %c2_20 = arith.constant 2 : index
    %c0_21 = arith.constant 0 : index
    %c0_22 = arith.constant 0 : index
    %19 = vector.load %arg3[%c2_20, %c0_21, %c0_22] : memref<9x4x128xf32, #tpu.memory_space<vmem>>, vector<1x4x128xf32>
    %20 = vector.shape_cast %19 : vector<1x4x128xf32> to vector<4x128xf32>
    %cst_23 = arith.constant dense<0.000000e+00> : vector<648x128xf32>
    %21 = tpu.matmul %18, %20, %cst_23 {dimension_numbers = #tpu.dot_dimension_numbers<[1], [0], [0], [1], [0, 0, 1, 1], [], []>} : vector<648x4xf32>, vector<4x128xf32>, vector<648x128xf32> -> vector<648x128xf32>
    %22 = arith.addf %17, %21 : vector<648x128xf32>
    %c23 = arith.constant 23 : index
    %c0_24 = arith.constant 0 : index
    %23 = vector.load %arg1[%c23, %c0_24] : memref<696x4xf32, #tpu.memory_space<vmem>>, vector<648x4xf32>
    %c3_25 = arith.constant 3 : index
    %c0_26 = arith.constant 0 : index
    %c0_27 = arith.constant 0 : index
    %24 = vector.load %arg3[%c3_25, %c0_26, %c0_27] : memref<9x4x128xf32, #tpu.memory_space<vmem>>, vector<1x4x128xf32>
    %25 = vector.shape_cast %24 : vector<1x4x128xf32> to vector<4x128xf32>
    %cst_28 = arith.constant dense<0.000000e+00> : vector<648x128xf32>
    %26 = tpu.matmul %23, %25, %cst_28 {dimension_numbers = #tpu.dot_dimension_numbers<[1], [0], [0], [1], [0, 0, 1, 1], [], []>} : vector<648x4xf32>, vector<4x128xf32>, vector<648x128xf32> -> vector<648x128xf32>
    %27 = arith.addf %22, %26 : vector<648x128xf32>
    %c24 = arith.constant 24 : index
    %c0_29 = arith.constant 0 : index
    %28 = vector.load %arg1[%c24, %c0_29] : memref<696x4xf32, #tpu.memory_space<vmem>>, vector<648x4xf32>
    %c4_30 = arith.constant 4 : index
    %c0_31 = arith.constant 0 : index
    %c0_32 = arith.constant 0 : index
    %29 = vector.load %arg3[%c4_30, %c0_31, %c0_32] : memref<9x4x128xf32, #tpu.memory_space<vmem>>, vector<1x4x128xf32>
    %30 = vector.shape_cast %29 : vector<1x4x128xf32> to vector<4x128xf32>
    %cst_33 = arith.constant dense<0.000000e+00> : vector<648x128xf32>
    %31 = tpu.matmul %28, %30, %cst_33 {dimension_numbers = #tpu.dot_dimension_numbers<[1], [0], [0], [1], [0, 0, 1, 1], [], []>} : vector<648x4xf32>, vector<4x128xf32>, vector<648x128xf32> -> vector<648x128xf32>
    %32 = arith.addf %27, %31 : vector<648x128xf32>
    %c25 = arith.constant 25 : index
    %c0_34 = arith.constant 0 : index
    %33 = vector.load %arg1[%c25, %c0_34] : memref<696x4xf32, #tpu.memory_space<vmem>>, vector<648x4xf32>
    %c5_35 = arith.constant 5 : index
    %c0_36 = arith.constant 0 : index
    %c0_37 = arith.constant 0 : index
    %34 = vector.load %arg3[%c5_35, %c0_36, %c0_37] : memref<9x4x128xf32, #tpu.memory_space<vmem>>, vector<1x4x128xf32>
    %35 = vector.shape_cast %34 : vector<1x4x128xf32> to vector<4x128xf32>
    %cst_38 = arith.constant dense<0.000000e+00> : vector<648x128xf32>
    %36 = tpu.matmul %33, %35, %cst_38 {dimension_numbers = #tpu.dot_dimension_numbers<[1], [0], [0], [1], [0, 0, 1, 1], [], []>} : vector<648x4xf32>, vector<4x128xf32>, vector<648x128xf32> -> vector<648x128xf32>
    %37 = arith.addf %32, %36 : vector<648x128xf32>
    %c41 = arith.constant 41 : index
    %c0_39 = arith.constant 0 : index
    %38 = vector.load %arg1[%c41, %c0_39] : memref<696x4xf32, #tpu.memory_space<vmem>>, vector<648x4xf32>
    %c6_40 = arith.constant 6 : index
    %c0_41 = arith.constant 0 : index
    %c0_42 = arith.constant 0 : index
    %39 = vector.load %arg3[%c6_40, %c0_41, %c0_42] : memref<9x4x128xf32, #tpu.memory_space<vmem>>, vector<1x4x128xf32>
    %40 = vector.shape_cast %39 : vector<1x4x128xf32> to vector<4x128xf32>
    %cst_43 = arith.constant dense<0.000000e+00> : vector<648x128xf32>
    %41 = tpu.matmul %38, %40, %cst_43 {dimension_numbers = #tpu.dot_dimension_numbers<[1], [0], [0], [1], [0, 0, 1, 1], [], []>} : vector<648x4xf32>, vector<4x128xf32>, vector<648x128xf32> -> vector<648x128xf32>
    %42 = arith.addf %37, %41 : vector<648x128xf32>
    %c42 = arith.constant 42 : index
    %c0_44 = arith.constant 0 : index
    %43 = vector.load %arg1[%c42, %c0_44] : memref<696x4xf32, #tpu.memory_space<vmem>>, vector<648x4xf32>
    %c7_45 = arith.constant 7 : index
    %c0_46 = arith.constant 0 : index
    %c0_47 = arith.constant 0 : index
    %44 = vector.load %arg3[%c7_45, %c0_46, %c0_47] : memref<9x4x128xf32, #tpu.memory_space<vmem>>, vector<1x4x128xf32>
    %45 = vector.shape_cast %44 : vector<1x4x128xf32> to vector<4x128xf32>
    %cst_48 = arith.constant dense<0.000000e+00> : vector<648x128xf32>
    %46 = tpu.matmul %43, %45, %cst_48 {dimension_numbers = #tpu.dot_dimension_numbers<[1], [0], [0], [1], [0, 0, 1, 1], [], []>} : vector<648x4xf32>, vector<4x128xf32>, vector<648x128xf32> -> vector<648x128xf32>
    %47 = arith.addf %42, %46 : vector<648x128xf32>
    %c43 = arith.constant 43 : index
    %c0_49 = arith.constant 0 : index
    %48 = vector.load %arg1[%c43, %c0_49] : memref<696x4xf32, #tpu.memory_space<vmem>>, vector<648x4xf32>
    %c8 = arith.constant 8 : index
    %c0_50 = arith.constant 0 : index
    %c0_51 = arith.constant 0 : index
    %49 = vector.load %arg3[%c8, %c0_50, %c0_51] : memref<9x4x128xf32, #tpu.memory_space<vmem>>, vector<1x4x128xf32>
    %50 = vector.shape_cast %49 : vector<1x4x128xf32> to vector<4x128xf32>
    %cst_52 = arith.constant dense<0.000000e+00> : vector<648x128xf32>
    %51 = tpu.matmul %48, %50, %cst_52 {dimension_numbers = #tpu.dot_dimension_numbers<[1], [0], [0], [1], [0, 0, 1, 1], [], []>} : vector<648x4xf32>, vector<4x128xf32>, vector<648x128xf32> -> vector<648x128xf32>
    %52 = arith.addf %47, %51 : vector<648x128xf32>
    %53 = vector.broadcast %0 : vector<648x1xf32> to vector<648x128xf32>
    %54 = arith.mulf %52, %53 : vector<648x128xf32>
    %cst_53 = arith.constant dense<0.000000e+00> : vector<128xf32>
    %55 = vector.multi_reduction <add>, %54, %cst_53 [0] : vector<648x128xf32> to vector<128xf32>
    %56 = vector.shape_cast %55 : vector<128xf32> to vector<1x128xf32>
    %57 = arith.mulf %54, %52 : vector<648x128xf32>
    %cst_54 = arith.constant dense<0.000000e+00> : vector<128xf32>
    %58 = vector.multi_reduction <add>, %57, %cst_54 [0] : vector<648x128xf32> to vector<128xf32>
    %59 = vector.shape_cast %58 : vector<128xf32> to vector<1x128xf32>
    %cst_55 = arith.constant 0.001953125 : f32
    %60 = vector.broadcast %cst_55 : f32 to vector<1x128xf32>
    %61 = arith.mulf %56, %60 : vector<1x128xf32>
    %cst_56 = arith.constant 0.001953125 : f32
    %62 = vector.broadcast %cst_56 : f32 to vector<1x128xf32>
    %63 = arith.mulf %59, %62 : vector<1x128xf32>
    %64 = arith.mulf %61, %61 : vector<1x128xf32>
    %65 = arith.subf %63, %64 : vector<1x128xf32>
    %cst_57 = arith.constant 0.000000e+00 : f32
    %66 = vector.broadcast %cst_57 : f32 to vector<1x128xf32>
    %67 = arith.maximumf %65, %66 : vector<1x128xf32>
    %cst_58 = arith.constant 9.99999974E-6 : f32
    %68 = vector.broadcast %cst_58 : f32 to vector<1x128xf32>
    %69 = arith.addf %67, %68 : vector<1x128xf32>
    %70 = math.rsqrt %69 : vector<1x128xf32>
    %71 = vector.broadcast %61 : vector<1x128xf32> to vector<648x128xf32>
    %72 = arith.subf %52, %71 : vector<648x128xf32>
    %73 = vector.broadcast %70 : vector<1x128xf32> to vector<648x128xf32>
    %74 = arith.mulf %72, %73 : vector<648x128xf32>
    %75 = vector.broadcast %1 : vector<1x128xf32> to vector<648x128xf32>
    %76 = arith.mulf %74, %75 : vector<648x128xf32>
    %77 = vector.broadcast %2 : vector<1x128xf32> to vector<648x128xf32>
    %78 = arith.addf %76, %77 : vector<648x128xf32>
    %cst_59 = arith.constant 0.000000e+00 : f32
    %79 = vector.broadcast %cst_59 : f32 to vector<648x128xf32>
    %80 = arith.maximumf %78, %79 : vector<648x128xf32>
    %81 = vector.broadcast %0 : vector<648x1xf32> to vector<648x128xf32>
    %82 = arith.mulf %80, %81 : vector<648x128xf32>
    %cst_60 = arith.constant 0.000000e+00 : f32
    %83 = vector.broadcast %cst_60 : f32 to vector<24x128xf32>
    %c0_61 = arith.constant 0 : index
    %c0_62 = arith.constant 0 : index
    %84 = vector.load %arg8[%c0_61, %c0_62] : memref<696x128xf32, #tpu.memory_space<vmem>>, vector<24x128xf32>
    tpu.vector_store %arg8[%c0_61, %c0_62], %83 {strides = array<i32>} : memref<696x128xf32, #tpu.memory_space<vmem>>, vector<24x128xf32>,
    %cst_63 = arith.constant 0.000000e+00 : f32
    %85 = vector.broadcast %cst_63 : f32 to vector<24x128xf32>
    %c672 = arith.constant 672 : index
    %c0_64 = arith.constant 0 : index
    %86 = vector.load %arg8[%c672, %c0_64] : memref<696x128xf32, #tpu.memory_space<vmem>>, vector<24x128xf32>
    tpu.vector_store %arg8[%c672, %c0_64], %85 {strides = array<i32>} : memref<696x128xf32, #tpu.memory_space<vmem>>, vector<24x128xf32>,
    %c24_65 = arith.constant 24 : index
    %c0_66 = arith.constant 0 : index
    %87 = vector.load %arg8[%c24_65, %c0_66] : memref<696x128xf32, #tpu.memory_space<vmem>>, vector<648x128xf32>
    tpu.vector_store %arg8[%c24_65, %c0_66], %82 {strides = array<i32>} : memref<696x128xf32, #tpu.memory_space<vmem>>, vector<648x128xf32>,
    %cst_67 = arith.constant 0.000000e+00 : f32
    %88 = vector.broadcast %cst_67 : f32 to vector<648x128xf32>
    %c5_68 = arith.constant 5 : index
    %c0_69 = arith.constant 0 : index
    %89 = vector.load %arg8[%c5_68, %c0_69] : memref<696x128xf32, #tpu.memory_space<vmem>>, vector<648x128xf32>
    %c0_70 = arith.constant 0 : index
    %c0_71 = arith.constant 0 : index
    %c0_72 = arith.constant 0 : index
    %90 = vector.load %arg4[%c0_70, %c0_71, %c0_72] : memref<9x128x128xf32, #tpu.memory_space<vmem>>, vector<1x128x128xf32>
    %91 = vector.shape_cast %90 : vector<1x128x128xf32> to vector<128x128xf32>
    %cst_73 = arith.constant dense<0.000000e+00> : vector<648x128xf32>
    %92 = tpu.matmul %89, %91, %cst_73 {dimension_numbers = #tpu.dot_dimension_numbers<[1], [0], [0], [1], [0, 0, 1, 1], [], []>} : vector<648x128xf32>, vector<128x128xf32>, vector<648x128xf32> -> vector<648x128xf32>
    %93 = arith.addf %88, %92 : vector<648x128xf32>
    %c6_74 = arith.constant 6 : index
    %c0_75 = arith.constant 0 : index
    %94 = vector.load %arg8[%c6_74, %c0_75] : memref<696x128xf32, #tpu.memory_space<vmem>>, vector<648x128xf32>
    %c1_76 = arith.constant 1 : index
    %c0_77 = arith.constant 0 : index
    %c0_78 = arith.constant 0 : index
    %95 = vector.load %arg4[%c1_76, %c0_77, %c0_78] : memref<9x128x128xf32, #tpu.memory_space<vmem>>, vector<1x128x128xf32>
    %96 = vector.shape_cast %95 : vector<1x128x128xf32> to vector<128x128xf32>
    %cst_79 = arith.constant dense<0.000000e+00> : vector<648x128xf32>
    %97 = tpu.matmul %94, %96, %cst_79 {dimension_numbers = #tpu.dot_dimension_numbers<[1], [0], [0], [1], [0, 0, 1, 1], [], []>} : vector<648x128xf32>, vector<128x128xf32>, vector<648x128xf32> -> vector<648x128xf32>
    %98 = arith.addf %93, %97 : vector<648x128xf32>
    %c7_80 = arith.constant 7 : index
    %c0_81 = arith.constant 0 : index
    %99 = vector.load %arg8[%c7_80, %c0_81] : memref<696x128xf32, #tpu.memory_space<vmem>>, vector<648x128xf32>
    %c2_82 = arith.constant 2 : index
    %c0_83 = arith.constant 0 : index
    %c0_84 = arith.constant 0 : index
    %100 = vector.load %arg4[%c2_82, %c0_83, %c0_84] : memref<9x128x128xf32, #tpu.memory_space<vmem>>, vector<1x128x128xf32>
    %101 = vector.shape_cast %100 : vector<1x128x128xf32> to vector<128x128xf32>
    %cst_85 = arith.constant dense<0.000000e+00> : vector<648x128xf32>
    %102 = tpu.matmul %99, %101, %cst_85 {dimension_numbers = #tpu.dot_dimension_numbers<[1], [0], [0], [1], [0, 0, 1, 1], [], []>} : vector<648x128xf32>, vector<128x128xf32>, vector<648x128xf32> -> vector<648x128xf32>
    %103 = arith.addf %98, %102 : vector<648x128xf32>
    %c23_86 = arith.constant 23 : index
    %c0_87 = arith.constant 0 : index
    %104 = vector.load %arg8[%c23_86, %c0_87] : memref<696x128xf32, #tpu.memory_space<vmem>>, vector<648x128xf32>
    %c3_88 = arith.constant 3 : index
    %c0_89 = arith.constant 0 : index
    %c0_90 = arith.constant 0 : index
    %105 = vector.load %arg4[%c3_88, %c0_89, %c0_90] : memref<9x128x128xf32, #tpu.memory_space<vmem>>, vector<1x128x128xf32>
    %106 = vector.shape_cast %105 : vector<1x128x128xf32> to vector<128x128xf32>
    %cst_91 = arith.constant dense<0.000000e+00> : vector<648x128xf32>
    %107 = tpu.matmul %104, %106, %cst_91 {dimension_numbers = #tpu.dot_dimension_numbers<[1], [0], [0], [1], [0, 0, 1, 1], [], []>} : vector<648x128xf32>, vector<128x128xf32>, vector<648x128xf32> -> vector<648x128xf32>
    %108 = arith.addf %103, %107 : vector<648x128xf32>
    %c24_92 = arith.constant 24 : index
    %c0_93 = arith.constant 0 : index
    %109 = vector.load %arg8[%c24_92, %c0_93] : memref<696x128xf32, #tpu.memory_space<vmem>>, vector<648x128xf32>
    %c4_94 = arith.constant 4 : index
    %c0_95 = arith.constant 0 : index
    %c0_96 = arith.constant 0 : index
    %110 = vector.load %arg4[%c4_94, %c0_95, %c0_96] : memref<9x128x128xf32, #tpu.memory_space<vmem>>, vector<1x128x128xf32>
    %111 = vector.shape_cast %110 : vector<1x128x128xf32> to vector<128x128xf32>
    %cst_97 = arith.constant dense<0.000000e+00> : vector<648x128xf32>
    %112 = tpu.matmul %109, %111, %cst_97 {dimension_numbers = #tpu.dot_dimension_numbers<[1], [0], [0], [1], [0, 0, 1, 1], [], []>} : vector<648x128xf32>, vector<128x128xf32>, vector<648x128xf32> -> vector<648x128xf32>
    %113 = arith.addf %108, %112 : vector<648x128xf32>
    %c25_98 = arith.constant 25 : index
    %c0_99 = arith.constant 0 : index
    %114 = vector.load %arg8[%c25_98, %c0_99] : memref<696x128xf32, #tpu.memory_space<vmem>>, vector<648x128xf32>
    %c5_100 = arith.constant 5 : index
    %c0_101 = arith.constant 0 : index
    %c0_102 = arith.constant 0 : index
    %115 = vector.load %arg4[%c5_100, %c0_101, %c0_102] : memref<9x128x128xf32, #tpu.memory_space<vmem>>, vector<1x128x128xf32>
    %116 = vector.shape_cast %115 : vector<1x128x128xf32> to vector<128x128xf32>
    %cst_103 = arith.constant dense<0.000000e+00> : vector<648x128xf32>
    %117 = tpu.matmul %114, %116, %cst_103 {dimension_numbers = #tpu.dot_dimension_numbers<[1], [0], [0], [1], [0, 0, 1, 1], [], []>} : vector<648x128xf32>, vector<128x128xf32>, vector<648x128xf32> -> vector<648x128xf32>
    %118 = arith.addf %113, %117 : vector<648x128xf32>
    %c41_104 = arith.constant 41 : index
    %c0_105 = arith.constant 0 : index
    %119 = vector.load %arg8[%c41_104, %c0_105] : memref<696x128xf32, #tpu.memory_space<vmem>>, vector<648x128xf32>
    %c6_106 = arith.constant 6 : index
    %c0_107 = arith.constant 0 : index
    %c0_108 = arith.constant 0 : index
    %120 = vector.load %arg4[%c6_106, %c0_107, %c0_108] : memref<9x128x128xf32, #tpu.memory_space<vmem>>, vector<1x128x128xf32>
    %121 = vector.shape_cast %120 : vector<1x128x128xf32> to vector<128x128xf32>
    %cst_109 = arith.constant dense<0.000000e+00> : vector<648x128xf32>
    %122 = tpu.matmul %119, %121, %cst_109 {dimension_numbers = #tpu.dot_dimension_numbers<[1], [0], [0], [1], [0, 0, 1, 1], [], []>} : vector<648x128xf32>, vector<128x128xf32>, vector<648x128xf32> -> vector<648x128xf32>
    %123 = arith.addf %118, %122 : vector<648x128xf32>
    %c42_110 = arith.constant 42 : index
    %c0_111 = arith.constant 0 : index
    %124 = vector.load %arg8[%c42_110, %c0_111] : memref<696x128xf32, #tpu.memory_space<vmem>>, vector<648x128xf32>
    %c7_112 = arith.constant 7 : index
    %c0_113 = arith.constant 0 : index
    %c0_114 = arith.constant 0 : index
    %125 = vector.load %arg4[%c7_112, %c0_113, %c0_114] : memref<9x128x128xf32, #tpu.memory_space<vmem>>, vector<1x128x128xf32>
    %126 = vector.shape_cast %125 : vector<1x128x128xf32> to vector<128x128xf32>
    %cst_115 = arith.constant dense<0.000000e+00> : vector<648x128xf32>
    %127 = tpu.matmul %124, %126, %cst_115 {dimension_numbers = #tpu.dot_dimension_numbers<[1], [0], [0], [1], [0, 0, 1, 1], [], []>} : vector<648x128xf32>, vector<128x128xf32>, vector<648x128xf32> -> vector<648x128xf32>
    %128 = arith.addf %123, %127 : vector<648x128xf32>
    %c43_116 = arith.constant 43 : index
    %c0_117 = arith.constant 0 : index
    %129 = vector.load %arg8[%c43_116, %c0_117] : memref<696x128xf32, #tpu.memory_space<vmem>>, vector<648x128xf32>
    %c8_118 = arith.constant 8 : index
    %c0_119 = arith.constant 0 : index
    %c0_120 = arith.constant 0 : index
    %130 = vector.load %arg4[%c8_118, %c0_119, %c0_120] : memref<9x128x128xf32, #tpu.memory_space<vmem>>, vector<1x128x128xf32>
    %131 = vector.shape_cast %130 : vector<1x128x128xf32> to vector<128x128xf32>
    %cst_121 = arith.constant dense<0.000000e+00> : vector<648x128xf32>
    %132 = tpu.matmul %129, %131, %cst_121 {dimension_numbers = #tpu.dot_dimension_numbers<[1], [0], [0], [1], [0, 0, 1, 1], [], []>} : vector<648x128xf32>, vector<128x128xf32>, vector<648x128xf32> -> vector<648x128xf32>
    %133 = arith.addf %128, %132 : vector<648x128xf32>
    %134 = vector.broadcast %0 : vector<648x1xf32> to vector<648x128xf32>
    %135 = arith.mulf %133, %134 : vector<648x128xf32>
    %cst_122 = arith.constant dense<0.000000e+00> : vector<128xf32>
    %136 = vector.multi_reduction <add>, %135, %cst_122 [0] : vector<648x128xf32> to vector<128xf32>
    %137 = vector.shape_cast %136 : vector<128xf32> to vector<1x128xf32>
    %138 = arith.mulf %135, %133 : vector<648x128xf32>
    %cst_123 = arith.constant dense<0.000000e+00> : vector<128xf32>
    %139 = vector.multi_reduction <add>, %138, %cst_123 [0] : vector<648x128xf32> to vector<128xf32>
    %140 = vector.shape_cast %139 : vector<128xf32> to vector<1x128xf32>
    %cst_124 = arith.constant 0.001953125 : f32
    %141 = vector.broadcast %cst_124 : f32 to vector<1x128xf32>
    %142 = arith.mulf %137, %141 : vector<1x128xf32>
    %cst_125 = arith.constant 0.001953125 : f32
    %143 = vector.broadcast %cst_125 : f32 to vector<1x128xf32>
    %144 = arith.mulf %140, %143 : vector<1x128xf32>
    %145 = arith.mulf %142, %142 : vector<1x128xf32>
    %146 = arith.subf %144, %145 : vector<1x128xf32>
    %cst_126 = arith.constant 0.000000e+00 : f32
    %147 = vector.broadcast %cst_126 : f32 to vector<1x128xf32>
    %148 = arith.maximumf %146, %147 : vector<1x128xf32>
    %cst_127 = arith.constant 9.99999974E-6 : f32
    %149 = vector.broadcast %cst_127 : f32 to vector<1x128xf32>
    %150 = arith.addf %148, %149 : vector<1x128xf32>
    %151 = math.rsqrt %150 : vector<1x128xf32>
    %c24_128 = arith.constant 24 : index
    %c0_129 = arith.constant 0 : index
    %152 = vector.load %arg1[%c24_128, %c0_129] : memref<696x4xf32, #tpu.memory_space<vmem>>, vector<648x4xf32>
    %c0_130 = arith.constant 0 : index
    %c0_131 = arith.constant 0 : index
    %153 = vector.load %arg5[%c0_130, %c0_131] : memref<4x128xf32, #tpu.memory_space<vmem>>, vector<4x128xf32>
    %cst_132 = arith.constant dense<0.000000e+00> : vector<648x128xf32>
    %154 = tpu.matmul %152, %153, %cst_132 {dimension_numbers = #tpu.dot_dimension_numbers<[1], [0], [0], [1], [0, 0, 1, 1], [], []>} : vector<648x4xf32>, vector<4x128xf32>, vector<648x128xf32> -> vector<648x128xf32>
    %155 = vector.broadcast %0 : vector<648x1xf32> to vector<648x128xf32>
    %156 = arith.mulf %154, %155 : vector<648x128xf32>
    %cst_133 = arith.constant dense<0.000000e+00> : vector<128xf32>
    %157 = vector.multi_reduction <add>, %156, %cst_133 [0] : vector<648x128xf32> to vector<128xf32>
    %158 = vector.shape_cast %157 : vector<128xf32> to vector<1x128xf32>
    %159 = arith.mulf %156, %154 : vector<648x128xf32>
    %cst_134 = arith.constant dense<0.000000e+00> : vector<128xf32>
    %160 = vector.multi_reduction <add>, %159, %cst_134 [0] : vector<648x128xf32> to vector<128xf32>
    %161 = vector.shape_cast %160 : vector<128xf32> to vector<1x128xf32>
    %cst_135 = arith.constant 0.001953125 : f32
    %162 = vector.broadcast %cst_135 : f32 to vector<1x128xf32>
    %163 = arith.mulf %158, %162 : vector<1x128xf32>
    %cst_136 = arith.constant 0.001953125 : f32
    %164 = vector.broadcast %cst_136 : f32 to vector<1x128xf32>
    %165 = arith.mulf %161, %164 : vector<1x128xf32>
    %166 = arith.mulf %163, %163 : vector<1x128xf32>
    %167 = arith.subf %165, %166 : vector<1x128xf32>
    %cst_137 = arith.constant 0.000000e+00 : f32
    %168 = vector.broadcast %cst_137 : f32 to vector<1x128xf32>
    %169 = arith.maximumf %167, %168 : vector<1x128xf32>
    %cst_138 = arith.constant 9.99999974E-6 : f32
    %170 = vector.broadcast %cst_138 : f32 to vector<1x128xf32>
    %171 = arith.addf %169, %170 : vector<1x128xf32>
    %172 = math.rsqrt %171 : vector<1x128xf32>
    %173 = vector.broadcast %142 : vector<1x128xf32> to vector<648x128xf32>
    %174 = arith.subf %133, %173 : vector<648x128xf32>
    %175 = vector.broadcast %151 : vector<1x128xf32> to vector<648x128xf32>
    %176 = arith.mulf %174, %175 : vector<648x128xf32>
    %177 = vector.broadcast %3 : vector<1x128xf32> to vector<648x128xf32>
    %178 = arith.mulf %176, %177 : vector<648x128xf32>
    %179 = vector.broadcast %4 : vector<1x128xf32> to vector<648x128xf32>
    %180 = arith.addf %178, %179 : vector<648x128xf32>
    %181 = vector.broadcast %163 : vector<1x128xf32> to vector<648x128xf32>
    %182 = arith.subf %154, %181 : vector<648x128xf32>
    %183 = vector.broadcast %172 : vector<1x128xf32> to vector<648x128xf32>
    %184 = arith.mulf %182, %183 : vector<648x128xf32>
    %185 = vector.broadcast %5 : vector<1x128xf32> to vector<648x128xf32>
    %186 = arith.mulf %184, %185 : vector<648x128xf32>
    %187 = arith.addf %180, %186 : vector<648x128xf32>
    %188 = vector.broadcast %6 : vector<1x128xf32> to vector<648x128xf32>
    %189 = arith.addf %187, %188 : vector<648x128xf32>
    %cst_139 = arith.constant 0.000000e+00 : f32
    %190 = vector.broadcast %cst_139 : f32 to vector<648x128xf32>
    %191 = arith.maximumf %189, %190 : vector<648x128xf32>
    %c0_140 = arith.constant 0 : index
    %c0_141 = arith.constant 0 : index
    %192 = vector.load %arg7[%c0_140, %c0_141] : memref<648x128xf32, #tpu.memory_space<vmem>>, vector<648x128xf32>
    tpu.vector_store %arg7[%c0_140, %c0_141], %191 {strides = array<i32>} : memref<648x128xf32, #tpu.memory_space<vmem>>, vector<648x128xf32>,
    return
  }
  func.func @transform_0(%arg0: i32) -> (i32, i32) {
    %c0_i32 = arith.constant 0 : i32
    %c0_i32_0 = arith.constant 0 : i32
    %c0_i32_1 = arith.constant 0 : i32
    return %c0_i32, %c0_i32_0 : i32, i32
  }
  func.func @transform_1(%arg0: i32) -> (i32, i32) {
    %c0_i32 = arith.constant 0 : i32
    %c0_i32_0 = arith.constant 0 : i32
    %c0_i32_1 = arith.constant 0 : i32
    return %c0_i32, %c0_i32_0 : i32, i32
  }
  func.func @transform_2(%arg0: i32) -> (i32, i32, i32) {
    %c0_i32 = arith.constant 0 : i32
    %c0_i32_0 = arith.constant 0 : i32
    %c0_i32_1 = arith.constant 0 : i32
    %c0_i32_2 = arith.constant 0 : i32
    return %c0_i32, %c0_i32_0, %c0_i32_1 : i32, i32, i32
  }
  func.func @transform_3(%arg0: i32) -> (i32, i32, i32) {
    %c0_i32 = arith.constant 0 : i32
    %c0_i32_0 = arith.constant 0 : i32
    %c0_i32_1 = arith.constant 0 : i32
    %c0_i32_2 = arith.constant 0 : i32
    return %c0_i32, %c0_i32_0, %c0_i32_1 : i32, i32, i32
  }
  func.func @transform_4(%arg0: i32) -> (i32, i32) {
    %c0_i32 = arith.constant 0 : i32
    %c0_i32_0 = arith.constant 0 : i32
    %c0_i32_1 = arith.constant 0 : i32
    return %c0_i32, %c0_i32_0 : i32, i32
  }
  func.func @transform_5(%arg0: i32) -> (i32, i32) {
    %c0_i32 = arith.constant 0 : i32
    %c0_i32_0 = arith.constant 0 : i32
    %c0_i32_1 = arith.constant 0 : i32
    return %c0_i32, %c0_i32_0 : i32, i32
  }
  func.func @transform_6(%arg0: i32) -> (i32, i32) {
    %c0_i32 = arith.constant 0 : i32
    %c0_i32_0 = arith.constant 0 : i32
    %c0_i32_1 = arith.constant 0 : i32
    return %c0_i32, %c0_i32_0 : i32, i32
  }
}

</mosaic_0001>

<llo_original>
// kernel: tpu_custom_call.1
$region0: #{tpu_custom_call.1}
  #allocation0 [shape = 'u32[]', space=smem, size = 0x4, offset = 0x4, fixed_abs, tag = 'smem constant byte address 0x4 - core index']
  #allocation1 [shape = 'u32[72,128]{1,0:T(1,128)}', space=vmem, size = 0x9000, scoped, tag = 'internal scratch']
  #allocation2 [shape = 'f32[696,128]{1,0:T(8,128)}', space=vmem, size = 0x57000, scoped, tag = 'scratch operand']
  %s0 = inlined_call_operand.vmem [shape: f32[696,4], index: 0, kind: input, shape index: {}]
  %s1 = inlined_call_operand.vmem [shape: f32[648,1], index: 1, kind: input, shape index: {}]
  %s2 = inlined_call_operand.vmem [shape: f32[9,4,128], index: 2, kind: input, shape index: {}]
  %s3 = inlined_call_operand.vmem [shape: f32[9,128,128], index: 3, kind: input, shape index: {}]
  %s4 = inlined_call_operand.vmem [shape: f32[4,128], index: 4, kind: input, shape index: {}]
  %s5 = inlined_call_operand.vmem [shape: f32[8,128], index: 5, kind: input, shape index: {}]
  %s6 = inlined_call_operand.hbm [shape: f32[648,128], index: 6, kind: output, shape index: {}]
  %s7 = sld [smem:[#allocation0]]
  $region34: #{tpu_custom_call.1} parent=0
    _
  %s9 = ssub.s32 1, %s7
  %s10 = scalar_select 0, %s9, %s7
  $region1: #{tpu_custom_call.1} parent=0
    #allocation3 [shape = 'u8[331776]{0}', space=vmem, size = 0x51000, scoped, tag = 'output window, operand 0, single buffered']
    #allocation4 [shape = 's32[1]{0}', space=sflag, size = 0x4, scoped, tag = 'scoped memory for tpu_custom_call.1']
    %11 = vsyncpa [#allocation4], 0
    // Predicated region
    $region2: #{tpu_custom_call.1} parent=1 // pred_check
      _
    $region3: #{tpu_custom_call.1} parent=1 // pred_check_branch
      %13 = sbr.rel (0) target = $region5
    $region4: #{tpu_custom_call.1} parent=1 // pred_region
      _
    $region5: #{tpu_custom_call.1} parent=1 // pred_fallthru
      _
    // Predicated region
    $region6: #{tpu_custom_call.1} parent=1 // pred_check
      _
    $region7: #{tpu_custom_call.1} parent=1 // pred_check_branch
      %15 = sbr.rel (0) target = $region9
    $region8: #{tpu_custom_call.1} parent=1 // pred_region
      _
    $region9: #{tpu_custom_call.1} parent=1 // pred_fallthru
      _
    // Predicated region
    $region10: #{tpu_custom_call.1} parent=1 // pred_check
      _
    $region11: #{tpu_custom_call.1} parent=1 // pred_check_branch
      %17 = sbr.rel (0) target = $region13
    $region12: #{tpu_custom_call.1} parent=1 // pred_region
      _
    $region13: #{tpu_custom_call.1} parent=1 // pred_fallthru
      _
    // Predicated region
    $region14: #{tpu_custom_call.1} parent=1 // pred_check
      _
    $region15: #{tpu_custom_call.1} parent=1 // pred_check_branch
      %19 = sbr.rel (0) target = $region17
    $region16: #{tpu_custom_call.1} parent=1 // pred_region
      _
    $region17: #{tpu_custom_call.1} parent=1 // pred_fallthru
      _
    // Predicated region
    $region18: #{tpu_custom_call.1} parent=1 // pred_check
      _
    $region19: #{tpu_custom_call.1} parent=1 // pred_check_branch
      %21 = sbr.rel (0) target = $region21
    $region20: #{tpu_custom_call.1} parent=1 // pred_region
      _
    $region21: #{tpu_custom_call.1} parent=1 // pred_fallthru
      _
    // Predicated region
    $region22: #{tpu_custom_call.1} parent=1 // pred_check
      _
    $region23: #{tpu_custom_call.1} parent=1 // pred_check_branch
      %23 = sbr.rel (0) target = $region25
    $region24: #{tpu_custom_call.1} parent=1 // pred_region
      _
    $region25: #{tpu_custom_call.1} parent=1 // pred_fallthru
      _
    %v24 = vld [vmem:[%s1] sm:$0xff]
    %v25 = vld [vmem:[%s1 + $0x8] sm:$0xff]
    %v26 = vld [vmem:[%s1 + $0x10] sm:$0xff]
    %v27 = vld [vmem:[%s1 + $0x18] sm:$0xff]
    %v28 = vld [vmem:[%s1 + $0x20] sm:$0xff]
    %v29 = vld [vmem:[%s1 + $0x28] sm:$0xff]
    %v30 = vld [vmem:[%s1 + $0x30] sm:$0xff]
    %v31 = vld [vmem:[%s1 + $0x38] sm:$0xff]
    %v32 = vld [vmem:[%s1 + $0x40] sm:$0xff]
    %v33 = vld [vmem:[%s1 + $0x48] sm:$0xff]
    %v34 = vld [vmem:[%s1 + $0x50] sm:$0xff]
    %v35 = vld [vmem:[%s1 + $0x58] sm:$0xff]
    %v36 = vld [vmem:[%s1 + $0x60] sm:$0xff]
    %v37 = vld [vmem:[%s1 + $0x68] sm:$0xff]
    %v38 = vld [vmem:[%s1 + $0x70] sm:$0xff]
    %v39 = vld [vmem:[%s1 + $0x78] sm:$0xff]
    %v40 = vld [vmem:[%s1 + $0x80] sm:$0xff]
    %v41 = vld [vmem:[%s1 + $0x88] sm:$0xff]
    %v42 = vld [vmem:[%s1 + $0x90] sm:$0xff]
    %v43 = vld [vmem:[%s1 + $0x98] sm:$0xff]
    %v44 = vld [vmem:[%s1 + $0xa0] sm:$0xff]
    %v45 = vld [vmem:[%s1 + $0xa8] sm:$0xff]
    %v46 = vld [vmem:[%s1 + $0xb0] sm:$0xff]
    %v47 = vld [vmem:[%s1 + $0xb8] sm:$0xff]
    %v48 = vld [vmem:[%s1 + $0xc0] sm:$0xff]
    %v49 = vld [vmem:[%s1 + $0xc8] sm:$0xff]
    %v50 = vld [vmem:[%s1 + $0xd0] sm:$0xff]
    %v51 = vld [vmem:[%s1 + $0xd8] sm:$0xff]
    %v52 = vld [vmem:[%s1 + $0xe0] sm:$0xff]
    %v53 = vld [vmem:[%s1 + $0xe8] sm:$0xff]
    %v54 = vld [vmem:[%s1 + $0xf0] sm:$0xff]
    %v55 = vld [vmem:[%s1 + $0xf8] sm:$0xff]
    %v56 = vld [vmem:[%s1 + $0x100] sm:$0xff]
    %v57 = vld [vmem:[%s1 + $0x108] sm:$0xff]
    %v58 = vld [vmem:[%s1 + $0x110] sm:$0xff]
    %v59 = vld [vmem:[%s1 + $0x118] sm:$0xff]
    %v60 = vld [vmem:[%s1 + $0x120] sm:$0xff]
    %v61 = vld [vmem:[%s1 + $0x128] sm:$0xff]
    %v62 = vld [vmem:[%s1 + $0x130] sm:$0xff]
    %v63 = vld [vmem:[%s1 + $0x138] sm:$0xff]
    %v64 = vld [vmem:[%s1 + $0x140] sm:$0xff]
    %v65 = vld [vmem:[%s1 + $0x148] sm:$0xff]
    %v66 = vld [vmem:[%s1 + $0x150] sm:$0xff]
    %v67 = vld [vmem:[%s1 + $0x158] sm:$0xff]
    %v68 = vld [vmem:[%s1 + $0x160] sm:$0xff]
    %v69 = vld [vmem:[%s1 + $0x168] sm:$0xff]
    %v70 = vld [vmem:[%s1 + $0x170] sm:$0xff]
    %v71 = vld [vmem:[%s1 + $0x178] sm:$0xff]
    %v72 = vld [vmem:[%s1 + $0x180] sm:$0xff]
    %v73 = vld [vmem:[%s1 + $0x188] sm:$0xff]
    %v74 = vld [vmem:[%s1 + $0x190] sm:$0xff]
    %v75 = vld [vmem:[%s1 + $0x198] sm:$0xff]
    %v76 = vld [vmem:[%s1 + $0x1a0] sm:$0xff]
    %v77 = vld [vmem:[%s1 + $0x1a8] sm:$0xff]
    %v78 = vld [vmem:[%s1 + $0x1b0] sm:$0xff]
    %v79 = vld [vmem:[%s1 + $0x1b8] sm:$0xff]
    %v80 = vld [vmem:[%s1 + $0x1c0] sm:$0xff]
    %v81 = vld [vmem:[%s1 + $0x1c8] sm:$0xff]
    %v82 = vld [vmem:[%s1 + $0x1d0] sm:$0xff]
    %v83 = vld [vmem:[%s1 + $0x1d8] sm:$0xff]
    %v84 = vld [vmem:[%s1 + $0x1e0] sm:$0xff]
    %v85 = vld [vmem:[%s1 + $0x1e8] sm:$0xff]
    %v86 = vld [vmem:[%s1 + $0x1f0] sm:$0xff]
    %v87 = vld [vmem:[%s1 + $0x1f8] sm:$0xff]
    %v88 = vld [vmem:[%s1 + $0x200] sm:$0xff]
    %v89 = vld [vmem:[%s1 + $0x208] sm:$0xff]
    %v90 = vld [vmem:[%s1 + $0x210] sm:$0xff]
    %v91 = vld [vmem:[%s1 + $0x218] sm:$0xff]
    %v92 = vld [vmem:[%s1 + $0x220] sm:$0xff]
    %v93 = vld [vmem:[%s1 + $0x228] sm:$0xff]
    %v94 = vld [vmem:[%s1 + $0x230] sm:$0xff]
    %v95 = vld [vmem:[%s1 + $0x238] sm:$0xff]
    %v96 = vld [vmem:[%s1 + $0x240] sm:$0xff]
    %v97 = vld [vmem:[%s1 + $0x248] sm:$0xff]
    %v98 = vld [vmem:[%s1 + $0x250] sm:$0xff]
    %v99 = vld [vmem:[%s1 + $0x258] sm:$0xff]
    %v100 = vld [vmem:[%s1 + $0x260] sm:$0xff]
    %v101 = vld [vmem:[%s1 + $0x268] sm:$0xff]
    %v102 = vld [vmem:[%s1 + $0x270] sm:$0xff]
    %v103 = vld [vmem:[%s1 + $0x278] sm:$0xff]
    %v104 = vld [vmem:[%s1 + $0x280] sm:$0xff]
    %v105 = vld [vmem:[%s5] sm:$0x1]
    %v106 = vld [vmem:[%s5 + $0x1] sm:$0x1]
    %v107 = vld [vmem:[%s5 + $0x2] sm:$0x1]
    %v108 = vld [vmem:[%s5 + $0x3] sm:$0x1]
    %v109 = vld [vmem:[%s5 + $0x4] sm:$0x1]
    %v110 = vld [vmem:[%s5 + $0x5] sm:$0x1]
    %v111 = vld [vmem:[%s0 + $0x5] sm:$0xff]
    %v112 = vld [vmem:[%s0 + $0xd] sm:$0xff]
    %v113 = vld [vmem:[%s0 + $0x15] sm:$0xff]
    %v114 = vld [vmem:[%s0 + $0x1d] sm:$0xff]
    %v115 = vld [vmem:[%s0 + $0x25] sm:$0xff]
    %v116 = vld [vmem:[%s0 + $0x2d] sm:$0xff]
    %v117 = vld [vmem:[%s0 + $0x35] sm:$0xff]
    %v118 = vld [vmem:[%s0 + $0x3d] sm:$0xff]
    %v119 = vld [vmem:[%s0 + $0x45] sm:$0xff]
    %v120 = vld [vmem:[%s0 + $0x4d] sm:$0xff]
    %v121 = vld [vmem:[%s0 + $0x55] sm:$0xff]
    %v122 = vld [vmem:[%s0 + $0x5d] sm:$0xff]
    %v123 = vld [vmem:[%s0 + $0x65] sm:$0xff]
    %v124 = vld [vmem:[%s0 + $0x6d] sm:$0xff]
    %v125 = vld [vmem:[%s0 + $0x75] sm:$0xff]
    %v126 = vld [vmem:[%s0 + $0x7d] sm:$0xff]
    %v127 = vld [vmem:[%s0 + $0x85] sm:$0xff]
    %v128 = vld [vmem:[%s0 + $0x8d] sm:$0xff]
    %v129 = vld [vmem:[%s0 + $0x95] sm:$0xff]
    %v130 = vld [vmem:[%s0 + $0x9d] sm:$0xff]
    %v131 = vld [vmem:[%s0 + $0xa5] sm:$0xff]
    %v132 = vld [vmem:[%s0 + $0xad] sm:$0xff]
    %v133 = vld [vmem:[%s0 + $0xb5] sm:$0xff]
    %v134 = vld [vmem:[%s0 + $0xbd] sm:$0xff]
    %v135 = vld [vmem:[%s0 + $0xc5] sm:$0xff]
    %v136 = vld [vmem:[%s0 + $0xcd] sm:$0xff]
    %v137 = vld [vmem:[%s0 + $0xd5] sm:$0xff]
    %v138 = vld [vmem:[%s0 + $0xdd] sm:$0xff]
    %v139 = vld [vmem:[%s0 + $0xe5] sm:$0xff]
    %v140 = vld [vmem:[%s0 + $0xed] sm:$0xff]
    %v141 = vld [vmem:[%s0 + $0xf5] sm:$0xff]
    %v142 = vld [vmem:[%s0 + $0xfd] sm:$0xff]
    %v143 = vld [vmem:[%s0 + $0x105] sm:$0xff]
    %v144 = vld [vmem:[%s0 + $0x10d] sm:$0xff]
    %v145 = vld [vmem:[%s0 + $0x115] sm:$0xff]
    %v146 = vld [vmem:[%s0 + $0x11d] sm:$0xff]
    %v147 = vld [vmem:[%s0 + $0x125] sm:$0xff]
    %v148 = vld [vmem:[%s0 + $0x12d] sm:$0xff]
    %v149 = vld [vmem:[%s0 + $0x135] sm:$0xff]
    %v150 = vld [vmem:[%s0 + $0x13d] sm:$0xff]
    %v151 = vld [vmem:[%s0 + $0x145] sm:$0xff]
    %v152 = vld [vmem:[%s0 + $0x14d] sm:$0xff]
    %v153 = vld [vmem:[%s0 + $0x155] sm:$0xff]
    %v154 = vld [vmem:[%s0 + $0x15d] sm:$0xff]
    %v155 = vld [vmem:[%s0 + $0x165] sm:$0xff]
    %v156 = vld [vmem:[%s0 + $0x16d] sm:$0xff]
    %v157 = vld [vmem:[%s0 + $0x175] sm:$0xff]
    %v158 = vld [vmem:[%s0 + $0x17d] sm:$0xff]
    %v159 = vld [vmem:[%s0 + $0x185] sm:$0xff]
    %v160 = vld [vmem:[%s0 + $0x18d] sm:$0xff]
    %v161 = vld [vmem:[%s0 + $0x195] sm:$0xff]
    %v162 = vld [vmem:[%s0 + $0x19d] sm:$0xff]
    %v163 = vld [vmem:[%s0 + $0x1a5] sm:$0xff]
    %v164 = vld [vmem:[%s0 + $0x1ad] sm:$0xff]
    %v165 = vld [vmem:[%s0 + $0x1b5] sm:$0xff]
    %v166 = vld [vmem:[%s0 + $0x1bd] sm:$0xff]
    %v167 = vld [vmem:[%s0 + $0x1c5] sm:$0xff]
    %v168 = vld [vmem:[%s0 + $0x1cd] sm:$0xff]
    %v169 = vld [vmem:[%s0 + $0x1d5] sm:$0xff]
    %v170 = vld [vmem:[%s0 + $0x1dd] sm:$0xff]
    %v171 = vld [vmem:[%s0 + $0x1e5] sm:$0xff]
    %v172 = vld [vmem:[%s0 + $0x1ed] sm:$0xff]
    %v173 = vld [vmem:[%s0 + $0x1f5] sm:$0xff]
    %v174 = vld [vmem:[%s0 + $0x1fd] sm:$0xff]
    %v175 = vld [vmem:[%s0 + $0x205] sm:$0xff]
    %v176 = vld [vmem:[%s0 + $0x20d] sm:$0xff]
    %v177 = vld [vmem:[%s0 + $0x215] sm:$0xff]
    %v178 = vld [vmem:[%s0 + $0x21d] sm:$0xff]
    %v179 = vld [vmem:[%s0 + $0x225] sm:$0xff]
    %v180 = vld [vmem:[%s0 + $0x22d] sm:$0xff]
    %v181 = vld [vmem:[%s0 + $0x235] sm:$0xff]
    %v182 = vld [vmem:[%s0 + $0x23d] sm:$0xff]
    %v183 = vld [vmem:[%s0 + $0x245] sm:$0xff]
    %v184 = vld [vmem:[%s0 + $0x24d] sm:$0xff]
    %v185 = vld [vmem:[%s0 + $0x255] sm:$0xff]
    %v186 = vld [vmem:[%s0 + $0x25d] sm:$0xff]
    %v187 = vld [vmem:[%s0 + $0x265] sm:$0xff]
    %v188 = vld [vmem:[%s0 + $0x26d] sm:$0xff]
    %v189 = vld [vmem:[%s0 + $0x275] sm:$0xff]
    %v190 = vld [vmem:[%s0 + $0x27d] sm:$0xff]
    %v191 = vld [vmem:[%s0 + $0x285] sm:$0xff]
    %v192 = vld [vmem:[%s2] sm:$0xf]
    %v193 = vld [vmem:[%s0 + $0x6] sm:$0xff]
    %v194 = vld [vmem:[%s0 + $0xe] sm:$0xff]
    %v195 = vld [vmem:[%s0 + $0x16] sm:$0xff]
    %v196 = vld [vmem:[%s0 + $0x1e] sm:$0xff]
    %v197 = vld [vmem:[%s0 + $0x26] sm:$0xff]
    %v198 = vld [vmem:[%s0 + $0x2e] sm:$0xff]
    %v199 = vld [vmem:[%s0 + $0x36] sm:$0xff]
    %v200 = vld [vmem:[%s0 + $0x3e] sm:$0xff]
    %v201 = vld [vmem:[%s0 + $0x46] sm:$0xff]
    %v202 = vld [vmem:[%s0 + $0x4e] sm:$0xff]
    %v203 = vld [vmem:[%s0 + $0x56] sm:$0xff]
    %v204 = vld [vmem:[%s0 + $0x5e] sm:$0xff]
    %v205 = vld [vmem:[%s0 + $0x66] sm:$0xff]
    %v206 = vld [vmem:[%s0 + $0x6e] sm:$0xff]
    %v207 = vld [vmem:[%s0 + $0x76] sm:$0xff]
    %v208 = vld [vmem:[%s0 + $0x7e] sm:$0xff]
    %v209 = vld [vmem:[%s0 + $0x86] sm:$0xff]
    %v210 = vld [vmem:[%s0 + $0x8e] sm:$0xff]
    %v211 = vld [vmem:[%s0 + $0x96] sm:$0xff]
    %v212 = vld [vmem:[%s0 + $0x9e] sm:$0xff]
    %v213 = vld [vmem:[%s0 + $0xa6] sm:$0xff]
    %v214 = vld [vmem:[%s0 + $0xae] sm:$0xff]
    %v215 = vld [vmem:[%s0 + $0xb6] sm:$0xff]
    %v216 = vld [vmem:[%s0 + $0xbe] sm:$0xff]
    %v217 = vld [vmem:[%s0 + $0xc6] sm:$0xff]
    %v218 = vld [vmem:[%s0 + $0xce] sm:$0xff]
    %v219 = vld [vmem:[%s0 + $0xd6] sm:$0xff]
    %v220 = vld [vmem:[%s0 + $0xde] sm:$0xff]
    %v221 = vld [vmem:[%s0 + $0xe6] sm:$0xff]
    %v222 = vld [vmem:[%s0 + $0xee] sm:$0xff]
    %v223 = vld [vmem:[%s0 + $0xf6] sm:$0xff]
    %v224 = vld [vmem:[%s0 + $0xfe] sm:$0xff]
    %v225 = vld [vmem:[%s0 + $0x106] sm:$0xff]
    %v226 = vld [vmem:[%s0 + $0x10e] sm:$0xff]
    %v227 = vld [vmem:[%s0 + $0x116] sm:$0xff]
    %v228 = vld [vmem:[%s0 + $0x11e] sm:$0xff]
    %v229 = vld [vmem:[%s0 + $0x126] sm:$0xff]
    %v230 = vld [vmem:[%s0 + $0x12e] sm:$0xff]
    %v231 = vld [vmem:[%s0 + $0x136] sm:$0xff]
    %v232 = vld [vmem:[%s0 + $0x13e] sm:$0xff]
    %v233 = vld [vmem:[%s0 + $0x146] sm:$0xff]
    %v234 = vld [vmem:[%s0 + $0x14e] sm:$0xff]
    %v235 = vld [vmem:[%s0 + $0x156] sm:$0xff]
    %v236 = vld [vmem:[%s0 + $0x15e] sm:$0xff]
    %v237 = vld [vmem:[%s0 + $0x166] sm:$0xff]
    %v238 = vld [vmem:[%s0 + $0x16e] sm:$0xff]
    %v239 = vld [vmem:[%s0 + $0x176] sm:$0xff]
    %v240 = vld [vmem:[%s0 + $0x17e] sm:$0xff]
    %v241 = vld [vmem:[%s0 + $0x186] sm:$0xff]
    %v242 = vld [vmem:[%s0 + $0x18e] sm:$0xff]
    %v243 = vld [vmem:[%s0 + $0x196] sm:$0xff]
    %v244 = vld [vmem:[%s0 + $0x19e] sm:$0xff]
    %v245 = vld [vmem:[%s0 + $0x1a6] sm:$0xff]
    %v246 = vld [vmem:[%s0 + $0x1ae] sm:$0xff]
    %v247 = vld [vmem:[%s0 + $0x1b6] sm:$0xff]
    %v248 = vld [vmem:[%s0 + $0x1be] sm:$0xff]
    %v249 = vld [vmem:[%s0 + $0x1c6] sm:$0xff]
    %v250 = vld [vmem:[%s0 + $0x1ce] sm:$0xff]
    %v251 = vld [vmem:[%s0 + $0x1d6] sm:$0xff]
    %v252 = vld [vmem:[%s0 + $0x1de] sm:$0xff]
    %v253 = vld [vmem:[%s0 + $0x1e6] sm:$0xff]
    %v254 = vld [vmem:[%s0 + $0x1ee] sm:$0xff]
    %v255 = vld [vmem:[%s0 + $0x1f6] sm:$0xff]
    %v256 = vld [vmem:[%s0 + $0x1fe] sm:$0xff]
    %v257 = vld [vmem:[%s0 + $0x206] sm:$0xff]
    %v258 = vld [vmem:[%s0 + $0x20e] sm:$0xff]
    %v259 = vld [vmem:[%s0 + $0x216] sm:$0xff]
    %v260 = vld [vmem:[%s0 + $0x21e] sm:$0xff]
    %v261 = vld [vmem:[%s0 + $0x226] sm:$0xff]
    %v262 = vld [vmem:[%s0 + $0x22e] sm:$0xff]
    %v263 = vld [vmem:[%s0 + $0x236] sm:$0xff]
    %v264 = vld [vmem:[%s0 + $0x23e] sm:$0xff]
    %v265 = vld [vmem:[%s0 + $0x246] sm:$0xff]
    %v266 = vld [vmem:[%s0 + $0x24e] sm:$0xff]
    %v267 = vld [vmem:[%s0 + $0x256] sm:$0xff]
    %v268 = vld [vmem:[%s0 + $0x25e] sm:$0xff]
    %v269 = vld [vmem:[%s0 + $0x266] sm:$0xff]
    %v270 = vld [vmem:[%s0 + $0x26e] sm:$0xff]
    %v271 = vld [vmem:[%s0 + $0x276] sm:$0xff]
    %v272 = vld [vmem:[%s0 + $0x27e] sm:$0xff]
    %v273 = vld [vmem:[%s0 + $0x286] sm:$0xff]
    %s274 = scalar_lea.vmem %s2, 4
    %v275 = vld [vmem:[%s274] sm:$0xf]
    %vm276 = vcmask 31744
    %v278 = vsel %vm276, %v193, 0
    %v281 = vsel %vm276, %v194, 0
    %v284 = vsel %vm276, %v195, 0
    %v287 = vsel %vm276, %v196, 0
    %v290 = vsel %vm276, %v197, 0
    %v293 = vsel %vm276, %v198, 0
    %v296 = vsel %vm276, %v199, 0
    %v299 = vsel %vm276, %v200, 0
    %v302 = vsel %vm276, %v201, 0
    %v305 = vsel %vm276, %v202, 0
    %v308 = vsel %vm276, %v203, 0
    %v311 = vsel %vm276, %v204, 0
    %v314 = vsel %vm276, %v205, 0
    %v317 = vsel %vm276, %v206, 0
    %v320 = vsel %vm276, %v207, 0
    %v323 = vsel %vm276, %v208, 0
    %v326 = vsel %vm276, %v209, 0
    %v329 = vsel %vm276, %v210, 0
    %v332 = vsel %vm276, %v211, 0
    %v335 = vsel %vm276, %v212, 0
    %v338 = vsel %vm276, %v213, 0
    %v341 = vsel %vm276, %v214, 0
    %v344 = vsel %vm276, %v215, 0
    %v347 = vsel %vm276, %v216, 0
    %v350 = vsel %vm276, %v217, 0
    %v353 = vsel %vm276, %v218, 0
    %v356 = vsel %vm276, %v219, 0
    %v359 = vsel %vm276, %v220, 0
    %v362 = vsel %vm276, %v221, 0
    %v365 = vsel %vm276, %v222, 0
    %v368 = vsel %vm276, %v223, 0
    %v371 = vsel %vm276, %v224, 0
    %v374 = vsel %vm276, %v225, 0
    %v377 = vsel %vm276, %v226, 0
    %v380 = vsel %vm276, %v227, 0
    %v383 = vsel %vm276, %v228, 0
    %v386 = vsel %vm276, %v229, 0
    %v389 = vsel %vm276, %v230, 0
    %v392 = vsel %vm276, %v231, 0
    %v395 = vsel %vm276, %v232, 0
    %v398 = vsel %vm276, %v233, 0
    %v401 = vsel %vm276, %v234, 0
    %v404 = vsel %vm276, %v235, 0
    %v407 = vsel %vm276, %v236, 0
    %v410 = vsel %vm276, %v237, 0
    %v413 = vsel %vm276, %v238, 0
    %v416 = vsel %vm276, %v239, 0
    %v419 = vsel %vm276, %v240, 0
    %v422 = vsel %vm276, %v241, 0
    %v425 = vsel %vm276, %v242, 0
    %v428 = vsel %vm276, %v243, 0
    %v431 = vsel %vm276, %v244, 0
    %v434 = vsel %vm276, %v245, 0
    %v437 = vsel %vm276, %v246, 0
    %v440 = vsel %vm276, %v247, 0
    %v443 = vsel %vm276, %v248, 0
    %v446 = vsel %vm276, %v249, 0
    %v449 = vsel %vm276, %v250, 0
    %v452 = vsel %vm276, %v251, 0
    %v455 = vsel %vm276, %v252, 0
    %v458 = vsel %vm276, %v253, 0
    %v461 = vsel %vm276, %v254, 0
    %v464 = vsel %vm276, %v255, 0
    %v467 = vsel %vm276, %v256, 0
    %v470 = vsel %vm276, %v257, 0
    %v473 = vsel %vm276, %v258, 0
    %v476 = vsel %vm276, %v259, 0
    %v479 = vsel %vm276, %v260, 0
    %v482 = vsel %vm276, %v261, 0
    %v485 = vsel %vm276, %v262, 0
    %v488 = vsel %vm276, %v263, 0
    %v491 = vsel %vm276, %v264, 0
    %v494 = vsel %vm276, %v265, 0
    %v497 = vsel %vm276, %v266, 0
    %v500 = vsel %vm276, %v267, 0
    %v503 = vsel %vm276, %v268, 0
    %v506 = vsel %vm276, %v269, 0
    %v509 = vsel %vm276, %v270, 0
    %v512 = vsel %vm276, %v271, 0
    %v515 = vsel %vm276, %v272, 0
    %v518 = vsel %vm276, %v273, 0
    %vm520 = vcmask 1043456
    %v522 = vsel %vm520, %v275, 0
    %524 = vmatpush.msra.mxu0 0.0
    %525 = vmatpush.msra.mxu0 0.0
    %526 = vmatpush.msra.mxu0 0.0
    %527 = vmatpush.msra.mxu0 0.0
    %528 = vmatpush.msra.mxu0 0.0
    %529 = vmatpush.msra.mxu0 0.0
    %530 = vmatpush.msra.mxu0 0.0
    %531 = vmatpush.msra.mxu0 0.0
    %532 = vmatpush.msra.mxu0 0.0
    %533 = vmatpush.msra.mxu0 0.0
    %534 = vmatpush.msra.mxu0 0.0
    %535 = vmatpush.msra.mxu0 0.0
    %536 = vmatpush.msra.mxu0 0.0
    %537 = vmatpush.msra.mxu0 0.0
    %538 = vmatpush.msra.mxu0 0.0
    %539 = vmatpush.msra.mxu0 %v522
    %540 = vmatmul.f32.gmra.mxu0 %v278
    %v541 = vpop.f32.mrf.mxu0
    %v542 = vadd.f32 0.0, %v541
    %543 = vmatmul.f32.gmra.mxu0 %v281
    %v544 = vpop.f32.mrf.mxu0
    %v545 = vadd.f32 0.0, %v544
    %546 = vmatmul.f32.gmra.mxu0 %v284
    %v547 = vpop.f32.mrf.mxu0
    %v548 = vadd.f32 0.0, %v547
    %549 = vmatmul.f32.gmra.mxu0 %v287
    %v550 = vpop.f32.mrf.mxu0
    %v551 = vadd.f32 0.0, %v550
    %552 = vmatmul.f32.gmra.mxu0 %v290
    %v553 = vpop.f32.mrf.mxu0
    %v554 = vadd.f32 0.0, %v553
    %555 = vmatmul.f32.gmra.mxu0 %v293
    %v556 = vpop.f32.mrf.mxu0
    %v557 = vadd.f32 0.0, %v556
    %558 = vmatmul.f32.gmra.mxu0 %v296
    %v559 = vpop.f32.mrf.mxu0
    %v560 = vadd.f32 0.0, %v559
    %561 = vmatmul.f32.gmra.mxu0 %v299
    %v562 = vpop.f32.mrf.mxu0
    %v563 = vadd.f32 0.0, %v562
    %564 = vmatmul.f32.gmra.mxu0 %v302
    %v565 = vpop.f32.mrf.mxu0
    %v566 = vadd.f32 0.0, %v565
    %567 = vmatmul.f32.gmra.mxu0 %v305
    %v568 = vpop.f32.mrf.mxu0
    %v569 = vadd.f32 0.0, %v568
    %570 = vmatmul.f32.gmra.mxu0 %v308
    %v571 = vpop.f32.mrf.mxu0
    %v572 = vadd.f32 0.0, %v571
    %573 = vmatmul.f32.gmra.mxu0 %v311
    %v574 = vpop.f32.mrf.mxu0
    %v575 = vadd.f32 0.0, %v574
    %576 = vmatmul.f32.gmra.mxu0 %v314
    %v577 = vpop.f32.mrf.mxu0
    %v578 = vadd.f32 0.0, %v577
    %579 = vmatmul.f32.gmra.mxu0 %v317
    %v580 = vpop.f32.mrf.mxu0
    %v581 = vadd.f32 0.0, %v580
    %582 = vmatmul.f32.gmra.mxu0 %v320
    %v583 = vpop.f32.mrf.mxu0
    %v584 = vadd.f32 0.0, %v583
    %585 = vmatmul.f32.gmra.mxu0 %v323
    %v586 = vpop.f32.mrf.mxu0
    %v587 = vadd.f32 0.0, %v586
    %588 = vmatmul.f32.gmra.mxu0 %v326
    %v589 = vpop.f32.mrf.mxu0
    %v590 = vadd.f32 0.0, %v589
    %591 = vmatmul.f32.gmra.mxu0 %v329
    %v592 = vpop.f32.mrf.mxu0
    %v593 = vadd.f32 0.0, %v592
    %594 = vmatmul.f32.gmra.mxu0 %v332
    %v595 = vpop.f32.mrf.mxu0
    %v596 = vadd.f32 0.0, %v595
    %597 = vmatmul.f32.gmra.mxu0 %v335
    %v598 = vpop.f32.mrf.mxu0
    %v599 = vadd.f32 0.0, %v598
    %600 = vmatmul.f32.gmra.mxu0 %v338
    %v601 = vpop.f32.mrf.mxu0
    %v602 = vadd.f32 0.0, %v601
    %603 = vmatmul.f32.gmra.mxu0 %v341
    %v604 = vpop.f32.mrf.mxu0
    %v605 = vadd.f32 0.0, %v604
    %606 = vmatmul.f32.gmra.mxu0 %v344
    %v607 = vpop.f32.mrf.mxu0
    %v608 = vadd.f32 0.0, %v607
    %609 = vmatmul.f32.gmra.mxu0 %v347
    %v610 = vpop.f32.mrf.mxu0
    %v611 = vadd.f32 0.0, %v610
    %612 = vmatmul.f32.gmra.mxu0 %v350
    %v613 = vpop.f32.mrf.mxu0
    %v614 = vadd.f32 0.0, %v613
    %615 = vmatmul.f32.gmra.mxu0 %v353
    %v616 = vpop.f32.mrf.mxu0
    %v617 = vadd.f32 0.0, %v616
    %618 = vmatmul.f32.gmra.mxu0 %v356
    %v619 = vpop.f32.mrf.mxu0
    %v620 = vadd.f32 0.0, %v619
    %621 = vmatmul.f32.gmra.mxu0 %v359
    %v622 = vpop.f32.mrf.mxu0
    %v623 = vadd.f32 0.0, %v622
    %624 = vmatmul.f32.gmra.mxu0 %v362
    %v625 = vpop.f32.mrf.mxu0
    %v626 = vadd.f32 0.0, %v625
    %627 = vmatmul.f32.gmra.mxu0 %v365
    %v628 = vpop.f32.mrf.mxu0
    %v629 = vadd.f32 0.0, %v628
    %630 = vmatmul.f32.gmra.mxu0 %v368
    %v631 = vpop.f32.mrf.mxu0
    %v632 = vadd.f32 0.0, %v631
    %633 = vmatmul.f32.gmra.mxu0 %v371
    %v634 = vpop.f32.mrf.mxu0
    %v635 = vadd.f32 0.0, %v634
    %636 = vmatmul.f32.gmra.mxu0 %v374
    %v637 = vpop.f32.mrf.mxu0
    %v638 = vadd.f32 0.0, %v637
    %639 = vmatmul.f32.gmra.mxu0 %v377
    %v640 = vpop.f32.mrf.mxu0
    %v641 = vadd.f32 0.0, %v640
    %642 = vmatmul.f32.gmra.mxu0 %v380
    %v643 = vpop.f32.mrf.mxu0
    %v644 = vadd.f32 0.0, %v643
    %645 = vmatmul.f32.gmra.mxu0 %v383
    %v646 = vpop.f32.mrf.mxu0
    %v647 = vadd.f32 0.0, %v646
    %648 = vmatmul.f32.gmra.mxu0 %v386
    %v649 = vpop.f32.mrf.mxu0
    %v650 = vadd.f32 0.0, %v649
    %651 = vmatmul.f32.gmra.mxu0 %v389
    %v652 = vpop.f32.mrf.mxu0
    %v653 = vadd.f32 0.0, %v652
    %654 = vmatmul.f32.gmra.mxu0 %v392
    %v655 = vpop.f32.mrf.mxu0
    %v656 = vadd.f32 0.0, %v655
    %657 = vmatmul.f32.gmra.mxu0 %v395
    %v658 = vpop.f32.mrf.mxu0
    %v659 = vadd.f32 0.0, %v658
    %660 = vmatmul.f32.gmra.mxu0 %v398
    %v661 = vpop.f32.mrf.mxu0
    %v662 = vadd.f32 0.0, %v661
    %663 = vmatmul.f32.gmra.mxu0 %v401
    %v664 = vpop.f32.mrf.mxu0
    %v665 = vadd.f32 0.0, %v664
    %666 = vmatmul.f32.gmra.mxu0 %v404
    %v667 = vpop.f32.mrf.mxu0
    %v668 = vadd.f32 0.0, %v667
    %669 = vmatmul.f32.gmra.mxu0 %v407
    %v670 = vpop.f32.mrf.mxu0
    %v671 = vadd.f32 0.0, %v670
    %672 = vmatmul.f32.gmra.mxu0 %v410
    %v673 = vpop.f32.mrf.mxu0
    %v674 = vadd.f32 0.0, %v673
    %675 = vmatmul.f32.gmra.mxu0 %v413
    %v676 = vpop.f32.mrf.mxu0
    %v677 = vadd.f32 0.0, %v676
    %678 = vmatmul.f32.gmra.mxu0 %v416
    %v679 = vpop.f32.mrf.mxu0
    %v680 = vadd.f32 0.0, %v679
    %681 = vmatmul.f32.gmra.mxu0 %v419
    %v682 = vpop.f32.mrf.mxu0
    %v683 = vadd.f32 0.0, %v682
    %684 = vmatmul.f32.gmra.mxu0 %v422
    %v685 = vpop.f32.mrf.mxu0
    %v686 = vadd.f32 0.0, %v685
    %687 = vmatmul.f32.gmra.mxu0 %v425
    %v688 = vpop.f32.mrf.mxu0
    %v689 = vadd.f32 0.0, %v688
    %690 = vmatmul.f32.gmra.mxu0 %v428
    %v691 = vpop.f32.mrf.mxu0
    %v692 = vadd.f32 0.0, %v691
    %693 = vmatmul.f32.gmra.mxu0 %v431
    %v694 = vpop.f32.mrf.mxu0
    %v695 = vadd.f32 0.0, %v694
    %696 = vmatmul.f32.gmra.mxu0 %v434
    %v697 = vpop.f32.mrf.mxu0
    %v698 = vadd.f32 0.0, %v697
    %699 = vmatmul.f32.gmra.mxu0 %v437
    %v700 = vpop.f32.mrf.mxu0
    %v701 = vadd.f32 0.0, %v700
    %702 = vmatmul.f32.gmra.mxu0 %v440
    %v703 = vpop.f32.mrf.mxu0
    %v704 = vadd.f32 0.0, %v703
    %705 = vmatmul.f32.gmra.mxu0 %v443
    %v706 = vpop.f32.mrf.mxu0
    %v707 = vadd.f32 0.0, %v706
    %708 = vmatmul.f32.gmra.mxu0 %v446
    %v709 = vpop.f32.mrf.mxu0
    %v710 = vadd.f32 0.0, %v709
    %711 = vmatmul.f32.gmra.mxu0 %v449
    %v712 = vpop.f32.mrf.mxu0
    %v713 = vadd.f32 0.0, %v712
    %714 = vmatmul.f32.gmra.mxu0 %v452
    %v715 = vpop.f32.mrf.mxu0
    %v716 = vadd.f32 0.0, %v715
    %717 = vmatmul.f32.gmra.mxu0 %v455
    %v718 = vpop.f32.mrf.mxu0
    %v719 = vadd.f32 0.0, %v718
    %720 = vmatmul.f32.gmra.mxu0 %v458
    %v721 = vpop.f32.mrf.mxu0
    %v722 = vadd.f32 0.0, %v721
    %723 = vmatmul.f32.gmra.mxu0 %v461
    %v724 = vpop.f32.mrf.mxu0
    %v725 = vadd.f32 0.0, %v724
    %726 = vmatmul.f32.gmra.mxu0 %v464
    %v727 = vpop.f32.mrf.mxu0
    %v728 = vadd.f32 0.0, %v727
    %729 = vmatmul.f32.gmra.mxu0 %v467
    %v730 = vpop.f32.mrf.mxu0
    %v731 = vadd.f32 0.0, %v730
    %732 = vmatmul.f32.gmra.mxu0 %v470
    %v733 = vpop.f32.mrf.mxu0
    %v734 = vadd.f32 0.0, %v733
    %735 = vmatmul.f32.gmra.mxu0 %v473
    %v736 = vpop.f32.mrf.mxu0
    %v737 = vadd.f32 0.0, %v736
    %738 = vmatmul.f32.gmra.mxu0 %v476
    %v739 = vpop.f32.mrf.mxu0
    %v740 = vadd.f32 0.0, %v739
    %741 = vmatmul.f32.gmra.mxu0 %v479
    %v742 = vpop.f32.mrf.mxu0
    %v743 = vadd.f32 0.0, %v742
    %744 = vmatmul.f32.gmra.mxu0 %v482
    %v745 = vpop.f32.mrf.mxu0
    %v746 = vadd.f32 0.0, %v745
    %747 = vmatmul.f32.gmra.mxu0 %v485
    %v748 = vpop.f32.mrf.mxu0
    %v749 = vadd.f32 0.0, %v748
    %750 = vmatmul.f32.gmra.mxu0 %v488
    %v751 = vpop.f32.mrf.mxu0
    %v752 = vadd.f32 0.0, %v751
    %753 = vmatmul.f32.gmra.mxu0 %v491
    %v754 = vpop.f32.mrf.mxu0
    %v755 = vadd.f32 0.0, %v754
    %756 = vmatmul.f32.gmra.mxu0 %v494
    %v757 = vpop.f32.mrf.mxu0
    %v758 = vadd.f32 0.0, %v757
    %759 = vmatmul.f32.gmra.mxu0 %v497
    %v760 = vpop.f32.mrf.mxu0
    %v761 = vadd.f32 0.0, %v760
    %762 = vmatmul.f32.gmra.mxu0 %v500
    %v763 = vpop.f32.mrf.mxu0
    %v764 = vadd.f32 0.0, %v763
    %765 = vmatmul.f32.gmra.mxu0 %v503
    %v766 = vpop.f32.mrf.mxu0
    %v767 = vadd.f32 0.0, %v766
    %768 = vmatmul.f32.gmra.mxu0 %v506
    %v769 = vpop.f32.mrf.mxu0
    %v770 = vadd.f32 0.0, %v769
    %771 = vmatmul.f32.gmra.mxu0 %v509
    %v772 = vpop.f32.mrf.mxu0
    %v773 = vadd.f32 0.0, %v772
    %774 = vmatmul.f32.gmra.mxu0 %v512
    %v775 = vpop.f32.mrf.mxu0
    %v776 = vadd.f32 0.0, %v775
    %777 = vmatmul.f32.gmra.mxu0 %v515
    %v778 = vpop.f32.mrf.mxu0
    %v779 = vadd.f32 0.0, %v778
    %780 = vmatmul.f32.gmra.mxu0 %v518
    %v781 = vpop.f32.mrf.mxu0
    %v782 = vadd.f32 0.0, %v781
    %783 = vdwg.mxu0
    %v785 = vsel %vm276, %v111, 0
    %v788 = vsel %vm276, %v112, 0
    %v791 = vsel %vm276, %v113, 0
    %v794 = vsel %vm276, %v114, 0
    %v797 = vsel %vm276, %v115, 0
    %v800 = vsel %vm276, %v116, 0
    %v803 = vsel %vm276, %v117, 0
    %v806 = vsel %vm276, %v118, 0
    %v809 = vsel %vm276, %v119, 0
    %v812 = vsel %vm276, %v120, 0
    %v815 = vsel %vm276, %v121, 0
    %v818 = vsel %vm276, %v122, 0
    %v821 = vsel %vm276, %v123, 0
    %v824 = vsel %vm276, %v124, 0
    %v827 = vsel %vm276, %v125, 0
    %v830 = vsel %vm276, %v126, 0
    %v833 = vsel %vm276, %v127, 0
    %v836 = vsel %vm276, %v128, 0
    %v839 = vsel %vm276, %v129, 0
    %v842 = vsel %vm276, %v130, 0
    %v845 = vsel %vm276, %v131, 0
    %v848 = vsel %vm276, %v132, 0
    %v851 = vsel %vm276, %v133, 0
    %v854 = vsel %vm276, %v134, 0
    %v857 = vsel %vm276, %v135, 0
    %v860 = vsel %vm276, %v136, 0
    %v863 = vsel %vm276, %v137, 0
    %v866 = vsel %vm276, %v138, 0
    %v869 = vsel %vm276, %v139, 0
    %v872 = vsel %vm276, %v140, 0
    %v875 = vsel %vm276, %v141, 0
    %v878 = vsel %vm276, %v142, 0
    %v881 = vsel %vm276, %v143, 0
    %v884 = vsel %vm276, %v144, 0
    %v887 = vsel %vm276, %v145, 0
    %v890 = vsel %vm276, %v146, 0
    %v893 = vsel %vm276, %v147, 0
    %v896 = vsel %vm276, %v148, 0
    %v899 = vsel %vm276, %v149, 0
    %v902 = vsel %vm276, %v150, 0
    %v905 = vsel %vm276, %v151, 0
    %v908 = vsel %vm276, %v152, 0
    %v911 = vsel %vm276, %v153, 0
    %v914 = vsel %vm276, %v154, 0
    %v917 = vsel %vm276, %v155, 0
    %v920 = vsel %vm276, %v156, 0
    %v923 = vsel %vm276, %v157, 0
    %v926 = vsel %vm276, %v158, 0
    %v929 = vsel %vm276, %v159, 0
    %v932 = vsel %vm276, %v160, 0
    %v935 = vsel %vm276, %v161, 0
    %v938 = vsel %vm276, %v162, 0
    %v941 = vsel %vm276, %v163, 0
    %v944 = vsel %vm276, %v164, 0
    %v947 = vsel %vm276, %v165, 0
    %v950 = vsel %vm276, %v166, 0
    %v953 = vsel %vm276, %v167, 0
    %v956 = vsel %vm276, %v168, 0
    %v959 = vsel %vm276, %v169, 0
    %v962 = vsel %vm276, %v170, 0
    %v965 = vsel %vm276, %v171, 0
    %v968 = vsel %vm276, %v172, 0
    %v971 = vsel %vm276, %v173, 0
    %v974 = vsel %vm276, %v174, 0
    %v977 = vsel %vm276, %v175, 0
    %v980 = vsel %vm276, %v176, 0
    %v983 = vsel %vm276, %v177, 0
    %v986 = vsel %vm276, %v178, 0
    %v989 = vsel %vm276, %v179, 0
    %v992 = vsel %vm276, %v180, 0
    %v995 = vsel %vm276, %v181, 0
    %v998 = vsel %vm276, %v182, 0
    %v1001 = vsel %vm276, %v183, 0
    %v1004 = vsel %vm276, %v184, 0
    %v1007 = vsel %vm276, %v185, 0
    %v1010 = vsel %vm276, %v186, 0
    %v1013 = vsel %vm276, %v187, 0
    %v1016 = vsel %vm276, %v188, 0
    %v1019 = vsel %vm276, %v189, 0
    %v1022 = vsel %vm276, %v190, 0
    %v1025 = vsel %vm276, %v191, 0
    %v1028 = vsel %vm520, %v192, 0
    %1030 = vmatpush.msra.mxu0 0.0
    %1031 = vmatpush.msra.mxu0 0.0
    %1032 = vmatpush.msra.mxu0 0.0
    %1033 = vmatpush.msra.mxu0 0.0
    %1034 = vmatpush.msra.mxu0 0.0
    %1035 = vmatpush.msra.mxu0 0.0
    %1036 = vmatpush.msra.mxu0 0.0
    %1037 = vmatpush.msra.mxu0 0.0
    %1038 = vmatpush.msra.mxu0 0.0
    %1039 = vmatpush.msra.mxu0 0.0
    %1040 = vmatpush.msra.mxu0 0.0
    %1041 = vmatpush.msra.mxu0 0.0
    %1042 = vmatpush.msra.mxu0 0.0
    %1043 = vmatpush.msra.mxu0 0.0
    %1044 = vmatpush.msra.mxu0 0.0
    %1045 = vmatpush.msra.mxu0 %v1028
    %1046 = vmatmul.f32.gmra.mxu0 %v785
    %v1047 = vpop.f32.mrf.mxu0
    %v1048 = vadd.f32 %v542, %v1047
    %1049 = vmatmul.f32.gmra.mxu0 %v788
    %v1050 = vpop.f32.mrf.mxu0
    %v1051 = vadd.f32 %v545, %v1050
    %1052 = vmatmul.f32.gmra.mxu0 %v791
    %v1053 = vpop.f32.mrf.mxu0
    %v1054 = vadd.f32 %v548, %v1053
    %1055 = vmatmul.f32.gmra.mxu0 %v794
    %v1056 = vpop.f32.mrf.mxu0
    %v1057 = vadd.f32 %v551, %v1056
    %1058 = vmatmul.f32.gmra.mxu0 %v797
    %v1059 = vpop.f32.mrf.mxu0
    %v1060 = vadd.f32 %v554, %v1059
    %1061 = vmatmul.f32.gmra.mxu0 %v800
    %v1062 = vpop.f32.mrf.mxu0
    %v1063 = vadd.f32 %v557, %v1062
    %1064 = vmatmul.f32.gmra.mxu0 %v803
    %v1065 = vpop.f32.mrf.mxu0
    %v1066 = vadd.f32 %v560, %v1065
    %1067 = vmatmul.f32.gmra.mxu0 %v806
    %v1068 = vpop.f32.mrf.mxu0
    %v1069 = vadd.f32 %v563, %v1068
    %1070 = vmatmul.f32.gmra.mxu0 %v809
    %v1071 = vpop.f32.mrf.mxu0
    %v1072 = vadd.f32 %v566, %v1071
    %1073 = vmatmul.f32.gmra.mxu0 %v812
    %v1074 = vpop.f32.mrf.mxu0
    %v1075 = vadd.f32 %v569, %v1074
    %1076 = vmatmul.f32.gmra.mxu0 %v815
    %v1077 = vpop.f32.mrf.mxu0
    %v1078 = vadd.f32 %v572, %v1077
    %1079 = vmatmul.f32.gmra.mxu0 %v818
    %v1080 = vpop.f32.mrf.mxu0
    %v1081 = vadd.f32 %v575, %v1080
    %1082 = vmatmul.f32.gmra.mxu0 %v821
    %v1083 = vpop.f32.mrf.mxu0
    %v1084 = vadd.f32 %v578, %v1083
    %1085 = vmatmul.f32.gmra.mxu0 %v824
    %v1086 = vpop.f32.mrf.mxu0
    %v1087 = vadd.f32 %v581, %v1086
    %1088 = vmatmul.f32.gmra.mxu0 %v827
    %v1089 = vpop.f32.mrf.mxu0
    %v1090 = vadd.f32 %v584, %v1089
    %1091 = vmatmul.f32.gmra.mxu0 %v830
    %v1092 = vpop.f32.mrf.mxu0
    %v1093 = vadd.f32 %v587, %v1092
    %1094 = vmatmul.f32.gmra.mxu0 %v833
    %v1095 = vpop.f32.mrf.mxu0
    %v1096 = vadd.f32 %v590, %v1095
    %1097 = vmatmul.f32.gmra.mxu0 %v836
    %v1098 = vpop.f32.mrf.mxu0
    %v1099 = vadd.f32 %v593, %v1098
    %1100 = vmatmul.f32.gmra.mxu0 %v839
    %v1101 = vpop.f32.mrf.mxu0
    %v1102 = vadd.f32 %v596, %v1101
    %1103 = vmatmul.f32.gmra.mxu0 %v842
    %v1104 = vpop.f32.mrf.mxu0
    %v1105 = vadd.f32 %v599, %v1104
    %1106 = vmatmul.f32.gmra.mxu0 %v845
    %v1107 = vpop.f32.mrf.mxu0
    %v1108 = vadd.f32 %v602, %v1107
    %1109 = vmatmul.f32.gmra.mxu0 %v848
    %v1110 = vpop.f32.mrf.mxu0
    %v1111 = vadd.f32 %v605, %v1110
    %1112 = vmatmul.f32.gmra.mxu0 %v851
    %v1113 = vpop.f32.mrf.mxu0
    %v1114 = vadd.f32 %v608, %v1113
    %1115 = vmatmul.f32.gmra.mxu0 %v854
    %v1116 = vpop.f32.mrf.mxu0
    %v1117 = vadd.f32 %v611, %v1116
    %1118 = vmatmul.f32.gmra.mxu0 %v857
    %v1119 = vpop.f32.mrf.mxu0
    %v1120 = vadd.f32 %v614, %v1119
    %1121 = vmatmul.f32.gmra.mxu0 %v860
    %v1122 = vpop.f32.mrf.mxu0
    %v1123 = vadd.f32 %v617, %v1122
    %1124 = vmatmul.f32.gmra.mxu0 %v863
    %v1125 = vpop.f32.mrf.mxu0
    %v1126 = vadd.f32 %v620, %v1125
    %1127 = vmatmul.f32.gmra.mxu0 %v866
    %v1128 = vpop.f32.mrf.mxu0
    %v1129 = vadd.f32 %v623, %v1128
    %1130 = vmatmul.f32.gmra.mxu0 %v869
    %v1131 = vpop.f32.mrf.mxu0
    %v1132 = vadd.f32 %v626, %v1131
    %1133 = vmatmul.f32.gmra.mxu0 %v872
    %v1134 = vpop.f32.mrf.mxu0
    %v1135 = vadd.f32 %v629, %v1134
    %1136 = vmatmul.f32.gmra.mxu0 %v875
    %v1137 = vpop.f32.mrf.mxu0
    %v1138 = vadd.f32 %v632, %v1137
    %1139 = vmatmul.f32.gmra.mxu0 %v878
    %v1140 = vpop.f32.mrf.mxu0
    %v1141 = vadd.f32 %v635, %v1140
    %1142 = vmatmul.f32.gmra.mxu0 %v881
    %v1143 = vpop.f32.mrf.mxu0
    %v1144 = vadd.f32 %v638, %v1143
    %1145 = vmatmul.f32.gmra.mxu0 %v884
    %v1146 = vpop.f32.mrf.mxu0
    %v1147 = vadd.f32 %v641, %v1146
    %1148 = vmatmul.f32.gmra.mxu0 %v887
    %v1149 = vpop.f32.mrf.mxu0
    %v1150 = vadd.f32 %v644, %v1149
    %1151 = vmatmul.f32.gmra.mxu0 %v890
    %v1152 = vpop.f32.mrf.mxu0
    %v1153 = vadd.f32 %v647, %v1152
    %1154 = vmatmul.f32.gmra.mxu0 %v893
    %v1155 = vpop.f32.mrf.mxu0
    %v1156 = vadd.f32 %v650, %v1155
    %1157 = vmatmul.f32.gmra.mxu0 %v896
    %v1158 = vpop.f32.mrf.mxu0
    %v1159 = vadd.f32 %v653, %v1158
    %1160 = vmatmul.f32.gmra.mxu0 %v899
    %v1161 = vpop.f32.mrf.mxu0
    %v1162 = vadd.f32 %v656, %v1161
    %1163 = vmatmul.f32.gmra.mxu0 %v902
    %v1164 = vpop.f32.mrf.mxu0
    %v1165 = vadd.f32 %v659, %v1164
    %1166 = vmatmul.f32.gmra.mxu0 %v905
    %v1167 = vpop.f32.mrf.mxu0
    %v1168 = vadd.f32 %v662, %v1167
    %1169 = vmatmul.f32.gmra.mxu0 %v908
    %v1170 = vpop.f32.mrf.mxu0
    %v1171 = vadd.f32 %v665, %v1170
    %1172 = vmatmul.f32.gmra.mxu0 %v911
    %v1173 = vpop.f32.mrf.mxu0
    %v1174 = vadd.f32 %v668, %v1173
    %1175 = vmatmul.f32.gmra.mxu0 %v914
    %v1176 = vpop.f32.mrf.mxu0
    %v1177 = vadd.f32 %v671, %v1176
    %1178 = vmatmul.f32.gmra.mxu0 %v917
    %v1179 = vpop.f32.mrf.mxu0
    %v1180 = vadd.f32 %v674, %v1179
    %1181 = vmatmul.f32.gmra.mxu0 %v920
    %v1182 = vpop.f32.mrf.mxu0
    %v1183 = vadd.f32 %v677, %v1182
    %1184 = vmatmul.f32.gmra.mxu0 %v923
    %v1185 = vpop.f32.mrf.mxu0
    %v1186 = vadd.f32 %v680, %v1185
    %1187 = vmatmul.f32.gmra.mxu0 %v926
    %v1188 = vpop.f32.mrf.mxu0
    %v1189 = vadd.f32 %v683, %v1188
    %1190 = vmatmul.f32.gmra.mxu0 %v929
    %v1191 = vpop.f32.mrf.mxu0
    %v1192 = vadd.f32 %v686, %v1191
    %1193 = vmatmul.f32.gmra.mxu0 %v932
    %v1194 = vpop.f32.mrf.mxu0
    %v1195 = vadd.f32 %v689, %v1194
    %1196 = vmatmul.f32.gmra.mxu0 %v935
    %v1197 = vpop.f32.mrf.mxu0
    %v1198 = vadd.f32 %v692, %v1197
    %1199 = vmatmul.f32.gmra.mxu0 %v938
    %v1200 = vpop.f32.mrf.mxu0
    %v1201 = vadd.f32 %v695, %v1200
    %1202 = vmatmul.f32.gmra.mxu0 %v941
    %v1203 = vpop.f32.mrf.mxu0
    %v1204 = vadd.f32 %v698, %v1203
    %1205 = vmatmul.f32.gmra.mxu0 %v944
    %v1206 = vpop.f32.mrf.mxu0
    %v1207 = vadd.f32 %v701, %v1206
    %1208 = vmatmul.f32.gmra.mxu0 %v947
    %v1209 = vpop.f32.mrf.mxu0
    %v1210 = vadd.f32 %v704, %v1209
    %1211 = vmatmul.f32.gmra.mxu0 %v950
    %v1212 = vpop.f32.mrf.mxu0
    %v1213 = vadd.f32 %v707, %v1212
    %1214 = vmatmul.f32.gmra.mxu0 %v953
    %v1215 = vpop.f32.mrf.mxu0
    %v1216 = vadd.f32 %v710, %v1215
    %1217 = vmatmul.f32.gmra.mxu0 %v956
    %v1218 = vpop.f32.mrf.mxu0
    %v1219 = vadd.f32 %v713, %v1218
    %1220 = vmatmul.f32.gmra.mxu0 %v959
    %v1221 = vpop.f32.mrf.mxu0
    %v1222 = vadd.f32 %v716, %v1221
    %1223 = vmatmul.f32.gmra.mxu0 %v962
    %v1224 = vpop.f32.mrf.mxu0
    %v1225 = vadd.f32 %v719, %v1224
    %1226 = vmatmul.f32.gmra.mxu0 %v965
    %v1227 = vpop.f32.mrf.mxu0
    %v1228 = vadd.f32 %v722, %v1227
    %1229 = vmatmul.f32.gmra.mxu0 %v968
    %v1230 = vpop.f32.mrf.mxu0
    %v1231 = vadd.f32 %v725, %v1230
    %1232 = vmatmul.f32.gmra.mxu0 %v971
    %v1233 = vpop.f32.mrf.mxu0
    %v1234 = vadd.f32 %v728, %v1233
    %1235 = vmatmul.f32.gmra.mxu0 %v974
    %v1236 = vpop.f32.mrf.mxu0
    %v1237 = vadd.f32 %v731, %v1236
    %1238 = vmatmul.f32.gmra.mxu0 %v977
    %v1239 = vpop.f32.mrf.mxu0
    %v1240 = vadd.f32 %v734, %v1239
    %1241 = vmatmul.f32.gmra.mxu0 %v980
    %v1242 = vpop.f32.mrf.mxu0
    %v1243 = vadd.f32 %v737, %v1242
    %1244 = vmatmul.f32.gmra.mxu0 %v983
    %v1245 = vpop.f32.mrf.mxu0
    %v1246 = vadd.f32 %v740, %v1245
    %1247 = vmatmul.f32.gmra.mxu0 %v986
    %v1248 = vpop.f32.mrf.mxu0
    %v1249 = vadd.f32 %v743, %v1248
    %1250 = vmatmul.f32.gmra.mxu0 %v989
    %v1251 = vpop.f32.mrf.mxu0
    %v1252 = vadd.f32 %v746, %v1251
    %1253 = vmatmul.f32.gmra.mxu0 %v992
    %v1254 = vpop.f32.mrf.mxu0
    %v1255 = vadd.f32 %v749, %v1254
    %1256 = vmatmul.f32.gmra.mxu0 %v995
    %v1257 = vpop.f32.mrf.mxu0
    %v1258 = vadd.f32 %v752, %v1257
    %1259 = vmatmul.f32.gmra.mxu0 %v998
    %v1260 = vpop.f32.mrf.mxu0
    %v1261 = vadd.f32 %v755, %v1260
    %1262 = vmatmul.f32.gmra.mxu0 %v1001
    %v1263 = vpop.f32.mrf.mxu0
    %v1264 = vadd.f32 %v758, %v1263
    %1265 = vmatmul.f32.gmra.mxu0 %v1004
    %v1266 = vpop.f32.mrf.mxu0
    %v1267 = vadd.f32 %v761, %v1266
    %1268 = vmatmul.f32.gmra.mxu0 %v1007
    %v1269 = vpop.f32.mrf.mxu0
    %v1270 = vadd.f32 %v764, %v1269
    %1271 = vmatmul.f32.gmra.mxu0 %v1010
    %v1272 = vpop.f32.mrf.mxu0
    %v1273 = vadd.f32 %v767, %v1272
    %1274 = vmatmul.f32.gmra.mxu0 %v1013
    %v1275 = vpop.f32.mrf.mxu0
    %v1276 = vadd.f32 %v770, %v1275
    %1277 = vmatmul.f32.gmra.mxu0 %v1016
    %v1278 = vpop.f32.mrf.mxu0
    %v1279 = vadd.f32 %v773, %v1278
    %1280 = vmatmul.f32.gmra.mxu0 %v1019
    %v1281 = vpop.f32.mrf.mxu0
    %v1282 = vadd.f32 %v776, %v1281
    %1283 = vmatmul.f32.gmra.mxu0 %v1022
    %v1284 = vpop.f32.mrf.mxu0
    %v1285 = vadd.f32 %v779, %v1284
    %1286 = vmatmul.f32.gmra.mxu0 %v1025
    %v1287 = vpop.f32.mrf.mxu0
    %v1288 = vadd.f32 %v782, %v1287
    %1289 = vdwg.mxu0
    %v1290 = vld [vmem:[%s0 + $0x7] sm:$0xff]
    %v1291 = vld [vmem:[%s0 + $0xf] sm:$0xff]
    %v1292 = vld [vmem:[%s0 + $0x17] sm:$0xff]
    %v1293 = vld [vmem:[%s0 + $0x1f] sm:$0xff]
    %v1294 = vld [vmem:[%s0 + $0x27] sm:$0xff]
    %v1295 = vld [vmem:[%s0 + $0x2f] sm:$0xff]
    %v1296 = vld [vmem:[%s0 + $0x37] sm:$0xff]
    %v1297 = vld [vmem:[%s0 + $0x3f] sm:$0xff]
    %v1298 = vld [vmem:[%s0 + $0x47] sm:$0xff]
    %v1299 = vld [vmem:[%s0 + $0x4f] sm:$0xff]
    %v1300 = vld [vmem:[%s0 + $0x57] sm:$0xff]
    %v1301 = vld [vmem:[%s0 + $0x5f] sm:$0xff]
    %v1302 = vld [vmem:[%s0 + $0x67] sm:$0xff]
    %v1303 = vld [vmem:[%s0 + $0x6f] sm:$0xff]
    %v1304 = vld [vmem:[%s0 + $0x77] sm:$0xff]
    %v1305 = vld [vmem:[%s0 + $0x7f] sm:$0xff]
    %v1306 = vld [vmem:[%s0 + $0x87] sm:$0xff]
    %v1307 = vld [vmem:[%s0 + $0x8f] sm:$0xff]
    %v1308 = vld [vmem:[%s0 + $0x97] sm:$0xff]
    %v1309 = vld [vmem:[%s0 + $0x9f] sm:$0xff]
    %v1310 = vld [vmem:[%s0 + $0xa7] sm:$0xff]
    %v1311 = vld [vmem:[%s0 + $0xaf] sm:$0xff]
    %v1312 = vld [vmem:[%s0 + $0xb7] sm:$0xff]
    %v1313 = vld [vmem:[%s0 + $0xbf] sm:$0xff]
    %v1314 = vld [vmem:[%s0 + $0xc7] sm:$0xff]
    %v1315 = vld [vmem:[%s0 + $0xcf] sm:$0xff]
    %v1316 = vld [vmem:[%s0 + $0xd7] sm:$0xff]
    %v1317 = vld [vmem:[%s0 + $0xdf] sm:$0xff]
    %v1318 = vld [vmem:[%s0 + $0xe7] sm:$0xff]
    %v1319 = vld [vmem:[%s0 + $0xef] sm:$0xff]
    %v1320 = vld [vmem:[%s0 + $0xf7] sm:$0xff]
    %v1321 = vld [vmem:[%s0 + $0xff] sm:$0xff]
    %v1322 = vld [vmem:[%s0 + $0x107] sm:$0xff]
    %v1323 = vld [vmem:[%s0 + $0x10f] sm:$0xff]
    %v1324 = vld [vmem:[%s0 + $0x117] sm:$0xff]
    %v1325 = vld [vmem:[%s0 + $0x11f] sm:$0xff]
    %v1326 = vld [vmem:[%s0 + $0x127] sm:$0xff]
    %v1327 = vld [vmem:[%s0 + $0x12f] sm:$0xff]
    %v1328 = vld [vmem:[%s0 + $0x137] sm:$0xff]
    %v1329 = vld [vmem:[%s0 + $0x13f] sm:$0xff]
    %v1330 = vld [vmem:[%s0 + $0x147] sm:$0xff]
    %v1331 = vld [vmem:[%s0 + $0x14f] sm:$0xff]
    %v1332 = vld [vmem:[%s0 + $0x157] sm:$0xff]
    %v1333 = vld [vmem:[%s0 + $0x15f] sm:$0xff]
    %v1334 = vld [vmem:[%s0 + $0x167] sm:$0xff]
    %v1335 = vld [vmem:[%s0 + $0x16f] sm:$0xff]
    %v1336 = vld [vmem:[%s0 + $0x177] sm:$0xff]
    %v1337 = vld [vmem:[%s0 + $0x17f] sm:$0xff]
    %v1338 = vld [vmem:[%s0 + $0x187] sm:$0xff]
    %v1339 = vld [vmem:[%s0 + $0x18f] sm:$0xff]
    %v1340 = vld [vmem:[%s0 + $0x197] sm:$0xff]
    %v1341 = vld [vmem:[%s0 + $0x19f] sm:$0xff]
    %v1342 = vld [vmem:[%s0 + $0x1a7] sm:$0xff]
    %v1343 = vld [vmem:[%s0 + $0x1af] sm:$0xff]
    %v1344 = vld [vmem:[%s0 + $0x1b7] sm:$0xff]
    %v1345 = vld [vmem:[%s0 + $0x1bf] sm:$0xff]
    %v1346 = vld [vmem:[%s0 + $0x1c7] sm:$0xff]
    %v1347 = vld [vmem:[%s0 + $0x1cf] sm:$0xff]
    %v1348 = vld [vmem:[%s0 + $0x1d7] sm:$0xff]
    %v1349 = vld [vmem:[%s0 + $0x1df] sm:$0xff]
    %v1350 = vld [vmem:[%s0 + $0x1e7] sm:$0xff]
    %v1351 = vld [vmem:[%s0 + $0x1ef] sm:$0xff]
    %v1352 = vld [vmem:[%s0 + $0x1f7] sm:$0xff]
    %v1353 = vld [vmem:[%s0 + $0x1ff] sm:$0xff]
    %v1354 = vld [vmem:[%s0 + $0x207] sm:$0xff]
    %v1355 = vld [vmem:[%s0 + $0x20f] sm:$0xff]
    %v1356 = vld [vmem:[%s0 + $0x217] sm:$0xff]
    %v1357 = vld [vmem:[%s0 + $0x21f] sm:$0xff]
    %v1358 = vld [vmem:[%s0 + $0x227] sm:$0xff]
    %v1359 = vld [vmem:[%s0 + $0x22f] sm:$0xff]
    %v1360 = vld [vmem:[%s0 + $0x237] sm:$0xff]
    %v1361 = vld [vmem:[%s0 + $0x23f] sm:$0xff]
    %v1362 = vld [vmem:[%s0 + $0x247] sm:$0xff]
    %v1363 = vld [vmem:[%s0 + $0x24f] sm:$0xff]
    %v1364 = vld [vmem:[%s0 + $0x257] sm:$0xff]
    %v1365 = vld [vmem:[%s0 + $0x25f] sm:$0xff]
    %v1366 = vld [vmem:[%s0 + $0x267] sm:$0xff]
    %v1367 = vld [vmem:[%s0 + $0x26f] sm:$0xff]
    %v1368 = vld [vmem:[%s0 + $0x277] sm:$0xff]
    %v1369 = vld [vmem:[%s0 + $0x27f] sm:$0xff]
    %v1370 = vld [vmem:[%s0 + $0x287] sm:$0xff]
    %s1371 = scalar_lea.vmem %s2, 8
    %v1372 = vld [vmem:[%s1371] sm:$0xf]
    %v1374 = vsel %vm276, %v1290, 0
    %v1377 = vsel %vm276, %v1291, 0
    %v1380 = vsel %vm276, %v1292, 0
    %v1383 = vsel %vm276, %v1293, 0
    %v1386 = vsel %vm276, %v1294, 0
    %v1389 = vsel %vm276, %v1295, 0
    %v1392 = vsel %vm276, %v1296, 0
    %v1395 = vsel %vm276, %v1297, 0
    %v1398 = vsel %vm276, %v1298, 0
    %v1401 = vsel %vm276, %v1299, 0
    %v1404 = vsel %vm276, %v1300, 0
    %v1407 = vsel %vm276, %v1301, 0
    %v1410 = vsel %vm276, %v1302, 0
    %v1413 = vsel %vm276, %v1303, 0
    %v1416 = vsel %vm276, %v1304, 0
    %v1419 = vsel %vm276, %v1305, 0
    %v1422 = vsel %vm276, %v1306, 0
    %v1425 = vsel %vm276, %v1307, 0
    %v1428 = vsel %vm276, %v1308, 0
    %v1431 = vsel %vm276, %v1309, 0
    %v1434 = vsel %vm276, %v1310, 0
    %v1437 = vsel %vm276, %v1311, 0
    %v1440 = vsel %vm276, %v1312, 0
    %v1443 = vsel %vm276, %v1313, 0
    %v1446 = vsel %vm276, %v1314, 0
    %v1449 = vsel %vm276, %v1315, 0
    %v1452 = vsel %vm276, %v1316, 0
    %v1455 = vsel %vm276, %v1317, 0
    %v1458 = vsel %vm276, %v1318, 0
    %v1461 = vsel %vm276, %v1319, 0
    %v1464 = vsel %vm276, %v1320, 0
    %v1467 = vsel %vm276, %v1321, 0
    %v1470 = vsel %vm276, %v1322, 0
    %v1473 = vsel %vm276, %v1323, 0
    %v1476 = vsel %vm276, %v1324, 0
    %v1479 = vsel %vm276, %v1325, 0
    %v1482 = vsel %vm276, %v1326, 0
    %v1485 = vsel %vm276, %v1327, 0
    %v1488 = vsel %vm276, %v1328, 0
    %v1491 = vsel %vm276, %v1329, 0
    %v1494 = vsel %vm276, %v1330, 0
    %v1497 = vsel %vm276, %v1331, 0
    %v1500 = vsel %vm276, %v1332, 0
    %v1503 = vsel %vm276, %v1333, 0
    %v1506 = vsel %vm276, %v1334, 0
    %v1509 = vsel %vm276, %v1335, 0
    %v1512 = vsel %vm276, %v1336, 0
    %v1515 = vsel %vm276, %v1337, 0
    %v1518 = vsel %vm276, %v1338, 0
    %v1521 = vsel %vm276, %v1339, 0
    %v1524 = vsel %vm276, %v1340, 0
    %v1527 = vsel %vm276, %v1341, 0
    %v1530 = vsel %vm276, %v1342, 0
    %v1533 = vsel %vm276, %v1343, 0
    %v1536 = vsel %vm276, %v1344, 0
    %v1539 = vsel %vm276, %v1345, 0
    %v1542 = vsel %vm276, %v1346, 0
    %v1545 = vsel %vm276, %v1347, 0
    %v1548 = vsel %vm276, %v1348, 0
    %v1551 = vsel %vm276, %v1349, 0
    %v1554 = vsel %vm276, %v1350, 0
    %v1557 = vsel %vm276, %v1351, 0
    %v1560 = vsel %vm276, %v1352, 0
    %v1563 = vsel %vm276, %v1353, 0
    %v1566 = vsel %vm276, %v1354, 0
    %v1569 = vsel %vm276, %v1355, 0
    %v1572 = vsel %vm276, %v1356, 0
    %v1575 = vsel %vm276, %v1357, 0
    %v1578 = vsel %vm276, %v1358, 0
    %v1581 = vsel %vm276, %v1359, 0
    %v1584 = vsel %vm276, %v1360, 0
    %v1587 = vsel %vm276, %v1361, 0
    %v1590 = vsel %vm276, %v1362, 0
    %v1593 = vsel %vm276, %v1363, 0
    %v1596 = vsel %vm276, %v1364, 0
    %v1599 = vsel %vm276, %v1365, 0
    %v1602 = vsel %vm276, %v1366, 0
    %v1605 = vsel %vm276, %v1367, 0
    %v1608 = vsel %vm276, %v1368, 0
    %v1611 = vsel %vm276, %v1369, 0
    %v1614 = vsel %vm276, %v1370, 0
    %v1617 = vsel %vm520, %v1372, 0
    %1619 = vmatpush.msra.mxu0 0.0
    %1620 = vmatpush.msra.mxu0 0.0
    %1621 = vmatpush.msra.mxu0 0.0
    %1622 = vmatpush.msra.mxu0 0.0
    %1623 = vmatpush.msra.mxu0 0.0
    %1624 = vmatpush.msra.mxu0 0.0
    %1625 = vmatpush.msra.mxu0 0.0
    %1626 = vmatpush.msra.mxu0 0.0
    %1627 = vmatpush.msra.mxu0 0.0
    %1628 = vmatpush.msra.mxu0 0.0
    %1629 = vmatpush.msra.mxu0 0.0
    %1630 = vmatpush.msra.mxu0 0.0
    %1631 = vmatpush.msra.mxu0 0.0
    %1632 = vmatpush.msra.mxu0 0.0
    %1633 = vmatpush.msra.mxu0 0.0
    %1634 = vmatpush.msra.mxu0 %v1617
    %1635 = vmatmul.f32.gmra.mxu0 %v1374
    %v1636 = vpop.f32.mrf.mxu0
    %v1637 = vadd.f32 0.0, %v1636
    %1638 = vmatmul.f32.gmra.mxu0 %v1377
    %v1639 = vpop.f32.mrf.mxu0
    %v1640 = vadd.f32 0.0, %v1639
    %1641 = vmatmul.f32.gmra.mxu0 %v1380
    %v1642 = vpop.f32.mrf.mxu0
    %v1643 = vadd.f32 0.0, %v1642
    %1644 = vmatmul.f32.gmra.mxu0 %v1383
    %v1645 = vpop.f32.mrf.mxu0
    %v1646 = vadd.f32 0.0, %v1645
    %1647 = vmatmul.f32.gmra.mxu0 %v1386
    %v1648 = vpop.f32.mrf.mxu0
    %v1649 = vadd.f32 0.0, %v1648
    %1650 = vmatmul.f32.gmra.mxu0 %v1389
    %v1651 = vpop.f32.mrf.mxu0
    %v1652 = vadd.f32 0.0, %v1651
    %1653 = vmatmul.f32.gmra.mxu0 %v1392
    %v1654 = vpop.f32.mrf.mxu0
    %v1655 = vadd.f32 0.0, %v1654
    %1656 = vmatmul.f32.gmra.mxu0 %v1395
    %v1657 = vpop.f32.mrf.mxu0
    %v1658 = vadd.f32 0.0, %v1657
    %1659 = vmatmul.f32.gmra.mxu0 %v1398
    %v1660 = vpop.f32.mrf.mxu0
    %v1661 = vadd.f32 0.0, %v1660
    %1662 = vmatmul.f32.gmra.mxu0 %v1401
    %v1663 = vpop.f32.mrf.mxu0
    %v1664 = vadd.f32 0.0, %v1663
    %1665 = vmatmul.f32.gmra.mxu0 %v1404
    %v1666 = vpop.f32.mrf.mxu0
    %v1667 = vadd.f32 0.0, %v1666
    %1668 = vmatmul.f32.gmra.mxu0 %v1407
    %v1669 = vpop.f32.mrf.mxu0
    %v1670 = vadd.f32 0.0, %v1669
    %1671 = vmatmul.f32.gmra.mxu0 %v1410
    %v1672 = vpop.f32.mrf.mxu0
    %v1673 = vadd.f32 0.0, %v1672
    %1674 = vmatmul.f32.gmra.mxu0 %v1413
    %v1675 = vpop.f32.mrf.mxu0
    %v1676 = vadd.f32 0.0, %v1675
    %1677 = vmatmul.f32.gmra.mxu0 %v1416
    %v1678 = vpop.f32.mrf.mxu0
    %v1679 = vadd.f32 0.0, %v1678
    %1680 = vmatmul.f32.gmra.mxu0 %v1419
    %v1681 = vpop.f32.mrf.mxu0
    %v1682 = vadd.f32 0.0, %v1681
    %1683 = vmatmul.f32.gmra.mxu0 %v1422
    %v1684 = vpop.f32.mrf.mxu0
    %v1685 = vadd.f32 0.0, %v1684
    %1686 = vmatmul.f32.gmra.mxu0 %v1425
    %v1687 = vpop.f32.mrf.mxu0
    %v1688 = vadd.f32 0.0, %v1687
    %1689 = vmatmul.f32.gmra.mxu0 %v1428
    %v1690 = vpop.f32.mrf.mxu0
    %v1691 = vadd.f32 0.0, %v1690
    %1692 = vmatmul.f32.gmra.mxu0 %v1431
    %v1693 = vpop.f32.mrf.mxu0
    %v1694 = vadd.f32 0.0, %v1693
    %1695 = vmatmul.f32.gmra.mxu0 %v1434
    %v1696 = vpop.f32.mrf.mxu0
    %v1697 = vadd.f32 0.0, %v1696
    %1698 = vmatmul.f32.gmra.mxu0 %v1437
    %v1699 = vpop.f32.mrf.mxu0
    %v1700 = vadd.f32 0.0, %v1699
    %1701 = vmatmul.f32.gmra.mxu0 %v1440
    %v1702 = vpop.f32.mrf.mxu0
    %v1703 = vadd.f32 0.0, %v1702
    %1704 = vmatmul.f32.gmra.mxu0 %v1443
    %v1705 = vpop.f32.mrf.mxu0
    %v1706 = vadd.f32 0.0, %v1705
    %1707 = vmatmul.f32.gmra.mxu0 %v1446
    %v1708 = vpop.f32.mrf.mxu0
    %v1709 = vadd.f32 0.0, %v1708
    %1710 = vmatmul.f32.gmra.mxu0 %v1449
    %v1711 = vpop.f32.mrf.mxu0
    %v1712 = vadd.f32 0.0, %v1711
    %1713 = vmatmul.f32.gmra.mxu0 %v1452
    %v1714 = vpop.f32.mrf.mxu0
    %v1715 = vadd.f32 0.0, %v1714
    %1716 = vmatmul.f32.gmra.mxu0 %v1455
    %v1717 = vpop.f32.mrf.mxu0
    %v1718 = vadd.f32 0.0, %v1717
    %1719 = vmatmul.f32.gmra.mxu0 %v1458
    %v1720 = vpop.f32.mrf.mxu0
    %v1721 = vadd.f32 0.0, %v1720
    %1722 = vmatmul.f32.gmra.mxu0 %v1461
    %v1723 = vpop.f32.mrf.mxu0
    %v1724 = vadd.f32 0.0, %v1723
    %1725 = vmatmul.f32.gmra.mxu0 %v1464
    %v1726 = vpop.f32.mrf.mxu0
    %v1727 = vadd.f32 0.0, %v1726
    %1728 = vmatmul.f32.gmra.mxu0 %v1467
    %v1729 = vpop.f32.mrf.mxu0
    %v1730 = vadd.f32 0.0, %v1729
    %1731 = vmatmul.f32.gmra.mxu0 %v1470
    %v1732 = vpop.f32.mrf.mxu0
    %v1733 = vadd.f32 0.0, %v1732
    %1734 = vmatmul.f32.gmra.mxu0 %v1473
    %v1735 = vpop.f32.mrf.mxu0
    %v1736 = vadd.f32 0.0, %v1735
    %1737 = vmatmul.f32.gmra.mxu0 %v1476
    %v1738 = vpop.f32.mrf.mxu0
    %v1739 = vadd.f32 0.0, %v1738
    %1740 = vmatmul.f32.gmra.mxu0 %v1479
    %v1741 = vpop.f32.mrf.mxu0
    %v1742 = vadd.f32 0.0, %v1741
    %1743 = vmatmul.f32.gmra.mxu0 %v1482
    %v1744 = vpop.f32.mrf.mxu0
    %v1745 = vadd.f32 0.0, %v1744
    %1746 = vmatmul.f32.gmra.mxu0 %v1485
    %v1747 = vpop.f32.mrf.mxu0
    %v1748 = vadd.f32 0.0, %v1747
    %1749 = vmatmul.f32.gmra.mxu0 %v1488
    %v1750 = vpop.f32.mrf.mxu0
    %v1751 = vadd.f32 0.0, %v1750
    %1752 = vmatmul.f32.gmra.mxu0 %v1491
    %v1753 = vpop.f32.mrf.mxu0
    %v1754 = vadd.f32 0.0, %v1753
    %1755 = vmatmul.f32.gmra.mxu0 %v1494
    %v1756 = vpop.f32.mrf.mxu0
    %v1757 = vadd.f32 0.0, %v1756
    %1758 = vmatmul.f32.gmra.mxu0 %v1497
    %v1759 = vpop.f32.mrf.mxu0
    %v1760 = vadd.f32 0.0, %v1759
    %1761 = vmatmul.f32.gmra.mxu0 %v1500
    %v1762 = vpop.f32.mrf.mxu0
    %v1763 = vadd.f32 0.0, %v1762
    %1764 = vmatmul.f32.gmra.mxu0 %v1503
    %v1765 = vpop.f32.mrf.mxu0
    %v1766 = vadd.f32 0.0, %v1765
    %1767 = vmatmul.f32.gmra.mxu0 %v1506
    %v1768 = vpop.f32.mrf.mxu0
    %v1769 = vadd.f32 0.0, %v1768
    %1770 = vmatmul.f32.gmra.mxu0 %v1509
    %v1771 = vpop.f32.mrf.mxu0
    %v1772 = vadd.f32 0.0, %v1771
    %1773 = vmatmul.f32.gmra.mxu0 %v1512
    %v1774 = vpop.f32.mrf.mxu0
    %v1775 = vadd.f32 0.0, %v1774
    %1776 = vmatmul.f32.gmra.mxu0 %v1515
    %v1777 = vpop.f32.mrf.mxu0
    %v1778 = vadd.f32 0.0, %v1777
    %1779 = vmatmul.f32.gmra.mxu0 %v1518
    %v1780 = vpop.f32.mrf.mxu0
    %v1781 = vadd.f32 0.0, %v1780
    %1782 = vmatmul.f32.gmra.mxu0 %v1521
    %v1783 = vpop.f32.mrf.mxu0
    %v1784 = vadd.f32 0.0, %v1783
    %1785 = vmatmul.f32.gmra.mxu0 %v1524
    %v1786 = vpop.f32.mrf.mxu0
    %v1787 = vadd.f32 0.0, %v1786
    %1788 = vmatmul.f32.gmra.mxu0 %v1527
    %v1789 = vpop.f32.mrf.mxu0
    %v1790 = vadd.f32 0.0, %v1789
    %1791 = vmatmul.f32.gmra.mxu0 %v1530
    %v1792 = vpop.f32.mrf.mxu0
    %v1793 = vadd.f32 0.0, %v1792
    %1794 = vmatmul.f32.gmra.mxu0 %v1533
    %v1795 = vpop.f32.mrf.mxu0
    %v1796 = vadd.f32 0.0, %v1795
    %1797 = vmatmul.f32.gmra.mxu0 %v1536
    %v1798 = vpop.f32.mrf.mxu0
    %v1799 = vadd.f32 0.0, %v1798
    %1800 = vmatmul.f32.gmra.mxu0 %v1539
    %v1801 = vpop.f32.mrf.mxu0
    %v1802 = vadd.f32 0.0, %v1801
    %1803 = vmatmul.f32.gmra.mxu0 %v1542
    %v1804 = vpop.f32.mrf.mxu0
    %v1805 = vadd.f32 0.0, %v1804
    %1806 = vmatmul.f32.gmra.mxu0 %v1545
    %v1807 = vpop.f32.mrf.mxu0
    %v1808 = vadd.f32 0.0, %v1807
    %1809 = vmatmul.f32.gmra.mxu0 %v1548
    %v1810 = vpop.f32.mrf.mxu0
    %v1811 = vadd.f32 0.0, %v1810
    %1812 = vmatmul.f32.gmra.mxu0 %v1551
    %v1813 = vpop.f32.mrf.mxu0
    %v1814 = vadd.f32 0.0, %v1813
    %1815 = vmatmul.f32.gmra.mxu0 %v1554
    %v1816 = vpop.f32.mrf.mxu0
    %v1817 = vadd.f32 0.0, %v1816
    %1818 = vmatmul.f32.gmra.mxu0 %v1557
    %v1819 = vpop.f32.mrf.mxu0
    %v1820 = vadd.f32 0.0, %v1819
    %1821 = vmatmul.f32.gmra.mxu0 %v1560
    %v1822 = vpop.f32.mrf.mxu0
    %v1823 = vadd.f32 0.0, %v1822
    %1824 = vmatmul.f32.gmra.mxu0 %v1563
    %v1825 = vpop.f32.mrf.mxu0
    %v1826 = vadd.f32 0.0, %v1825
    %1827 = vmatmul.f32.gmra.mxu0 %v1566
    %v1828 = vpop.f32.mrf.mxu0
    %v1829 = vadd.f32 0.0, %v1828
    %1830 = vmatmul.f32.gmra.mxu0 %v1569
    %v1831 = vpop.f32.mrf.mxu0
    %v1832 = vadd.f32 0.0, %v1831
    %1833 = vmatmul.f32.gmra.mxu0 %v1572
    %v1834 = vpop.f32.mrf.mxu0
    %v1835 = vadd.f32 0.0, %v1834
    %1836 = vmatmul.f32.gmra.mxu0 %v1575
    %v1837 = vpop.f32.mrf.mxu0
    %v1838 = vadd.f32 0.0, %v1837
    %1839 = vmatmul.f32.gmra.mxu0 %v1578
    %v1840 = vpop.f32.mrf.mxu0
    %v1841 = vadd.f32 0.0, %v1840
    %1842 = vmatmul.f32.gmra.mxu0 %v1581
    %v1843 = vpop.f32.mrf.mxu0
    %v1844 = vadd.f32 0.0, %v1843
    %1845 = vmatmul.f32.gmra.mxu0 %v1584
    %v1846 = vpop.f32.mrf.mxu0
    %v1847 = vadd.f32 0.0, %v1846
    %1848 = vmatmul.f32.gmra.mxu0 %v1587
    %v1849 = vpop.f32.mrf.mxu0
    %v1850 = vadd.f32 0.0, %v1849
    %1851 = vmatmul.f32.gmra.mxu0 %v1590
    %v1852 = vpop.f32.mrf.mxu0
    %v1853 = vadd.f32 0.0, %v1852
    %1854 = vmatmul.f32.gmra.mxu0 %v1593
    %v1855 = vpop.f32.mrf.mxu0
    %v1856 = vadd.f32 0.0, %v1855
    %1857 = vmatmul.f32.gmra.mxu0 %v1596
    %v1858 = vpop.f32.mrf.mxu0
    %v1859 = vadd.f32 0.0, %v1858
    %1860 = vmatmul.f32.gmra.mxu0 %v1599
    %v1861 = vpop.f32.mrf.mxu0
    %v1862 = vadd.f32 0.0, %v1861
    %1863 = vmatmul.f32.gmra.mxu0 %v1602
    %v1864 = vpop.f32.mrf.mxu0
    %v1865 = vadd.f32 0.0, %v1864
    %1866 = vmatmul.f32.gmra.mxu0 %v1605
    %v1867 = vpop.f32.mrf.mxu0
    %v1868 = vadd.f32 0.0, %v1867
    %1869 = vmatmul.f32.gmra.mxu0 %v1608
    %v1870 = vpop.f32.mrf.mxu0
    %v1871 = vadd.f32 0.0, %v1870
    %1872 = vmatmul.f32.gmra.mxu0 %v1611
    %v1873 = vpop.f32.mrf.mxu0
    %v1874 = vadd.f32 0.0, %v1873
    %1875 = vmatmul.f32.gmra.mxu0 %v1614
    %v1876 = vpop.f32.mrf.mxu0
    %v1877 = vadd.f32 0.0, %v1876
    %1878 = vdwg.mxu0
    %v1879 = vadd.f32 %v1048, %v1637
    %v1880 = vadd.f32 %v1051, %v1640
    %v1881 = vadd.f32 %v1054, %v1643
    %v1882 = vadd.f32 %v1057, %v1646
    %v1883 = vadd.f32 %v1060, %v1649
    %v1884 = vadd.f32 %v1063, %v1652
    %v1885 = vadd.f32 %v1066, %v1655
    %v1886 = vadd.f32 %v1069, %v1658
    %v1887 = vadd.f32 %v1072, %v1661
    %v1888 = vadd.f32 %v1075, %v1664
    %v1889 = vadd.f32 %v1078, %v1667
    %v1890 = vadd.f32 %v1081, %v1670
    %v1891 = vadd.f32 %v1084, %v1673
    %v1892 = vadd.f32 %v1087, %v1676
    %v1893 = vadd.f32 %v1090, %v1679
    %v1894 = vadd.f32 %v1093, %v1682
    %v1895 = vadd.f32 %v1096, %v1685
    %v1896 = vadd.f32 %v1099, %v1688
    %v1897 = vadd.f32 %v1102, %v1691
    %v1898 = vadd.f32 %v1105, %v1694
    %v1899 = vadd.f32 %v1108, %v1697
    %v1900 = vadd.f32 %v1111, %v1700
    %v1901 = vadd.f32 %v1114, %v1703
    %v1902 = vadd.f32 %v1117, %v1706
    %v1903 = vadd.f32 %v1120, %v1709
    %v1904 = vadd.f32 %v1123, %v1712
    %v1905 = vadd.f32 %v1126, %v1715
    %v1906 = vadd.f32 %v1129, %v1718
    %v1907 = vadd.f32 %v1132, %v1721
    %v1908 = vadd.f32 %v1135, %v1724
    %v1909 = vadd.f32 %v1138, %v1727
    %v1910 = vadd.f32 %v1141, %v1730
    %v1911 = vadd.f32 %v1144, %v1733
    %v1912 = vadd.f32 %v1147, %v1736
    %v1913 = vadd.f32 %v1150, %v1739
    %v1914 = vadd.f32 %v1153, %v1742
    %v1915 = vadd.f32 %v1156, %v1745
    %v1916 = vadd.f32 %v1159, %v1748
    %v1917 = vadd.f32 %v1162, %v1751
    %v1918 = vadd.f32 %v1165, %v1754
    %v1919 = vadd.f32 %v1168, %v1757
    %v1920 = vadd.f32 %v1171, %v1760
    %v1921 = vadd.f32 %v1174, %v1763
    %v1922 = vadd.f32 %v1177, %v1766
    %v1923 = vadd.f32 %v1180, %v1769
    %v1924 = vadd.f32 %v1183, %v1772
    %v1925 = vadd.f32 %v1186, %v1775
    %v1926 = vadd.f32 %v1189, %v1778
    %v1927 = vadd.f32 %v1192, %v1781
    %v1928 = vadd.f32 %v1195, %v1784
    %v1929 = vadd.f32 %v1198, %v1787
    %v1930 = vadd.f32 %v1201, %v1790
    %v1931 = vadd.f32 %v1204, %v1793
    %v1932 = vadd.f32 %v1207, %v1796
    %v1933 = vadd.f32 %v1210, %v1799
    %v1934 = vadd.f32 %v1213, %v1802
    %v1935 = vadd.f32 %v1216, %v1805
    %v1936 = vadd.f32 %v1219, %v1808
    %v1937 = vadd.f32 %v1222, %v1811
    %v1938 = vadd.f32 %v1225, %v1814
    %v1939 = vadd.f32 %v1228, %v1817
    %v1940 = vadd.f32 %v1231, %v1820
    %v1941 = vadd.f32 %v1234, %v1823
    %v1942 = vadd.f32 %v1237, %v1826
    %v1943 = vadd.f32 %v1240, %v1829
    %v1944 = vadd.f32 %v1243, %v1832
    %v1945 = vadd.f32 %v1246, %v1835
    %v1946 = vadd.f32 %v1249, %v1838
    %v1947 = vadd.f32 %v1252, %v1841
    %v1948 = vadd.f32 %v1255, %v1844
    %v1949 = vadd.f32 %v1258, %v1847
    %v1950 = vadd.f32 %v1261, %v1850
    %v1951 = vadd.f32 %v1264, %v1853
    %v1952 = vadd.f32 %v1267, %v1856
    %v1953 = vadd.f32 %v1270, %v1859
    %v1954 = vadd.f32 %v1273, %v1862
    %v1955 = vadd.f32 %v1276, %v1865
    %v1956 = vadd.f32 %v1279, %v1868
    %v1957 = vadd.f32 %v1282, %v1871
    %v1958 = vadd.f32 %v1285, %v1874
    %v1959 = vadd.f32 %v1288, %v1877
    %v1960 = vld [vmem:[%s0 + $0x17] sm:$0xff]
    %v1961 = vld [vmem:[%s0 + $0x1f] sm:$0xff]
    %v1962 = vld [vmem:[%s0 + $0x27] sm:$0xff]
    %v1963 = vld [vmem:[%s0 + $0x2f] sm:$0xff]
    %v1964 = vld [vmem:[%s0 + $0x37] sm:$0xff]
    %v1965 = vld [vmem:[%s0 + $0x3f] sm:$0xff]
    %v1966 = vld [vmem:[%s0 + $0x47] sm:$0xff]
    %v1967 = vld [vmem:[%s0 + $0x4f] sm:$0xff]
    %v1968 = vld [vmem:[%s0 + $0x57] sm:$0xff]
    %v1969 = vld [vmem:[%s0 + $0x5f] sm:$0xff]
    %v1970 = vld [vmem:[%s0 + $0x67] sm:$0xff]
    %v1971 = vld [vmem:[%s0 + $0x6f] sm:$0xff]
    %v1972 = vld [vmem:[%s0 + $0x77] sm:$0xff]
    %v1973 = vld [vmem:[%s0 + $0x7f] sm:$0xff]
    %v1974 = vld [vmem:[%s0 + $0x87] sm:$0xff]
    %v1975 = vld [vmem:[%s0 + $0x8f] sm:$0xff]
    %v1976 = vld [vmem:[%s0 + $0x97] sm:$0xff]
    %v1977 = vld [vmem:[%s0 + $0x9f] sm:$0xff]
    %v1978 = vld [vmem:[%s0 + $0xa7] sm:$0xff]
    %v1979 = vld [vmem:[%s0 + $0xaf] sm:$0xff]
    %v1980 = vld [vmem:[%s0 + $0xb7] sm:$0xff]
    %v1981 = vld [vmem:[%s0 + $0xbf] sm:$0xff]
    %v1982 = vld [vmem:[%s0 + $0xc7] sm:$0xff]
    %v1983 = vld [vmem:[%s0 + $0xcf] sm:$0xff]
    %v1984 = vld [vmem:[%s0 + $0xd7] sm:$0xff]
    %v1985 = vld [vmem:[%s0 + $0xdf] sm:$0xff]
    %v1986 = vld [vmem:[%s0 + $0xe7] sm:$0xff]
    %v1987 = vld [vmem:[%s0 + $0xef] sm:$0xff]
    %v1988 = vld [vmem:[%s0 + $0xf7] sm:$0xff]
    %v1989 = vld [vmem:[%s0 + $0xff] sm:$0xff]
    %v1990 = vld [vmem:[%s0 + $0x107] sm:$0xff]
    %v1991 = vld [vmem:[%s0 + $0x10f] sm:$0xff]
    %v1992 = vld [vmem:[%s0 + $0x117] sm:$0xff]
    %v1993 = vld [vmem:[%s0 + $0x11f] sm:$0xff]
    %v1994 = vld [vmem:[%s0 + $0x127] sm:$0xff]
    %v1995 = vld [vmem:[%s0 + $0x12f] sm:$0xff]
    %v1996 = vld [vmem:[%s0 + $0x137] sm:$0xff]
    %v1997 = vld [vmem:[%s0 + $0x13f] sm:$0xff]
    %v1998 = vld [vmem:[%s0 + $0x147] sm:$0xff]
    %v1999 = vld [vmem:[%s0 + $0x14f] sm:$0xff]
    %v2000 = vld [vmem:[%s0 + $0x157] sm:$0xff]
    %v2001 = vld [vmem:[%s0 + $0x15f] sm:$0xff]
    %v2002 = vld [vmem:[%s0 + $0x167] sm:$0xff]
    %v2003 = vld [vmem:[%s0 + $0x16f] sm:$0xff]
    %v2004 = vld [vmem:[%s0 + $0x177] sm:$0xff]
    %v2005 = vld [vmem:[%s0 + $0x17f] sm:$0xff]
    %v2006 = vld [vmem:[%s0 + $0x187] sm:$0xff]
    %v2007 = vld [vmem:[%s0 + $0x18f] sm:$0xff]
    %v2008 = vld [vmem:[%s0 + $0x197] sm:$0xff]
    %v2009 = vld [vmem:[%s0 + $0x19f] sm:$0xff]
    %v2010 = vld [vmem:[%s0 + $0x1a7] sm:$0xff]
    %v2011 = vld [vmem:[%s0 + $0x1af] sm:$0xff]
    %v2012 = vld [vmem:[%s0 + $0x1b7] sm:$0xff]
    %v2013 = vld [vmem:[%s0 + $0x1bf] sm:$0xff]
    %v2014 = vld [vmem:[%s0 + $0x1c7] sm:$0xff]
    %v2015 = vld [vmem:[%s0 + $0x1cf] sm:$0xff]
    %v2016 = vld [vmem:[%s0 + $0x1d7] sm:$0xff]
    %v2017 = vld [vmem:[%s0 + $0x1df] sm:$0xff]
    %v2018 = vld [vmem:[%s0 + $0x1e7] sm:$0xff]
    %v2019 = vld [vmem:[%s0 + $0x1ef] sm:$0xff]
    %v2020 = vld [vmem:[%s0 + $0x1f7] sm:$0xff]
    %v2021 = vld [vmem:[%s0 + $0x1ff] sm:$0xff]
    %v2022 = vld [vmem:[%s0 + $0x207] sm:$0xff]
    %v2023 = vld [vmem:[%s0 + $0x20f] sm:$0xff]
    %v2024 = vld [vmem:[%s0 + $0x217] sm:$0xff]
    %v2025 = vld [vmem:[%s0 + $0x21f] sm:$0xff]
    %v2026 = vld [vmem:[%s0 + $0x227] sm:$0xff]
    %v2027 = vld [vmem:[%s0 + $0x22f] sm:$0xff]
    %v2028 = vld [vmem:[%s0 + $0x237] sm:$0xff]
    %v2029 = vld [vmem:[%s0 + $0x23f] sm:$0xff]
    %v2030 = vld [vmem:[%s0 + $0x247] sm:$0xff]
    %v2031 = vld [vmem:[%s0 + $0x24f] sm:$0xff]
    %v2032 = vld [vmem:[%s0 + $0x257] sm:$0xff]
    %v2033 = vld [vmem:[%s0 + $0x25f] sm:$0xff]
    %v2034 = vld [vmem:[%s0 + $0x267] sm:$0xff]
    %v2035 = vld [vmem:[%s0 + $0x26f] sm:$0xff]
    %v2036 = vld [vmem:[%s0 + $0x277] sm:$0xff]
    %v2037 = vld [vmem:[%s0 + $0x27f] sm:$0xff]
    %v2038 = vld [vmem:[%s0 + $0x287] sm:$0xff]
    %v2039 = vld [vmem:[%s0 + $0x28f] sm:$0xff]
    %v2040 = vld [vmem:[%s0 + $0x297] sm:$0xff]
    %s2041 = scalar_lea.vmem %s2, 12
    %v2042 = vld [vmem:[%s2041] sm:$0xf]
    %v2044 = vsel %vm276, %v1960, 0
    %v2047 = vsel %vm276, %v1961, 0
    %v2050 = vsel %vm276, %v1962, 0
    %v2053 = vsel %vm276, %v1963, 0
    %v2056 = vsel %vm276, %v1964, 0
    %v2059 = vsel %vm276, %v1965, 0
    %v2062 = vsel %vm276, %v1966, 0
    %v2065 = vsel %vm276, %v1967, 0
    %v2068 = vsel %vm276, %v1968, 0
    %v2071 = vsel %vm276, %v1969, 0
    %v2074 = vsel %vm276, %v1970, 0
    %v2077 = vsel %vm276, %v1971, 0
    %v2080 = vsel %vm276, %v1972, 0
    %v2083 = vsel %vm276, %v1973, 0
    %v2086 = vsel %vm276, %v1974, 0
    %v2089 = vsel %vm276, %v1975, 0
    %v2092 = vsel %vm276, %v1976, 0
    %v2095 = vsel %vm276, %v1977, 0
    %v2098 = vsel %vm276, %v1978, 0
    %v2101 = vsel %vm276, %v1979, 0
    %v2104 = vsel %vm276, %v1980, 0
    %v2107 = vsel %vm276, %v1981, 0
    %v2110 = vsel %vm276, %v1982, 0
    %v2113 = vsel %vm276, %v1983, 0
    %v2116 = vsel %vm276, %v1984, 0
    %v2119 = vsel %vm276, %v1985, 0
    %v2122 = vsel %vm276, %v1986, 0
    %v2125 = vsel %vm276, %v1987, 0
    %v2128 = vsel %vm276, %v1988, 0
    %v2131 = vsel %vm276, %v1989, 0
    %v2134 = vsel %vm276, %v1990, 0
    %v2137 = vsel %vm276, %v1991, 0
    %v2140 = vsel %vm276, %v1992, 0
    %v2143 = vsel %vm276, %v1993, 0
    %v2146 = vsel %vm276, %v1994, 0
    %v2149 = vsel %vm276, %v1995, 0
    %v2152 = vsel %vm276, %v1996, 0
    %v2155 = vsel %vm276, %v1997, 0
    %v2158 = vsel %vm276, %v1998, 0
    %v2161 = vsel %vm276, %v1999, 0
    %v2164 = vsel %vm276, %v2000, 0
    %v2167 = vsel %vm276, %v2001, 0
    %v2170 = vsel %vm276, %v2002, 0
    %v2173 = vsel %vm276, %v2003, 0
    %v2176 = vsel %vm276, %v2004, 0
    %v2179 = vsel %vm276, %v2005, 0
    %v2182 = vsel %vm276, %v2006, 0
    %v2185 = vsel %vm276, %v2007, 0
    %v2188 = vsel %vm276, %v2008, 0
    %v2191 = vsel %vm276, %v2009, 0
    %v2194 = vsel %vm276, %v2010, 0
    %v2197 = vsel %vm276, %v2011, 0
    %v2200 = vsel %vm276, %v2012, 0
    %v2203 = vsel %vm276, %v2013, 0
    %v2206 = vsel %vm276, %v2014, 0
    %v2209 = vsel %vm276, %v2015, 0
    %v2212 = vsel %vm276, %v2016, 0
    %v2215 = vsel %vm276, %v2017, 0
    %v2218 = vsel %vm276, %v2018, 0
    %v2221 = vsel %vm276, %v2019, 0
    %v2224 = vsel %vm276, %v2020, 0
    %v2227 = vsel %vm276, %v2021, 0
    %v2230 = vsel %vm276, %v2022, 0
    %v2233 = vsel %vm276, %v2023, 0
    %v2236 = vsel %vm276, %v2024, 0
    %v2239 = vsel %vm276, %v2025, 0
    %v2242 = vsel %vm276, %v2026, 0
    %v2245 = vsel %vm276, %v2027, 0
    %v2248 = vsel %vm276, %v2028, 0
    %v2251 = vsel %vm276, %v2029, 0
    %v2254 = vsel %vm276, %v2030, 0
    %v2257 = vsel %vm276, %v2031, 0
    %v2260 = vsel %vm276, %v2032, 0
    %v2263 = vsel %vm276, %v2033, 0
    %v2266 = vsel %vm276, %v2034, 0
    %v2269 = vsel %vm276, %v2035, 0
    %v2272 = vsel %vm276, %v2036, 0
    %v2275 = vsel %vm276, %v2037, 0
    %v2278 = vsel %vm276, %v2038, 0
    %v2281 = vsel %vm276, %v2039, 0
    %v2284 = vsel %vm276, %v2040, 0
    %v2287 = vsel %vm520, %v2042, 0
    %2289 = vmatpush.msra.mxu0 0.0
    %2290 = vmatpush.msra.mxu0 0.0
    %2291 = vmatpush.msra.mxu0 0.0
    %2292 = vmatpush.msra.mxu0 0.0
    %2293 = vmatpush.msra.mxu0 0.0
    %2294 = vmatpush.msra.mxu0 0.0
    %2295 = vmatpush.msra.mxu0 0.0
    %2296 = vmatpush.msra.mxu0 0.0
    %2297 = vmatpush.msra.mxu0 0.0
    %2298 = vmatpush.msra.mxu0 0.0
    %2299 = vmatpush.msra.mxu0 0.0
    %2300 = vmatpush.msra.mxu0 0.0
    %2301 = vmatpush.msra.mxu0 0.0
    %2302 = vmatpush.msra.mxu0 0.0
    %2303 = vmatpush.msra.mxu0 0.0
    %2304 = vmatpush.msra.mxu0 %v2287
    %2305 = vmatmul.f32.gmra.mxu0 %v2044
    %v2306 = vpop.f32.mrf.mxu0
    %v2307 = vadd.f32 0.0, %v2306
    %2308 = vmatmul.f32.gmra.mxu0 %v2047
    %v2309 = vpop.f32.mrf.mxu0
    %v2310 = vadd.f32 0.0, %v2309
    %2311 = vmatmul.f32.gmra.mxu0 %v2050
    %v2312 = vpop.f32.mrf.mxu0
    %v2313 = vadd.f32 0.0, %v2312
    %2314 = vmatmul.f32.gmra.mxu0 %v2053
    %v2315 = vpop.f32.mrf.mxu0
    %v2316 = vadd.f32 0.0, %v2315
    %2317 = vmatmul.f32.gmra.mxu0 %v2056
    %v2318 = vpop.f32.mrf.mxu0
    %v2319 = vadd.f32 0.0, %v2318
    %2320 = vmatmul.f32.gmra.mxu0 %v2059
    %v2321 = vpop.f32.mrf.mxu0
    %v2322 = vadd.f32 0.0, %v2321
    %2323 = vmatmul.f32.gmra.mxu0 %v2062
    %v2324 = vpop.f32.mrf.mxu0
    %v2325 = vadd.f32 0.0, %v2324
    %2326 = vmatmul.f32.gmra.mxu0 %v2065
    %v2327 = vpop.f32.mrf.mxu0
    %v2328 = vadd.f32 0.0, %v2327
    %2329 = vmatmul.f32.gmra.mxu0 %v2068
    %v2330 = vpop.f32.mrf.mxu0
    %v2331 = vadd.f32 0.0, %v2330
    %2332 = vmatmul.f32.gmra.mxu0 %v2071
    %v2333 = vpop.f32.mrf.mxu0
    %v2334 = vadd.f32 0.0, %v2333
    %2335 = vmatmul.f32.gmra.mxu0 %v2074
    %v2336 = vpop.f32.mrf.mxu0
    %v2337 = vadd.f32 0.0, %v2336
    %2338 = vmatmul.f32.gmra.mxu0 %v2077
    %v2339 = vpop.f32.mrf.mxu0
    %v2340 = vadd.f32 0.0, %v2339
    %2341 = vmatmul.f32.gmra.mxu0 %v2080
    %v2342 = vpop.f32.mrf.mxu0
    %v2343 = vadd.f32 0.0, %v2342
    %2344 = vmatmul.f32.gmra.mxu0 %v2083
    %v2345 = vpop.f32.mrf.mxu0
    %v2346 = vadd.f32 0.0, %v2345
    %2347 = vmatmul.f32.gmra.mxu0 %v2086
    %v2348 = vpop.f32.mrf.mxu0
    %v2349 = vadd.f32 0.0, %v2348
    %2350 = vmatmul.f32.gmra.mxu0 %v2089
    %v2351 = vpop.f32.mrf.mxu0
    %v2352 = vadd.f32 0.0, %v2351
    %2353 = vmatmul.f32.gmra.mxu0 %v2092
    %v2354 = vpop.f32.mrf.mxu0
    %v2355 = vadd.f32 0.0, %v2354
    %2356 = vmatmul.f32.gmra.mxu0 %v2095
    %v2357 = vpop.f32.mrf.mxu0
    %v2358 = vadd.f32 0.0, %v2357
    %2359 = vmatmul.f32.gmra.mxu0 %v2098
    %v2360 = vpop.f32.mrf.mxu0
    %v2361 = vadd.f32 0.0, %v2360
    %2362 = vmatmul.f32.gmra.mxu0 %v2101
    %v2363 = vpop.f32.mrf.mxu0
    %v2364 = vadd.f32 0.0, %v2363
    %2365 = vmatmul.f32.gmra.mxu0 %v2104
    %v2366 = vpop.f32.mrf.mxu0
    %v2367 = vadd.f32 0.0, %v2366
    %2368 = vmatmul.f32.gmra.mxu0 %v2107
    %v2369 = vpop.f32.mrf.mxu0
    %v2370 = vadd.f32 0.0, %v2369
    %2371 = vmatmul.f32.gmra.mxu0 %v2110
    %v2372 = vpop.f32.mrf.mxu0
    %v2373 = vadd.f32 0.0, %v2372
    %2374 = vmatmul.f32.gmra.mxu0 %v2113
    %v2375 = vpop.f32.mrf.mxu0
    %v2376 = vadd.f32 0.0, %v2375
    %2377 = vmatmul.f32.gmra.mxu0 %v2116
    %v2378 = vpop.f32.mrf.mxu0
    %v2379 = vadd.f32 0.0, %v2378
    %2380 = vmatmul.f32.gmra.mxu0 %v2119
    %v2381 = vpop.f32.mrf.mxu0
    %v2382 = vadd.f32 0.0, %v2381
    %2383 = vmatmul.f32.gmra.mxu0 %v2122
    %v2384 = vpop.f32.mrf.mxu0
    %v2385 = vadd.f32 0.0, %v2384
    %2386 = vmatmul.f32.gmra.mxu0 %v2125
    %v2387 = vpop.f32.mrf.mxu0
    %v2388 = vadd.f32 0.0, %v2387
    %2389 = vmatmul.f32.gmra.mxu0 %v2128
    %v2390 = vpop.f32.mrf.mxu0
    %v2391 = vadd.f32 0.0, %v2390
    %2392 = vmatmul.f32.gmra.mxu0 %v2131
    %v2393 = vpop.f32.mrf.mxu0
    %v2394 = vadd.f32 0.0, %v2393
    %2395 = vmatmul.f32.gmra.mxu0 %v2134
    %v2396 = vpop.f32.mrf.mxu0
    %v2397 = vadd.f32 0.0, %v2396
    %2398 = vmatmul.f32.gmra.mxu0 %v2137
    %v2399 = vpop.f32.mrf.mxu0
    %v2400 = vadd.f32 0.0, %v2399
    %2401 = vmatmul.f32.gmra.mxu0 %v2140
    %v2402 = vpop.f32.mrf.mxu0
    %v2403 = vadd.f32 0.0, %v2402
    %2404 = vmatmul.f32.gmra.mxu0 %v2143
    %v2405 = vpop.f32.mrf.mxu0
    %v2406 = vadd.f32 0.0, %v2405
    %2407 = vmatmul.f32.gmra.mxu0 %v2146
    %v2408 = vpop.f32.mrf.mxu0
    %v2409 = vadd.f32 0.0, %v2408
    %2410 = vmatmul.f32.gmra.mxu0 %v2149
    %v2411 = vpop.f32.mrf.mxu0
    %v2412 = vadd.f32 0.0, %v2411
    %2413 = vmatmul.f32.gmra.mxu0 %v2152
    %v2414 = vpop.f32.mrf.mxu0
    %v2415 = vadd.f32 0.0, %v2414
    %2416 = vmatmul.f32.gmra.mxu0 %v2155
    %v2417 = vpop.f32.mrf.mxu0
    %v2418 = vadd.f32 0.0, %v2417
    %2419 = vmatmul.f32.gmra.mxu0 %v2158
    %v2420 = vpop.f32.mrf.mxu0
    %v2421 = vadd.f32 0.0, %v2420
    %2422 = vmatmul.f32.gmra.mxu0 %v2161
    %v2423 = vpop.f32.mrf.mxu0
    %v2424 = vadd.f32 0.0, %v2423
    %2425 = vmatmul.f32.gmra.mxu0 %v2164
    %v2426 = vpop.f32.mrf.mxu0
    %v2427 = vadd.f32 0.0, %v2426
    %2428 = vmatmul.f32.gmra.mxu0 %v2167
    %v2429 = vpop.f32.mrf.mxu0
    %v2430 = vadd.f32 0.0, %v2429
    %2431 = vmatmul.f32.gmra.mxu0 %v2170
    %v2432 = vpop.f32.mrf.mxu0
    %v2433 = vadd.f32 0.0, %v2432
    %2434 = vmatmul.f32.gmra.mxu0 %v2173
    %v2435 = vpop.f32.mrf.mxu0
    %v2436 = vadd.f32 0.0, %v2435
    %2437 = vmatmul.f32.gmra.mxu0 %v2176
    %v2438 = vpop.f32.mrf.mxu0
    %v2439 = vadd.f32 0.0, %v2438
    %2440 = vmatmul.f32.gmra.mxu0 %v2179
    %v2441 = vpop.f32.mrf.mxu0
    %v2442 = vadd.f32 0.0, %v2441
    %2443 = vmatmul.f32.gmra.mxu0 %v2182
    %v2444 = vpop.f32.mrf.mxu0
    %v2445 = vadd.f32 0.0, %v2444
    %2446 = vmatmul.f32.gmra.mxu0 %v2185
    %v2447 = vpop.f32.mrf.mxu0
    %v2448 = vadd.f32 0.0, %v2447
    %2449 = vmatmul.f32.gmra.mxu0 %v2188
    %v2450 = vpop.f32.mrf.mxu0
    %v2451 = vadd.f32 0.0, %v2450
    %2452 = vmatmul.f32.gmra.mxu0 %v2191
    %v2453 = vpop.f32.mrf.mxu0
    %v2454 = vadd.f32 0.0, %v2453
    %2455 = vmatmul.f32.gmra.mxu0 %v2194
    %v2456 = vpop.f32.mrf.mxu0
    %v2457 = vadd.f32 0.0, %v2456
    %2458 = vmatmul.f32.gmra.mxu0 %v2197
    %v2459 = vpop.f32.mrf.mxu0
    %v2460 = vadd.f32 0.0, %v2459
    %2461 = vmatmul.f32.gmra.mxu0 %v2200
    %v2462 = vpop.f32.mrf.mxu0
    %v2463 = vadd.f32 0.0, %v2462
    %2464 = vmatmul.f32.gmra.mxu0 %v2203
    %v2465 = vpop.f32.mrf.mxu0
    %v2466 = vadd.f32 0.0, %v2465
    %2467 = vmatmul.f32.gmra.mxu0 %v2206
    %v2468 = vpop.f32.mrf.mxu0
    %v2469 = vadd.f32 0.0, %v2468
    %2470 = vmatmul.f32.gmra.mxu0 %v2209
    %v2471 = vpop.f32.mrf.mxu0
    %v2472 = vadd.f32 0.0, %v2471
    %2473 = vmatmul.f32.gmra.mxu0 %v2212
    %v2474 = vpop.f32.mrf.mxu0
    %v2475 = vadd.f32 0.0, %v2474
    %2476 = vmatmul.f32.gmra.mxu0 %v2215
    %v2477 = vpop.f32.mrf.mxu0
    %v2478 = vadd.f32 0.0, %v2477
    %2479 = vmatmul.f32.gmra.mxu0 %v2218
    %v2480 = vpop.f32.mrf.mxu0
    %v2481 = vadd.f32 0.0, %v2480
    %2482 = vmatmul.f32.gmra.mxu0 %v2221
    %v2483 = vpop.f32.mrf.mxu0
    %v2484 = vadd.f32 0.0, %v2483
    %2485 = vmatmul.f32.gmra.mxu0 %v2224
    %v2486 = vpop.f32.mrf.mxu0
    %v2487 = vadd.f32 0.0, %v2486
    %2488 = vmatmul.f32.gmra.mxu0 %v2227
    %v2489 = vpop.f32.mrf.mxu0
    %v2490 = vadd.f32 0.0, %v2489
    %2491 = vmatmul.f32.gmra.mxu0 %v2230
    %v2492 = vpop.f32.mrf.mxu0
    %v2493 = vadd.f32 0.0, %v2492
    %2494 = vmatmul.f32.gmra.mxu0 %v2233
    %v2495 = vpop.f32.mrf.mxu0
    %v2496 = vadd.f32 0.0, %v2495
    %2497 = vmatmul.f32.gmra.mxu0 %v2236
    %v2498 = vpop.f32.mrf.mxu0
    %v2499 = vadd.f32 0.0, %v2498
    %2500 = vmatmul.f32.gmra.mxu0 %v2239
    %v2501 = vpop.f32.mrf.mxu0
    %v2502 = vadd.f32 0.0, %v2501
    %2503 = vmatmul.f32.gmra.mxu0 %v2242
    %v2504 = vpop.f32.mrf.mxu0
    %v2505 = vadd.f32 0.0, %v2504
    %2506 = vmatmul.f32.gmra.mxu0 %v2245
    %v2507 = vpop.f32.mrf.mxu0
    %v2508 = vadd.f32 0.0, %v2507
    %2509 = vmatmul.f32.gmra.mxu0 %v2248
    %v2510 = vpop.f32.mrf.mxu0
    %v2511 = vadd.f32 0.0, %v2510
    %2512 = vmatmul.f32.gmra.mxu0 %v2251
    %v2513 = vpop.f32.mrf.mxu0
    %v2514 = vadd.f32 0.0, %v2513
    %2515 = vmatmul.f32.gmra.mxu0 %v2254
    %v2516 = vpop.f32.mrf.mxu0
    %v2517 = vadd.f32 0.0, %v2516
    %2518 = vmatmul.f32.gmra.mxu0 %v2257
    %v2519 = vpop.f32.mrf.mxu0
    %v2520 = vadd.f32 0.0, %v2519
    %2521 = vmatmul.f32.gmra.mxu0 %v2260
    %v2522 = vpop.f32.mrf.mxu0
    %v2523 = vadd.f32 0.0, %v2522
    %2524 = vmatmul.f32.gmra.mxu0 %v2263
    %v2525 = vpop.f32.mrf.mxu0
    %v2526 = vadd.f32 0.0, %v2525
    %2527 = vmatmul.f32.gmra.mxu0 %v2266
    %v2528 = vpop.f32.mrf.mxu0
    %v2529 = vadd.f32 0.0, %v2528
    %2530 = vmatmul.f32.gmra.mxu0 %v2269
    %v2531 = vpop.f32.mrf.mxu0
    %v2532 = vadd.f32 0.0, %v2531
    %2533 = vmatmul.f32.gmra.mxu0 %v2272
    %v2534 = vpop.f32.mrf.mxu0
    %v2535 = vadd.f32 0.0, %v2534
    %2536 = vmatmul.f32.gmra.mxu0 %v2275
    %v2537 = vpop.f32.mrf.mxu0
    %v2538 = vadd.f32 0.0, %v2537
    %2539 = vmatmul.f32.gmra.mxu0 %v2278
    %v2540 = vpop.f32.mrf.mxu0
    %v2541 = vadd.f32 0.0, %v2540
    %2542 = vmatmul.f32.gmra.mxu0 %v2281
    %v2543 = vpop.f32.mrf.mxu0
    %v2544 = vadd.f32 0.0, %v2543
    %2545 = vmatmul.f32.gmra.mxu0 %v2284
    %v2546 = vpop.f32.mrf.mxu0
    %v2547 = vadd.f32 0.0, %v2546
    %2548 = vdwg.mxu0
    %v2549 = vadd.f32 %v1879, %v2307
    %v2550 = vadd.f32 %v1880, %v2310
    %v2551 = vadd.f32 %v1881, %v2313
    %v2552 = vadd.f32 %v1882, %v2316
    %v2553 = vadd.f32 %v1883, %v2319
    %v2554 = vadd.f32 %v1884, %v2322
    %v2555 = vadd.f32 %v1885, %v2325
    %v2556 = vadd.f32 %v1886, %v2328
    %v2557 = vadd.f32 %v1887, %v2331
    %v2558 = vadd.f32 %v1888, %v2334
    %v2559 = vadd.f32 %v1889, %v2337
    %v2560 = vadd.f32 %v1890, %v2340
    %v2561 = vadd.f32 %v1891, %v2343
    %v2562 = vadd.f32 %v1892, %v2346
    %v2563 = vadd.f32 %v1893, %v2349
    %v2564 = vadd.f32 %v1894, %v2352
    %v2565 = vadd.f32 %v1895, %v2355
    %v2566 = vadd.f32 %v1896, %v2358
    %v2567 = vadd.f32 %v1897, %v2361
    %v2568 = vadd.f32 %v1898, %v2364
    %v2569 = vadd.f32 %v1899, %v2367
    %v2570 = vadd.f32 %v1900, %v2370
    %v2571 = vadd.f32 %v1901, %v2373
    %v2572 = vadd.f32 %v1902, %v2376
    %v2573 = vadd.f32 %v1903, %v2379
    %v2574 = vadd.f32 %v1904, %v2382
    %v2575 = vadd.f32 %v1905, %v2385
    %v2576 = vadd.f32 %v1906, %v2388
    %v2577 = vadd.f32 %v1907, %v2391
    %v2578 = vadd.f32 %v1908, %v2394
    %v2579 = vadd.f32 %v1909, %v2397
    %v2580 = vadd.f32 %v1910, %v2400
    %v2581 = vadd.f32 %v1911, %v2403
    %v2582 = vadd.f32 %v1912, %v2406
    %v2583 = vadd.f32 %v1913, %v2409
    %v2584 = vadd.f32 %v1914, %v2412
    %v2585 = vadd.f32 %v1915, %v2415
    %v2586 = vadd.f32 %v1916, %v2418
    %v2587 = vadd.f32 %v1917, %v2421
    %v2588 = vadd.f32 %v1918, %v2424
    %v2589 = vadd.f32 %v1919, %v2427
    %v2590 = vadd.f32 %v1920, %v2430
    %v2591 = vadd.f32 %v1921, %v2433
    %v2592 = vadd.f32 %v1922, %v2436
    %v2593 = vadd.f32 %v1923, %v2439
    %v2594 = vadd.f32 %v1924, %v2442
    %v2595 = vadd.f32 %v1925, %v2445
    %v2596 = vadd.f32 %v1926, %v2448
    %v2597 = vadd.f32 %v1927, %v2451
    %v2598 = vadd.f32 %v1928, %v2454
    %v2599 = vadd.f32 %v1929, %v2457
    %v2600 = vadd.f32 %v1930, %v2460
    %v2601 = vadd.f32 %v1931, %v2463
    %v2602 = vadd.f32 %v1932, %v2466
    %v2603 = vadd.f32 %v1933, %v2469
    %v2604 = vadd.f32 %v1934, %v2472
    %v2605 = vadd.f32 %v1935, %v2475
    %v2606 = vadd.f32 %v1936, %v2478
    %v2607 = vadd.f32 %v1937, %v2481
    %v2608 = vadd.f32 %v1938, %v2484
    %v2609 = vadd.f32 %v1939, %v2487
    %v2610 = vadd.f32 %v1940, %v2490
    %v2611 = vadd.f32 %v1941, %v2493
    %v2612 = vadd.f32 %v1942, %v2496
    %v2613 = vadd.f32 %v1943, %v2499
    %v2614 = vadd.f32 %v1944, %v2502
    %v2615 = vadd.f32 %v1945, %v2505
    %v2616 = vadd.f32 %v1946, %v2508
    %v2617 = vadd.f32 %v1947, %v2511
    %v2618 = vadd.f32 %v1948, %v2514
    %v2619 = vadd.f32 %v1949, %v2517
    %v2620 = vadd.f32 %v1950, %v2520
    %v2621 = vadd.f32 %v1951, %v2523
    %v2622 = vadd.f32 %v1952, %v2526
    %v2623 = vadd.f32 %v1953, %v2529
    %v2624 = vadd.f32 %v1954, %v2532
    %v2625 = vadd.f32 %v1955, %v2535
    %v2626 = vadd.f32 %v1956, %v2538
    %v2627 = vadd.f32 %v1957, %v2541
    %v2628 = vadd.f32 %v1958, %v2544
    %v2629 = vadd.f32 %v1959, %v2547
    %v2630 = vld [vmem:[%s0 + $0x18] sm:$0xff]
    %v2631 = vld [vmem:[%s0 + $0x20] sm:$0xff]
    %v2632 = vld [vmem:[%s0 + $0x28] sm:$0xff]
    %v2633 = vld [vmem:[%s0 + $0x30] sm:$0xff]
    %v2634 = vld [vmem:[%s0 + $0x38] sm:$0xff]
    %v2635 = vld [vmem:[%s0 + $0x40] sm:$0xff]
    %v2636 = vld [vmem:[%s0 + $0x48] sm:$0xff]
    %v2637 = vld [vmem:[%s0 + $0x50] sm:$0xff]
    %v2638 = vld [vmem:[%s0 + $0x58] sm:$0xff]
    %v2639 = vld [vmem:[%s0 + $0x60] sm:$0xff]
    %v2640 = vld [vmem:[%s0 + $0x68] sm:$0xff]
    %v2641 = vld [vmem:[%s0 + $0x70] sm:$0xff]
    %v2642 = vld [vmem:[%s0 + $0x78] sm:$0xff]
    %v2643 = vld [vmem:[%s0 + $0x80] sm:$0xff]
    %v2644 = vld [vmem:[%s0 + $0x88] sm:$0xff]
    %v2645 = vld [vmem:[%s0 + $0x90] sm:$0xff]
    %v2646 = vld [vmem:[%s0 + $0x98] sm:$0xff]
    %v2647 = vld [vmem:[%s0 + $0xa0] sm:$0xff]
    %v2648 = vld [vmem:[%s0 + $0xa8] sm:$0xff]
    %v2649 = vld [vmem:[%s0 + $0xb0] sm:$0xff]
    %v2650 = vld [vmem:[%s0 + $0xb8] sm:$0xff]
    %v2651 = vld [vmem:[%s0 + $0xc0] sm:$0xff]
    %v2652 = vld [vmem:[%s0 + $0xc8] sm:$0xff]
    %v2653 = vld [vmem:[%s0 + $0xd0] sm:$0xff]
    %v2654 = vld [vmem:[%s0 + $0xd8] sm:$0xff]
    %v2655 = vld [vmem:[%s0 + $0xe0] sm:$0xff]
    %v2656 = vld [vmem:[%s0 + $0xe8] sm:$0xff]
    %v2657 = vld [vmem:[%s0 + $0xf0] sm:$0xff]
    %v2658 = vld [vmem:[%s0 + $0xf8] sm:$0xff]
    %v2659 = vld [vmem:[%s0 + $0x100] sm:$0xff]
    %v2660 = vld [vmem:[%s0 + $0x108] sm:$0xff]
    %v2661 = vld [vmem:[%s0 + $0x110] sm:$0xff]
    %v2662 = vld [vmem:[%s0 + $0x118] sm:$0xff]
    %v2663 = vld [vmem:[%s0 + $0x120] sm:$0xff]
    %v2664 = vld [vmem:[%s0 + $0x128] sm:$0xff]
    %v2665 = vld [vmem:[%s0 + $0x130] sm:$0xff]
    %v2666 = vld [vmem:[%s0 + $0x138] sm:$0xff]
    %v2667 = vld [vmem:[%s0 + $0x140] sm:$0xff]
    %v2668 = vld [vmem:[%s0 + $0x148] sm:$0xff]
    %v2669 = vld [vmem:[%s0 + $0x150] sm:$0xff]
    %v2670 = vld [vmem:[%s0 + $0x158] sm:$0xff]
    %v2671 = vld [vmem:[%s0 + $0x160] sm:$0xff]
    %v2672 = vld [vmem:[%s0 + $0x168] sm:$0xff]
    %v2673 = vld [vmem:[%s0 + $0x170] sm:$0xff]
    %v2674 = vld [vmem:[%s0 + $0x178] sm:$0xff]
    %v2675 = vld [vmem:[%s0 + $0x180] sm:$0xff]
    %v2676 = vld [vmem:[%s0 + $0x188] sm:$0xff]
    %v2677 = vld [vmem:[%s0 + $0x190] sm:$0xff]
    %v2678 = vld [vmem:[%s0 + $0x198] sm:$0xff]
    %v2679 = vld [vmem:[%s0 + $0x1a0] sm:$0xff]
    %v2680 = vld [vmem:[%s0 + $0x1a8] sm:$0xff]
    %v2681 = vld [vmem:[%s0 + $0x1b0] sm:$0xff]
    %v2682 = vld [vmem:[%s0 + $0x1b8] sm:$0xff]
    %v2683 = vld [vmem:[%s0 + $0x1c0] sm:$0xff]
    %v2684 = vld [vmem:[%s0 + $0x1c8] sm:$0xff]
    %v2685 = vld [vmem:[%s0 + $0x1d0] sm:$0xff]
    %v2686 = vld [vmem:[%s0 + $0x1d8] sm:$0xff]
    %v2687 = vld [vmem:[%s0 + $0x1e0] sm:$0xff]
    %v2688 = vld [vmem:[%s0 + $0x1e8] sm:$0xff]
    %v2689 = vld [vmem:[%s0 + $0x1f0] sm:$0xff]
    %v2690 = vld [vmem:[%s0 + $0x1f8] sm:$0xff]
    %v2691 = vld [vmem:[%s0 + $0x200] sm:$0xff]
    %v2692 = vld [vmem:[%s0 + $0x208] sm:$0xff]
    %v2693 = vld [vmem:[%s0 + $0x210] sm:$0xff]
    %v2694 = vld [vmem:[%s0 + $0x218] sm:$0xff]
    %v2695 = vld [vmem:[%s0 + $0x220] sm:$0xff]
    %v2696 = vld [vmem:[%s0 + $0x228] sm:$0xff]
    %v2697 = vld [vmem:[%s0 + $0x230] sm:$0xff]
    %v2698 = vld [vmem:[%s0 + $0x238] sm:$0xff]
    %v2699 = vld [vmem:[%s0 + $0x240] sm:$0xff]
    %v2700 = vld [vmem:[%s0 + $0x248] sm:$0xff]
    %v2701 = vld [vmem:[%s0 + $0x250] sm:$0xff]
    %v2702 = vld [vmem:[%s0 + $0x258] sm:$0xff]
    %v2703 = vld [vmem:[%s0 + $0x260] sm:$0xff]
    %v2704 = vld [vmem:[%s0 + $0x268] sm:$0xff]
    %v2705 = vld [vmem:[%s0 + $0x270] sm:$0xff]
    %v2706 = vld [vmem:[%s0 + $0x278] sm:$0xff]
    %v2707 = vld [vmem:[%s0 + $0x280] sm:$0xff]
    %v2708 = vld [vmem:[%s0 + $0x288] sm:$0xff]
    %v2709 = vld [vmem:[%s0 + $0x290] sm:$0xff]
    %v2710 = vld [vmem:[%s0 + $0x298] sm:$0xff]
    %s2711 = scalar_lea.vmem %s2, 16
    %v2712 = vld [vmem:[%s2711] sm:$0xf]
    %v2714 = vsel %vm276, %v2630, 0
    %v2717 = vsel %vm276, %v2631, 0
    %v2720 = vsel %vm276, %v2632, 0
    %v2723 = vsel %vm276, %v2633, 0
    %v2726 = vsel %vm276, %v2634, 0
    %v2729 = vsel %vm276, %v2635, 0
    %v2732 = vsel %vm276, %v2636, 0
    %v2735 = vsel %vm276, %v2637, 0
    %v2738 = vsel %vm276, %v2638, 0
    %v2741 = vsel %vm276, %v2639, 0
    %v2744 = vsel %vm276, %v2640, 0
    %v2747 = vsel %vm276, %v2641, 0
    %v2750 = vsel %vm276, %v2642, 0
    %v2753 = vsel %vm276, %v2643, 0
    %v2756 = vsel %vm276, %v2644, 0
    %v2759 = vsel %vm276, %v2645, 0
    %v2762 = vsel %vm276, %v2646, 0
    %v2765 = vsel %vm276, %v2647, 0
    %v2768 = vsel %vm276, %v2648, 0
    %v2771 = vsel %vm276, %v2649, 0
    %v2774 = vsel %vm276, %v2650, 0
    %v2777 = vsel %vm276, %v2651, 0
    %v2780 = vsel %vm276, %v2652, 0
    %v2783 = vsel %vm276, %v2653, 0
    %v2786 = vsel %vm276, %v2654, 0
    %v2789 = vsel %vm276, %v2655, 0
    %v2792 = vsel %vm276, %v2656, 0
    %v2795 = vsel %vm276, %v2657, 0
    %v2798 = vsel %vm276, %v2658, 0
    %v2801 = vsel %vm276, %v2659, 0
    %v2804 = vsel %vm276, %v2660, 0
    %v2807 = vsel %vm276, %v2661, 0
    %v2810 = vsel %vm276, %v2662, 0
    %v2813 = vsel %vm276, %v2663, 0
    %v2816 = vsel %vm276, %v2664, 0
    %v2819 = vsel %vm276, %v2665, 0
    %v2822 = vsel %vm276, %v2666, 0
    %v2825 = vsel %vm276, %v2667, 0
    %v2828 = vsel %vm276, %v2668, 0
    %v2831 = vsel %vm276, %v2669, 0
    %v2834 = vsel %vm276, %v2670, 0
    %v2837 = vsel %vm276, %v2671, 0
    %v2840 = vsel %vm276, %v2672, 0
    %v2843 = vsel %vm276, %v2673, 0
    %v2846 = vsel %vm276, %v2674, 0
    %v2849 = vsel %vm276, %v2675, 0
    %v2852 = vsel %vm276, %v2676, 0
    %v2855 = vsel %vm276, %v2677, 0
    %v2858 = vsel %vm276, %v2678, 0
    %v2861 = vsel %vm276, %v2679, 0
    %v2864 = vsel %vm276, %v2680, 0
    %v2867 = vsel %vm276, %v2681, 0
    %v2870 = vsel %vm276, %v2682, 0
    %v2873 = vsel %vm276, %v2683, 0
    %v2876 = vsel %vm276, %v2684, 0
    %v2879 = vsel %vm276, %v2685, 0
    %v2882 = vsel %vm276, %v2686, 0
    %v2885 = vsel %vm276, %v2687, 0
    %v2888 = vsel %vm276, %v2688, 0
    %v2891 = vsel %vm276, %v2689, 0
    %v2894 = vsel %vm276, %v2690, 0
    %v2897 = vsel %vm276, %v2691, 0
    %v2900 = vsel %vm276, %v2692, 0
    %v2903 = vsel %vm276, %v2693, 0
    %v2906 = vsel %vm276, %v2694, 0
    %v2909 = vsel %vm276, %v2695, 0
    %v2912 = vsel %vm276, %v2696, 0
    %v2915 = vsel %vm276, %v2697, 0
    %v2918 = vsel %vm276, %v2698, 0
    %v2921 = vsel %vm276, %v2699, 0
    %v2924 = vsel %vm276, %v2700, 0
    %v2927 = vsel %vm276, %v2701, 0
    %v2930 = vsel %vm276, %v2702, 0
    %v2933 = vsel %vm276, %v2703, 0
    %v2936 = vsel %vm276, %v2704, 0
    %v2939 = vsel %vm276, %v2705, 0
    %v2942 = vsel %vm276, %v2706, 0
    %v2945 = vsel %vm276, %v2707, 0
    %v2948 = vsel %vm276, %v2708, 0
    %v2951 = vsel %vm276, %v2709, 0
    %v2954 = vsel %vm276, %v2710, 0
    %v2957 = vsel %vm520, %v2712, 0
    %2959 = vmatpush.msra.mxu0 0.0
    %2960 = vmatpush.msra.mxu0 0.0
    %2961 = vmatpush.msra.mxu0 0.0
    %2962 = vmatpush.msra.mxu0 0.0
    %2963 = vmatpush.msra.mxu0 0.0
    %2964 = vmatpush.msra.mxu0 0.0
    %2965 = vmatpush.msra.mxu0 0.0
    %2966 = vmatpush.msra.mxu0 0.0
    %2967 = vmatpush.msra.mxu0 0.0
    %2968 = vmatpush.msra.mxu0 0.0
    %2969 = vmatpush.msra.mxu0 0.0
    %2970 = vmatpush.msra.mxu0 0.0
    %2971 = vmatpush.msra.mxu0 0.0
    %2972 = vmatpush.msra.mxu0 0.0
    %2973 = vmatpush.msra.mxu0 0.0
    %2974 = vmatpush.msra.mxu0 %v2957
    %2975 = vmatmul.f32.gmra.mxu0 %v2714
    %v2976 = vpop.f32.mrf.mxu0
    %v2977 = vadd.f32 0.0, %v2976
    %2978 = vmatmul.f32.gmra.mxu0 %v2717
    %v2979 = vpop.f32.mrf.mxu0
    %v2980 = vadd.f32 0.0, %v2979
    %2981 = vmatmul.f32.gmra.mxu0 %v2720
    %v2982 = vpop.f32.mrf.mxu0
    %v2983 = vadd.f32 0.0, %v2982
    %2984 = vmatmul.f32.gmra.mxu0 %v2723
    %v2985 = vpop.f32.mrf.mxu0
    %v2986 = vadd.f32 0.0, %v2985
    %2987 = vmatmul.f32.gmra.mxu0 %v2726
    %v2988 = vpop.f32.mrf.mxu0
    %v2989 = vadd.f32 0.0, %v2988
    %2990 = vmatmul.f32.gmra.mxu0 %v2729
    %v2991 = vpop.f32.mrf.mxu0
    %v2992 = vadd.f32 0.0, %v2991
    %2993 = vmatmul.f32.gmra.mxu0 %v2732
    %v2994 = vpop.f32.mrf.mxu0
    %v2995 = vadd.f32 0.0, %v2994
    %2996 = vmatmul.f32.gmra.mxu0 %v2735
    %v2997 = vpop.f32.mrf.mxu0
    %v2998 = vadd.f32 0.0, %v2997
    %2999 = vmatmul.f32.gmra.mxu0 %v2738
    %v3000 = vpop.f32.mrf.mxu0
    %v3001 = vadd.f32 0.0, %v3000
    %3002 = vmatmul.f32.gmra.mxu0 %v2741
    %v3003 = vpop.f32.mrf.mxu0
    %v3004 = vadd.f32 0.0, %v3003
    %3005 = vmatmul.f32.gmra.mxu0 %v2744
    %v3006 = vpop.f32.mrf.mxu0
    %v3007 = vadd.f32 0.0, %v3006
    %3008 = vmatmul.f32.gmra.mxu0 %v2747
    %v3009 = vpop.f32.mrf.mxu0
    %v3010 = vadd.f32 0.0, %v3009
    %3011 = vmatmul.f32.gmra.mxu0 %v2750
    %v3012 = vpop.f32.mrf.mxu0
    %v3013 = vadd.f32 0.0, %v3012
    %3014 = vmatmul.f32.gmra.mxu0 %v2753
    %v3015 = vpop.f32.mrf.mxu0
    %v3016 = vadd.f32 0.0, %v3015
    %3017 = vmatmul.f32.gmra.mxu0 %v2756
    %v3018 = vpop.f32.mrf.mxu0
    %v3019 = vadd.f32 0.0, %v3018
    %3020 = vmatmul.f32.gmra.mxu0 %v2759
    %v3021 = vpop.f32.mrf.mxu0
    %v3022 = vadd.f32 0.0, %v3021
    %3023 = vmatmul.f32.gmra.mxu0 %v2762
    %v3024 = vpop.f32.mrf.mxu0
    %v3025 = vadd.f32 0.0, %v3024
    %3026 = vmatmul.f32.gmra.mxu0 %v2765
    %v3027 = vpop.f32.mrf.mxu0
    %v3028 = vadd.f32 0.0, %v3027
    %3029 = vmatmul.f32.gmra.mxu0 %v2768
    %v3030 = vpop.f32.mrf.mxu0
    %v3031 = vadd.f32 0.0, %v3030
    %3032 = vmatmul.f32.gmra.mxu0 %v2771
    %v3033 = vpop.f32.mrf.mxu0
    %v3034 = vadd.f32 0.0, %v3033
    %3035 = vmatmul.f32.gmra.mxu0 %v2774
    %v3036 = vpop.f32.mrf.mxu0
    %v3037 = vadd.f32 0.0, %v3036
    %3038 = vmatmul.f32.gmra.mxu0 %v2777
    %v3039 = vpop.f32.mrf.mxu0
    %v3040 = vadd.f32 0.0, %v3039
    %3041 = vmatmul.f32.gmra.mxu0 %v2780
    %v3042 = vpop.f32.mrf.mxu0
    %v3043 = vadd.f32 0.0, %v3042
    %3044 = vmatmul.f32.gmra.mxu0 %v2783
    %v3045 = vpop.f32.mrf.mxu0
    %v3046 = vadd.f32 0.0, %v3045
    %3047 = vmatmul.f32.gmra.mxu0 %v2786
    %v3048 = vpop.f32.mrf.mxu0
    %v3049 = vadd.f32 0.0, %v3048
    %3050 = vmatmul.f32.gmra.mxu0 %v2789
    %v3051 = vpop.f32.mrf.mxu0
    %v3052 = vadd.f32 0.0, %v3051
    %3053 = vmatmul.f32.gmra.mxu0 %v2792
    %v3054 = vpop.f32.mrf.mxu0
    %v3055 = vadd.f32 0.0, %v3054
    %3056 = vmatmul.f32.gmra.mxu0 %v2795
    %v3057 = vpop.f32.mrf.mxu0
    %v3058 = vadd.f32 0.0, %v3057
    %3059 = vmatmul.f32.gmra.mxu0 %v2798
    %v3060 = vpop.f32.mrf.mxu0
    %v3061 = vadd.f32 0.0, %v3060
    %3062 = vmatmul.f32.gmra.mxu0 %v2801
    %v3063 = vpop.f32.mrf.mxu0
    %v3064 = vadd.f32 0.0, %v3063
    %3065 = vmatmul.f32.gmra.mxu0 %v2804
    %v3066 = vpop.f32.mrf.mxu0
    %v3067 = vadd.f32 0.0, %v3066
    %3068 = vmatmul.f32.gmra.mxu0 %v2807
    %v3069 = vpop.f32.mrf.mxu0
    %v3070 = vadd.f32 0.0, %v3069
    %3071 = vmatmul.f32.gmra.mxu0 %v2810
    %v3072 = vpop.f32.mrf.mxu0
    %v3073 = vadd.f32 0.0, %v3072
    %3074 = vmatmul.f32.gmra.mxu0 %v2813
    %v3075 = vpop.f32.mrf.mxu0
    %v3076 = vadd.f32 0.0, %v3075
    %3077 = vmatmul.f32.gmra.mxu0 %v2816
    %v3078 = vpop.f32.mrf.mxu0
    %v3079 = vadd.f32 0.0, %v3078
    %3080 = vmatmul.f32.gmra.mxu0 %v2819
    %v3081 = vpop.f32.mrf.mxu0
    %v3082 = vadd.f32 0.0, %v3081
    %3083 = vmatmul.f32.gmra.mxu0 %v2822
    %v3084 = vpop.f32.mrf.mxu0
    %v3085 = vadd.f32 0.0, %v3084
    %3086 = vmatmul.f32.gmra.mxu0 %v2825
    %v3087 = vpop.f32.mrf.mxu0
    %v3088 = vadd.f32 0.0, %v3087
    %3089 = vmatmul.f32.gmra.mxu0 %v2828
    %v3090 = vpop.f32.mrf.mxu0
    %v3091 = vadd.f32 0.0, %v3090
    %3092 = vmatmul.f32.gmra.mxu0 %v2831
    %v3093 = vpop.f32.mrf.mxu0
    %v3094 = vadd.f32 0.0, %v3093
    %3095 = vmatmul.f32.gmra.mxu0 %v2834
    %v3096 = vpop.f32.mrf.mxu0
    %v3097 = vadd.f32 0.0, %v3096
    %3098 = vmatmul.f32.gmra.mxu0 %v2837
    %v3099 = vpop.f32.mrf.mxu0
    %v3100 = vadd.f32 0.0, %v3099
    %3101 = vmatmul.f32.gmra.mxu0 %v2840
    %v3102 = vpop.f32.mrf.mxu0
    %v3103 = vadd.f32 0.0, %v3102
    %3104 = vmatmul.f32.gmra.mxu0 %v2843
    %v3105 = vpop.f32.mrf.mxu0
    %v3106 = vadd.f32 0.0, %v3105
    %3107 = vmatmul.f32.gmra.mxu0 %v2846
    %v3108 = vpop.f32.mrf.mxu0
    %v3109 = vadd.f32 0.0, %v3108
    %3110 = vmatmul.f32.gmra.mxu0 %v2849
    %v3111 = vpop.f32.mrf.mxu0
    %v3112 = vadd.f32 0.0, %v3111
    %3113 = vmatmul.f32.gmra.mxu0 %v2852
    %v3114 = vpop.f32.mrf.mxu0
    %v3115 = vadd.f32 0.0, %v3114
    %3116 = vmatmul.f32.gmra.mxu0 %v2855
    %v3117 = vpop.f32.mrf.mxu0
    %v3118 = vadd.f32 0.0, %v3117
    %3119 = vmatmul.f32.gmra.mxu0 %v2858
    %v3120 = vpop.f32.mrf.mxu0
    %v3121 = vadd.f32 0.0, %v3120
    %3122 = vmatmul.f32.gmra.mxu0 %v2861
    %v3123 = vpop.f32.mrf.mxu0
    %v3124 = vadd.f32 0.0, %v3123
    %3125 = vmatmul.f32.gmra.mxu0 %v2864
    %v3126 = vpop.f32.mrf.mxu0
    %v3127 = vadd.f32 0.0, %v3126
    %3128 = vmatmul.f32.gmra.mxu0 %v2867
    %v3129 = vpop.f32.mrf.mxu0
    %v3130 = vadd.f32 0.0, %v3129
    %3131 = vmatmul.f32.gmra.mxu0 %v2870
    %v3132 = vpop.f32.mrf.mxu0
    %v3133 = vadd.f32 0.0, %v3132
    %3134 = vmatmul.f32.gmra.mxu0 %v2873
    %v3135 = vpop.f32.mrf.mxu0
    %v3136 = vadd.f32 0.0, %v3135
    %3137 = vmatmul.f32.gmra.mxu0 %v2876
    %v3138 = vpop.f32.mrf.mxu0
    %v3139 = vadd.f32 0.0, %v3138
    %3140 = vmatmul.f32.gmra.mxu0 %v2879
    %v3141 = vpop.f32.mrf.mxu0
    %v3142 = vadd.f32 0.0, %v3141
    %3143 = vmatmul.f32.gmra.mxu0 %v2882
    %v3144 = vpop.f32.mrf.mxu0
    %v3145 = vadd.f32 0.0, %v3144
    %3146 = vmatmul.f32.gmra.mxu0 %v2885
    %v3147 = vpop.f32.mrf.mxu0
    %v3148 = vadd.f32 0.0, %v3147
    %3149 = vmatmul.f32.gmra.mxu0 %v2888
    %v3150 = vpop.f32.mrf.mxu0
    %v3151 = vadd.f32 0.0, %v3150
    %3152 = vmatmul.f32.gmra.mxu0 %v2891
    %v3153 = vpop.f32.mrf.mxu0
    %v3154 = vadd.f32 0.0, %v3153
    %3155 = vmatmul.f32.gmra.mxu0 %v2894
    %v3156 = vpop.f32.mrf.mxu0
    %v3157 = vadd.f32 0.0, %v3156
    %3158 = vmatmul.f32.gmra.mxu0 %v2897
    %v3159 = vpop.f32.mrf.mxu0
    %v3160 = vadd.f32 0.0, %v3159
    %3161 = vmatmul.f32.gmra.mxu0 %v2900
    %v3162 = vpop.f32.mrf.mxu0
    %v3163 = vadd.f32 0.0, %v3162
    %3164 = vmatmul.f32.gmra.mxu0 %v2903
    %v3165 = vpop.f32.mrf.mxu0
    %v3166 = vadd.f32 0.0, %v3165
    %3167 = vmatmul.f32.gmra.mxu0 %v2906
    %v3168 = vpop.f32.mrf.mxu0
    %v3169 = vadd.f32 0.0, %v3168
    %3170 = vmatmul.f32.gmra.mxu0 %v2909
    %v3171 = vpop.f32.mrf.mxu0
    %v3172 = vadd.f32 0.0, %v3171
    %3173 = vmatmul.f32.gmra.mxu0 %v2912
    %v3174 = vpop.f32.mrf.mxu0
    %v3175 = vadd.f32 0.0, %v3174
    %3176 = vmatmul.f32.gmra.mxu0 %v2915
    %v3177 = vpop.f32.mrf.mxu0
    %v3178 = vadd.f32 0.0, %v3177
    %3179 = vmatmul.f32.gmra.mxu0 %v2918
    %v3180 = vpop.f32.mrf.mxu0
    %v3181 = vadd.f32 0.0, %v3180
    %3182 = vmatmul.f32.gmra.mxu0 %v2921
    %v3183 = vpop.f32.mrf.mxu0
    %v3184 = vadd.f32 0.0, %v3183
    %3185 = vmatmul.f32.gmra.mxu0 %v2924
    %v3186 = vpop.f32.mrf.mxu0
    %v3187 = vadd.f32 0.0, %v3186
    %3188 = vmatmul.f32.gmra.mxu0 %v2927
    %v3189 = vpop.f32.mrf.mxu0
    %v3190 = vadd.f32 0.0, %v3189
    %3191 = vmatmul.f32.gmra.mxu0 %v2930
    %v3192 = vpop.f32.mrf.mxu0
    %v3193 = vadd.f32 0.0, %v3192
    %3194 = vmatmul.f32.gmra.mxu0 %v2933
    %v3195 = vpop.f32.mrf.mxu0
    %v3196 = vadd.f32 0.0, %v3195
    %3197 = vmatmul.f32.gmra.mxu0 %v2936
    %v3198 = vpop.f32.mrf.mxu0
    %v3199 = vadd.f32 0.0, %v3198
    %3200 = vmatmul.f32.gmra.mxu0 %v2939
    %v3201 = vpop.f32.mrf.mxu0
    %v3202 = vadd.f32 0.0, %v3201
    %3203 = vmatmul.f32.gmra.mxu0 %v2942
    %v3204 = vpop.f32.mrf.mxu0
    %v3205 = vadd.f32 0.0, %v3204
    %3206 = vmatmul.f32.gmra.mxu0 %v2945
    %v3207 = vpop.f32.mrf.mxu0
    %v3208 = vadd.f32 0.0, %v3207
    %3209 = vmatmul.f32.gmra.mxu0 %v2948
    %v3210 = vpop.f32.mrf.mxu0
    %v3211 = vadd.f32 0.0, %v3210
    %3212 = vmatmul.f32.gmra.mxu0 %v2951
    %v3213 = vpop.f32.mrf.mxu0
    %v3214 = vadd.f32 0.0, %v3213
    %3215 = vmatmul.f32.gmra.mxu0 %v2954
    %v3216 = vpop.f32.mrf.mxu0
    %v3217 = vadd.f32 0.0, %v3216
    %3218 = vdwg.mxu0
    %v3219 = vadd.f32 %v2549, %v2977
    %v3220 = vadd.f32 %v2550, %v2980
    %v3221 = vadd.f32 %v2551, %v2983
    %v3222 = vadd.f32 %v2552, %v2986
    %v3223 = vadd.f32 %v2553, %v2989
    %v3224 = vadd.f32 %v2554, %v2992
    %v3225 = vadd.f32 %v2555, %v2995
    %v3226 = vadd.f32 %v2556, %v2998
    %v3227 = vadd.f32 %v2557, %v3001
    %v3228 = vadd.f32 %v2558, %v3004
    %v3229 = vadd.f32 %v2559, %v3007
    %v3230 = vadd.f32 %v2560, %v3010
    %v3231 = vadd.f32 %v2561, %v3013
    %v3232 = vadd.f32 %v2562, %v3016
    %v3233 = vadd.f32 %v2563, %v3019
    %v3234 = vadd.f32 %v2564, %v3022
    %v3235 = vadd.f32 %v2565, %v3025
    %v3236 = vadd.f32 %v2566, %v3028
    %v3237 = vadd.f32 %v2567, %v3031
    %v3238 = vadd.f32 %v2568, %v3034
    %v3239 = vadd.f32 %v2569, %v3037
    %v3240 = vadd.f32 %v2570, %v3040
    %v3241 = vadd.f32 %v2571, %v3043
    %v3242 = vadd.f32 %v2572, %v3046
    %v3243 = vadd.f32 %v2573, %v3049
    %v3244 = vadd.f32 %v2574, %v3052
    %v3245 = vadd.f32 %v2575, %v3055
    %v3246 = vadd.f32 %v2576, %v3058
    %v3247 = vadd.f32 %v2577, %v3061
    %v3248 = vadd.f32 %v2578, %v3064
    %v3249 = vadd.f32 %v2579, %v3067
    %v3250 = vadd.f32 %v2580, %v3070
    %v3251 = vadd.f32 %v2581, %v3073
    %v3252 = vadd.f32 %v2582, %v3076
    %v3253 = vadd.f32 %v2583, %v3079
    %v3254 = vadd.f32 %v2584, %v3082
    %v3255 = vadd.f32 %v2585, %v3085
    %v3256 = vadd.f32 %v2586, %v3088
    %v3257 = vadd.f32 %v2587, %v3091
    %v3258 = vadd.f32 %v2588, %v3094
    %v3259 = vadd.f32 %v2589, %v3097
    %v3260 = vadd.f32 %v2590, %v3100
    %v3261 = vadd.f32 %v2591, %v3103
    %v3262 = vadd.f32 %v2592, %v3106
    %v3263 = vadd.f32 %v2593, %v3109
    %v3264 = vadd.f32 %v2594, %v3112
    %v3265 = vadd.f32 %v2595, %v3115
    %v3266 = vadd.f32 %v2596, %v3118
    %v3267 = vadd.f32 %v2597, %v3121
    %v3268 = vadd.f32 %v2598, %v3124
    %v3269 = vadd.f32 %v2599, %v3127
    %v3270 = vadd.f32 %v2600, %v3130
    %v3271 = vadd.f32 %v2601, %v3133
    %v3272 = vadd.f32 %v2602, %v3136
    %v3273 = vadd.f32 %v2603, %v3139
    %v3274 = vadd.f32 %v2604, %v3142
    %v3275 = vadd.f32 %v2605, %v3145
    %v3276 = vadd.f32 %v2606, %v3148
    %v3277 = vadd.f32 %v2607, %v3151
    %v3278 = vadd.f32 %v2608, %v3154
    %v3279 = vadd.f32 %v2609, %v3157
    %v3280 = vadd.f32 %v2610, %v3160
    %v3281 = vadd.f32 %v2611, %v3163
    %v3282 = vadd.f32 %v2612, %v3166
    %v3283 = vadd.f32 %v2613, %v3169
    %v3284 = vadd.f32 %v2614, %v3172
    %v3285 = vadd.f32 %v2615, %v3175
    %v3286 = vadd.f32 %v2616, %v3178
    %v3287 = vadd.f32 %v2617, %v3181
    %v3288 = vadd.f32 %v2618, %v3184
    %v3289 = vadd.f32 %v2619, %v3187
    %v3290 = vadd.f32 %v2620, %v3190
    %v3291 = vadd.f32 %v2621, %v3193
    %v3292 = vadd.f32 %v2622, %v3196
    %v3293 = vadd.f32 %v2623, %v3199
    %v3294 = vadd.f32 %v2624, %v3202
    %v3295 = vadd.f32 %v2625, %v3205
    %v3296 = vadd.f32 %v2626, %v3208
    %v3297 = vadd.f32 %v2627, %v3211
    %v3298 = vadd.f32 %v2628, %v3214
    %v3299 = vadd.f32 %v2629, %v3217
    %v3300 = vld [vmem:[%s0 + $0x19] sm:$0xff]
    %v3301 = vld [vmem:[%s0 + $0x21] sm:$0xff]
    %v3302 = vld [vmem:[%s0 + $0x29] sm:$0xff]
    %v3303 = vld [vmem:[%s0 + $0x31] sm:$0xff]
    %v3304 = vld [vmem:[%s0 + $0x39] sm:$0xff]
    %v3305 = vld [vmem:[%s0 + $0x41] sm:$0xff]
    %v3306 = vld [vmem:[%s0 + $0x49] sm:$0xff]
    %v3307 = vld [vmem:[%s0 + $0x51] sm:$0xff]
    %v3308 = vld [vmem:[%s0 + $0x59] sm:$0xff]
    %v3309 = vld [vmem:[%s0 + $0x61] sm:$0xff]
    %v3310 = vld [vmem:[%s0 + $0x69] sm:$0xff]
    %v3311 = vld [vmem:[%s0 + $0x71] sm:$0xff]
    %v3312 = vld [vmem:[%s0 + $0x79] sm:$0xff]
    %v3313 = vld [vmem:[%s0 + $0x81] sm:$0xff]
    %v3314 = vld [vmem:[%s0 + $0x89] sm:$0xff]
    %v3315 = vld [vmem:[%s0 + $0x91] sm:$0xff]
    %v3316 = vld [vmem:[%s0 + $0x99] sm:$0xff]
    %v3317 = vld [vmem:[%s0 + $0xa1] sm:$0xff]
    %v3318 = vld [vmem:[%s0 + $0xa9] sm:$0xff]
    %v3319 = vld [vmem:[%s0 + $0xb1] sm:$0xff]
    %v3320 = vld [vmem:[%s0 + $0xb9] sm:$0xff]
    %v3321 = vld [vmem:[%s0 + $0xc1] sm:$0xff]
    %v3322 = vld [vmem:[%s0 + $0xc9] sm:$0xff]
    %v3323 = vld [vmem:[%s0 + $0xd1] sm:$0xff]
    %v3324 = vld [vmem:[%s0 + $0xd9] sm:$0xff]
    %v3325 = vld [vmem:[%s0 + $0xe1] sm:$0xff]
    %v3326 = vld [vmem:[%s0 + $0xe9] sm:$0xff]
    %v3327 = vld [vmem:[%s0 + $0xf1] sm:$0xff]
    %v3328 = vld [vmem:[%s0 + $0xf9] sm:$0xff]
    %v3329 = vld [vmem:[%s0 + $0x101] sm:$0xff]
    %v3330 = vld [vmem:[%s0 + $0x109] sm:$0xff]
    %v3331 = vld [vmem:[%s0 + $0x111] sm:$0xff]
    %v3332 = vld [vmem:[%s0 + $0x119] sm:$0xff]
    %v3333 = vld [vmem:[%s0 + $0x121] sm:$0xff]
    %v3334 = vld [vmem:[%s0 + $0x129] sm:$0xff]
    %v3335 = vld [vmem:[%s0 + $0x131] sm:$0xff]
    %v3336 = vld [vmem:[%s0 + $0x139] sm:$0xff]
    %v3337 = vld [vmem:[%s0 + $0x141] sm:$0xff]
    %v3338 = vld [vmem:[%s0 + $0x149] sm:$0xff]
    %v3339 = vld [vmem:[%s0 + $0x151] sm:$0xff]
    %v3340 = vld [vmem:[%s0 + $0x159] sm:$0xff]
    %v3341 = vld [vmem:[%s0 + $0x161] sm:$0xff]
    %v3342 = vld [vmem:[%s0 + $0x169] sm:$0xff]
    %v3343 = vld [vmem:[%s0 + $0x171] sm:$0xff]
    %v3344 = vld [vmem:[%s0 + $0x179] sm:$0xff]
    %v3345 = vld [vmem:[%s0 + $0x181] sm:$0xff]
    %v3346 = vld [vmem:[%s0 + $0x189] sm:$0xff]
    %v3347 = vld [vmem:[%s0 + $0x191] sm:$0xff]
    %v3348 = vld [vmem:[%s0 + $0x199] sm:$0xff]
    %v3349 = vld [vmem:[%s0 + $0x1a1] sm:$0xff]
    %v3350 = vld [vmem:[%s0 + $0x1a9] sm:$0xff]
    %v3351 = vld [vmem:[%s0 + $0x1b1] sm:$0xff]
    %v3352 = vld [vmem:[%s0 + $0x1b9] sm:$0xff]
    %v3353 = vld [vmem:[%s0 + $0x1c1] sm:$0xff]
    %v3354 = vld [vmem:[%s0 + $0x1c9] sm:$0xff]
    %v3355 = vld [vmem:[%s0 + $0x1d1] sm:$0xff]
    %v3356 = vld [vmem:[%s0 + $0x1d9] sm:$0xff]
    %v3357 = vld [vmem:[%s0 + $0x1e1] sm:$0xff]
    %v3358 = vld [vmem:[%s0 + $0x1e9] sm:$0xff]
    %v3359 = vld [vmem:[%s0 + $0x1f1] sm:$0xff]
    %v3360 = vld [vmem:[%s0 + $0x1f9] sm:$0xff]
    %v3361 = vld [vmem:[%s0 + $0x201] sm:$0xff]
    %v3362 = vld [vmem:[%s0 + $0x209] sm:$0xff]
    %v3363 = vld [vmem:[%s0 + $0x211] sm:$0xff]
    %v3364 = vld [vmem:[%s0 + $0x219] sm:$0xff]
    %v3365 = vld [vmem:[%s0 + $0x221] sm:$0xff]
    %v3366 = vld [vmem:[%s0 + $0x229] sm:$0xff]
    %v3367 = vld [vmem:[%s0 + $0x231] sm:$0xff]
    %v3368 = vld [vmem:[%s0 + $0x239] sm:$0xff]
    %v3369 = vld [vmem:[%s0 + $0x241] sm:$0xff]
    %v3370 = vld [vmem:[%s0 + $0x249] sm:$0xff]
    %v3371 = vld [vmem:[%s0 + $0x251] sm:$0xff]
    %v3372 = vld [vmem:[%s0 + $0x259] sm:$0xff]
    %v3373 = vld [vmem:[%s0 + $0x261] sm:$0xff]
    %v3374 = vld [vmem:[%s0 + $0x269] sm:$0xff]
    %v3375 = vld [vmem:[%s0 + $0x271] sm:$0xff]
    %v3376 = vld [vmem:[%s0 + $0x279] sm:$0xff]
    %v3377 = vld [vmem:[%s0 + $0x281] sm:$0xff]
    %v3378 = vld [vmem:[%s0 + $0x289] sm:$0xff]
    %v3379 = vld [vmem:[%s0 + $0x291] sm:$0xff]
    %v3380 = vld [vmem:[%s0 + $0x299] sm:$0xff]
    %s3381 = scalar_lea.vmem %s2, 20
    %v3382 = vld [vmem:[%s3381] sm:$0xf]
    %v3384 = vsel %vm276, %v3300, 0
    %v3387 = vsel %vm276, %v3301, 0
    %v3390 = vsel %vm276, %v3302, 0
    %v3393 = vsel %vm276, %v3303, 0
    %v3396 = vsel %vm276, %v3304, 0
    %v3399 = vsel %vm276, %v3305, 0
    %v3402 = vsel %vm276, %v3306, 0
    %v3405 = vsel %vm276, %v3307, 0
    %v3408 = vsel %vm276, %v3308, 0
    %v3411 = vsel %vm276, %v3309, 0
    %v3414 = vsel %vm276, %v3310, 0
    %v3417 = vsel %vm276, %v3311, 0
    %v3420 = vsel %vm276, %v3312, 0
    %v3423 = vsel %vm276, %v3313, 0
    %v3426 = vsel %vm276, %v3314, 0
    %v3429 = vsel %vm276, %v3315, 0
    %v3432 = vsel %vm276, %v3316, 0
    %v3435 = vsel %vm276, %v3317, 0
    %v3438 = vsel %vm276, %v3318, 0
    %v3441 = vsel %vm276, %v3319, 0
    %v3444 = vsel %vm276, %v3320, 0
    %v3447 = vsel %vm276, %v3321, 0
    %v3450 = vsel %vm276, %v3322, 0
    %v3453 = vsel %vm276, %v3323, 0
    %v3456 = vsel %vm276, %v3324, 0
    %v3459 = vsel %vm276, %v3325, 0
    %v3462 = vsel %vm276, %v3326, 0
    %v3465 = vsel %vm276, %v3327, 0
    %v3468 = vsel %vm276, %v3328, 0
    %v3471 = vsel %vm276, %v3329, 0
    %v3474 = vsel %vm276, %v3330, 0
    %v3477 = vsel %vm276, %v3331, 0
    %v3480 = vsel %vm276, %v3332, 0
    %v3483 = vsel %vm276, %v3333, 0
    %v3486 = vsel %vm276, %v3334, 0
    %v3489 = vsel %vm276, %v3335, 0
    %v3492 = vsel %vm276, %v3336, 0
    %v3495 = vsel %vm276, %v3337, 0
    %v3498 = vsel %vm276, %v3338, 0
    %v3501 = vsel %vm276, %v3339, 0
    %v3504 = vsel %vm276, %v3340, 0
    %v3507 = vsel %vm276, %v3341, 0
    %v3510 = vsel %vm276, %v3342, 0
    %v3513 = vsel %vm276, %v3343, 0
    %v3516 = vsel %vm276, %v3344, 0
    %v3519 = vsel %vm276, %v3345, 0
    %v3522 = vsel %vm276, %v3346, 0
    %v3525 = vsel %vm276, %v3347, 0
    %v3528 = vsel %vm276, %v3348, 0
    %v3531 = vsel %vm276, %v3349, 0
    %v3534 = vsel %vm276, %v3350, 0
    %v3537 = vsel %vm276, %v3351, 0
    %v3540 = vsel %vm276, %v3352, 0
    %v3543 = vsel %vm276, %v3353, 0
    %v3546 = vsel %vm276, %v3354, 0
    %v3549 = vsel %vm276, %v3355, 0
    %v3552 = vsel %vm276, %v3356, 0
    %v3555 = vsel %vm276, %v3357, 0
    %v3558 = vsel %vm276, %v3358, 0
    %v3561 = vsel %vm276, %v3359, 0
    %v3564 = vsel %vm276, %v3360, 0
    %v3567 = vsel %vm276, %v3361, 0
    %v3570 = vsel %vm276, %v3362, 0
    %v3573 = vsel %vm276, %v3363, 0
    %v3576 = vsel %vm276, %v3364, 0
    %v3579 = vsel %vm276, %v3365, 0
    %v3582 = vsel %vm276, %v3366, 0
    %v3585 = vsel %vm276, %v3367, 0
    %v3588 = vsel %vm276, %v3368, 0
    %v3591 = vsel %vm276, %v3369, 0
    %v3594 = vsel %vm276, %v3370, 0
    %v3597 = vsel %vm276, %v3371, 0
    %v3600 = vsel %vm276, %v3372, 0
    %v3603 = vsel %vm276, %v3373, 0
    %v3606 = vsel %vm276, %v3374, 0
    %v3609 = vsel %vm276, %v3375, 0
    %v3612 = vsel %vm276, %v3376, 0
    %v3615 = vsel %vm276, %v3377, 0
    %v3618 = vsel %vm276, %v3378, 0
    %v3621 = vsel %vm276, %v3379, 0
    %v3624 = vsel %vm276, %v3380, 0
    %v3627 = vsel %vm520, %v3382, 0
    %3629 = vmatpush.msra.mxu0 0.0
    %3630 = vmatpush.msra.mxu0 0.0
    %3631 = vmatpush.msra.mxu0 0.0
    %3632 = vmatpush.msra.mxu0 0.0
    %3633 = vmatpush.msra.mxu0 0.0
    %3634 = vmatpush.msra.mxu0 0.0
    %3635 = vmatpush.msra.mxu0 0.0
    %3636 = vmatpush.msra.mxu0 0.0
    %3637 = vmatpush.msra.mxu0 0.0
    %3638 = vmatpush.msra.mxu0 0.0
    %3639 = vmatpush.msra.mxu0 0.0
    %3640 = vmatpush.msra.mxu0 0.0
    %3641 = vmatpush.msra.mxu0 0.0
    %3642 = vmatpush.msra.mxu0 0.0
    %3643 = vmatpush.msra.mxu0 0.0
    %3644 = vmatpush.msra.mxu0 %v3627
    %3645 = vmatmul.f32.gmra.mxu0 %v3384
    %v3646 = vpop.f32.mrf.mxu0
    %v3647 = vadd.f32 0.0, %v3646
    %3648 = vmatmul.f32.gmra.mxu0 %v3387
    %v3649 = vpop.f32.mrf.mxu0
    %v3650 = vadd.f32 0.0, %v3649
    %3651 = vmatmul.f32.gmra.mxu0 %v3390
    %v3652 = vpop.f32.mrf.mxu0
    %v3653 = vadd.f32 0.0, %v3652
    %3654 = vmatmul.f32.gmra.mxu0 %v3393
    %v3655 = vpop.f32.mrf.mxu0
    %v3656 = vadd.f32 0.0, %v3655
    %3657 = vmatmul.f32.gmra.mxu0 %v3396
    %v3658 = vpop.f32.mrf.mxu0
    %v3659 = vadd.f32 0.0, %v3658
    %3660 = vmatmul.f32.gmra.mxu0 %v3399
    %v3661 = vpop.f32.mrf.mxu0
    %v3662 = vadd.f32 0.0, %v3661
    %3663 = vmatmul.f32.gmra.mxu0 %v3402
    %v3664 = vpop.f32.mrf.mxu0
    %v3665 = vadd.f32 0.0, %v3664
    %3666 = vmatmul.f32.gmra.mxu0 %v3405
    %v3667 = vpop.f32.mrf.mxu0
    %v3668 = vadd.f32 0.0, %v3667
    %3669 = vmatmul.f32.gmra.mxu0 %v3408
    %v3670 = vpop.f32.mrf.mxu0
    %v3671 = vadd.f32 0.0, %v3670
    %3672 = vmatmul.f32.gmra.mxu0 %v3411
    %v3673 = vpop.f32.mrf.mxu0
    %v3674 = vadd.f32 0.0, %v3673
    %3675 = vmatmul.f32.gmra.mxu0 %v3414
    %v3676 = vpop.f32.mrf.mxu0
    %v3677 = vadd.f32 0.0, %v3676
    %3678 = vmatmul.f32.gmra.mxu0 %v3417
    %v3679 = vpop.f32.mrf.mxu0
    %v3680 = vadd.f32 0.0, %v3679
    %3681 = vmatmul.f32.gmra.mxu0 %v3420
    %v3682 = vpop.f32.mrf.mxu0
    %v3683 = vadd.f32 0.0, %v3682
    %3684 = vmatmul.f32.gmra.mxu0 %v3423
    %v3685 = vpop.f32.mrf.mxu0
    %v3686 = vadd.f32 0.0, %v3685
    %3687 = vmatmul.f32.gmra.mxu0 %v3426
    %v3688 = vpop.f32.mrf.mxu0
    %v3689 = vadd.f32 0.0, %v3688
    %3690 = vmatmul.f32.gmra.mxu0 %v3429
    %v3691 = vpop.f32.mrf.mxu0
    %v3692 = vadd.f32 0.0, %v3691
    %3693 = vmatmul.f32.gmra.mxu0 %v3432
    %v3694 = vpop.f32.mrf.mxu0
    %v3695 = vadd.f32 0.0, %v3694
    %3696 = vmatmul.f32.gmra.mxu0 %v3435
    %v3697 = vpop.f32.mrf.mxu0
    %v3698 = vadd.f32 0.0, %v3697
    %3699 = vmatmul.f32.gmra.mxu0 %v3438
    %v3700 = vpop.f32.mrf.mxu0
    %v3701 = vadd.f32 0.0, %v3700
    %3702 = vmatmul.f32.gmra.mxu0 %v3441
    %v3703 = vpop.f32.mrf.mxu0
    %v3704 = vadd.f32 0.0, %v3703
    %3705 = vmatmul.f32.gmra.mxu0 %v3444
    %v3706 = vpop.f32.mrf.mxu0
    %v3707 = vadd.f32 0.0, %v3706
    %3708 = vmatmul.f32.gmra.mxu0 %v3447
    %v3709 = vpop.f32.mrf.mxu0
    %v3710 = vadd.f32 0.0, %v3709
    %3711 = vmatmul.f32.gmra.mxu0 %v3450
    %v3712 = vpop.f32.mrf.mxu0
    %v3713 = vadd.f32 0.0, %v3712
    %3714 = vmatmul.f32.gmra.mxu0 %v3453
    %v3715 = vpop.f32.mrf.mxu0
    %v3716 = vadd.f32 0.0, %v3715
    %3717 = vmatmul.f32.gmra.mxu0 %v3456
    %v3718 = vpop.f32.mrf.mxu0
    %v3719 = vadd.f32 0.0, %v3718
    %3720 = vmatmul.f32.gmra.mxu0 %v3459
    %v3721 = vpop.f32.mrf.mxu0
    %v3722 = vadd.f32 0.0, %v3721
    %3723 = vmatmul.f32.gmra.mxu0 %v3462
    %v3724 = vpop.f32.mrf.mxu0
    %v3725 = vadd.f32 0.0, %v3724
    %3726 = vmatmul.f32.gmra.mxu0 %v3465
    %v3727 = vpop.f32.mrf.mxu0
    %v3728 = vadd.f32 0.0, %v3727
    %3729 = vmatmul.f32.gmra.mxu0 %v3468
    %v3730 = vpop.f32.mrf.mxu0
    %v3731 = vadd.f32 0.0, %v3730
    %3732 = vmatmul.f32.gmra.mxu0 %v3471
    %v3733 = vpop.f32.mrf.mxu0
    %v3734 = vadd.f32 0.0, %v3733
    %3735 = vmatmul.f32.gmra.mxu0 %v3474
    %v3736 = vpop.f32.mrf.mxu0
    %v3737 = vadd.f32 0.0, %v3736
    %3738 = vmatmul.f32.gmra.mxu0 %v3477
    %v3739 = vpop.f32.mrf.mxu0
    %v3740 = vadd.f32 0.0, %v3739
    %3741 = vmatmul.f32.gmra.mxu0 %v3480
    %v3742 = vpop.f32.mrf.mxu0
    %v3743 = vadd.f32 0.0, %v3742
    %3744 = vmatmul.f32.gmra.mxu0 %v3483
    %v3745 = vpop.f32.mrf.mxu0
    %v3746 = vadd.f32 0.0, %v3745
    %3747 = vmatmul.f32.gmra.mxu0 %v3486
    %v3748 = vpop.f32.mrf.mxu0
    %v3749 = vadd.f32 0.0, %v3748
    %3750 = vmatmul.f32.gmra.mxu0 %v3489
    %v3751 = vpop.f32.mrf.mxu0
    %v3752 = vadd.f32 0.0, %v3751
    %3753 = vmatmul.f32.gmra.mxu0 %v3492
    %v3754 = vpop.f32.mrf.mxu0
    %v3755 = vadd.f32 0.0, %v3754
    %3756 = vmatmul.f32.gmra.mxu0 %v3495
    %v3757 = vpop.f32.mrf.mxu0
    %v3758 = vadd.f32 0.0, %v3757
    %3759 = vmatmul.f32.gmra.mxu0 %v3498
    %v3760 = vpop.f32.mrf.mxu0
    %v3761 = vadd.f32 0.0, %v3760
    %3762 = vmatmul.f32.gmra.mxu0 %v3501
    %v3763 = vpop.f32.mrf.mxu0
    %v3764 = vadd.f32 0.0, %v3763
    %3765 = vmatmul.f32.gmra.mxu0 %v3504
    %v3766 = vpop.f32.mrf.mxu0
    %v3767 = vadd.f32 0.0, %v3766
    %3768 = vmatmul.f32.gmra.mxu0 %v3507
    %v3769 = vpop.f32.mrf.mxu0
    %v3770 = vadd.f32 0.0, %v3769
    %3771 = vmatmul.f32.gmra.mxu0 %v3510
    %v3772 = vpop.f32.mrf.mxu0
    %v3773 = vadd.f32 0.0, %v3772
    %3774 = vmatmul.f32.gmra.mxu0 %v3513
    %v3775 = vpop.f32.mrf.mxu0
    %v3776 = vadd.f32 0.0, %v3775
    %3777 = vmatmul.f32.gmra.mxu0 %v3516
    %v3778 = vpop.f32.mrf.mxu0
    %v3779 = vadd.f32 0.0, %v3778
    %3780 = vmatmul.f32.gmra.mxu0 %v3519
    %v3781 = vpop.f32.mrf.mxu0
    %v3782 = vadd.f32 0.0, %v3781
    %3783 = vmatmul.f32.gmra.mxu0 %v3522
    %v3784 = vpop.f32.mrf.mxu0
    %v3785 = vadd.f32 0.0, %v3784
    %3786 = vmatmul.f32.gmra.mxu0 %v3525
    %v3787 = vpop.f32.mrf.mxu0
    %v3788 = vadd.f32 0.0, %v3787
    %3789 = vmatmul.f32.gmra.mxu0 %v3528
    %v3790 = vpop.f32.mrf.mxu0
    %v3791 = vadd.f32 0.0, %v3790
    %3792 = vmatmul.f32.gmra.mxu0 %v3531
    %v3793 = vpop.f32.mrf.mxu0
    %v3794 = vadd.f32 0.0, %v3793
    %3795 = vmatmul.f32.gmra.mxu0 %v3534
    %v3796 = vpop.f32.mrf.mxu0
    %v3797 = vadd.f32 0.0, %v3796
    %3798 = vmatmul.f32.gmra.mxu0 %v3537
    %v3799 = vpop.f32.mrf.mxu0
    %v3800 = vadd.f32 0.0, %v3799
    %3801 = vmatmul.f32.gmra.mxu0 %v3540
    %v3802 = vpop.f32.mrf.mxu0
    %v3803 = vadd.f32 0.0, %v3802
    %3804 = vmatmul.f32.gmra.mxu0 %v3543
    %v3805 = vpop.f32.mrf.mxu0
    %v3806 = vadd.f32 0.0, %v3805
    %3807 = vmatmul.f32.gmra.mxu0 %v3546
    %v3808 = vpop.f32.mrf.mxu0
    %v3809 = vadd.f32 0.0, %v3808
    %3810 = vmatmul.f32.gmra.mxu0 %v3549
    %v3811 = vpop.f32.mrf.mxu0
    %v3812 = vadd.f32 0.0, %v3811
    %3813 = vmatmul.f32.gmra.mxu0 %v3552
    %v3814 = vpop.f32.mrf.mxu0
    %v3815 = vadd.f32 0.0, %v3814
    %3816 = vmatmul.f32.gmra.mxu0 %v3555
    %v3817 = vpop.f32.mrf.mxu0
    %v3818 = vadd.f32 0.0, %v3817
    %3819 = vmatmul.f32.gmra.mxu0 %v3558
    %v3820 = vpop.f32.mrf.mxu0
    %v3821 = vadd.f32 0.0, %v3820
    %3822 = vmatmul.f32.gmra.mxu0 %v3561
    %v3823 = vpop.f32.mrf.mxu0
    %v3824 = vadd.f32 0.0, %v3823
    %3825 = vmatmul.f32.gmra.mxu0 %v3564
    %v3826 = vpop.f32.mrf.mxu0
    %v3827 = vadd.f32 0.0, %v3826
    %3828 = vmatmul.f32.gmra.mxu0 %v3567
    %v3829 = vpop.f32.mrf.mxu0
    %v3830 = vadd.f32 0.0, %v3829
    %3831 = vmatmul.f32.gmra.mxu0 %v3570
    %v3832 = vpop.f32.mrf.mxu0
    %v3833 = vadd.f32 0.0, %v3832
    %3834 = vmatmul.f32.gmra.mxu0 %v3573
    %v3835 = vpop.f32.mrf.mxu0
    %v3836 = vadd.f32 0.0, %v3835
    %3837 = vmatmul.f32.gmra.mxu0 %v3576
    %v3838 = vpop.f32.mrf.mxu0
    %v3839 = vadd.f32 0.0, %v3838
    %3840 = vmatmul.f32.gmra.mxu0 %v3579
    %v3841 = vpop.f32.mrf.mxu0
    %v3842 = vadd.f32 0.0, %v3841
    %3843 = vmatmul.f32.gmra.mxu0 %v3582
    %v3844 = vpop.f32.mrf.mxu0
    %v3845 = vadd.f32 0.0, %v3844
    %3846 = vmatmul.f32.gmra.mxu0 %v3585
    %v3847 = vpop.f32.mrf.mxu0
    %v3848 = vadd.f32 0.0, %v3847
    %3849 = vmatmul.f32.gmra.mxu0 %v3588
    %v3850 = vpop.f32.mrf.mxu0
    %v3851 = vadd.f32 0.0, %v3850
    %3852 = vmatmul.f32.gmra.mxu0 %v3591
    %v3853 = vpop.f32.mrf.mxu0
    %v3854 = vadd.f32 0.0, %v3853
    %3855 = vmatmul.f32.gmra.mxu0 %v3594
    %v3856 = vpop.f32.mrf.mxu0
    %v3857 = vadd.f32 0.0, %v3856
    %3858 = vmatmul.f32.gmra.mxu0 %v3597
    %v3859 = vpop.f32.mrf.mxu0
    %v3860 = vadd.f32 0.0, %v3859
    %3861 = vmatmul.f32.gmra.mxu0 %v3600
    %v3862 = vpop.f32.mrf.mxu0
    %v3863 = vadd.f32 0.0, %v3862
    %3864 = vmatmul.f32.gmra.mxu0 %v3603
    %v3865 = vpop.f32.mrf.mxu0
    %v3866 = vadd.f32 0.0, %v3865
    %3867 = vmatmul.f32.gmra.mxu0 %v3606
    %v3868 = vpop.f32.mrf.mxu0
    %v3869 = vadd.f32 0.0, %v3868
    %3870 = vmatmul.f32.gmra.mxu0 %v3609
    %v3871 = vpop.f32.mrf.mxu0
    %v3872 = vadd.f32 0.0, %v3871
    %3873 = vmatmul.f32.gmra.mxu0 %v3612
    %v3874 = vpop.f32.mrf.mxu0
    %v3875 = vadd.f32 0.0, %v3874
    %3876 = vmatmul.f32.gmra.mxu0 %v3615
    %v3877 = vpop.f32.mrf.mxu0
    %v3878 = vadd.f32 0.0, %v3877
    %3879 = vmatmul.f32.gmra.mxu0 %v3618
    %v3880 = vpop.f32.mrf.mxu0
    %v3881 = vadd.f32 0.0, %v3880
    %3882 = vmatmul.f32.gmra.mxu0 %v3621
    %v3883 = vpop.f32.mrf.mxu0
    %v3884 = vadd.f32 0.0, %v3883
    %3885 = vmatmul.f32.gmra.mxu0 %v3624
    %v3886 = vpop.f32.mrf.mxu0
    %v3887 = vadd.f32 0.0, %v3886
    %3888 = vdwg.mxu0
    %v3889 = vadd.f32 %v3219, %v3647
    %v3890 = vadd.f32 %v3220, %v3650
    %v3891 = vadd.f32 %v3221, %v3653
    %v3892 = vadd.f32 %v3222, %v3656
    %v3893 = vadd.f32 %v3223, %v3659
    %v3894 = vadd.f32 %v3224, %v3662
    %v3895 = vadd.f32 %v3225, %v3665
    %v3896 = vadd.f32 %v3226, %v3668
    %v3897 = vadd.f32 %v3227, %v3671
    %v3898 = vadd.f32 %v3228, %v3674
    %v3899 = vadd.f32 %v3229, %v3677
    %v3900 = vadd.f32 %v3230, %v3680
    %v3901 = vadd.f32 %v3231, %v3683
    %v3902 = vadd.f32 %v3232, %v3686
    %v3903 = vadd.f32 %v3233, %v3689
    %v3904 = vadd.f32 %v3234, %v3692
    %v3905 = vadd.f32 %v3235, %v3695
    %v3906 = vadd.f32 %v3236, %v3698
    %v3907 = vadd.f32 %v3237, %v3701
    %v3908 = vadd.f32 %v3238, %v3704
    %v3909 = vadd.f32 %v3239, %v3707
    %v3910 = vadd.f32 %v3240, %v3710
    %v3911 = vadd.f32 %v3241, %v3713
    %v3912 = vadd.f32 %v3242, %v3716
    %v3913 = vadd.f32 %v3243, %v3719
    %v3914 = vadd.f32 %v3244, %v3722
    %v3915 = vadd.f32 %v3245, %v3725
    %v3916 = vadd.f32 %v3246, %v3728
    %v3917 = vadd.f32 %v3247, %v3731
    %v3918 = vadd.f32 %v3248, %v3734
    %v3919 = vadd.f32 %v3249, %v3737
    %v3920 = vadd.f32 %v3250, %v3740
    %v3921 = vadd.f32 %v3251, %v3743
    %v3922 = vadd.f32 %v3252, %v3746
    %v3923 = vadd.f32 %v3253, %v3749
    %v3924 = vadd.f32 %v3254, %v3752
    %v3925 = vadd.f32 %v3255, %v3755
    %v3926 = vadd.f32 %v3256, %v3758
    %v3927 = vadd.f32 %v3257, %v3761
    %v3928 = vadd.f32 %v3258, %v3764
    %v3929 = vadd.f32 %v3259, %v3767
    %v3930 = vadd.f32 %v3260, %v3770
    %v3931 = vadd.f32 %v3261, %v3773
    %v3932 = vadd.f32 %v3262, %v3776
    %v3933 = vadd.f32 %v3263, %v3779
    %v3934 = vadd.f32 %v3264, %v3782
    %v3935 = vadd.f32 %v3265, %v3785
    %v3936 = vadd.f32 %v3266, %v3788
    %v3937 = vadd.f32 %v3267, %v3791
    %v3938 = vadd.f32 %v3268, %v3794
    %v3939 = vadd.f32 %v3269, %v3797
    %v3940 = vadd.f32 %v3270, %v3800
    %v3941 = vadd.f32 %v3271, %v3803
    %v3942 = vadd.f32 %v3272, %v3806
    %v3943 = vadd.f32 %v3273, %v3809
    %v3944 = vadd.f32 %v3274, %v3812
    %v3945 = vadd.f32 %v3275, %v3815
    %v3946 = vadd.f32 %v3276, %v3818
    %v3947 = vadd.f32 %v3277, %v3821
    %v3948 = vadd.f32 %v3278, %v3824
    %v3949 = vadd.f32 %v3279, %v3827
    %v3950 = vadd.f32 %v3280, %v3830
    %v3951 = vadd.f32 %v3281, %v3833
    %v3952 = vadd.f32 %v3282, %v3836
    %v3953 = vadd.f32 %v3283, %v3839
    %v3954 = vadd.f32 %v3284, %v3842
    %v3955 = vadd.f32 %v3285, %v3845
    %v3956 = vadd.f32 %v3286, %v3848
    %v3957 = vadd.f32 %v3287, %v3851
    %v3958 = vadd.f32 %v3288, %v3854
    %v3959 = vadd.f32 %v3289, %v3857
    %v3960 = vadd.f32 %v3290, %v3860
    %v3961 = vadd.f32 %v3291, %v3863
    %v3962 = vadd.f32 %v3292, %v3866
    %v3963 = vadd.f32 %v3293, %v3869
    %v3964 = vadd.f32 %v3294, %v3872
    %v3965 = vadd.f32 %v3295, %v3875
    %v3966 = vadd.f32 %v3296, %v3878
    %v3967 = vadd.f32 %v3297, %v3881
    %v3968 = vadd.f32 %v3298, %v3884
    %v3969 = vadd.f32 %v3299, %v3887
    %v3970 = vld [vmem:[%s0 + $0x29] sm:$0xff]
    %v3971 = vld [vmem:[%s0 + $0x31] sm:$0xff]
    %v3972 = vld [vmem:[%s0 + $0x39] sm:$0xff]
    %v3973 = vld [vmem:[%s0 + $0x41] sm:$0xff]
    %v3974 = vld [vmem:[%s0 + $0x49] sm:$0xff]
    %v3975 = vld [vmem:[%s0 + $0x51] sm:$0xff]
    %v3976 = vld [vmem:[%s0 + $0x59] sm:$0xff]
    %v3977 = vld [vmem:[%s0 + $0x61] sm:$0xff]
    %v3978 = vld [vmem:[%s0 + $0x69] sm:$0xff]
    %v3979 = vld [vmem:[%s0 + $0x71] sm:$0xff]
    %v3980 = vld [vmem:[%s0 + $0x79] sm:$0xff]
    %v3981 = vld [vmem:[%s0 + $0x81] sm:$0xff]
    %v3982 = vld [vmem:[%s0 + $0x89] sm:$0xff]
    %v3983 = vld [vmem:[%s0 + $0x91] sm:$0xff]
    %v3984 = vld [vmem:[%s0 + $0x99] sm:$0xff]
    %v3985 = vld [vmem:[%s0 + $0xa1] sm:$0xff]
    %v3986 = vld [vmem:[%s0 + $0xa9] sm:$0xff]
    %v3987 = vld [vmem:[%s0 + $0xb1] sm:$0xff]
    %v3988 = vld [vmem:[%s0 + $0xb9] sm:$0xff]
    %v3989 = vld [vmem:[%s0 + $0xc1] sm:$0xff]
    %v3990 = vld [vmem:[%s0 + $0xc9] sm:$0xff]
    %v3991 = vld [vmem:[%s0 + $0xd1] sm:$0xff]
    %v3992 = vld [vmem:[%s0 + $0xd9] sm:$0xff]
    %v3993 = vld [vmem:[%s0 + $0xe1] sm:$0xff]
    %v3994 = vld [vmem:[%s0 + $0xe9] sm:$0xff]
    %v3995 = vld [vmem:[%s0 + $0xf1] sm:$0xff]
    %v3996 = vld [vmem:[%s0 + $0xf9] sm:$0xff]
    %v3997 = vld [vmem:[%s0 + $0x101] sm:$0xff]
    %v3998 = vld [vmem:[%s0 + $0x109] sm:$0xff]
    %v3999 = vld [vmem:[%s0 + $0x111] sm:$0xff]
    %v4000 = vld [vmem:[%s0 + $0x119] sm:$0xff]
    %v4001 = vld [vmem:[%s0 + $0x121] sm:$0xff]
    %v4002 = vld [vmem:[%s0 + $0x129] sm:$0xff]
    %v4003 = vld [vmem:[%s0 + $0x131] sm:$0xff]
    %v4004 = vld [vmem:[%s0 + $0x139] sm:$0xff]
    %v4005 = vld [vmem:[%s0 + $0x141] sm:$0xff]
    %v4006 = vld [vmem:[%s0 + $0x149] sm:$0xff]
    %v4007 = vld [vmem:[%s0 + $0x151] sm:$0xff]
    %v4008 = vld [vmem:[%s0 + $0x159] sm:$0xff]
    %v4009 = vld [vmem:[%s0 + $0x161] sm:$0xff]
    %v4010 = vld [vmem:[%s0 + $0x169] sm:$0xff]
    %v4011 = vld [vmem:[%s0 + $0x171] sm:$0xff]
    %v4012 = vld [vmem:[%s0 + $0x179] sm:$0xff]
    %v4013 = vld [vmem:[%s0 + $0x181] sm:$0xff]
    %v4014 = vld [vmem:[%s0 + $0x189] sm:$0xff]
    %v4015 = vld [vmem:[%s0 + $0x191] sm:$0xff]
    %v4016 = vld [vmem:[%s0 + $0x199] sm:$0xff]
    %v4017 = vld [vmem:[%s0 + $0x1a1] sm:$0xff]
    %v4018 = vld [vmem:[%s0 + $0x1a9] sm:$0xff]
    %v4019 = vld [vmem:[%s0 + $0x1b1] sm:$0xff]
    %v4020 = vld [vmem:[%s0 + $0x1b9] sm:$0xff]
    %v4021 = vld [vmem:[%s0 + $0x1c1] sm:$0xff]
    %v4022 = vld [vmem:[%s0 + $0x1c9] sm:$0xff]
    %v4023 = vld [vmem:[%s0 + $0x1d1] sm:$0xff]
    %v4024 = vld [vmem:[%s0 + $0x1d9] sm:$0xff]
    %v4025 = vld [vmem:[%s0 + $0x1e1] sm:$0xff]
    %v4026 = vld [vmem:[%s0 + $0x1e9] sm:$0xff]
    %v4027 = vld [vmem:[%s0 + $0x1f1] sm:$0xff]
    %v4028 = vld [vmem:[%s0 + $0x1f9] sm:$0xff]
    %v4029 = vld [vmem:[%s0 + $0x201] sm:$0xff]
    %v4030 = vld [vmem:[%s0 + $0x209] sm:$0xff]
    %v4031 = vld [vmem:[%s0 + $0x211] sm:$0xff]
    %v4032 = vld [vmem:[%s0 + $0x219] sm:$0xff]
    %v4033 = vld [vmem:[%s0 + $0x221] sm:$0xff]
    %v4034 = vld [vmem:[%s0 + $0x229] sm:$0xff]
    %v4035 = vld [vmem:[%s0 + $0x231] sm:$0xff]
    %v4036 = vld [vmem:[%s0 + $0x239] sm:$0xff]
    %v4037 = vld [vmem:[%s0 + $0x241] sm:$0xff]
    %v4038 = vld [vmem:[%s0 + $0x249] sm:$0xff]
    %v4039 = vld [vmem:[%s0 + $0x251] sm:$0xff]
    %v4040 = vld [vmem:[%s0 + $0x259] sm:$0xff]
    %v4041 = vld [vmem:[%s0 + $0x261] sm:$0xff]
    %v4042 = vld [vmem:[%s0 + $0x269] sm:$0xff]
    %v4043 = vld [vmem:[%s0 + $0x271] sm:$0xff]
    %v4044 = vld [vmem:[%s0 + $0x279] sm:$0xff]
    %v4045 = vld [vmem:[%s0 + $0x281] sm:$0xff]
    %v4046 = vld [vmem:[%s0 + $0x289] sm:$0xff]
    %v4047 = vld [vmem:[%s0 + $0x291] sm:$0xff]
    %v4048 = vld [vmem:[%s0 + $0x299] sm:$0xff]
    %v4049 = vld [vmem:[%s0 + $0x2a1] sm:$0xff]
    %v4050 = vld [vmem:[%s0 + $0x2a9] sm:$0xff]
    %s4051 = scalar_lea.vmem %s2, 24
    %v4052 = vld [vmem:[%s4051] sm:$0xf]
    %v4054 = vsel %vm276, %v3970, 0
    %v4057 = vsel %vm276, %v3971, 0
    %v4060 = vsel %vm276, %v3972, 0
    %v4063 = vsel %vm276, %v3973, 0
    %v4066 = vsel %vm276, %v3974, 0
    %v4069 = vsel %vm276, %v3975, 0
    %v4072 = vsel %vm276, %v3976, 0
    %v4075 = vsel %vm276, %v3977, 0
    %v4078 = vsel %vm276, %v3978, 0
    %v4081 = vsel %vm276, %v3979, 0
    %v4084 = vsel %vm276, %v3980, 0
    %v4087 = vsel %vm276, %v3981, 0
    %v4090 = vsel %vm276, %v3982, 0
    %v4093 = vsel %vm276, %v3983, 0
    %v4096 = vsel %vm276, %v3984, 0
    %v4099 = vsel %vm276, %v3985, 0
    %v4102 = vsel %vm276, %v3986, 0
    %v4105 = vsel %vm276, %v3987, 0
    %v4108 = vsel %vm276, %v3988, 0
    %v4111 = vsel %vm276, %v3989, 0
    %v4114 = vsel %vm276, %v3990, 0
    %v4117 = vsel %vm276, %v3991, 0
    %v4120 = vsel %vm276, %v3992, 0
    %v4123 = vsel %vm276, %v3993, 0
    %v4126 = vsel %vm276, %v3994, 0
    %v4129 = vsel %vm276, %v3995, 0
    %v4132 = vsel %vm276, %v3996, 0
    %v4135 = vsel %vm276, %v3997, 0
    %v4138 = vsel %vm276, %v3998, 0
    %v4141 = vsel %vm276, %v3999, 0
    %v4144 = vsel %vm276, %v4000, 0
    %v4147 = vsel %vm276, %v4001, 0
    %v4150 = vsel %vm276, %v4002, 0
    %v4153 = vsel %vm276, %v4003, 0
    %v4156 = vsel %vm276, %v4004, 0
    %v4159 = vsel %vm276, %v4005, 0
    %v4162 = vsel %vm276, %v4006, 0
    %v4165 = vsel %vm276, %v4007, 0
    %v4168 = vsel %vm276, %v4008, 0
    %v4171 = vsel %vm276, %v4009, 0
    %v4174 = vsel %vm276, %v4010, 0
    %v4177 = vsel %vm276, %v4011, 0
    %v4180 = vsel %vm276, %v4012, 0
    %v4183 = vsel %vm276, %v4013, 0
    %v4186 = vsel %vm276, %v4014, 0
    %v4189 = vsel %vm276, %v4015, 0
    %v4192 = vsel %vm276, %v4016, 0
    %v4195 = vsel %vm276, %v4017, 0
    %v4198 = vsel %vm276, %v4018, 0
    %v4201 = vsel %vm276, %v4019, 0
    %v4204 = vsel %vm276, %v4020, 0
    %v4207 = vsel %vm276, %v4021, 0
    %v4210 = vsel %vm276, %v4022, 0
    %v4213 = vsel %vm276, %v4023, 0
    %v4216 = vsel %vm276, %v4024, 0
    %v4219 = vsel %vm276, %v4025, 0
    %v4222 = vsel %vm276, %v4026, 0
    %v4225 = vsel %vm276, %v4027, 0
    %v4228 = vsel %vm276, %v4028, 0
    %v4231 = vsel %vm276, %v4029, 0
    %v4234 = vsel %vm276, %v4030, 0
    %v4237 = vsel %vm276, %v4031, 0
    %v4240 = vsel %vm276, %v4032, 0
    %v4243 = vsel %vm276, %v4033, 0
    %v4246 = vsel %vm276, %v4034, 0
    %v4249 = vsel %vm276, %v4035, 0
    %v4252 = vsel %vm276, %v4036, 0
    %v4255 = vsel %vm276, %v4037, 0
    %v4258 = vsel %vm276, %v4038, 0
    %v4261 = vsel %vm276, %v4039, 0
    %v4264 = vsel %vm276, %v4040, 0
    %v4267 = vsel %vm276, %v4041, 0
    %v4270 = vsel %vm276, %v4042, 0
    %v4273 = vsel %vm276, %v4043, 0
    %v4276 = vsel %vm276, %v4044, 0
    %v4279 = vsel %vm276, %v4045, 0
    %v4282 = vsel %vm276, %v4046, 0
    %v4285 = vsel %vm276, %v4047, 0
    %v4288 = vsel %vm276, %v4048, 0
    %v4291 = vsel %vm276, %v4049, 0
    %v4294 = vsel %vm276, %v4050, 0
    %v4297 = vsel %vm520, %v4052, 0
    %4299 = vmatpush.msra.mxu0 0.0
    %4300 = vmatpush.msra.mxu0 0.0
    %4301 = vmatpush.msra.mxu0 0.0
    %4302 = vmatpush.msra.mxu0 0.0
    %4303 = vmatpush.msra.mxu0 0.0
    %4304 = vmatpush.msra.mxu0 0.0
    %4305 = vmatpush.msra.mxu0 0.0
    %4306 = vmatpush.msra.mxu0 0.0
    %4307 = vmatpush.msra.mxu0 0.0
    %4308 = vmatpush.msra.mxu0 0.0
    %4309 = vmatpush.msra.mxu0 0.0
    %4310 = vmatpush.msra.mxu0 0.0
    %4311 = vmatpush.msra.mxu0 0.0
    %4312 = vmatpush.msra.mxu0 0.0
    %4313 = vmatpush.msra.mxu0 0.0
    %4314 = vmatpush.msra.mxu0 %v4297
    %4315 = vmatmul.f32.gmra.mxu0 %v4054
    %v4316 = vpop.f32.mrf.mxu0
    %v4317 = vadd.f32 0.0, %v4316
    %4318 = vmatmul.f32.gmra.mxu0 %v4057
    %v4319 = vpop.f32.mrf.mxu0
    %v4320 = vadd.f32 0.0, %v4319
    %4321 = vmatmul.f32.gmra.mxu0 %v4060
    %v4322 = vpop.f32.mrf.mxu0
    %v4323 = vadd.f32 0.0, %v4322
    %4324 = vmatmul.f32.gmra.mxu0 %v4063
    %v4325 = vpop.f32.mrf.mxu0
    %v4326 = vadd.f32 0.0, %v4325
    %4327 = vmatmul.f32.gmra.mxu0 %v4066
    %v4328 = vpop.f32.mrf.mxu0
    %v4329 = vadd.f32 0.0, %v4328
    %4330 = vmatmul.f32.gmra.mxu0 %v4069
    %v4331 = vpop.f32.mrf.mxu0
    %v4332 = vadd.f32 0.0, %v4331
    %4333 = vmatmul.f32.gmra.mxu0 %v4072
    %v4334 = vpop.f32.mrf.mxu0
    %v4335 = vadd.f32 0.0, %v4334
    %4336 = vmatmul.f32.gmra.mxu0 %v4075
    %v4337 = vpop.f32.mrf.mxu0
    %v4338 = vadd.f32 0.0, %v4337
    %4339 = vmatmul.f32.gmra.mxu0 %v4078
    %v4340 = vpop.f32.mrf.mxu0
    %v4341 = vadd.f32 0.0, %v4340
    %4342 = vmatmul.f32.gmra.mxu0 %v4081
    %v4343 = vpop.f32.mrf.mxu0
    %v4344 = vadd.f32 0.0, %v4343
    %4345 = vmatmul.f32.gmra.mxu0 %v4084
    %v4346 = vpop.f32.mrf.mxu0
    %v4347 = vadd.f32 0.0, %v4346
    %4348 = vmatmul.f32.gmra.mxu0 %v4087
    %v4349 = vpop.f32.mrf.mxu0
    %v4350 = vadd.f32 0.0, %v4349
    %4351 = vmatmul.f32.gmra.mxu0 %v4090
    %v4352 = vpop.f32.mrf.mxu0
    %v4353 = vadd.f32 0.0, %v4352
    %4354 = vmatmul.f32.gmra.mxu0 %v4093
    %v4355 = vpop.f32.mrf.mxu0
    %v4356 = vadd.f32 0.0, %v4355
    %4357 = vmatmul.f32.gmra.mxu0 %v4096
    %v4358 = vpop.f32.mrf.mxu0
    %v4359 = vadd.f32 0.0, %v4358
    %4360 = vmatmul.f32.gmra.mxu0 %v4099
    %v4361 = vpop.f32.mrf.mxu0
    %v4362 = vadd.f32 0.0, %v4361
    %4363 = vmatmul.f32.gmra.mxu0 %v4102
    %v4364 = vpop.f32.mrf.mxu0
    %v4365 = vadd.f32 0.0, %v4364
    %4366 = vmatmul.f32.gmra.mxu0 %v4105
    %v4367 = vpop.f32.mrf.mxu0
    %v4368 = vadd.f32 0.0, %v4367
    %4369 = vmatmul.f32.gmra.mxu0 %v4108
    %v4370 = vpop.f32.mrf.mxu0
    %v4371 = vadd.f32 0.0, %v4370
    %4372 = vmatmul.f32.gmra.mxu0 %v4111
    %v4373 = vpop.f32.mrf.mxu0
    %v4374 = vadd.f32 0.0, %v4373
    %4375 = vmatmul.f32.gmra.mxu0 %v4114
    %v4376 = vpop.f32.mrf.mxu0
    %v4377 = vadd.f32 0.0, %v4376
    %4378 = vmatmul.f32.gmra.mxu0 %v4117
    %v4379 = vpop.f32.mrf.mxu0
    %v4380 = vadd.f32 0.0, %v4379
    %4381 = vmatmul.f32.gmra.mxu0 %v4120
    %v4382 = vpop.f32.mrf.mxu0
    %v4383 = vadd.f32 0.0, %v4382
    %4384 = vmatmul.f32.gmra.mxu0 %v4123
    %v4385 = vpop.f32.mrf.mxu0
    %v4386 = vadd.f32 0.0, %v4385
    %4387 = vmatmul.f32.gmra.mxu0 %v4126
    %v4388 = vpop.f32.mrf.mxu0
    %v4389 = vadd.f32 0.0, %v4388
    %4390 = vmatmul.f32.gmra.mxu0 %v4129
    %v4391 = vpop.f32.mrf.mxu0
    %v4392 = vadd.f32 0.0, %v4391
    %4393 = vmatmul.f32.gmra.mxu0 %v4132
    %v4394 = vpop.f32.mrf.mxu0
    %v4395 = vadd.f32 0.0, %v4394
    %4396 = vmatmul.f32.gmra.mxu0 %v4135
    %v4397 = vpop.f32.mrf.mxu0
    %v4398 = vadd.f32 0.0, %v4397
    %4399 = vmatmul.f32.gmra.mxu0 %v4138
    %v4400 = vpop.f32.mrf.mxu0
    %v4401 = vadd.f32 0.0, %v4400
    %4402 = vmatmul.f32.gmra.mxu0 %v4141
    %v4403 = vpop.f32.mrf.mxu0
    %v4404 = vadd.f32 0.0, %v4403
    %4405 = vmatmul.f32.gmra.mxu0 %v4144
    %v4406 = vpop.f32.mrf.mxu0
    %v4407 = vadd.f32 0.0, %v4406
    %4408 = vmatmul.f32.gmra.mxu0 %v4147
    %v4409 = vpop.f32.mrf.mxu0
    %v4410 = vadd.f32 0.0, %v4409
    %4411 = vmatmul.f32.gmra.mxu0 %v4150
    %v4412 = vpop.f32.mrf.mxu0
    %v4413 = vadd.f32 0.0, %v4412
    %4414 = vmatmul.f32.gmra.mxu0 %v4153
    %v4415 = vpop.f32.mrf.mxu0
    %v4416 = vadd.f32 0.0, %v4415
    %4417 = vmatmul.f32.gmra.mxu0 %v4156
    %v4418 = vpop.f32.mrf.mxu0
    %v4419 = vadd.f32 0.0, %v4418
    %4420 = vmatmul.f32.gmra.mxu0 %v4159
    %v4421 = vpop.f32.mrf.mxu0
    %v4422 = vadd.f32 0.0, %v4421
    %4423 = vmatmul.f32.gmra.mxu0 %v4162
    %v4424 = vpop.f32.mrf.mxu0
    %v4425 = vadd.f32 0.0, %v4424
    %4426 = vmatmul.f32.gmra.mxu0 %v4165
    %v4427 = vpop.f32.mrf.mxu0
    %v4428 = vadd.f32 0.0, %v4427
    %4429 = vmatmul.f32.gmra.mxu0 %v4168
    %v4430 = vpop.f32.mrf.mxu0
    %v4431 = vadd.f32 0.0, %v4430
    %4432 = vmatmul.f32.gmra.mxu0 %v4171
    %v4433 = vpop.f32.mrf.mxu0
    %v4434 = vadd.f32 0.0, %v4433
    %4435 = vmatmul.f32.gmra.mxu0 %v4174
    %v4436 = vpop.f32.mrf.mxu0
    %v4437 = vadd.f32 0.0, %v4436
    %4438 = vmatmul.f32.gmra.mxu0 %v4177
    %v4439 = vpop.f32.mrf.mxu0
    %v4440 = vadd.f32 0.0, %v4439
    %4441 = vmatmul.f32.gmra.mxu0 %v4180
    %v4442 = vpop.f32.mrf.mxu0
    %v4443 = vadd.f32 0.0, %v4442
    %4444 = vmatmul.f32.gmra.mxu0 %v4183
    %v4445 = vpop.f32.mrf.mxu0
    %v4446 = vadd.f32 0.0, %v4445
    %4447 = vmatmul.f32.gmra.mxu0 %v4186
    %v4448 = vpop.f32.mrf.mxu0
    %v4449 = vadd.f32 0.0, %v4448
    %4450 = vmatmul.f32.gmra.mxu0 %v4189
    %v4451 = vpop.f32.mrf.mxu0
    %v4452 = vadd.f32 0.0, %v4451
    %4453 = vmatmul.f32.gmra.mxu0 %v4192
    %v4454 = vpop.f32.mrf.mxu0
    %v4455 = vadd.f32 0.0, %v4454
    %4456 = vmatmul.f32.gmra.mxu0 %v4195
    %v4457 = vpop.f32.mrf.mxu0
    %v4458 = vadd.f32 0.0, %v4457
    %4459 = vmatmul.f32.gmra.mxu0 %v4198
    %v4460 = vpop.f32.mrf.mxu0
    %v4461 = vadd.f32 0.0, %v4460
    %4462 = vmatmul.f32.gmra.mxu0 %v4201
    %v4463 = vpop.f32.mrf.mxu0
    %v4464 = vadd.f32 0.0, %v4463
    %4465 = vmatmul.f32.gmra.mxu0 %v4204
    %v4466 = vpop.f32.mrf.mxu0
    %v4467 = vadd.f32 0.0, %v4466
    %4468 = vmatmul.f32.gmra.mxu0 %v4207
    %v4469 = vpop.f32.mrf.mxu0
    %v4470 = vadd.f32 0.0, %v4469
    %4471 = vmatmul.f32.gmra.mxu0 %v4210
    %v4472 = vpop.f32.mrf.mxu0
    %v4473 = vadd.f32 0.0, %v4472
    %4474 = vmatmul.f32.gmra.mxu0 %v4213
    %v4475 = vpop.f32.mrf.mxu0
    %v4476 = vadd.f32 0.0, %v4475
    %4477 = vmatmul.f32.gmra.mxu0 %v4216
    %v4478 = vpop.f32.mrf.mxu0
    %v4479 = vadd.f32 0.0, %v4478
    %4480 = vmatmul.f32.gmra.mxu0 %v4219
    %v4481 = vpop.f32.mrf.mxu0
    %v4482 = vadd.f32 0.0, %v4481
    %4483 = vmatmul.f32.gmra.mxu0 %v4222
    %v4484 = vpop.f32.mrf.mxu0
    %v4485 = vadd.f32 0.0, %v4484
    %4486 = vmatmul.f32.gmra.mxu0 %v4225
    %v4487 = vpop.f32.mrf.mxu0
    %v4488 = vadd.f32 0.0, %v4487
    %4489 = vmatmul.f32.gmra.mxu0 %v4228
    %v4490 = vpop.f32.mrf.mxu0
    %v4491 = vadd.f32 0.0, %v4490
    %4492 = vmatmul.f32.gmra.mxu0 %v4231
    %v4493 = vpop.f32.mrf.mxu0
    %v4494 = vadd.f32 0.0, %v4493
    %4495 = vmatmul.f32.gmra.mxu0 %v4234
    %v4496 = vpop.f32.mrf.mxu0
    %v4497 = vadd.f32 0.0, %v4496
    %4498 = vmatmul.f32.gmra.mxu0 %v4237
    %v4499 = vpop.f32.mrf.mxu0
    %v4500 = vadd.f32 0.0, %v4499
    %4501 = vmatmul.f32.gmra.mxu0 %v4240
    %v4502 = vpop.f32.mrf.mxu0
    %v4503 = vadd.f32 0.0, %v4502
    %4504 = vmatmul.f32.gmra.mxu0 %v4243
    %v4505 = vpop.f32.mrf.mxu0
    %v4506 = vadd.f32 0.0, %v4505
    %4507 = vmatmul.f32.gmra.mxu0 %v4246
    %v4508 = vpop.f32.mrf.mxu0
    %v4509 = vadd.f32 0.0, %v4508
    %4510 = vmatmul.f32.gmra.mxu0 %v4249
    %v4511 = vpop.f32.mrf.mxu0
    %v4512 = vadd.f32 0.0, %v4511
    %4513 = vmatmul.f32.gmra.mxu0 %v4252
    %v4514 = vpop.f32.mrf.mxu0
    %v4515 = vadd.f32 0.0, %v4514
    %4516 = vmatmul.f32.gmra.mxu0 %v4255
    %v4517 = vpop.f32.mrf.mxu0
    %v4518 = vadd.f32 0.0, %v4517
    %4519 = vmatmul.f32.gmra.mxu0 %v4258
    %v4520 = vpop.f32.mrf.mxu0
    %v4521 = vadd.f32 0.0, %v4520
    %4522 = vmatmul.f32.gmra.mxu0 %v4261
    %v4523 = vpop.f32.mrf.mxu0
    %v4524 = vadd.f32 0.0, %v4523
    %4525 = vmatmul.f32.gmra.mxu0 %v4264
    %v4526 = vpop.f32.mrf.mxu0
    %v4527 = vadd.f32 0.0, %v4526
    %4528 = vmatmul.f32.gmra.mxu0 %v4267
    %v4529 = vpop.f32.mrf.mxu0
    %v4530 = vadd.f32 0.0, %v4529
    %4531 = vmatmul.f32.gmra.mxu0 %v4270
    %v4532 = vpop.f32.mrf.mxu0
    %v4533 = vadd.f32 0.0, %v4532
    %4534 = vmatmul.f32.gmra.mxu0 %v4273
    %v4535 = vpop.f32.mrf.mxu0
    %v4536 = vadd.f32 0.0, %v4535
    %4537 = vmatmul.f32.gmra.mxu0 %v4276
    %v4538 = vpop.f32.mrf.mxu0
    %v4539 = vadd.f32 0.0, %v4538
    %4540 = vmatmul.f32.gmra.mxu0 %v4279
    %v4541 = vpop.f32.mrf.mxu0
    %v4542 = vadd.f32 0.0, %v4541
    %4543 = vmatmul.f32.gmra.mxu0 %v4282
    %v4544 = vpop.f32.mrf.mxu0
    %v4545 = vadd.f32 0.0, %v4544
    %4546 = vmatmul.f32.gmra.mxu0 %v4285
    %v4547 = vpop.f32.mrf.mxu0
    %v4548 = vadd.f32 0.0, %v4547
    %4549 = vmatmul.f32.gmra.mxu0 %v4288
    %v4550 = vpop.f32.mrf.mxu0
    %v4551 = vadd.f32 0.0, %v4550
    %4552 = vmatmul.f32.gmra.mxu0 %v4291
    %v4553 = vpop.f32.mrf.mxu0
    %v4554 = vadd.f32 0.0, %v4553
    %4555 = vmatmul.f32.gmra.mxu0 %v4294
    %v4556 = vpop.f32.mrf.mxu0
    %v4557 = vadd.f32 0.0, %v4556
    %4558 = vdwg.mxu0
    %v4559 = vadd.f32 %v3889, %v4317
    %v4560 = vadd.f32 %v3890, %v4320
    %v4561 = vadd.f32 %v3891, %v4323
    %v4562 = vadd.f32 %v3892, %v4326
    %v4563 = vadd.f32 %v3893, %v4329
    %v4564 = vadd.f32 %v3894, %v4332
    %v4565 = vadd.f32 %v3895, %v4335
    %v4566 = vadd.f32 %v3896, %v4338
    %v4567 = vadd.f32 %v3897, %v4341
    %v4568 = vadd.f32 %v3898, %v4344
    %v4569 = vadd.f32 %v3899, %v4347
    %v4570 = vadd.f32 %v3900, %v4350
    %v4571 = vadd.f32 %v3901, %v4353
    %v4572 = vadd.f32 %v3902, %v4356
    %v4573 = vadd.f32 %v3903, %v4359
    %v4574 = vadd.f32 %v3904, %v4362
    %v4575 = vadd.f32 %v3905, %v4365
    %v4576 = vadd.f32 %v3906, %v4368
    %v4577 = vadd.f32 %v3907, %v4371
    %v4578 = vadd.f32 %v3908, %v4374
    %v4579 = vadd.f32 %v3909, %v4377
    %v4580 = vadd.f32 %v3910, %v4380
    %v4581 = vadd.f32 %v3911, %v4383
    %v4582 = vadd.f32 %v3912, %v4386
    %v4583 = vadd.f32 %v3913, %v4389
    %v4584 = vadd.f32 %v3914, %v4392
    %v4585 = vadd.f32 %v3915, %v4395
    %v4586 = vadd.f32 %v3916, %v4398
    %v4587 = vadd.f32 %v3917, %v4401
    %v4588 = vadd.f32 %v3918, %v4404
    %v4589 = vadd.f32 %v3919, %v4407
    %v4590 = vadd.f32 %v3920, %v4410
    %v4591 = vadd.f32 %v3921, %v4413
    %v4592 = vadd.f32 %v3922, %v4416
    %v4593 = vadd.f32 %v3923, %v4419
    %v4594 = vadd.f32 %v3924, %v4422
    %v4595 = vadd.f32 %v3925, %v4425
    %v4596 = vadd.f32 %v3926, %v4428
    %v4597 = vadd.f32 %v3927, %v4431
    %v4598 = vadd.f32 %v3928, %v4434
    %v4599 = vadd.f32 %v3929, %v4437
    %v4600 = vadd.f32 %v3930, %v4440
    %v4601 = vadd.f32 %v3931, %v4443
    %v4602 = vadd.f32 %v3932, %v4446
    %v4603 = vadd.f32 %v3933, %v4449
    %v4604 = vadd.f32 %v3934, %v4452
    %v4605 = vadd.f32 %v3935, %v4455
    %v4606 = vadd.f32 %v3936, %v4458
    %v4607 = vadd.f32 %v3937, %v4461
    %v4608 = vadd.f32 %v3938, %v4464
    %v4609 = vadd.f32 %v3939, %v4467
    %v4610 = vadd.f32 %v3940, %v4470
    %v4611 = vadd.f32 %v3941, %v4473
    %v4612 = vadd.f32 %v3942, %v4476
    %v4613 = vadd.f32 %v3943, %v4479
    %v4614 = vadd.f32 %v3944, %v4482
    %v4615 = vadd.f32 %v3945, %v4485
    %v4616 = vadd.f32 %v3946, %v4488
    %v4617 = vadd.f32 %v3947, %v4491
    %v4618 = vadd.f32 %v3948, %v4494
    %v4619 = vadd.f32 %v3949, %v4497
    %v4620 = vadd.f32 %v3950, %v4500
    %v4621 = vadd.f32 %v3951, %v4503
    %v4622 = vadd.f32 %v3952, %v4506
    %v4623 = vadd.f32 %v3953, %v4509
    %v4624 = vadd.f32 %v3954, %v4512
    %v4625 = vadd.f32 %v3955, %v4515
    %v4626 = vadd.f32 %v3956, %v4518
    %v4627 = vadd.f32 %v3957, %v4521
    %v4628 = vadd.f32 %v3958, %v4524
    %v4629 = vadd.f32 %v3959, %v4527
    %v4630 = vadd.f32 %v3960, %v4530
    %v4631 = vadd.f32 %v3961, %v4533
    %v4632 = vadd.f32 %v3962, %v4536
    %v4633 = vadd.f32 %v3963, %v4539
    %v4634 = vadd.f32 %v3964, %v4542
    %v4635 = vadd.f32 %v3965, %v4545
    %v4636 = vadd.f32 %v3966, %v4548
    %v4637 = vadd.f32 %v3967, %v4551
    %v4638 = vadd.f32 %v3968, %v4554
    %v4639 = vadd.f32 %v3969, %v4557
    %v4640 = vld [vmem:[%s0 + $0x2a] sm:$0xff]
    %v4641 = vld [vmem:[%s0 + $0x32] sm:$0xff]
    %v4642 = vld [vmem:[%s0 + $0x3a] sm:$0xff]
    %v4643 = vld [vmem:[%s0 + $0x42] sm:$0xff]
    %v4644 = vld [vmem:[%s0 + $0x4a] sm:$0xff]
    %v4645 = vld [vmem:[%s0 + $0x52] sm:$0xff]
    %v4646 = vld [vmem:[%s0 + $0x5a] sm:$0xff]
    %v4647 = vld [vmem:[%s0 + $0x62] sm:$0xff]
    %v4648 = vld [vmem:[%s0 + $0x6a] sm:$0xff]
    %v4649 = vld [vmem:[%s0 + $0x72] sm:$0xff]
    %v4650 = vld [vmem:[%s0 + $0x7a] sm:$0xff]
    %v4651 = vld [vmem:[%s0 + $0x82] sm:$0xff]
    %v4652 = vld [vmem:[%s0 + $0x8a] sm:$0xff]
    %v4653 = vld [vmem:[%s0 + $0x92] sm:$0xff]
    %v4654 = vld [vmem:[%s0 + $0x9a] sm:$0xff]
    %v4655 = vld [vmem:[%s0 + $0xa2] sm:$0xff]
    %v4656 = vld [vmem:[%s0 + $0xaa] sm:$0xff]
    %v4657 = vld [vmem:[%s0 + $0xb2] sm:$0xff]
    %v4658 = vld [vmem:[%s0 + $0xba] sm:$0xff]
    %v4659 = vld [vmem:[%s0 + $0xc2] sm:$0xff]
    %v4660 = vld [vmem:[%s0 + $0xca] sm:$0xff]
    %v4661 = vld [vmem:[%s0 + $0xd2] sm:$0xff]
    %v4662 = vld [vmem:[%s0 + $0xda] sm:$0xff]
    %v4663 = vld [vmem:[%s0 + $0xe2] sm:$0xff]
    %v4664 = vld [vmem:[%s0 + $0xea] sm:$0xff]
    %v4665 = vld [vmem:[%s0 + $0xf2] sm:$0xff]
    %v4666 = vld [vmem:[%s0 + $0xfa] sm:$0xff]
    %v4667 = vld [vmem:[%s0 + $0x102] sm:$0xff]
    %v4668 = vld [vmem:[%s0 + $0x10a] sm:$0xff]
    %v4669 = vld [vmem:[%s0 + $0x112] sm:$0xff]
    %v4670 = vld [vmem:[%s0 + $0x11a] sm:$0xff]
    %v4671 = vld [vmem:[%s0 + $0x122] sm:$0xff]
    %v4672 = vld [vmem:[%s0 + $0x12a] sm:$0xff]
    %v4673 = vld [vmem:[%s0 + $0x132] sm:$0xff]
    %v4674 = vld [vmem:[%s0 + $0x13a] sm:$0xff]
    %v4675 = vld [vmem:[%s0 + $0x142] sm:$0xff]
    %v4676 = vld [vmem:[%s0 + $0x14a] sm:$0xff]
    %v4677 = vld [vmem:[%s0 + $0x152] sm:$0xff]
    %v4678 = vld [vmem:[%s0 + $0x15a] sm:$0xff]
    %v4679 = vld [vmem:[%s0 + $0x162] sm:$0xff]
    %v4680 = vld [vmem:[%s0 + $0x16a] sm:$0xff]
    %v4681 = vld [vmem:[%s0 + $0x172] sm:$0xff]
    %v4682 = vld [vmem:[%s0 + $0x17a] sm:$0xff]
    %v4683 = vld [vmem:[%s0 + $0x182] sm:$0xff]
    %v4684 = vld [vmem:[%s0 + $0x18a] sm:$0xff]
    %v4685 = vld [vmem:[%s0 + $0x192] sm:$0xff]
    %v4686 = vld [vmem:[%s0 + $0x19a] sm:$0xff]
    %v4687 = vld [vmem:[%s0 + $0x1a2] sm:$0xff]
    %v4688 = vld [vmem:[%s0 + $0x1aa] sm:$0xff]
    %v4689 = vld [vmem:[%s0 + $0x1b2] sm:$0xff]
    %v4690 = vld [vmem:[%s0 + $0x1ba] sm:$0xff]
    %v4691 = vld [vmem:[%s0 + $0x1c2] sm:$0xff]
    %v4692 = vld [vmem:[%s0 + $0x1ca] sm:$0xff]
    %v4693 = vld [vmem:[%s0 + $0x1d2] sm:$0xff]
    %v4694 = vld [vmem:[%s0 + $0x1da] sm:$0xff]
    %v4695 = vld [vmem:[%s0 + $0x1e2] sm:$0xff]
    %v4696 = vld [vmem:[%s0 + $0x1ea] sm:$0xff]
    %v4697 = vld [vmem:[%s0 + $0x1f2] sm:$0xff]
    %v4698 = vld [vmem:[%s0 + $0x1fa] sm:$0xff]
    %v4699 = vld [vmem:[%s0 + $0x202] sm:$0xff]
    %v4700 = vld [vmem:[%s0 + $0x20a] sm:$0xff]
    %v4701 = vld [vmem:[%s0 + $0x212] sm:$0xff]
    %v4702 = vld [vmem:[%s0 + $0x21a] sm:$0xff]
    %v4703 = vld [vmem:[%s0 + $0x222] sm:$0xff]
    %v4704 = vld [vmem:[%s0 + $0x22a] sm:$0xff]
    %v4705 = vld [vmem:[%s0 + $0x232] sm:$0xff]
    %v4706 = vld [vmem:[%s0 + $0x23a] sm:$0xff]
    %v4707 = vld [vmem:[%s0 + $0x242] sm:$0xff]
    %v4708 = vld [vmem:[%s0 + $0x24a] sm:$0xff]
    %v4709 = vld [vmem:[%s0 + $0x252] sm:$0xff]
    %v4710 = vld [vmem:[%s0 + $0x25a] sm:$0xff]
    %v4711 = vld [vmem:[%s0 + $0x262] sm:$0xff]
    %v4712 = vld [vmem:[%s0 + $0x26a] sm:$0xff]
    %v4713 = vld [vmem:[%s0 + $0x272] sm:$0xff]
    %v4714 = vld [vmem:[%s0 + $0x27a] sm:$0xff]
    %v4715 = vld [vmem:[%s0 + $0x282] sm:$0xff]
    %v4716 = vld [vmem:[%s0 + $0x28a] sm:$0xff]
    %v4717 = vld [vmem:[%s0 + $0x292] sm:$0xff]
    %v4718 = vld [vmem:[%s0 + $0x29a] sm:$0xff]
    %v4719 = vld [vmem:[%s0 + $0x2a2] sm:$0xff]
    %v4720 = vld [vmem:[%s0 + $0x2aa] sm:$0xff]
    %s4721 = scalar_lea.vmem %s2, 28
    %v4722 = vld [vmem:[%s4721] sm:$0xf]
    %v4724 = vsel %vm276, %v4640, 0
    %v4727 = vsel %vm276, %v4641, 0
    %v4730 = vsel %vm276, %v4642, 0
    %v4733 = vsel %vm276, %v4643, 0
    %v4736 = vsel %vm276, %v4644, 0
    %v4739 = vsel %vm276, %v4645, 0
    %v4742 = vsel %vm276, %v4646, 0
    %v4745 = vsel %vm276, %v4647, 0
    %v4748 = vsel %vm276, %v4648, 0
    %v4751 = vsel %vm276, %v4649, 0
    %v4754 = vsel %vm276, %v4650, 0
    %v4757 = vsel %vm276, %v4651, 0
    %v4760 = vsel %vm276, %v4652, 0
    %v4763 = vsel %vm276, %v4653, 0
    %v4766 = vsel %vm276, %v4654, 0
    %v4769 = vsel %vm276, %v4655, 0
    %v4772 = vsel %vm276, %v4656, 0
    %v4775 = vsel %vm276, %v4657, 0
    %v4778 = vsel %vm276, %v4658, 0
    %v4781 = vsel %vm276, %v4659, 0
    %v4784 = vsel %vm276, %v4660, 0
    %v4787 = vsel %vm276, %v4661, 0
    %v4790 = vsel %vm276, %v4662, 0
    %v4793 = vsel %vm276, %v4663, 0
    %v4796 = vsel %vm276, %v4664, 0
    %v4799 = vsel %vm276, %v4665, 0
    %v4802 = vsel %vm276, %v4666, 0
    %v4805 = vsel %vm276, %v4667, 0
    %v4808 = vsel %vm276, %v4668, 0
    %v4811 = vsel %vm276, %v4669, 0
    %v4814 = vsel %vm276, %v4670, 0
    %v4817 = vsel %vm276, %v4671, 0
    %v4820 = vsel %vm276, %v4672, 0
    %v4823 = vsel %vm276, %v4673, 0
    %v4826 = vsel %vm276, %v4674, 0
    %v4829 = vsel %vm276, %v4675, 0
    %v4832 = vsel %vm276, %v4676, 0
    %v4835 = vsel %vm276, %v4677, 0
    %v4838 = vsel %vm276, %v4678, 0
    %v4841 = vsel %vm276, %v4679, 0
    %v4844 = vsel %vm276, %v4680, 0
    %v4847 = vsel %vm276, %v4681, 0
    %v4850 = vsel %vm276, %v4682, 0
    %v4853 = vsel %vm276, %v4683, 0
    %v4856 = vsel %vm276, %v4684, 0
    %v4859 = vsel %vm276, %v4685, 0
    %v4862 = vsel %vm276, %v4686, 0
    %v4865 = vsel %vm276, %v4687, 0
    %v4868 = vsel %vm276, %v4688, 0
    %v4871 = vsel %vm276, %v4689, 0
    %v4874 = vsel %vm276, %v4690, 0
    %v4877 = vsel %vm276, %v4691, 0
    %v4880 = vsel %vm276, %v4692, 0
    %v4883 = vsel %vm276, %v4693, 0
    %v4886 = vsel %vm276, %v4694, 0
    %v4889 = vsel %vm276, %v4695, 0
    %v4892 = vsel %vm276, %v4696, 0
    %v4895 = vsel %vm276, %v4697, 0
    %v4898 = vsel %vm276, %v4698, 0
    %v4901 = vsel %vm276, %v4699, 0
    %v4904 = vsel %vm276, %v4700, 0
    %v4907 = vsel %vm276, %v4701, 0
    %v4910 = vsel %vm276, %v4702, 0
    %v4913 = vsel %vm276, %v4703, 0
    %v4916 = vsel %vm276, %v4704, 0
    %v4919 = vsel %vm276, %v4705, 0
    %v4922 = vsel %vm276, %v4706, 0
    %v4925 = vsel %vm276, %v4707, 0
    %v4928 = vsel %vm276, %v4708, 0
    %v4931 = vsel %vm276, %v4709, 0
    %v4934 = vsel %vm276, %v4710, 0
    %v4937 = vsel %vm276, %v4711, 0
    %v4940 = vsel %vm276, %v4712, 0
    %v4943 = vsel %vm276, %v4713, 0
    %v4946 = vsel %vm276, %v4714, 0
    %v4949 = vsel %vm276, %v4715, 0
    %v4952 = vsel %vm276, %v4716, 0
    %v4955 = vsel %vm276, %v4717, 0
    %v4958 = vsel %vm276, %v4718, 0
    %v4961 = vsel %vm276, %v4719, 0
    %v4964 = vsel %vm276, %v4720, 0
    %v4967 = vsel %vm520, %v4722, 0
    %4969 = vmatpush.msra.mxu0 0.0
    %4970 = vmatpush.msra.mxu0 0.0
    %4971 = vmatpush.msra.mxu0 0.0
    %4972 = vmatpush.msra.mxu0 0.0
    %4973 = vmatpush.msra.mxu0 0.0
    %4974 = vmatpush.msra.mxu0 0.0
    %4975 = vmatpush.msra.mxu0 0.0
    %4976 = vmatpush.msra.mxu0 0.0
    %4977 = vmatpush.msra.mxu0 0.0
    %4978 = vmatpush.msra.mxu0 0.0
    %4979 = vmatpush.msra.mxu0 0.0
    %4980 = vmatpush.msra.mxu0 0.0
    %4981 = vmatpush.msra.mxu0 0.0
    %4982 = vmatpush.msra.mxu0 0.0
    %4983 = vmatpush.msra.mxu0 0.0
    %4984 = vmatpush.msra.mxu0 %v4967
    %4985 = vmatmul.f32.gmra.mxu0 %v4724
    %v4986 = vpop.f32.mrf.mxu0
    %v4987 = vadd.f32 0.0, %v4986
    %4988 = vmatmul.f32.gmra.mxu0 %v4727
    %v4989 = vpop.f32.mrf.mxu0
    %v4990 = vadd.f32 0.0, %v4989
    %4991 = vmatmul.f32.gmra.mxu0 %v4730
    %v4992 = vpop.f32.mrf.mxu0
    %v4993 = vadd.f32 0.0, %v4992
    %4994 = vmatmul.f32.gmra.mxu0 %v4733
    %v4995 = vpop.f32.mrf.mxu0
    %v4996 = vadd.f32 0.0, %v4995
    %4997 = vmatmul.f32.gmra.mxu0 %v4736
    %v4998 = vpop.f32.mrf.mxu0
    %v4999 = vadd.f32 0.0, %v4998
    %5000 = vmatmul.f32.gmra.mxu0 %v4739
    %v5001 = vpop.f32.mrf.mxu0
    %v5002 = vadd.f32 0.0, %v5001
    %5003 = vmatmul.f32.gmra.mxu0 %v4742
    %v5004 = vpop.f32.mrf.mxu0
    %v5005 = vadd.f32 0.0, %v5004
    %5006 = vmatmul.f32.gmra.mxu0 %v4745
    %v5007 = vpop.f32.mrf.mxu0
    %v5008 = vadd.f32 0.0, %v5007
    %5009 = vmatmul.f32.gmra.mxu0 %v4748
    %v5010 = vpop.f32.mrf.mxu0
    %v5011 = vadd.f32 0.0, %v5010
    %5012 = vmatmul.f32.gmra.mxu0 %v4751
    %v5013 = vpop.f32.mrf.mxu0
    %v5014 = vadd.f32 0.0, %v5013
    %5015 = vmatmul.f32.gmra.mxu0 %v4754
    %v5016 = vpop.f32.mrf.mxu0
    %v5017 = vadd.f32 0.0, %v5016
    %5018 = vmatmul.f32.gmra.mxu0 %v4757
    %v5019 = vpop.f32.mrf.mxu0
    %v5020 = vadd.f32 0.0, %v5019
    %5021 = vmatmul.f32.gmra.mxu0 %v4760
    %v5022 = vpop.f32.mrf.mxu0
    %v5023 = vadd.f32 0.0, %v5022
    %5024 = vmatmul.f32.gmra.mxu0 %v4763
    %v5025 = vpop.f32.mrf.mxu0
    %v5026 = vadd.f32 0.0, %v5025
    %5027 = vmatmul.f32.gmra.mxu0 %v4766
    %v5028 = vpop.f32.mrf.mxu0
    %v5029 = vadd.f32 0.0, %v5028
    %5030 = vmatmul.f32.gmra.mxu0 %v4769
    %v5031 = vpop.f32.mrf.mxu0
    %v5032 = vadd.f32 0.0, %v5031
    %5033 = vmatmul.f32.gmra.mxu0 %v4772
    %v5034 = vpop.f32.mrf.mxu0
    %v5035 = vadd.f32 0.0, %v5034
    %5036 = vmatmul.f32.gmra.mxu0 %v4775
    %v5037 = vpop.f32.mrf.mxu0
    %v5038 = vadd.f32 0.0, %v5037
    %5039 = vmatmul.f32.gmra.mxu0 %v4778
    %v5040 = vpop.f32.mrf.mxu0
    %v5041 = vadd.f32 0.0, %v5040
    %5042 = vmatmul.f32.gmra.mxu0 %v4781
    %v5043 = vpop.f32.mrf.mxu0
    %v5044 = vadd.f32 0.0, %v5043
    %5045 = vmatmul.f32.gmra.mxu0 %v4784
    %v5046 = vpop.f32.mrf.mxu0
    %v5047 = vadd.f32 0.0, %v5046
    %5048 = vmatmul.f32.gmra.mxu0 %v4787
    %v5049 = vpop.f32.mrf.mxu0
    %v5050 = vadd.f32 0.0, %v5049
    %5051 = vmatmul.f32.gmra.mxu0 %v4790
    %v5052 = vpop.f32.mrf.mxu0
    %v5053 = vadd.f32 0.0, %v5052
    %5054 = vmatmul.f32.gmra.mxu0 %v4793
    %v5055 = vpop.f32.mrf.mxu0
    %v5056 = vadd.f32 0.0, %v5055
    %5057 = vmatmul.f32.gmra.mxu0 %v4796
    %v5058 = vpop.f32.mrf.mxu0
    %v5059 = vadd.f32 0.0, %v5058
    %5060 = vmatmul.f32.gmra.mxu0 %v4799
    %v5061 = vpop.f32.mrf.mxu0
    %v5062 = vadd.f32 0.0, %v5061
    %5063 = vmatmul.f32.gmra.mxu0 %v4802
    %v5064 = vpop.f32.mrf.mxu0
    %v5065 = vadd.f32 0.0, %v5064
    %5066 = vmatmul.f32.gmra.mxu0 %v4805
    %v5067 = vpop.f32.mrf.mxu0
    %v5068 = vadd.f32 0.0, %v5067
    %5069 = vmatmul.f32.gmra.mxu0 %v4808
    %v5070 = vpop.f32.mrf.mxu0
    %v5071 = vadd.f32 0.0, %v5070
    %5072 = vmatmul.f32.gmra.mxu0 %v4811
    %v5073 = vpop.f32.mrf.mxu0
    %v5074 = vadd.f32 0.0, %v5073
    %5075 = vmatmul.f32.gmra.mxu0 %v4814
    %v5076 = vpop.f32.mrf.mxu0
    %v5077 = vadd.f32 0.0, %v5076
    %5078 = vmatmul.f32.gmra.mxu0 %v4817
    %v5079 = vpop.f32.mrf.mxu0
    %v5080 = vadd.f32 0.0, %v5079
    %5081 = vmatmul.f32.gmra.mxu0 %v4820
    %v5082 = vpop.f32.mrf.mxu0
    %v5083 = vadd.f32 0.0, %v5082
    %5084 = vmatmul.f32.gmra.mxu0 %v4823
    %v5085 = vpop.f32.mrf.mxu0
    %v5086 = vadd.f32 0.0, %v5085
    %5087 = vmatmul.f32.gmra.mxu0 %v4826
    %v5088 = vpop.f32.mrf.mxu0
    %v5089 = vadd.f32 0.0, %v5088
    %5090 = vmatmul.f32.gmra.mxu0 %v4829
    %v5091 = vpop.f32.mrf.mxu0
    %v5092 = vadd.f32 0.0, %v5091
    %5093 = vmatmul.f32.gmra.mxu0 %v4832
    %v5094 = vpop.f32.mrf.mxu0
    %v5095 = vadd.f32 0.0, %v5094
    %5096 = vmatmul.f32.gmra.mxu0 %v4835
    %v5097 = vpop.f32.mrf.mxu0
    %v5098 = vadd.f32 0.0, %v5097
    %5099 = vmatmul.f32.gmra.mxu0 %v4838
    %v5100 = vpop.f32.mrf.mxu0
    %v5101 = vadd.f32 0.0, %v5100
    %5102 = vmatmul.f32.gmra.mxu0 %v4841
    %v5103 = vpop.f32.mrf.mxu0
    %v5104 = vadd.f32 0.0, %v5103
    %5105 = vmatmul.f32.gmra.mxu0 %v4844
    %v5106 = vpop.f32.mrf.mxu0
    %v5107 = vadd.f32 0.0, %v5106
    %5108 = vmatmul.f32.gmra.mxu0 %v4847
    %v5109 = vpop.f32.mrf.mxu0
    %v5110 = vadd.f32 0.0, %v5109
    %5111 = vmatmul.f32.gmra.mxu0 %v4850
    %v5112 = vpop.f32.mrf.mxu0
    %v5113 = vadd.f32 0.0, %v5112
    %5114 = vmatmul.f32.gmra.mxu0 %v4853
    %v5115 = vpop.f32.mrf.mxu0
    %v5116 = vadd.f32 0.0, %v5115
    %5117 = vmatmul.f32.gmra.mxu0 %v4856
    %v5118 = vpop.f32.mrf.mxu0
    %v5119 = vadd.f32 0.0, %v5118
    %5120 = vmatmul.f32.gmra.mxu0 %v4859
    %v5121 = vpop.f32.mrf.mxu0
    %v5122 = vadd.f32 0.0, %v5121
    %5123 = vmatmul.f32.gmra.mxu0 %v4862
    %v5124 = vpop.f32.mrf.mxu0
    %v5125 = vadd.f32 0.0, %v5124
    %5126 = vmatmul.f32.gmra.mxu0 %v4865
    %v5127 = vpop.f32.mrf.mxu0
    %v5128 = vadd.f32 0.0, %v5127
    %5129 = vmatmul.f32.gmra.mxu0 %v4868
    %v5130 = vpop.f32.mrf.mxu0
    %v5131 = vadd.f32 0.0, %v5130
    %5132 = vmatmul.f32.gmra.mxu0 %v4871
    %v5133 = vpop.f32.mrf.mxu0
    %v5134 = vadd.f32 0.0, %v5133
    %5135 = vmatmul.f32.gmra.mxu0 %v4874
    %v5136 = vpop.f32.mrf.mxu0
    %v5137 = vadd.f32 0.0, %v5136
    %5138 = vmatmul.f32.gmra.mxu0 %v4877
    %v5139 = vpop.f32.mrf.mxu0
    %v5140 = vadd.f32 0.0, %v5139
    %5141 = vmatmul.f32.gmra.mxu0 %v4880
    %v5142 = vpop.f32.mrf.mxu0
    %v5143 = vadd.f32 0.0, %v5142
    %5144 = vmatmul.f32.gmra.mxu0 %v4883
    %v5145 = vpop.f32.mrf.mxu0
    %v5146 = vadd.f32 0.0, %v5145
    %5147 = vmatmul.f32.gmra.mxu0 %v4886
    %v5148 = vpop.f32.mrf.mxu0
    %v5149 = vadd.f32 0.0, %v5148
    %5150 = vmatmul.f32.gmra.mxu0 %v4889
    %v5151 = vpop.f32.mrf.mxu0
    %v5152 = vadd.f32 0.0, %v5151
    %5153 = vmatmul.f32.gmra.mxu0 %v4892
    %v5154 = vpop.f32.mrf.mxu0
    %v5155 = vadd.f32 0.0, %v5154
    %5156 = vmatmul.f32.gmra.mxu0 %v4895
    %v5157 = vpop.f32.mrf.mxu0
    %v5158 = vadd.f32 0.0, %v5157
    %5159 = vmatmul.f32.gmra.mxu0 %v4898
    %v5160 = vpop.f32.mrf.mxu0
    %v5161 = vadd.f32 0.0, %v5160
    %5162 = vmatmul.f32.gmra.mxu0 %v4901
    %v5163 = vpop.f32.mrf.mxu0
    %v5164 = vadd.f32 0.0, %v5163
    %5165 = vmatmul.f32.gmra.mxu0 %v4904
    %v5166 = vpop.f32.mrf.mxu0
    %v5167 = vadd.f32 0.0, %v5166
    %5168 = vmatmul.f32.gmra.mxu0 %v4907
    %v5169 = vpop.f32.mrf.mxu0
    %v5170 = vadd.f32 0.0, %v5169
    %5171 = vmatmul.f32.gmra.mxu0 %v4910
    %v5172 = vpop.f32.mrf.mxu0
    %v5173 = vadd.f32 0.0, %v5172
    %5174 = vmatmul.f32.gmra.mxu0 %v4913
    %v5175 = vpop.f32.mrf.mxu0
    %v5176 = vadd.f32 0.0, %v5175
    %5177 = vmatmul.f32.gmra.mxu0 %v4916
    %v5178 = vpop.f32.mrf.mxu0
    %v5179 = vadd.f32 0.0, %v5178
    %5180 = vmatmul.f32.gmra.mxu0 %v4919
    %v5181 = vpop.f32.mrf.mxu0
    %v5182 = vadd.f32 0.0, %v5181
    %5183 = vmatmul.f32.gmra.mxu0 %v4922
    %v5184 = vpop.f32.mrf.mxu0
    %v5185 = vadd.f32 0.0, %v5184
    %5186 = vmatmul.f32.gmra.mxu0 %v4925
    %v5187 = vpop.f32.mrf.mxu0
    %v5188 = vadd.f32 0.0, %v5187
    %5189 = vmatmul.f32.gmra.mxu0 %v4928
    %v5190 = vpop.f32.mrf.mxu0
    %v5191 = vadd.f32 0.0, %v5190
    %5192 = vmatmul.f32.gmra.mxu0 %v4931
    %v5193 = vpop.f32.mrf.mxu0
    %v5194 = vadd.f32 0.0, %v5193
    %5195 = vmatmul.f32.gmra.mxu0 %v4934
    %v5196 = vpop.f32.mrf.mxu0
    %v5197 = vadd.f32 0.0, %v5196
    %5198 = vmatmul.f32.gmra.mxu0 %v4937
    %v5199 = vpop.f32.mrf.mxu0
    %v5200 = vadd.f32 0.0, %v5199
    %5201 = vmatmul.f32.gmra.mxu0 %v4940
    %v5202 = vpop.f32.mrf.mxu0
    %v5203 = vadd.f32 0.0, %v5202
    %5204 = vmatmul.f32.gmra.mxu0 %v4943
    %v5205 = vpop.f32.mrf.mxu0
    %v5206 = vadd.f32 0.0, %v5205
    %5207 = vmatmul.f32.gmra.mxu0 %v4946
    %v5208 = vpop.f32.mrf.mxu0
    %v5209 = vadd.f32 0.0, %v5208
    %5210 = vmatmul.f32.gmra.mxu0 %v4949
    %v5211 = vpop.f32.mrf.mxu0
    %v5212 = vadd.f32 0.0, %v5211
    %5213 = vmatmul.f32.gmra.mxu0 %v4952
    %v5214 = vpop.f32.mrf.mxu0
    %v5215 = vadd.f32 0.0, %v5214
    %5216 = vmatmul.f32.gmra.mxu0 %v4955
    %v5217 = vpop.f32.mrf.mxu0
    %v5218 = vadd.f32 0.0, %v5217
    %5219 = vmatmul.f32.gmra.mxu0 %v4958
    %v5220 = vpop.f32.mrf.mxu0
    %v5221 = vadd.f32 0.0, %v5220
    %5222 = vmatmul.f32.gmra.mxu0 %v4961
    %v5223 = vpop.f32.mrf.mxu0
    %v5224 = vadd.f32 0.0, %v5223
    %5225 = vmatmul.f32.gmra.mxu0 %v4964
    %v5226 = vpop.f32.mrf.mxu0
    %v5227 = vadd.f32 0.0, %v5226
    %5228 = vdwg.mxu0
    %v5229 = vadd.f32 %v4559, %v4987
    %v5230 = vadd.f32 %v4560, %v4990
    %v5231 = vadd.f32 %v4561, %v4993
    %v5232 = vadd.f32 %v4562, %v4996
    %v5233 = vadd.f32 %v4563, %v4999
    %v5234 = vadd.f32 %v4564, %v5002
    %v5235 = vadd.f32 %v4565, %v5005
    %v5236 = vadd.f32 %v4566, %v5008
    %v5237 = vadd.f32 %v4567, %v5011
    %v5238 = vadd.f32 %v4568, %v5014
    %v5239 = vadd.f32 %v4569, %v5017
    %v5240 = vadd.f32 %v4570, %v5020
    %v5241 = vadd.f32 %v4571, %v5023
    %v5242 = vadd.f32 %v4572, %v5026
    %v5243 = vadd.f32 %v4573, %v5029
    %v5244 = vadd.f32 %v4574, %v5032
    %v5245 = vadd.f32 %v4575, %v5035
    %v5246 = vadd.f32 %v4576, %v5038
    %v5247 = vadd.f32 %v4577, %v5041
    %v5248 = vadd.f32 %v4578, %v5044
    %v5249 = vadd.f32 %v4579, %v5047
    %v5250 = vadd.f32 %v4580, %v5050
    %v5251 = vadd.f32 %v4581, %v5053
    %v5252 = vadd.f32 %v4582, %v5056
    %v5253 = vadd.f32 %v4583, %v5059
    %v5254 = vadd.f32 %v4584, %v5062
    %v5255 = vadd.f32 %v4585, %v5065
    %v5256 = vadd.f32 %v4586, %v5068
    %v5257 = vadd.f32 %v4587, %v5071
    %v5258 = vadd.f32 %v4588, %v5074
    %v5259 = vadd.f32 %v4589, %v5077
    %v5260 = vadd.f32 %v4590, %v5080
    %v5261 = vadd.f32 %v4591, %v5083
    %v5262 = vadd.f32 %v4592, %v5086
    %v5263 = vadd.f32 %v4593, %v5089
    %v5264 = vadd.f32 %v4594, %v5092
    %v5265 = vadd.f32 %v4595, %v5095
    %v5266 = vadd.f32 %v4596, %v5098
    %v5267 = vadd.f32 %v4597, %v5101
    %v5268 = vadd.f32 %v4598, %v5104
    %v5269 = vadd.f32 %v4599, %v5107
    %v5270 = vadd.f32 %v4600, %v5110
    %v5271 = vadd.f32 %v4601, %v5113
    %v5272 = vadd.f32 %v4602, %v5116
    %v5273 = vadd.f32 %v4603, %v5119
    %v5274 = vadd.f32 %v4604, %v5122
    %v5275 = vadd.f32 %v4605, %v5125
    %v5276 = vadd.f32 %v4606, %v5128
    %v5277 = vadd.f32 %v4607, %v5131
    %v5278 = vadd.f32 %v4608, %v5134
    %v5279 = vadd.f32 %v4609, %v5137
    %v5280 = vadd.f32 %v4610, %v5140
    %v5281 = vadd.f32 %v4611, %v5143
    %v5282 = vadd.f32 %v4612, %v5146
    %v5283 = vadd.f32 %v4613, %v5149
    %v5284 = vadd.f32 %v4614, %v5152
    %v5285 = vadd.f32 %v4615, %v5155
    %v5286 = vadd.f32 %v4616, %v5158
    %v5287 = vadd.f32 %v4617, %v5161
    %v5288 = vadd.f32 %v4618, %v5164
    %v5289 = vadd.f32 %v4619, %v5167
    %v5290 = vadd.f32 %v4620, %v5170
    %v5291 = vadd.f32 %v4621, %v5173
    %v5292 = vadd.f32 %v4622, %v5176
    %v5293 = vadd.f32 %v4623, %v5179
    %v5294 = vadd.f32 %v4624, %v5182
    %v5295 = vadd.f32 %v4625, %v5185
    %v5296 = vadd.f32 %v4626, %v5188
    %v5297 = vadd.f32 %v4627, %v5191
    %v5298 = vadd.f32 %v4628, %v5194
    %v5299 = vadd.f32 %v4629, %v5197
    %v5300 = vadd.f32 %v4630, %v5200
    %v5301 = vadd.f32 %v4631, %v5203
    %v5302 = vadd.f32 %v4632, %v5206
    %v5303 = vadd.f32 %v4633, %v5209
    %v5304 = vadd.f32 %v4634, %v5212
    %v5305 = vadd.f32 %v4635, %v5215
    %v5306 = vadd.f32 %v4636, %v5218
    %v5307 = vadd.f32 %v4637, %v5221
    %v5308 = vadd.f32 %v4638, %v5224
    %v5309 = vadd.f32 %v4639, %v5227
    %v5310 = vld [vmem:[%s0 + $0x2b] sm:$0xff]
    %v5311 = vld [vmem:[%s0 + $0x33] sm:$0xff]
    %v5312 = vld [vmem:[%s0 + $0x3b] sm:$0xff]
    %v5313 = vld [vmem:[%s0 + $0x43] sm:$0xff]
    %v5314 = vld [vmem:[%s0 + $0x4b] sm:$0xff]
    %v5315 = vld [vmem:[%s0 + $0x53] sm:$0xff]
    %v5316 = vld [vmem:[%s0 + $0x5b] sm:$0xff]
    %v5317 = vld [vmem:[%s0 + $0x63] sm:$0xff]
    %v5318 = vld [vmem:[%s0 + $0x6b] sm:$0xff]
    %v5319 = vld [vmem:[%s0 + $0x73] sm:$0xff]
    %v5320 = vld [vmem:[%s0 + $0x7b] sm:$0xff]
    %v5321 = vld [vmem:[%s0 + $0x83] sm:$0xff]
    %v5322 = vld [vmem:[%s0 + $0x8b] sm:$0xff]
    %v5323 = vld [vmem:[%s0 + $0x93] sm:$0xff]
    %v5324 = vld [vmem:[%s0 + $0x9b] sm:$0xff]
    %v5325 = vld [vmem:[%s0 + $0xa3] sm:$0xff]
    %v5326 = vld [vmem:[%s0 + $0xab] sm:$0xff]
    %v5327 = vld [vmem:[%s0 + $0xb3] sm:$0xff]
    %v5328 = vld [vmem:[%s0 + $0xbb] sm:$0xff]
    %v5329 = vld [vmem:[%s0 + $0xc3] sm:$0xff]
    %v5330 = vld [vmem:[%s0 + $0xcb] sm:$0xff]
    %v5331 = vld [vmem:[%s0 + $0xd3] sm:$0xff]
    %v5332 = vld [vmem:[%s0 + $0xdb] sm:$0xff]
    %v5333 = vld [vmem:[%s0 + $0xe3] sm:$0xff]
    %v5334 = vld [vmem:[%s0 + $0xeb] sm:$0xff]
    %v5335 = vld [vmem:[%s0 + $0xf3] sm:$0xff]
    %v5336 = vld [vmem:[%s0 + $0xfb] sm:$0xff]
    %v5337 = vld [vmem:[%s0 + $0x103] sm:$0xff]
    %v5338 = vld [vmem:[%s0 + $0x10b] sm:$0xff]
    %v5339 = vld [vmem:[%s0 + $0x113] sm:$0xff]
    %v5340 = vld [vmem:[%s0 + $0x11b] sm:$0xff]
    %v5341 = vld [vmem:[%s0 + $0x123] sm:$0xff]
    %v5342 = vld [vmem:[%s0 + $0x12b] sm:$0xff]
    %v5343 = vld [vmem:[%s0 + $0x133] sm:$0xff]
    %v5344 = vld [vmem:[%s0 + $0x13b] sm:$0xff]
    %v5345 = vld [vmem:[%s0 + $0x143] sm:$0xff]
    %v5346 = vld [vmem:[%s0 + $0x14b] sm:$0xff]
    %v5347 = vld [vmem:[%s0 + $0x153] sm:$0xff]
    %v5348 = vld [vmem:[%s0 + $0x15b] sm:$0xff]
    %v5349 = vld [vmem:[%s0 + $0x163] sm:$0xff]
    %v5350 = vld [vmem:[%s0 + $0x16b] sm:$0xff]
    %v5351 = vld [vmem:[%s0 + $0x173] sm:$0xff]
    %v5352 = vld [vmem:[%s0 + $0x17b] sm:$0xff]
    %v5353 = vld [vmem:[%s0 + $0x183] sm:$0xff]
    %v5354 = vld [vmem:[%s0 + $0x18b] sm:$0xff]
    %v5355 = vld [vmem:[%s0 + $0x193] sm:$0xff]
    %v5356 = vld [vmem:[%s0 + $0x19b] sm:$0xff]
    %v5357 = vld [vmem:[%s0 + $0x1a3] sm:$0xff]
    %v5358 = vld [vmem:[%s0 + $0x1ab] sm:$0xff]
    %v5359 = vld [vmem:[%s0 + $0x1b3] sm:$0xff]
    %v5360 = vld [vmem:[%s0 + $0x1bb] sm:$0xff]
    %v5361 = vld [vmem:[%s0 + $0x1c3] sm:$0xff]
    %v5362 = vld [vmem:[%s0 + $0x1cb] sm:$0xff]
    %v5363 = vld [vmem:[%s0 + $0x1d3] sm:$0xff]
    %v5364 = vld [vmem:[%s0 + $0x1db] sm:$0xff]
    %v5365 = vld [vmem:[%s0 + $0x1e3] sm:$0xff]
    %v5366 = vld [vmem:[%s0 + $0x1eb] sm:$0xff]
    %v5367 = vld [vmem:[%s0 + $0x1f3] sm:$0xff]
    %v5368 = vld [vmem:[%s0 + $0x1fb] sm:$0xff]
    %v5369 = vld [vmem:[%s0 + $0x203] sm:$0xff]
    %v5370 = vld [vmem:[%s0 + $0x20b] sm:$0xff]
    %v5371 = vld [vmem:[%s0 + $0x213] sm:$0xff]
    %v5372 = vld [vmem:[%s0 + $0x21b] sm:$0xff]
    %v5373 = vld [vmem:[%s0 + $0x223] sm:$0xff]
    %v5374 = vld [vmem:[%s0 + $0x22b] sm:$0xff]
    %v5375 = vld [vmem:[%s0 + $0x233] sm:$0xff]
    %v5376 = vld [vmem:[%s0 + $0x23b] sm:$0xff]
    %v5377 = vld [vmem:[%s0 + $0x243] sm:$0xff]
    %v5378 = vld [vmem:[%s0 + $0x24b] sm:$0xff]
    %v5379 = vld [vmem:[%s0 + $0x253] sm:$0xff]
    %v5380 = vld [vmem:[%s0 + $0x25b] sm:$0xff]
    %v5381 = vld [vmem:[%s0 + $0x263] sm:$0xff]
    %v5382 = vld [vmem:[%s0 + $0x26b] sm:$0xff]
    %v5383 = vld [vmem:[%s0 + $0x273] sm:$0xff]
    %v5384 = vld [vmem:[%s0 + $0x27b] sm:$0xff]
    %v5385 = vld [vmem:[%s0 + $0x283] sm:$0xff]
    %v5386 = vld [vmem:[%s0 + $0x28b] sm:$0xff]
    %v5387 = vld [vmem:[%s0 + $0x293] sm:$0xff]
    %v5388 = vld [vmem:[%s0 + $0x29b] sm:$0xff]
    %v5389 = vld [vmem:[%s0 + $0x2a3] sm:$0xff]
    %v5390 = vld [vmem:[%s0 + $0x2ab] sm:$0xff]
    %s5391 = scalar_lea.vmem %s2, 32
    %v5392 = vld [vmem:[%s5391] sm:$0xf]
    %v5394 = vsel %vm276, %v5310, 0
    %v5397 = vsel %vm276, %v5311, 0
    %v5400 = vsel %vm276, %v5312, 0
    %v5403 = vsel %vm276, %v5313, 0
    %v5406 = vsel %vm276, %v5314, 0
    %v5409 = vsel %vm276, %v5315, 0
    %v5412 = vsel %vm276, %v5316, 0
    %v5415 = vsel %vm276, %v5317, 0
    %v5418 = vsel %vm276, %v5318, 0
    %v5421 = vsel %vm276, %v5319, 0
    %v5424 = vsel %vm276, %v5320, 0
    %v5427 = vsel %vm276, %v5321, 0
    %v5430 = vsel %vm276, %v5322, 0
    %v5433 = vsel %vm276, %v5323, 0
    %v5436 = vsel %vm276, %v5324, 0
    %v5439 = vsel %vm276, %v5325, 0
    %v5442 = vsel %vm276, %v5326, 0
    %v5445 = vsel %vm276, %v5327, 0
    %v5448 = vsel %vm276, %v5328, 0
    %v5451 = vsel %vm276, %v5329, 0
    %v5454 = vsel %vm276, %v5330, 0
    %v5457 = vsel %vm276, %v5331, 0
    %v5460 = vsel %vm276, %v5332, 0
    %v5463 = vsel %vm276, %v5333, 0
    %v5466 = vsel %vm276, %v5334, 0
    %v5469 = vsel %vm276, %v5335, 0
    %v5472 = vsel %vm276, %v5336, 0
    %v5475 = vsel %vm276, %v5337, 0
    %v5478 = vsel %vm276, %v5338, 0
    %v5481 = vsel %vm276, %v5339, 0
    %v5484 = vsel %vm276, %v5340, 0
    %v5487 = vsel %vm276, %v5341, 0
    %v5490 = vsel %vm276, %v5342, 0
    %v5493 = vsel %vm276, %v5343, 0
    %v5496 = vsel %vm276, %v5344, 0
    %v5499 = vsel %vm276, %v5345, 0
    %v5502 = vsel %vm276, %v5346, 0
    %v5505 = vsel %vm276, %v5347, 0
    %v5508 = vsel %vm276, %v5348, 0
    %v5511 = vsel %vm276, %v5349, 0
    %v5514 = vsel %vm276, %v5350, 0
    %v5517 = vsel %vm276, %v5351, 0
    %v5520 = vsel %vm276, %v5352, 0
    %v5523 = vsel %vm276, %v5353, 0
    %v5526 = vsel %vm276, %v5354, 0
    %v5529 = vsel %vm276, %v5355, 0
    %v5532 = vsel %vm276, %v5356, 0
    %v5535 = vsel %vm276, %v5357, 0
    %v5538 = vsel %vm276, %v5358, 0
    %v5541 = vsel %vm276, %v5359, 0
    %v5544 = vsel %vm276, %v5360, 0
    %v5547 = vsel %vm276, %v5361, 0
    %v5550 = vsel %vm276, %v5362, 0
    %v5553 = vsel %vm276, %v5363, 0
    %v5556 = vsel %vm276, %v5364, 0
    %v5559 = vsel %vm276, %v5365, 0
    %v5562 = vsel %vm276, %v5366, 0
    %v5565 = vsel %vm276, %v5367, 0
    %v5568 = vsel %vm276, %v5368, 0
    %v5571 = vsel %vm276, %v5369, 0
    %v5574 = vsel %vm276, %v5370, 0
    %v5577 = vsel %vm276, %v5371, 0
    %v5580 = vsel %vm276, %v5372, 0
    %v5583 = vsel %vm276, %v5373, 0
    %v5586 = vsel %vm276, %v5374, 0
    %v5589 = vsel %vm276, %v5375, 0
    %v5592 = vsel %vm276, %v5376, 0
    %v5595 = vsel %vm276, %v5377, 0
    %v5598 = vsel %vm276, %v5378, 0
    %v5601 = vsel %vm276, %v5379, 0
    %v5604 = vsel %vm276, %v5380, 0
    %v5607 = vsel %vm276, %v5381, 0
    %v5610 = vsel %vm276, %v5382, 0
    %v5613 = vsel %vm276, %v5383, 0
    %v5616 = vsel %vm276, %v5384, 0
    %v5619 = vsel %vm276, %v5385, 0
    %v5622 = vsel %vm276, %v5386, 0
    %v5625 = vsel %vm276, %v5387, 0
    %v5628 = vsel %vm276, %v5388, 0
    %v5631 = vsel %vm276, %v5389, 0
    %v5634 = vsel %vm276, %v5390, 0
    %v5637 = vsel %vm520, %v5392, 0
    %5639 = vmatpush.msra.mxu0 0.0
    %5640 = vmatpush.msra.mxu0 0.0
    %5641 = vmatpush.msra.mxu0 0.0
    %5642 = vmatpush.msra.mxu0 0.0
    %5643 = vmatpush.msra.mxu0 0.0
    %5644 = vmatpush.msra.mxu0 0.0
    %5645 = vmatpush.msra.mxu0 0.0
    %5646 = vmatpush.msra.mxu0 0.0
    %5647 = vmatpush.msra.mxu0 0.0
    %5648 = vmatpush.msra.mxu0 0.0
    %5649 = vmatpush.msra.mxu0 0.0
    %5650 = vmatpush.msra.mxu0 0.0
    %5651 = vmatpush.msra.mxu0 0.0
    %5652 = vmatpush.msra.mxu0 0.0
    %5653 = vmatpush.msra.mxu0 0.0
    %5654 = vmatpush.msra.mxu0 %v5637
    %5655 = vmatmul.f32.gmra.mxu0 %v5394
    %v5656 = vpop.f32.mrf.mxu0
    %v5657 = vadd.f32 0.0, %v5656
    %5658 = vmatmul.f32.gmra.mxu0 %v5397
    %v5659 = vpop.f32.mrf.mxu0
    %v5660 = vadd.f32 0.0, %v5659
    %5661 = vmatmul.f32.gmra.mxu0 %v5400
    %v5662 = vpop.f32.mrf.mxu0
    %v5663 = vadd.f32 0.0, %v5662
    %5664 = vmatmul.f32.gmra.mxu0 %v5403
    %v5665 = vpop.f32.mrf.mxu0
    %v5666 = vadd.f32 0.0, %v5665
    %5667 = vmatmul.f32.gmra.mxu0 %v5406
    %v5668 = vpop.f32.mrf.mxu0
    %v5669 = vadd.f32 0.0, %v5668
    %5670 = vmatmul.f32.gmra.mxu0 %v5409
    %v5671 = vpop.f32.mrf.mxu0
    %v5672 = vadd.f32 0.0, %v5671
    %5673 = vmatmul.f32.gmra.mxu0 %v5412
    %v5674 = vpop.f32.mrf.mxu0
    %v5675 = vadd.f32 0.0, %v5674
    %5676 = vmatmul.f32.gmra.mxu0 %v5415
    %v5677 = vpop.f32.mrf.mxu0
    %v5678 = vadd.f32 0.0, %v5677
    %5679 = vmatmul.f32.gmra.mxu0 %v5418
    %v5680 = vpop.f32.mrf.mxu0
    %v5681 = vadd.f32 0.0, %v5680
    %5682 = vmatmul.f32.gmra.mxu0 %v5421
    %v5683 = vpop.f32.mrf.mxu0
    %v5684 = vadd.f32 0.0, %v5683
    %5685 = vmatmul.f32.gmra.mxu0 %v5424
    %v5686 = vpop.f32.mrf.mxu0
    %v5687 = vadd.f32 0.0, %v5686
    %5688 = vmatmul.f32.gmra.mxu0 %v5427
    %v5689 = vpop.f32.mrf.mxu0
    %v5690 = vadd.f32 0.0, %v5689
    %5691 = vmatmul.f32.gmra.mxu0 %v5430
    %v5692 = vpop.f32.mrf.mxu0
    %v5693 = vadd.f32 0.0, %v5692
    %5694 = vmatmul.f32.gmra.mxu0 %v5433
    %v5695 = vpop.f32.mrf.mxu0
    %v5696 = vadd.f32 0.0, %v5695
    %5697 = vmatmul.f32.gmra.mxu0 %v5436
    %v5698 = vpop.f32.mrf.mxu0
    %v5699 = vadd.f32 0.0, %v5698
    %5700 = vmatmul.f32.gmra.mxu0 %v5439
    %v5701 = vpop.f32.mrf.mxu0
    %v5702 = vadd.f32 0.0, %v5701
    %5703 = vmatmul.f32.gmra.mxu0 %v5442
    %v5704 = vpop.f32.mrf.mxu0
    %v5705 = vadd.f32 0.0, %v5704
    %5706 = vmatmul.f32.gmra.mxu0 %v5445
    %v5707 = vpop.f32.mrf.mxu0
    %v5708 = vadd.f32 0.0, %v5707
    %5709 = vmatmul.f32.gmra.mxu0 %v5448
    %v5710 = vpop.f32.mrf.mxu0
    %v5711 = vadd.f32 0.0, %v5710
    %5712 = vmatmul.f32.gmra.mxu0 %v5451
    %v5713 = vpop.f32.mrf.mxu0
    %v5714 = vadd.f32 0.0, %v5713
    %5715 = vmatmul.f32.gmra.mxu0 %v5454
    %v5716 = vpop.f32.mrf.mxu0
    %v5717 = vadd.f32 0.0, %v5716
    %5718 = vmatmul.f32.gmra.mxu0 %v5457
    %v5719 = vpop.f32.mrf.mxu0
    %v5720 = vadd.f32 0.0, %v5719
    %5721 = vmatmul.f32.gmra.mxu0 %v5460
    %v5722 = vpop.f32.mrf.mxu0
    %v5723 = vadd.f32 0.0, %v5722
    %5724 = vmatmul.f32.gmra.mxu0 %v5463
    %v5725 = vpop.f32.mrf.mxu0
    %v5726 = vadd.f32 0.0, %v5725
    %5727 = vmatmul.f32.gmra.mxu0 %v5466
    %v5728 = vpop.f32.mrf.mxu0
    %v5729 = vadd.f32 0.0, %v5728
    %5730 = vmatmul.f32.gmra.mxu0 %v5469
    %v5731 = vpop.f32.mrf.mxu0
    %v5732 = vadd.f32 0.0, %v5731
    %5733 = vmatmul.f32.gmra.mxu0 %v5472
    %v5734 = vpop.f32.mrf.mxu0
    %v5735 = vadd.f32 0.0, %v5734
    %5736 = vmatmul.f32.gmra.mxu0 %v5475
    %v5737 = vpop.f32.mrf.mxu0
    %v5738 = vadd.f32 0.0, %v5737
    %5739 = vmatmul.f32.gmra.mxu0 %v5478
    %v5740 = vpop.f32.mrf.mxu0
    %v5741 = vadd.f32 0.0, %v5740
    %5742 = vmatmul.f32.gmra.mxu0 %v5481
    %v5743 = vpop.f32.mrf.mxu0
    %v5744 = vadd.f32 0.0, %v5743
    %5745 = vmatmul.f32.gmra.mxu0 %v5484
    %v5746 = vpop.f32.mrf.mxu0
    %v5747 = vadd.f32 0.0, %v5746
    %5748 = vmatmul.f32.gmra.mxu0 %v5487
    %v5749 = vpop.f32.mrf.mxu0
    %v5750 = vadd.f32 0.0, %v5749
    %5751 = vmatmul.f32.gmra.mxu0 %v5490
    %v5752 = vpop.f32.mrf.mxu0
    %v5753 = vadd.f32 0.0, %v5752
    %5754 = vmatmul.f32.gmra.mxu0 %v5493
    %v5755 = vpop.f32.mrf.mxu0
    %v5756 = vadd.f32 0.0, %v5755
    %5757 = vmatmul.f32.gmra.mxu0 %v5496
    %v5758 = vpop.f32.mrf.mxu0
    %v5759 = vadd.f32 0.0, %v5758
    %5760 = vmatmul.f32.gmra.mxu0 %v5499
    %v5761 = vpop.f32.mrf.mxu0
    %v5762 = vadd.f32 0.0, %v5761
    %5763 = vmatmul.f32.gmra.mxu0 %v5502
    %v5764 = vpop.f32.mrf.mxu0
    %v5765 = vadd.f32 0.0, %v5764
    %5766 = vmatmul.f32.gmra.mxu0 %v5505
    %v5767 = vpop.f32.mrf.mxu0
    %v5768 = vadd.f32 0.0, %v5767
    %5769 = vmatmul.f32.gmra.mxu0 %v5508
    %v5770 = vpop.f32.mrf.mxu0
    %v5771 = vadd.f32 0.0, %v5770
    %5772 = vmatmul.f32.gmra.mxu0 %v5511
    %v5773 = vpop.f32.mrf.mxu0
    %v5774 = vadd.f32 0.0, %v5773
    %5775 = vmatmul.f32.gmra.mxu0 %v5514
    %v5776 = vpop.f32.mrf.mxu0
    %v5777 = vadd.f32 0.0, %v5776
    %5778 = vmatmul.f32.gmra.mxu0 %v5517
    %v5779 = vpop.f32.mrf.mxu0
    %v5780 = vadd.f32 0.0, %v5779
    %5781 = vmatmul.f32.gmra.mxu0 %v5520
    %v5782 = vpop.f32.mrf.mxu0
    %v5783 = vadd.f32 0.0, %v5782
    %5784 = vmatmul.f32.gmra.mxu0 %v5523
    %v5785 = vpop.f32.mrf.mxu0
    %v5786 = vadd.f32 0.0, %v5785
    %5787 = vmatmul.f32.gmra.mxu0 %v5526
    %v5788 = vpop.f32.mrf.mxu0
    %v5789 = vadd.f32 0.0, %v5788
    %5790 = vmatmul.f32.gmra.mxu0 %v5529
    %v5791 = vpop.f32.mrf.mxu0
    %v5792 = vadd.f32 0.0, %v5791
    %5793 = vmatmul.f32.gmra.mxu0 %v5532
    %v5794 = vpop.f32.mrf.mxu0
    %v5795 = vadd.f32 0.0, %v5794
    %5796 = vmatmul.f32.gmra.mxu0 %v5535
    %v5797 = vpop.f32.mrf.mxu0
    %v5798 = vadd.f32 0.0, %v5797
    %5799 = vmatmul.f32.gmra.mxu0 %v5538
    %v5800 = vpop.f32.mrf.mxu0
    %v5801 = vadd.f32 0.0, %v5800
    %5802 = vmatmul.f32.gmra.mxu0 %v5541
    %v5803 = vpop.f32.mrf.mxu0
    %v5804 = vadd.f32 0.0, %v5803
    %5805 = vmatmul.f32.gmra.mxu0 %v5544
    %v5806 = vpop.f32.mrf.mxu0
    %v5807 = vadd.f32 0.0, %v5806
    %5808 = vmatmul.f32.gmra.mxu0 %v5547
    %v5809 = vpop.f32.mrf.mxu0
    %v5810 = vadd.f32 0.0, %v5809
    %5811 = vmatmul.f32.gmra.mxu0 %v5550
    %v5812 = vpop.f32.mrf.mxu0
    %v5813 = vadd.f32 0.0, %v5812
    %5814 = vmatmul.f32.gmra.mxu0 %v5553
    %v5815 = vpop.f32.mrf.mxu0
    %v5816 = vadd.f32 0.0, %v5815
    %5817 = vmatmul.f32.gmra.mxu0 %v5556
    %v5818 = vpop.f32.mrf.mxu0
    %v5819 = vadd.f32 0.0, %v5818
    %5820 = vmatmul.f32.gmra.mxu0 %v5559
    %v5821 = vpop.f32.mrf.mxu0
    %v5822 = vadd.f32 0.0, %v5821
    %5823 = vmatmul.f32.gmra.mxu0 %v5562
    %v5824 = vpop.f32.mrf.mxu0
    %v5825 = vadd.f32 0.0, %v5824
    %5826 = vmatmul.f32.gmra.mxu0 %v5565
    %v5827 = vpop.f32.mrf.mxu0
    %v5828 = vadd.f32 0.0, %v5827
    %5829 = vmatmul.f32.gmra.mxu0 %v5568
    %v5830 = vpop.f32.mrf.mxu0
    %v5831 = vadd.f32 0.0, %v5830
    %5832 = vmatmul.f32.gmra.mxu0 %v5571
    %v5833 = vpop.f32.mrf.mxu0
    %v5834 = vadd.f32 0.0, %v5833
    %5835 = vmatmul.f32.gmra.mxu0 %v5574
    %v5836 = vpop.f32.mrf.mxu0
    %v5837 = vadd.f32 0.0, %v5836
    %5838 = vmatmul.f32.gmra.mxu0 %v5577
    %v5839 = vpop.f32.mrf.mxu0
    %v5840 = vadd.f32 0.0, %v5839
    %5841 = vmatmul.f32.gmra.mxu0 %v5580
    %v5842 = vpop.f32.mrf.mxu0
    %v5843 = vadd.f32 0.0, %v5842
    %5844 = vmatmul.f32.gmra.mxu0 %v5583
    %v5845 = vpop.f32.mrf.mxu0
    %v5846 = vadd.f32 0.0, %v5845
    %5847 = vmatmul.f32.gmra.mxu0 %v5586
    %v5848 = vpop.f32.mrf.mxu0
    %v5849 = vadd.f32 0.0, %v5848
    %5850 = vmatmul.f32.gmra.mxu0 %v5589
    %v5851 = vpop.f32.mrf.mxu0
    %v5852 = vadd.f32 0.0, %v5851
    %5853 = vmatmul.f32.gmra.mxu0 %v5592
    %v5854 = vpop.f32.mrf.mxu0
    %v5855 = vadd.f32 0.0, %v5854
    %5856 = vmatmul.f32.gmra.mxu0 %v5595
    %v5857 = vpop.f32.mrf.mxu0
    %v5858 = vadd.f32 0.0, %v5857
    %5859 = vmatmul.f32.gmra.mxu0 %v5598
    %v5860 = vpop.f32.mrf.mxu0
    %v5861 = vadd.f32 0.0, %v5860
    %5862 = vmatmul.f32.gmra.mxu0 %v5601
    %v5863 = vpop.f32.mrf.mxu0
    %v5864 = vadd.f32 0.0, %v5863
    %5865 = vmatmul.f32.gmra.mxu0 %v5604
    %v5866 = vpop.f32.mrf.mxu0
    %v5867 = vadd.f32 0.0, %v5866
    %5868 = vmatmul.f32.gmra.mxu0 %v5607
    %v5869 = vpop.f32.mrf.mxu0
    %v5870 = vadd.f32 0.0, %v5869
    %5871 = vmatmul.f32.gmra.mxu0 %v5610
    %v5872 = vpop.f32.mrf.mxu0
    %v5873 = vadd.f32 0.0, %v5872
    %5874 = vmatmul.f32.gmra.mxu0 %v5613
    %v5875 = vpop.f32.mrf.mxu0
    %v5876 = vadd.f32 0.0, %v5875
    %5877 = vmatmul.f32.gmra.mxu0 %v5616
    %v5878 = vpop.f32.mrf.mxu0
    %v5879 = vadd.f32 0.0, %v5878
    %5880 = vmatmul.f32.gmra.mxu0 %v5619
    %v5881 = vpop.f32.mrf.mxu0
    %v5882 = vadd.f32 0.0, %v5881
    %5883 = vmatmul.f32.gmra.mxu0 %v5622
    %v5884 = vpop.f32.mrf.mxu0
    %v5885 = vadd.f32 0.0, %v5884
    %5886 = vmatmul.f32.gmra.mxu0 %v5625
    %v5887 = vpop.f32.mrf.mxu0
    %v5888 = vadd.f32 0.0, %v5887
    %5889 = vmatmul.f32.gmra.mxu0 %v5628
    %v5890 = vpop.f32.mrf.mxu0
    %v5891 = vadd.f32 0.0, %v5890
    %5892 = vmatmul.f32.gmra.mxu0 %v5631
    %v5893 = vpop.f32.mrf.mxu0
    %v5894 = vadd.f32 0.0, %v5893
    %5895 = vmatmul.f32.gmra.mxu0 %v5634
    %v5896 = vpop.f32.mrf.mxu0
    %v5897 = vadd.f32 0.0, %v5896
    %5898 = vdwg.mxu0
    %v5899 = vadd.f32 %v5229, %v5657
    %v5900 = vadd.f32 %v5230, %v5660
    %v5901 = vadd.f32 %v5231, %v5663
    %v5902 = vadd.f32 %v5232, %v5666
    %v5903 = vadd.f32 %v5233, %v5669
    %v5904 = vadd.f32 %v5234, %v5672
    %v5905 = vadd.f32 %v5235, %v5675
    %v5906 = vadd.f32 %v5236, %v5678
    %v5907 = vadd.f32 %v5237, %v5681
    %v5908 = vadd.f32 %v5238, %v5684
    %v5909 = vadd.f32 %v5239, %v5687
    %v5910 = vadd.f32 %v5240, %v5690
    %v5911 = vadd.f32 %v5241, %v5693
    %v5912 = vadd.f32 %v5242, %v5696
    %v5913 = vadd.f32 %v5243, %v5699
    %v5914 = vadd.f32 %v5244, %v5702
    %v5915 = vadd.f32 %v5245, %v5705
    %v5916 = vadd.f32 %v5246, %v5708
    %v5917 = vadd.f32 %v5247, %v5711
    %v5918 = vadd.f32 %v5248, %v5714
    %v5919 = vadd.f32 %v5249, %v5717
    %v5920 = vadd.f32 %v5250, %v5720
    %v5921 = vadd.f32 %v5251, %v5723
    %v5922 = vadd.f32 %v5252, %v5726
    %v5923 = vadd.f32 %v5253, %v5729
    %v5924 = vadd.f32 %v5254, %v5732
    %v5925 = vadd.f32 %v5255, %v5735
    %v5926 = vadd.f32 %v5256, %v5738
    %v5927 = vadd.f32 %v5257, %v5741
    %v5928 = vadd.f32 %v5258, %v5744
    %v5929 = vadd.f32 %v5259, %v5747
    %v5930 = vadd.f32 %v5260, %v5750
    %v5931 = vadd.f32 %v5261, %v5753
    %v5932 = vadd.f32 %v5262, %v5756
    %v5933 = vadd.f32 %v5263, %v5759
    %v5934 = vadd.f32 %v5264, %v5762
    %v5935 = vadd.f32 %v5265, %v5765
    %v5936 = vadd.f32 %v5266, %v5768
    %v5937 = vadd.f32 %v5267, %v5771
    %v5938 = vadd.f32 %v5268, %v5774
    %v5939 = vadd.f32 %v5269, %v5777
    %v5940 = vadd.f32 %v5270, %v5780
    %v5941 = vadd.f32 %v5271, %v5783
    %v5942 = vadd.f32 %v5272, %v5786
    %v5943 = vadd.f32 %v5273, %v5789
    %v5944 = vadd.f32 %v5274, %v5792
    %v5945 = vadd.f32 %v5275, %v5795
    %v5946 = vadd.f32 %v5276, %v5798
    %v5947 = vadd.f32 %v5277, %v5801
    %v5948 = vadd.f32 %v5278, %v5804
    %v5949 = vadd.f32 %v5279, %v5807
    %v5950 = vadd.f32 %v5280, %v5810
    %v5951 = vadd.f32 %v5281, %v5813
    %v5952 = vadd.f32 %v5282, %v5816
    %v5953 = vadd.f32 %v5283, %v5819
    %v5954 = vadd.f32 %v5284, %v5822
    %v5955 = vadd.f32 %v5285, %v5825
    %v5956 = vadd.f32 %v5286, %v5828
    %v5957 = vadd.f32 %v5287, %v5831
    %v5958 = vadd.f32 %v5288, %v5834
    %v5959 = vadd.f32 %v5289, %v5837
    %v5960 = vadd.f32 %v5290, %v5840
    %v5961 = vadd.f32 %v5291, %v5843
    %v5962 = vadd.f32 %v5292, %v5846
    %v5963 = vadd.f32 %v5293, %v5849
    %v5964 = vadd.f32 %v5294, %v5852
    %v5965 = vadd.f32 %v5295, %v5855
    %v5966 = vadd.f32 %v5296, %v5858
    %v5967 = vadd.f32 %v5297, %v5861
    %v5968 = vadd.f32 %v5298, %v5864
    %v5969 = vadd.f32 %v5299, %v5867
    %v5970 = vadd.f32 %v5300, %v5870
    %v5971 = vadd.f32 %v5301, %v5873
    %v5972 = vadd.f32 %v5302, %v5876
    %v5973 = vadd.f32 %v5303, %v5879
    %v5974 = vadd.f32 %v5304, %v5882
    %v5975 = vadd.f32 %v5305, %v5885
    %v5976 = vadd.f32 %v5306, %v5888
    %v5977 = vadd.f32 %v5307, %v5891
    %v5978 = vadd.f32 %v5308, %v5894
    %v5979 = vadd.f32 %v5309, %v5897
    %5981 = vset.pattern.permute.xlu0 0
    %5982 = vperm.xlu0 %5981, %v24
    %v5983 = vpop.permute.xlu0 %5982
    %5986 = vset.pattern.permute.xlu0 0
    %5987 = vperm.xlu0 %5986, %v25
    %v5988 = vpop.permute.xlu0 %5987
    %5991 = vset.pattern.permute.xlu0 0
    %5992 = vperm.xlu0 %5991, %v26
    %v5993 = vpop.permute.xlu0 %5992
    %5996 = vset.pattern.permute.xlu0 0
    %5997 = vperm.xlu0 %5996, %v27
    %v5998 = vpop.permute.xlu0 %5997
    %6001 = vset.pattern.permute.xlu0 0
    %6002 = vperm.xlu0 %6001, %v28
    %v6003 = vpop.permute.xlu0 %6002
    %6006 = vset.pattern.permute.xlu0 0
    %6007 = vperm.xlu0 %6006, %v29
    %v6008 = vpop.permute.xlu0 %6007
    %6011 = vset.pattern.permute.xlu0 0
    %6012 = vperm.xlu0 %6011, %v30
    %v6013 = vpop.permute.xlu0 %6012
    %6016 = vset.pattern.permute.xlu0 0
    %6017 = vperm.xlu0 %6016, %v31
    %v6018 = vpop.permute.xlu0 %6017
    %6021 = vset.pattern.permute.xlu0 0
    %6022 = vperm.xlu0 %6021, %v32
    %v6023 = vpop.permute.xlu0 %6022
    %6026 = vset.pattern.permute.xlu0 0
    %6027 = vperm.xlu0 %6026, %v33
    %v6028 = vpop.permute.xlu0 %6027
    %6031 = vset.pattern.permute.xlu0 0
    %6032 = vperm.xlu0 %6031, %v34
    %v6033 = vpop.permute.xlu0 %6032
    %6036 = vset.pattern.permute.xlu0 0
    %6037 = vperm.xlu0 %6036, %v35
    %v6038 = vpop.permute.xlu0 %6037
    %6041 = vset.pattern.permute.xlu0 0
    %6042 = vperm.xlu0 %6041, %v36
    %v6043 = vpop.permute.xlu0 %6042
    %6046 = vset.pattern.permute.xlu0 0
    %6047 = vperm.xlu0 %6046, %v37
    %v6048 = vpop.permute.xlu0 %6047
    %6051 = vset.pattern.permute.xlu0 0
    %6052 = vperm.xlu0 %6051, %v38
    %v6053 = vpop.permute.xlu0 %6052
    %6056 = vset.pattern.permute.xlu0 0
    %6057 = vperm.xlu0 %6056, %v39
    %v6058 = vpop.permute.xlu0 %6057
    %6061 = vset.pattern.permute.xlu0 0
    %6062 = vperm.xlu0 %6061, %v40
    %v6063 = vpop.permute.xlu0 %6062
    %6066 = vset.pattern.permute.xlu0 0
    %6067 = vperm.xlu0 %6066, %v41
    %v6068 = vpop.permute.xlu0 %6067
    %6071 = vset.pattern.permute.xlu0 0
    %6072 = vperm.xlu0 %6071, %v42
    %v6073 = vpop.permute.xlu0 %6072
    %6076 = vset.pattern.permute.xlu0 0
    %6077 = vperm.xlu0 %6076, %v43
    %v6078 = vpop.permute.xlu0 %6077
    %6081 = vset.pattern.permute.xlu0 0
    %6082 = vperm.xlu0 %6081, %v44
    %v6083 = vpop.permute.xlu0 %6082
    %6086 = vset.pattern.permute.xlu0 0
    %6087 = vperm.xlu0 %6086, %v45
    %v6088 = vpop.permute.xlu0 %6087
    %6091 = vset.pattern.permute.xlu0 0
    %6092 = vperm.xlu0 %6091, %v46
    %v6093 = vpop.permute.xlu0 %6092
    %6096 = vset.pattern.permute.xlu0 0
    %6097 = vperm.xlu0 %6096, %v47
    %v6098 = vpop.permute.xlu0 %6097
    %6101 = vset.pattern.permute.xlu0 0
    %6102 = vperm.xlu0 %6101, %v48
    %v6103 = vpop.permute.xlu0 %6102
    %6106 = vset.pattern.permute.xlu0 0
    %6107 = vperm.xlu0 %6106, %v49
    %v6108 = vpop.permute.xlu0 %6107
    %6111 = vset.pattern.permute.xlu0 0
    %6112 = vperm.xlu0 %6111, %v50
    %v6113 = vpop.permute.xlu0 %6112
    %6116 = vset.pattern.permute.xlu0 0
    %6117 = vperm.xlu0 %6116, %v51
    %v6118 = vpop.permute.xlu0 %6117
    %6121 = vset.pattern.permute.xlu0 0
    %6122 = vperm.xlu0 %6121, %v52
    %v6123 = vpop.permute.xlu0 %6122
    %6126 = vset.pattern.permute.xlu0 0
    %6127 = vperm.xlu0 %6126, %v53
    %v6128 = vpop.permute.xlu0 %6127
    %6131 = vset.pattern.permute.xlu0 0
    %6132 = vperm.xlu0 %6131, %v54
    %v6133 = vpop.permute.xlu0 %6132
    %6136 = vset.pattern.permute.xlu0 0
    %6137 = vperm.xlu0 %6136, %v55
    %v6138 = vpop.permute.xlu0 %6137
    %6141 = vset.pattern.permute.xlu0 0
    %6142 = vperm.xlu0 %6141, %v56
    %v6143 = vpop.permute.xlu0 %6142
    %6146 = vset.pattern.permute.xlu0 0
    %6147 = vperm.xlu0 %6146, %v57
    %v6148 = vpop.permute.xlu0 %6147
    %6151 = vset.pattern.permute.xlu0 0
    %6152 = vperm.xlu0 %6151, %v58
    %v6153 = vpop.permute.xlu0 %6152
    %6156 = vset.pattern.permute.xlu0 0
    %6157 = vperm.xlu0 %6156, %v59
    %v6158 = vpop.permute.xlu0 %6157
    %6161 = vset.pattern.permute.xlu0 0
    %6162 = vperm.xlu0 %6161, %v60
    %v6163 = vpop.permute.xlu0 %6162
    %6166 = vset.pattern.permute.xlu0 0
    %6167 = vperm.xlu0 %6166, %v61
    %v6168 = vpop.permute.xlu0 %6167
    %6171 = vset.pattern.permute.xlu0 0
    %6172 = vperm.xlu0 %6171, %v62
    %v6173 = vpop.permute.xlu0 %6172
    %6176 = vset.pattern.permute.xlu0 0
    %6177 = vperm.xlu0 %6176, %v63
    %v6178 = vpop.permute.xlu0 %6177
    %6181 = vset.pattern.permute.xlu0 0
    %6182 = vperm.xlu0 %6181, %v64
    %v6183 = vpop.permute.xlu0 %6182
    %6186 = vset.pattern.permute.xlu0 0
    %6187 = vperm.xlu0 %6186, %v65
    %v6188 = vpop.permute.xlu0 %6187
    %6191 = vset.pattern.permute.xlu0 0
    %6192 = vperm.xlu0 %6191, %v66
    %v6193 = vpop.permute.xlu0 %6192
    %6196 = vset.pattern.permute.xlu0 0
    %6197 = vperm.xlu0 %6196, %v67
    %v6198 = vpop.permute.xlu0 %6197
    %6201 = vset.pattern.permute.xlu0 0
    %6202 = vperm.xlu0 %6201, %v68
    %v6203 = vpop.permute.xlu0 %6202
    %6206 = vset.pattern.permute.xlu0 0
    %6207 = vperm.xlu0 %6206, %v69
    %v6208 = vpop.permute.xlu0 %6207
    %6211 = vset.pattern.permute.xlu0 0
    %6212 = vperm.xlu0 %6211, %v70
    %v6213 = vpop.permute.xlu0 %6212
    %6216 = vset.pattern.permute.xlu0 0
    %6217 = vperm.xlu0 %6216, %v71
    %v6218 = vpop.permute.xlu0 %6217
    %6221 = vset.pattern.permute.xlu0 0
    %6222 = vperm.xlu0 %6221, %v72
    %v6223 = vpop.permute.xlu0 %6222
    %6226 = vset.pattern.permute.xlu0 0
    %6227 = vperm.xlu0 %6226, %v73
    %v6228 = vpop.permute.xlu0 %6227
    %6231 = vset.pattern.permute.xlu0 0
    %6232 = vperm.xlu0 %6231, %v74
    %v6233 = vpop.permute.xlu0 %6232
    %6236 = vset.pattern.permute.xlu0 0
    %6237 = vperm.xlu0 %6236, %v75
    %v6238 = vpop.permute.xlu0 %6237
    %6241 = vset.pattern.permute.xlu0 0
    %6242 = vperm.xlu0 %6241, %v76
    %v6243 = vpop.permute.xlu0 %6242
    %6246 = vset.pattern.permute.xlu0 0
    %6247 = vperm.xlu0 %6246, %v77
    %v6248 = vpop.permute.xlu0 %6247
    %6251 = vset.pattern.permute.xlu0 0
    %6252 = vperm.xlu0 %6251, %v78
    %v6253 = vpop.permute.xlu0 %6252
    %6256 = vset.pattern.permute.xlu0 0
    %6257 = vperm.xlu0 %6256, %v79
    %v6258 = vpop.permute.xlu0 %6257
    %6261 = vset.pattern.permute.xlu0 0
    %6262 = vperm.xlu0 %6261, %v80
    %v6263 = vpop.permute.xlu0 %6262
    %6266 = vset.pattern.permute.xlu0 0
    %6267 = vperm.xlu0 %6266, %v81
    %v6268 = vpop.permute.xlu0 %6267
    %6271 = vset.pattern.permute.xlu0 0
    %6272 = vperm.xlu0 %6271, %v82
    %v6273 = vpop.permute.xlu0 %6272
    %6276 = vset.pattern.permute.xlu0 0
    %6277 = vperm.xlu0 %6276, %v83
    %v6278 = vpop.permute.xlu0 %6277
    %6281 = vset.pattern.permute.xlu0 0
    %6282 = vperm.xlu0 %6281, %v84
    %v6283 = vpop.permute.xlu0 %6282
    %6286 = vset.pattern.permute.xlu0 0
    %6287 = vperm.xlu0 %6286, %v85
    %v6288 = vpop.permute.xlu0 %6287
    %6291 = vset.pattern.permute.xlu0 0
    %6292 = vperm.xlu0 %6291, %v86
    %v6293 = vpop.permute.xlu0 %6292
    %6296 = vset.pattern.permute.xlu0 0
    %6297 = vperm.xlu0 %6296, %v87
    %v6298 = vpop.permute.xlu0 %6297
    %6301 = vset.pattern.permute.xlu0 0
    %6302 = vperm.xlu0 %6301, %v88
    %v6303 = vpop.permute.xlu0 %6302
    %6306 = vset.pattern.permute.xlu0 0
    %6307 = vperm.xlu0 %6306, %v89
    %v6308 = vpop.permute.xlu0 %6307
    %6311 = vset.pattern.permute.xlu0 0
    %6312 = vperm.xlu0 %6311, %v90
    %v6313 = vpop.permute.xlu0 %6312
    %6316 = vset.pattern.permute.xlu0 0
    %6317 = vperm.xlu0 %6316, %v91
    %v6318 = vpop.permute.xlu0 %6317
    %6321 = vset.pattern.permute.xlu0 0
    %6322 = vperm.xlu0 %6321, %v92
    %v6323 = vpop.permute.xlu0 %6322
    %6326 = vset.pattern.permute.xlu0 0
    %6327 = vperm.xlu0 %6326, %v93
    %v6328 = vpop.permute.xlu0 %6327
    %6331 = vset.pattern.permute.xlu0 0
    %6332 = vperm.xlu0 %6331, %v94
    %v6333 = vpop.permute.xlu0 %6332
    %6336 = vset.pattern.permute.xlu0 0
    %6337 = vperm.xlu0 %6336, %v95
    %v6338 = vpop.permute.xlu0 %6337
    %6341 = vset.pattern.permute.xlu0 0
    %6342 = vperm.xlu0 %6341, %v96
    %v6343 = vpop.permute.xlu0 %6342
    %6346 = vset.pattern.permute.xlu0 0
    %6347 = vperm.xlu0 %6346, %v97
    %v6348 = vpop.permute.xlu0 %6347
    %6351 = vset.pattern.permute.xlu0 0
    %6352 = vperm.xlu0 %6351, %v98
    %v6353 = vpop.permute.xlu0 %6352
    %6356 = vset.pattern.permute.xlu0 0
    %6357 = vperm.xlu0 %6356, %v99
    %v6358 = vpop.permute.xlu0 %6357
    %6361 = vset.pattern.permute.xlu0 0
    %6362 = vperm.xlu0 %6361, %v100
    %v6363 = vpop.permute.xlu0 %6362
    %6366 = vset.pattern.permute.xlu0 0
    %6367 = vperm.xlu0 %6366, %v101
    %v6368 = vpop.permute.xlu0 %6367
    %6371 = vset.pattern.permute.xlu0 0
    %6372 = vperm.xlu0 %6371, %v102
    %v6373 = vpop.permute.xlu0 %6372
    %6376 = vset.pattern.permute.xlu0 0
    %6377 = vperm.xlu0 %6376, %v103
    %v6378 = vpop.permute.xlu0 %6377
    %6381 = vset.pattern.permute.xlu0 0
    %6382 = vperm.xlu0 %6381, %v104
    %v6383 = vpop.permute.xlu0 %6382
    %v6385 = vmul.f32 %v5899, %v5983
    %v6386 = vmul.f32 %v5900, %v5988
    %v6387 = vmul.f32 %v5901, %v5993
    %v6388 = vmul.f32 %v5902, %v5998
    %v6389 = vmul.f32 %v5903, %v6003
    %v6390 = vmul.f32 %v5904, %v6008
    %v6391 = vmul.f32 %v5905, %v6013
    %v6392 = vmul.f32 %v5906, %v6018
    %v6393 = vmul.f32 %v5907, %v6023
    %v6394 = vmul.f32 %v5908, %v6028
    %v6395 = vmul.f32 %v5909, %v6033
    %v6396 = vmul.f32 %v5910, %v6038
    %v6397 = vmul.f32 %v5911, %v6043
    %v6398 = vmul.f32 %v5912, %v6048
    %v6399 = vmul.f32 %v5913, %v6053
    %v6400 = vmul.f32 %v5914, %v6058
    %v6401 = vmul.f32 %v5915, %v6063
    %v6402 = vmul.f32 %v5916, %v6068
    %v6403 = vmul.f32 %v5917, %v6073
    %v6404 = vmul.f32 %v5918, %v6078
    %v6405 = vmul.f32 %v5919, %v6083
    %v6406 = vmul.f32 %v5920, %v6088
    %v6407 = vmul.f32 %v5921, %v6093
    %v6408 = vmul.f32 %v5922, %v6098
    %v6409 = vmul.f32 %v5923, %v6103
    %v6410 = vmul.f32 %v5924, %v6108
    %v6411 = vmul.f32 %v5925, %v6113
    %v6412 = vmul.f32 %v5926, %v6118
    %v6413 = vmul.f32 %v5927, %v6123
    %v6414 = vmul.f32 %v5928, %v6128
    %v6415 = vmul.f32 %v5929, %v6133
    %v6416 = vmul.f32 %v5930, %v6138
    %v6417 = vmul.f32 %v5931, %v6143
    %v6418 = vmul.f32 %v5932, %v6148
    %v6419 = vmul.f32 %v5933, %v6153
    %v6420 = vmul.f32 %v5934, %v6158
    %v6421 = vmul.f32 %v5935, %v6163
    %v6422 = vmul.f32 %v5936, %v6168
    %v6423 = vmul.f32 %v5937, %v6173
    %v6424 = vmul.f32 %v5938, %v6178
    %v6425 = vmul.f32 %v5939, %v6183
    %v6426 = vmul.f32 %v5940, %v6188
    %v6427 = vmul.f32 %v5941, %v6193
    %v6428 = vmul.f32 %v5942, %v6198
    %v6429 = vmul.f32 %v5943, %v6203
    %v6430 = vmul.f32 %v5944, %v6208
    %v6431 = vmul.f32 %v5945, %v6213
    %v6432 = vmul.f32 %v5946, %v6218
    %v6433 = vmul.f32 %v5947, %v6223
    %v6434 = vmul.f32 %v5948, %v6228
    %v6435 = vmul.f32 %v5949, %v6233
    %v6436 = vmul.f32 %v5950, %v6238
    %v6437 = vmul.f32 %v5951, %v6243
    %v6438 = vmul.f32 %v5952, %v6248
    %v6439 = vmul.f32 %v5953, %v6253
    %v6440 = vmul.f32 %v5954, %v6258
    %v6441 = vmul.f32 %v5955, %v6263
    %v6442 = vmul.f32 %v5956, %v6268
    %v6443 = vmul.f32 %v5957, %v6273
    %v6444 = vmul.f32 %v5958, %v6278
    %v6445 = vmul.f32 %v5959, %v6283
    %v6446 = vmul.f32 %v5960, %v6288
    %v6447 = vmul.f32 %v5961, %v6293
    %v6448 = vmul.f32 %v5962, %v6298
    %v6449 = vmul.f32 %v5963, %v6303
    %v6450 = vmul.f32 %v5964, %v6308
    %v6451 = vmul.f32 %v5965, %v6313
    %v6452 = vmul.f32 %v5966, %v6318
    %v6453 = vmul.f32 %v5967, %v6323
    %v6454 = vmul.f32 %v5968, %v6328
    %v6455 = vmul.f32 %v5969, %v6333
    %v6456 = vmul.f32 %v5970, %v6338
    %v6457 = vmul.f32 %v5971, %v6343
    %v6458 = vmul.f32 %v5972, %v6348
    %v6459 = vmul.f32 %v5973, %v6353
    %v6460 = vmul.f32 %v5974, %v6358
    %v6461 = vmul.f32 %v5975, %v6363
    %v6462 = vmul.f32 %v5976, %v6368
    %v6463 = vmul.f32 %v5977, %v6373
    %v6464 = vmul.f32 %v5978, %v6378
    %v6465 = vmul.f32 %v5979, %v6383
    %v6466 = vadd.f32 %v6385, %v6386
    %v6467 = vadd.f32 %v6466, %v6387
    %v6468 = vadd.f32 %v6467, %v6388
    %v6469 = vadd.f32 %v6468, %v6389
    %v6470 = vadd.f32 %v6469, %v6390
    %v6471 = vadd.f32 %v6470, %v6391
    %v6472 = vadd.f32 %v6471, %v6392
    %v6473 = vadd.f32 %v6472, %v6393
    %v6474 = vadd.f32 %v6473, %v6394
    %v6475 = vadd.f32 %v6474, %v6395
    %v6476 = vadd.f32 %v6475, %v6396
    %v6477 = vadd.f32 %v6476, %v6397
    %v6478 = vadd.f32 %v6477, %v6398
    %v6479 = vadd.f32 %v6478, %v6399
    %v6480 = vadd.f32 %v6479, %v6400
    %v6481 = vadd.f32 %v6480, %v6401
    %v6482 = vadd.f32 %v6481, %v6402
    %v6483 = vadd.f32 %v6482, %v6403
    %v6484 = vadd.f32 %v6483, %v6404
    %v6485 = vadd.f32 %v6484, %v6405
    %v6486 = vadd.f32 %v6485, %v6406
    %v6487 = vadd.f32 %v6486, %v6407
    %v6488 = vadd.f32 %v6487, %v6408
    %v6489 = vadd.f32 %v6488, %v6409
    %v6490 = vadd.f32 %v6489, %v6410
    %v6491 = vadd.f32 %v6490, %v6411
    %v6492 = vadd.f32 %v6491, %v6412
    %v6493 = vadd.f32 %v6492, %v6413
    %v6494 = vadd.f32 %v6493, %v6414
    %v6495 = vadd.f32 %v6494, %v6415
    %v6496 = vadd.f32 %v6495, %v6416
    %v6497 = vadd.f32 %v6496, %v6417
    %v6498 = vadd.f32 %v6497, %v6418
    %v6499 = vadd.f32 %v6498, %v6419
    %v6500 = vadd.f32 %v6499, %v6420
    %v6501 = vadd.f32 %v6500, %v6421
    %v6502 = vadd.f32 %v6501, %v6422
    %v6503 = vadd.f32 %v6502, %v6423
    %v6504 = vadd.f32 %v6503, %v6424
    %v6505 = vadd.f32 %v6504, %v6425
    %v6506 = vadd.f32 %v6505, %v6426
    %v6507 = vadd.f32 %v6506, %v6427
    %v6508 = vadd.f32 %v6507, %v6428
    %v6509 = vadd.f32 %v6508, %v6429
    %v6510 = vadd.f32 %v6509, %v6430
    %v6511 = vadd.f32 %v6510, %v6431
    %v6512 = vadd.f32 %v6511, %v6432
    %v6513 = vadd.f32 %v6512, %v6433
    %v6514 = vadd.f32 %v6513, %v6434
    %v6515 = vadd.f32 %v6514, %v6435
    %v6516 = vadd.f32 %v6515, %v6436
    %v6517 = vadd.f32 %v6516, %v6437
    %v6518 = vadd.f32 %v6517, %v6438
    %v6519 = vadd.f32 %v6518, %v6439
    %v6520 = vadd.f32 %v6519, %v6440
    %v6521 = vadd.f32 %v6520, %v6441
    %v6522 = vadd.f32 %v6521, %v6442
    %v6523 = vadd.f32 %v6522, %v6443
    %v6524 = vadd.f32 %v6523, %v6444
    %v6525 = vadd.f32 %v6524, %v6445
    %v6526 = vadd.f32 %v6525, %v6446
    %v6527 = vadd.f32 %v6526, %v6447
    %v6528 = vadd.f32 %v6527, %v6448
    %v6529 = vadd.f32 %v6528, %v6449
    %v6530 = vadd.f32 %v6529, %v6450
    %v6531 = vadd.f32 %v6530, %v6451
    %v6532 = vadd.f32 %v6531, %v6452
    %v6533 = vadd.f32 %v6532, %v6453
    %v6534 = vadd.f32 %v6533, %v6454
    %v6535 = vadd.f32 %v6534, %v6455
    %v6536 = vadd.f32 %v6535, %v6456
    %v6537 = vadd.f32 %v6536, %v6457
    %v6538 = vadd.f32 %v6537, %v6458
    %v6539 = vadd.f32 %v6538, %v6459
    %v6540 = vadd.f32 %v6539, %v6460
    %v6541 = vadd.f32 %v6540, %v6461
    %v6542 = vadd.f32 %v6541, %v6462
    %v6543 = vadd.f32 %v6542, %v6463
    %v6544 = vadd.f32 %v6543, %v6464
    %v6545 = vadd.f32 %v6544, %v6465
    %v6546 = vrot.slane %v6545, 4
    %v6547 = vadd.f32 %v6545, %v6546
    %v6548 = vrot.slane %v6547, 2
    %v6549 = vadd.f32 %v6547, %v6548
    %v6550 = vrot.slane %v6549, 1
    %v6551 = vadd.f32 %v6549, %v6550
    %v6552 = vmul.f32 %v6385, %v5899
    %v6553 = vmul.f32 %v6386, %v5900
    %v6554 = vmul.f32 %v6387, %v5901
    %v6555 = vmul.f32 %v6388, %v5902
    %v6556 = vmul.f32 %v6389, %v5903
    %v6557 = vmul.f32 %v6390, %v5904
    %v6558 = vmul.f32 %v6391, %v5905
    %v6559 = vmul.f32 %v6392, %v5906
    %v6560 = vmul.f32 %v6393, %v5907
    %v6561 = vmul.f32 %v6394, %v5908
    %v6562 = vmul.f32 %v6395, %v5909
    %v6563 = vmul.f32 %v6396, %v5910
    %v6564 = vmul.f32 %v6397, %v5911
    %v6565 = vmul.f32 %v6398, %v5912
    %v6566 = vmul.f32 %v6399, %v5913
    %v6567 = vmul.f32 %v6400, %v5914
    %v6568 = vmul.f32 %v6401, %v5915
    %v6569 = vmul.f32 %v6402, %v5916
    %v6570 = vmul.f32 %v6403, %v5917
    %v6571 = vmul.f32 %v6404, %v5918
    %v6572 = vmul.f32 %v6405, %v5919
    %v6573 = vmul.f32 %v6406, %v5920
    %v6574 = vmul.f32 %v6407, %v5921
    %v6575 = vmul.f32 %v6408, %v5922
    %v6576 = vmul.f32 %v6409, %v5923
    %v6577 = vmul.f32 %v6410, %v5924
    %v6578 = vmul.f32 %v6411, %v5925
    %v6579 = vmul.f32 %v6412, %v5926
    %v6580 = vmul.f32 %v6413, %v5927
    %v6581 = vmul.f32 %v6414, %v5928
    %v6582 = vmul.f32 %v6415, %v5929
    %v6583 = vmul.f32 %v6416, %v5930
    %v6584 = vmul.f32 %v6417, %v5931
    %v6585 = vmul.f32 %v6418, %v5932
    %v6586 = vmul.f32 %v6419, %v5933
    %v6587 = vmul.f32 %v6420, %v5934
    %v6588 = vmul.f32 %v6421, %v5935
    %v6589 = vmul.f32 %v6422, %v5936
    %v6590 = vmul.f32 %v6423, %v5937
    %v6591 = vmul.f32 %v6424, %v5938
    %v6592 = vmul.f32 %v6425, %v5939
    %v6593 = vmul.f32 %v6426, %v5940
    %v6594 = vmul.f32 %v6427, %v5941
    %v6595 = vmul.f32 %v6428, %v5942
    %v6596 = vmul.f32 %v6429, %v5943
    %v6597 = vmul.f32 %v6430, %v5944
    %v6598 = vmul.f32 %v6431, %v5945
    %v6599 = vmul.f32 %v6432, %v5946
    %v6600 = vmul.f32 %v6433, %v5947
    %v6601 = vmul.f32 %v6434, %v5948
    %v6602 = vmul.f32 %v6435, %v5949
    %v6603 = vmul.f32 %v6436, %v5950
    %v6604 = vmul.f32 %v6437, %v5951
    %v6605 = vmul.f32 %v6438, %v5952
    %v6606 = vmul.f32 %v6439, %v5953
    %v6607 = vmul.f32 %v6440, %v5954
    %v6608 = vmul.f32 %v6441, %v5955
    %v6609 = vmul.f32 %v6442, %v5956
    %v6610 = vmul.f32 %v6443, %v5957
    %v6611 = vmul.f32 %v6444, %v5958
    %v6612 = vmul.f32 %v6445, %v5959
    %v6613 = vmul.f32 %v6446, %v5960
    %v6614 = vmul.f32 %v6447, %v5961
    %v6615 = vmul.f32 %v6448, %v5962
    %v6616 = vmul.f32 %v6449, %v5963
    %v6617 = vmul.f32 %v6450, %v5964
    %v6618 = vmul.f32 %v6451, %v5965
    %v6619 = vmul.f32 %v6452, %v5966
    %v6620 = vmul.f32 %v6453, %v5967
    %v6621 = vmul.f32 %v6454, %v5968
    %v6622 = vmul.f32 %v6455, %v5969
    %v6623 = vmul.f32 %v6456, %v5970
    %v6624 = vmul.f32 %v6457, %v5971
    %v6625 = vmul.f32 %v6458, %v5972
    %v6626 = vmul.f32 %v6459, %v5973
    %v6627 = vmul.f32 %v6460, %v5974
    %v6628 = vmul.f32 %v6461, %v5975
    %v6629 = vmul.f32 %v6462, %v5976
    %v6630 = vmul.f32 %v6463, %v5977
    %v6631 = vmul.f32 %v6464, %v5978
    %v6632 = vmul.f32 %v6465, %v5979
    %v6633 = vadd.f32 %v6552, %v6553
    %v6634 = vadd.f32 %v6633, %v6554
    %v6635 = vadd.f32 %v6634, %v6555
    %v6636 = vadd.f32 %v6635, %v6556
    %v6637 = vadd.f32 %v6636, %v6557
    %v6638 = vadd.f32 %v6637, %v6558
    %v6639 = vadd.f32 %v6638, %v6559
    %v6640 = vadd.f32 %v6639, %v6560
    %v6641 = vadd.f32 %v6640, %v6561
    %v6642 = vadd.f32 %v6641, %v6562
    %v6643 = vadd.f32 %v6642, %v6563
    %v6644 = vadd.f32 %v6643, %v6564
    %v6645 = vadd.f32 %v6644, %v6565
    %v6646 = vadd.f32 %v6645, %v6566
    %v6647 = vadd.f32 %v6646, %v6567
    %v6648 = vadd.f32 %v6647, %v6568
    %v6649 = vadd.f32 %v6648, %v6569
    %v6650 = vadd.f32 %v6649, %v6570
    %v6651 = vadd.f32 %v6650, %v6571
    %v6652 = vadd.f32 %v6651, %v6572
    %v6653 = vadd.f32 %v6652, %v6573
    %v6654 = vadd.f32 %v6653, %v6574
    %v6655 = vadd.f32 %v6654, %v6575
    %v6656 = vadd.f32 %v6655, %v6576
    %v6657 = vadd.f32 %v6656, %v6577
    %v6658 = vadd.f32 %v6657, %v6578
    %v6659 = vadd.f32 %v6658, %v6579
    %v6660 = vadd.f32 %v6659, %v6580
    %v6661 = vadd.f32 %v6660, %v6581
    %v6662 = vadd.f32 %v6661, %v6582
    %v6663 = vadd.f32 %v6662, %v6583
    %v6664 = vadd.f32 %v6663, %v6584
    %v6665 = vadd.f32 %v6664, %v6585
    %v6666 = vadd.f32 %v6665, %v6586
    %v6667 = vadd.f32 %v6666, %v6587
    %v6668 = vadd.f32 %v6667, %v6588
    %v6669 = vadd.f32 %v6668, %v6589
    %v6670 = vadd.f32 %v6669, %v6590
    %v6671 = vadd.f32 %v6670, %v6591
    %v6672 = vadd.f32 %v6671, %v6592
    %v6673 = vadd.f32 %v6672, %v6593
    %v6674 = vadd.f32 %v6673, %v6594
    %v6675 = vadd.f32 %v6674, %v6595
    %v6676 = vadd.f32 %v6675, %v6596
    %v6677 = vadd.f32 %v6676, %v6597
    %v6678 = vadd.f32 %v6677, %v6598
    %v6679 = vadd.f32 %v6678, %v6599
    %v6680 = vadd.f32 %v6679, %v6600
    %v6681 = vadd.f32 %v6680, %v6601
    %v6682 = vadd.f32 %v6681, %v6602
    %v6683 = vadd.f32 %v6682, %v6603
    %v6684 = vadd.f32 %v6683, %v6604
    %v6685 = vadd.f32 %v6684, %v6605
    %v6686 = vadd.f32 %v6685, %v6606
    %v6687 = vadd.f32 %v6686, %v6607
    %v6688 = vadd.f32 %v6687, %v6608
    %v6689 = vadd.f32 %v6688, %v6609
    %v6690 = vadd.f32 %v6689, %v6610
    %v6691 = vadd.f32 %v6690, %v6611
    %v6692 = vadd.f32 %v6691, %v6612
    %v6693 = vadd.f32 %v6692, %v6613
    %v6694 = vadd.f32 %v6693, %v6614
    %v6695 = vadd.f32 %v6694, %v6615
    %v6696 = vadd.f32 %v6695, %v6616
    %v6697 = vadd.f32 %v6696, %v6617
    %v6698 = vadd.f32 %v6697, %v6618
    %v6699 = vadd.f32 %v6698, %v6619
    %v6700 = vadd.f32 %v6699, %v6620
    %v6701 = vadd.f32 %v6700, %v6621
    %v6702 = vadd.f32 %v6701, %v6622
    %v6703 = vadd.f32 %v6702, %v6623
    %v6704 = vadd.f32 %v6703, %v6624
    %v6705 = vadd.f32 %v6704, %v6625
    %v6706 = vadd.f32 %v6705, %v6626
    %v6707 = vadd.f32 %v6706, %v6627
    %v6708 = vadd.f32 %v6707, %v6628
    %v6709 = vadd.f32 %v6708, %v6629
    %v6710 = vadd.f32 %v6709, %v6630
    %v6711 = vadd.f32 %v6710, %v6631
    %v6712 = vadd.f32 %v6711, %v6632
    %v6713 = vrot.slane %v6712, 4
    %v6714 = vadd.f32 %v6712, %v6713
    %v6715 = vrot.slane %v6714, 2
    %v6716 = vadd.f32 %v6714, %v6715
    %v6717 = vrot.slane %v6716, 1
    %v6718 = vadd.f32 %v6716, %v6717
    %v6719 = vmul.f32 %v6551, 0.001953125
    %v6720 = vmul.f32 %v6718, 0.001953125
    %v6721 = vmul.f32 %v6719, %v6719
    %v6722 = vsub.f32 %v6720, %v6721
    %v6723 = vmax.f32 %v6722, 0.0
    %v6724 = vadd.f32 %v6723, 1e-05
    %v6725 = vrsqrt.pop %v6724
    %v6726 = vmul.f32 %v6725, %v6724
    %v6727 = vmul.f32 %v6726, %v6725
    %v6728 = vmul.f32 0.5, %v6727
    %v6729 = vsub.f32 1.5, %v6728
    %v6730 = vmul.f32 %v6725, %v6729
    %vm6731 = vweird.f32 %v6724
    %vm6732 = vweird.f32 %v6725
    %vm6733 = vmor %vm6731, %vm6732
    %v6734 = vsel %vm6733, %v6725, %v6730
    %v6735 = vsub.f32 %v5899, %v6719
    %v6736 = vsub.f32 %v5900, %v6719
    %v6737 = vsub.f32 %v5901, %v6719
    %v6738 = vsub.f32 %v5902, %v6719
    %v6739 = vsub.f32 %v5903, %v6719
    %v6740 = vsub.f32 %v5904, %v6719
    %v6741 = vsub.f32 %v5905, %v6719
    %v6742 = vsub.f32 %v5906, %v6719
    %v6743 = vsub.f32 %v5907, %v6719
    %v6744 = vsub.f32 %v5908, %v6719
    %v6745 = vsub.f32 %v5909, %v6719
    %v6746 = vsub.f32 %v5910, %v6719
    %v6747 = vsub.f32 %v5911, %v6719
    %v6748 = vsub.f32 %v5912, %v6719
    %v6749 = vsub.f32 %v5913, %v6719
    %v6750 = vsub.f32 %v5914, %v6719
    %v6751 = vsub.f32 %v5915, %v6719
    %v6752 = vsub.f32 %v5916, %v6719
    %v6753 = vsub.f32 %v5917, %v6719
    %v6754 = vsub.f32 %v5918, %v6719
    %v6755 = vsub.f32 %v5919, %v6719
    %v6756 = vsub.f32 %v5920, %v6719
    %v6757 = vsub.f32 %v5921, %v6719
    %v6758 = vsub.f32 %v5922, %v6719
    %v6759 = vsub.f32 %v5923, %v6719
    %v6760 = vsub.f32 %v5924, %v6719
    %v6761 = vsub.f32 %v5925, %v6719
    %v6762 = vsub.f32 %v5926, %v6719
    %v6763 = vsub.f32 %v5927, %v6719
    %v6764 = vsub.f32 %v5928, %v6719
    %v6765 = vsub.f32 %v5929, %v6719
    %v6766 = vsub.f32 %v5930, %v6719
    %v6767 = vsub.f32 %v5931, %v6719
    %v6768 = vsub.f32 %v5932, %v6719
    %v6769 = vsub.f32 %v5933, %v6719
    %v6770 = vsub.f32 %v5934, %v6719
    %v6771 = vsub.f32 %v5935, %v6719
    %v6772 = vsub.f32 %v5936, %v6719
    %v6773 = vsub.f32 %v5937, %v6719
    %v6774 = vsub.f32 %v5938, %v6719
    %v6775 = vsub.f32 %v5939, %v6719
    %v6776 = vsub.f32 %v5940, %v6719
    %v6777 = vsub.f32 %v5941, %v6719
    %v6778 = vsub.f32 %v5942, %v6719
    %v6779 = vsub.f32 %v5943, %v6719
    %v6780 = vsub.f32 %v5944, %v6719
    %v6781 = vsub.f32 %v5945, %v6719
    %v6782 = vsub.f32 %v5946, %v6719
    %v6783 = vsub.f32 %v5947, %v6719
    %v6784 = vsub.f32 %v5948, %v6719
    %v6785 = vsub.f32 %v5949, %v6719
    %v6786 = vsub.f32 %v5950, %v6719
    %v6787 = vsub.f32 %v5951, %v6719
    %v6788 = vsub.f32 %v5952, %v6719
    %v6789 = vsub.f32 %v5953, %v6719
    %v6790 = vsub.f32 %v5954, %v6719
    %v6791 = vsub.f32 %v5955, %v6719
    %v6792 = vsub.f32 %v5956, %v6719
    %v6793 = vsub.f32 %v5957, %v6719
    %v6794 = vsub.f32 %v5958, %v6719
    %v6795 = vsub.f32 %v5959, %v6719
    %v6796 = vsub.f32 %v5960, %v6719
    %v6797 = vsub.f32 %v5961, %v6719
    %v6798 = vsub.f32 %v5962, %v6719
    %v6799 = vsub.f32 %v5963, %v6719
    %v6800 = vsub.f32 %v5964, %v6719
    %v6801 = vsub.f32 %v5965, %v6719
    %v6802 = vsub.f32 %v5966, %v6719
    %v6803 = vsub.f32 %v5967, %v6719
    %v6804 = vsub.f32 %v5968, %v6719
    %v6805 = vsub.f32 %v5969, %v6719
    %v6806 = vsub.f32 %v5970, %v6719
    %v6807 = vsub.f32 %v5971, %v6719
    %v6808 = vsub.f32 %v5972, %v6719
    %v6809 = vsub.f32 %v5973, %v6719
    %v6810 = vsub.f32 %v5974, %v6719
    %v6811 = vsub.f32 %v5975, %v6719
    %v6812 = vsub.f32 %v5976, %v6719
    %v6813 = vsub.f32 %v5977, %v6719
    %v6814 = vsub.f32 %v5978, %v6719
    %v6815 = vsub.f32 %v5979, %v6719
    %v6816 = vmul.f32 %v6735, %v6734
    %v6817 = vmul.f32 %v6736, %v6734
    %v6818 = vmul.f32 %v6737, %v6734
    %v6819 = vmul.f32 %v6738, %v6734
    %v6820 = vmul.f32 %v6739, %v6734
    %v6821 = vmul.f32 %v6740, %v6734
    %v6822 = vmul.f32 %v6741, %v6734
    %v6823 = vmul.f32 %v6742, %v6734
    %v6824 = vmul.f32 %v6743, %v6734
    %v6825 = vmul.f32 %v6744, %v6734
    %v6826 = vmul.f32 %v6745, %v6734
    %v6827 = vmul.f32 %v6746, %v6734
    %v6828 = vmul.f32 %v6747, %v6734
    %v6829 = vmul.f32 %v6748, %v6734
    %v6830 = vmul.f32 %v6749, %v6734
    %v6831 = vmul.f32 %v6750, %v6734
    %v6832 = vmul.f32 %v6751, %v6734
    %v6833 = vmul.f32 %v6752, %v6734
    %v6834 = vmul.f32 %v6753, %v6734
    %v6835 = vmul.f32 %v6754, %v6734
    %v6836 = vmul.f32 %v6755, %v6734
    %v6837 = vmul.f32 %v6756, %v6734
    %v6838 = vmul.f32 %v6757, %v6734
    %v6839 = vmul.f32 %v6758, %v6734
    %v6840 = vmul.f32 %v6759, %v6734
    %v6841 = vmul.f32 %v6760, %v6734
    %v6842 = vmul.f32 %v6761, %v6734
    %v6843 = vmul.f32 %v6762, %v6734
    %v6844 = vmul.f32 %v6763, %v6734
    %v6845 = vmul.f32 %v6764, %v6734
    %v6846 = vmul.f32 %v6765, %v6734
    %v6847 = vmul.f32 %v6766, %v6734
    %v6848 = vmul.f32 %v6767, %v6734
    %v6849 = vmul.f32 %v6768, %v6734
    %v6850 = vmul.f32 %v6769, %v6734
    %v6851 = vmul.f32 %v6770, %v6734
    %v6852 = vmul.f32 %v6771, %v6734
    %v6853 = vmul.f32 %v6772, %v6734
    %v6854 = vmul.f32 %v6773, %v6734
    %v6855 = vmul.f32 %v6774, %v6734
    %v6856 = vmul.f32 %v6775, %v6734
    %v6857 = vmul.f32 %v6776, %v6734
    %v6858 = vmul.f32 %v6777, %v6734
    %v6859 = vmul.f32 %v6778, %v6734
    %v6860 = vmul.f32 %v6779, %v6734
    %v6861 = vmul.f32 %v6780, %v6734
    %v6862 = vmul.f32 %v6781, %v6734
    %v6863 = vmul.f32 %v6782, %v6734
    %v6864 = vmul.f32 %v6783, %v6734
    %v6865 = vmul.f32 %v6784, %v6734
    %v6866 = vmul.f32 %v6785, %v6734
    %v6867 = vmul.f32 %v6786, %v6734
    %v6868 = vmul.f32 %v6787, %v6734
    %v6869 = vmul.f32 %v6788, %v6734
    %v6870 = vmul.f32 %v6789, %v6734
    %v6871 = vmul.f32 %v6790, %v6734
    %v6872 = vmul.f32 %v6791, %v6734
    %v6873 = vmul.f32 %v6792, %v6734
    %v6874 = vmul.f32 %v6793, %v6734
    %v6875 = vmul.f32 %v6794, %v6734
    %v6876 = vmul.f32 %v6795, %v6734
    %v6877 = vmul.f32 %v6796, %v6734
    %v6878 = vmul.f32 %v6797, %v6734
    %v6879 = vmul.f32 %v6798, %v6734
    %v6880 = vmul.f32 %v6799, %v6734
    %v6881 = vmul.f32 %v6800, %v6734
    %v6882 = vmul.f32 %v6801, %v6734
    %v6883 = vmul.f32 %v6802, %v6734
    %v6884 = vmul.f32 %v6803, %v6734
    %v6885 = vmul.f32 %v6804, %v6734
    %v6886 = vmul.f32 %v6805, %v6734
    %v6887 = vmul.f32 %v6806, %v6734
    %v6888 = vmul.f32 %v6807, %v6734
    %v6889 = vmul.f32 %v6808, %v6734
    %v6890 = vmul.f32 %v6809, %v6734
    %v6891 = vmul.f32 %v6810, %v6734
    %v6892 = vmul.f32 %v6811, %v6734
    %v6893 = vmul.f32 %v6812, %v6734
    %v6894 = vmul.f32 %v6813, %v6734
    %v6895 = vmul.f32 %v6814, %v6734
    %v6896 = vmul.f32 %v6815, %v6734
    %v6897 = vperm.slane %v105, 0
    %v6898 = vmul.f32 %v6816, %v6897
    %v6899 = vmul.f32 %v6817, %v6897
    %v6900 = vmul.f32 %v6818, %v6897
    %v6901 = vmul.f32 %v6819, %v6897
    %v6902 = vmul.f32 %v6820, %v6897
    %v6903 = vmul.f32 %v6821, %v6897
    %v6904 = vmul.f32 %v6822, %v6897
    %v6905 = vmul.f32 %v6823, %v6897
    %v6906 = vmul.f32 %v6824, %v6897
    %v6907 = vmul.f32 %v6825, %v6897
    %v6908 = vmul.f32 %v6826, %v6897
    %v6909 = vmul.f32 %v6827, %v6897
    %v6910 = vmul.f32 %v6828, %v6897
    %v6911 = vmul.f32 %v6829, %v6897
    %v6912 = vmul.f32 %v6830, %v6897
    %v6913 = vmul.f32 %v6831, %v6897
    %v6914 = vmul.f32 %v6832, %v6897
    %v6915 = vmul.f32 %v6833, %v6897
    %v6916 = vmul.f32 %v6834, %v6897
    %v6917 = vmul.f32 %v6835, %v6897
    %v6918 = vmul.f32 %v6836, %v6897
    %v6919 = vmul.f32 %v6837, %v6897
    %v6920 = vmul.f32 %v6838, %v6897
    %v6921 = vmul.f32 %v6839, %v6897
    %v6922 = vmul.f32 %v6840, %v6897
    %v6923 = vmul.f32 %v6841, %v6897
    %v6924 = vmul.f32 %v6842, %v6897
    %v6925 = vmul.f32 %v6843, %v6897
    %v6926 = vmul.f32 %v6844, %v6897
    %v6927 = vmul.f32 %v6845, %v6897
    %v6928 = vmul.f32 %v6846, %v6897
    %v6929 = vmul.f32 %v6847, %v6897
    %v6930 = vmul.f32 %v6848, %v6897
    %v6931 = vmul.f32 %v6849, %v6897
    %v6932 = vmul.f32 %v6850, %v6897
    %v6933 = vmul.f32 %v6851, %v6897
    %v6934 = vmul.f32 %v6852, %v6897
    %v6935 = vmul.f32 %v6853, %v6897
    %v6936 = vmul.f32 %v6854, %v6897
    %v6937 = vmul.f32 %v6855, %v6897
    %v6938 = vmul.f32 %v6856, %v6897
    %v6939 = vmul.f32 %v6857, %v6897
    %v6940 = vmul.f32 %v6858, %v6897
    %v6941 = vmul.f32 %v6859, %v6897
    %v6942 = vmul.f32 %v6860, %v6897
    %v6943 = vmul.f32 %v6861, %v6897
    %v6944 = vmul.f32 %v6862, %v6897
    %v6945 = vmul.f32 %v6863, %v6897
    %v6946 = vmul.f32 %v6864, %v6897
    %v6947 = vmul.f32 %v6865, %v6897
    %v6948 = vmul.f32 %v6866, %v6897
    %v6949 = vmul.f32 %v6867, %v6897
    %v6950 = vmul.f32 %v6868, %v6897
    %v6951 = vmul.f32 %v6869, %v6897
    %v6952 = vmul.f32 %v6870, %v6897
    %v6953 = vmul.f32 %v6871, %v6897
    %v6954 = vmul.f32 %v6872, %v6897
    %v6955 = vmul.f32 %v6873, %v6897
    %v6956 = vmul.f32 %v6874, %v6897
    %v6957 = vmul.f32 %v6875, %v6897
    %v6958 = vmul.f32 %v6876, %v6897
    %v6959 = vmul.f32 %v6877, %v6897
    %v6960 = vmul.f32 %v6878, %v6897
    %v6961 = vmul.f32 %v6879, %v6897
    %v6962 = vmul.f32 %v6880, %v6897
    %v6963 = vmul.f32 %v6881, %v6897
    %v6964 = vmul.f32 %v6882, %v6897
    %v6965 = vmul.f32 %v6883, %v6897
    %v6966 = vmul.f32 %v6884, %v6897
    %v6967 = vmul.f32 %v6885, %v6897
    %v6968 = vmul.f32 %v6886, %v6897
    %v6969 = vmul.f32 %v6887, %v6897
    %v6970 = vmul.f32 %v6888, %v6897
    %v6971 = vmul.f32 %v6889, %v6897
    %v6972 = vmul.f32 %v6890, %v6897
    %v6973 = vmul.f32 %v6891, %v6897
    %v6974 = vmul.f32 %v6892, %v6897
    %v6975 = vmul.f32 %v6893, %v6897
    %v6976 = vmul.f32 %v6894, %v6897
    %v6977 = vmul.f32 %v6895, %v6897
    %v6978 = vmul.f32 %v6896, %v6897
    %v6979 = vperm.slane %v106, 0
    %v6980 = vadd.f32 %v6898, %v6979
    %v6981 = vadd.f32 %v6899, %v6979
    %v6982 = vadd.f32 %v6900, %v6979
    %v6983 = vadd.f32 %v6901, %v6979
    %v6984 = vadd.f32 %v6902, %v6979
    %v6985 = vadd.f32 %v6903, %v6979
    %v6986 = vadd.f32 %v6904, %v6979
    %v6987 = vadd.f32 %v6905, %v6979
    %v6988 = vadd.f32 %v6906, %v6979
    %v6989 = vadd.f32 %v6907, %v6979
    %v6990 = vadd.f32 %v6908, %v6979
    %v6991 = vadd.f32 %v6909, %v6979
    %v6992 = vadd.f32 %v6910, %v6979
    %v6993 = vadd.f32 %v6911, %v6979
    %v6994 = vadd.f32 %v6912, %v6979
    %v6995 = vadd.f32 %v6913, %v6979
    %v6996 = vadd.f32 %v6914, %v6979
    %v6997 = vadd.f32 %v6915, %v6979
    %v6998 = vadd.f32 %v6916, %v6979
    %v6999 = vadd.f32 %v6917, %v6979
    %v7000 = vadd.f32 %v6918, %v6979
    %v7001 = vadd.f32 %v6919, %v6979
    %v7002 = vadd.f32 %v6920, %v6979
    %v7003 = vadd.f32 %v6921, %v6979
    %v7004 = vadd.f32 %v6922, %v6979
    %v7005 = vadd.f32 %v6923, %v6979
    %v7006 = vadd.f32 %v6924, %v6979
    %v7007 = vadd.f32 %v6925, %v6979
    %v7008 = vadd.f32 %v6926, %v6979
    %v7009 = vadd.f32 %v6927, %v6979
    %v7010 = vadd.f32 %v6928, %v6979
    %v7011 = vadd.f32 %v6929, %v6979
    %v7012 = vadd.f32 %v6930, %v6979
    %v7013 = vadd.f32 %v6931, %v6979
    %v7014 = vadd.f32 %v6932, %v6979
    %v7015 = vadd.f32 %v6933, %v6979
    %v7016 = vadd.f32 %v6934, %v6979
    %v7017 = vadd.f32 %v6935, %v6979
    %v7018 = vadd.f32 %v6936, %v6979
    %v7019 = vadd.f32 %v6937, %v6979
    %v7020 = vadd.f32 %v6938, %v6979
    %v7021 = vadd.f32 %v6939, %v6979
    %v7022 = vadd.f32 %v6940, %v6979
    %v7023 = vadd.f32 %v6941, %v6979
    %v7024 = vadd.f32 %v6942, %v6979
    %v7025 = vadd.f32 %v6943, %v6979
    %v7026 = vadd.f32 %v6944, %v6979
    %v7027 = vadd.f32 %v6945, %v6979
    %v7028 = vadd.f32 %v6946, %v6979
    %v7029 = vadd.f32 %v6947, %v6979
    %v7030 = vadd.f32 %v6948, %v6979
    %v7031 = vadd.f32 %v6949, %v6979
    %v7032 = vadd.f32 %v6950, %v6979
    %v7033 = vadd.f32 %v6951, %v6979
    %v7034 = vadd.f32 %v6952, %v6979
    %v7035 = vadd.f32 %v6953, %v6979
    %v7036 = vadd.f32 %v6954, %v6979
    %v7037 = vadd.f32 %v6955, %v6979
    %v7038 = vadd.f32 %v6956, %v6979
    %v7039 = vadd.f32 %v6957, %v6979
    %v7040 = vadd.f32 %v6958, %v6979
    %v7041 = vadd.f32 %v6959, %v6979
    %v7042 = vadd.f32 %v6960, %v6979
    %v7043 = vadd.f32 %v6961, %v6979
    %v7044 = vadd.f32 %v6962, %v6979
    %v7045 = vadd.f32 %v6963, %v6979
    %v7046 = vadd.f32 %v6964, %v6979
    %v7047 = vadd.f32 %v6965, %v6979
    %v7048 = vadd.f32 %v6966, %v6979
    %v7049 = vadd.f32 %v6967, %v6979
    %v7050 = vadd.f32 %v6968, %v6979
    %v7051 = vadd.f32 %v6969, %v6979
    %v7052 = vadd.f32 %v6970, %v6979
    %v7053 = vadd.f32 %v6971, %v6979
    %v7054 = vadd.f32 %v6972, %v6979
    %v7055 = vadd.f32 %v6973, %v6979
    %v7056 = vadd.f32 %v6974, %v6979
    %v7057 = vadd.f32 %v6975, %v6979
    %v7058 = vadd.f32 %v6976, %v6979
    %v7059 = vadd.f32 %v6977, %v6979
    %v7060 = vadd.f32 %v6978, %v6979
    %v7061 = vmax.f32 %v6980, 0.0
    %v7062 = vmax.f32 %v6981, 0.0
    %v7063 = vmax.f32 %v6982, 0.0
    %v7064 = vmax.f32 %v6983, 0.0
    %v7065 = vmax.f32 %v6984, 0.0
    %v7066 = vmax.f32 %v6985, 0.0
    %v7067 = vmax.f32 %v6986, 0.0
    %v7068 = vmax.f32 %v6987, 0.0
    %v7069 = vmax.f32 %v6988, 0.0
    %v7070 = vmax.f32 %v6989, 0.0
    %v7071 = vmax.f32 %v6990, 0.0
    %v7072 = vmax.f32 %v6991, 0.0
    %v7073 = vmax.f32 %v6992, 0.0
    %v7074 = vmax.f32 %v6993, 0.0
    %v7075 = vmax.f32 %v6994, 0.0
    %v7076 = vmax.f32 %v6995, 0.0
    %v7077 = vmax.f32 %v6996, 0.0
    %v7078 = vmax.f32 %v6997, 0.0
    %v7079 = vmax.f32 %v6998, 0.0
    %v7080 = vmax.f32 %v6999, 0.0
    %v7081 = vmax.f32 %v7000, 0.0
    %v7082 = vmax.f32 %v7001, 0.0
    %v7083 = vmax.f32 %v7002, 0.0
    %v7084 = vmax.f32 %v7003, 0.0
    %v7085 = vmax.f32 %v7004, 0.0
    %v7086 = vmax.f32 %v7005, 0.0
    %v7087 = vmax.f32 %v7006, 0.0
    %v7088 = vmax.f32 %v7007, 0.0
    %v7089 = vmax.f32 %v7008, 0.0
    %v7090 = vmax.f32 %v7009, 0.0
    %v7091 = vmax.f32 %v7010, 0.0
    %v7092 = vmax.f32 %v7011, 0.0
    %v7093 = vmax.f32 %v7012, 0.0
    %v7094 = vmax.f32 %v7013, 0.0
    %v7095 = vmax.f32 %v7014, 0.0
    %v7096 = vmax.f32 %v7015, 0.0
    %v7097 = vmax.f32 %v7016, 0.0
    %v7098 = vmax.f32 %v7017, 0.0
    %v7099 = vmax.f32 %v7018, 0.0
    %v7100 = vmax.f32 %v7019, 0.0
    %v7101 = vmax.f32 %v7020, 0.0
    %v7102 = vmax.f32 %v7021, 0.0
    %v7103 = vmax.f32 %v7022, 0.0
    %v7104 = vmax.f32 %v7023, 0.0
    %v7105 = vmax.f32 %v7024, 0.0
    %v7106 = vmax.f32 %v7025, 0.0
    %v7107 = vmax.f32 %v7026, 0.0
    %v7108 = vmax.f32 %v7027, 0.0
    %v7109 = vmax.f32 %v7028, 0.0
    %v7110 = vmax.f32 %v7029, 0.0
    %v7111 = vmax.f32 %v7030, 0.0
    %v7112 = vmax.f32 %v7031, 0.0
    %v7113 = vmax.f32 %v7032, 0.0
    %v7114 = vmax.f32 %v7033, 0.0
    %v7115 = vmax.f32 %v7034, 0.0
    %v7116 = vmax.f32 %v7035, 0.0
    %v7117 = vmax.f32 %v7036, 0.0
    %v7118 = vmax.f32 %v7037, 0.0
    %v7119 = vmax.f32 %v7038, 0.0
    %v7120 = vmax.f32 %v7039, 0.0
    %v7121 = vmax.f32 %v7040, 0.0
    %v7122 = vmax.f32 %v7041, 0.0
    %v7123 = vmax.f32 %v7042, 0.0
    %v7124 = vmax.f32 %v7043, 0.0
    %v7125 = vmax.f32 %v7044, 0.0
    %v7126 = vmax.f32 %v7045, 0.0
    %v7127 = vmax.f32 %v7046, 0.0
    %v7128 = vmax.f32 %v7047, 0.0
    %v7129 = vmax.f32 %v7048, 0.0
    %v7130 = vmax.f32 %v7049, 0.0
    %v7131 = vmax.f32 %v7050, 0.0
    %v7132 = vmax.f32 %v7051, 0.0
    %v7133 = vmax.f32 %v7052, 0.0
    %v7134 = vmax.f32 %v7053, 0.0
    %v7135 = vmax.f32 %v7054, 0.0
    %v7136 = vmax.f32 %v7055, 0.0
    %v7137 = vmax.f32 %v7056, 0.0
    %v7138 = vmax.f32 %v7057, 0.0
    %v7139 = vmax.f32 %v7058, 0.0
    %v7140 = vmax.f32 %v7059, 0.0
    %v7141 = vmax.f32 %v7060, 0.0
    %v7142 = vmul.f32 %v7061, %v5983
    %v7143 = vmul.f32 %v7062, %v5988
    %v7144 = vmul.f32 %v7063, %v5993
    %v7145 = vmul.f32 %v7064, %v5998
    %v7146 = vmul.f32 %v7065, %v6003
    %v7147 = vmul.f32 %v7066, %v6008
    %v7148 = vmul.f32 %v7067, %v6013
    %v7149 = vmul.f32 %v7068, %v6018
    %v7150 = vmul.f32 %v7069, %v6023
    %v7151 = vmul.f32 %v7070, %v6028
    %v7152 = vmul.f32 %v7071, %v6033
    %v7153 = vmul.f32 %v7072, %v6038
    %v7154 = vmul.f32 %v7073, %v6043
    %v7155 = vmul.f32 %v7074, %v6048
    %v7156 = vmul.f32 %v7075, %v6053
    %v7157 = vmul.f32 %v7076, %v6058
    %v7158 = vmul.f32 %v7077, %v6063
    %v7159 = vmul.f32 %v7078, %v6068
    %v7160 = vmul.f32 %v7079, %v6073
    %v7161 = vmul.f32 %v7080, %v6078
    %v7162 = vmul.f32 %v7081, %v6083
    %v7163 = vmul.f32 %v7082, %v6088
    %v7164 = vmul.f32 %v7083, %v6093
    %v7165 = vmul.f32 %v7084, %v6098
    %v7166 = vmul.f32 %v7085, %v6103
    %v7167 = vmul.f32 %v7086, %v6108
    %v7168 = vmul.f32 %v7087, %v6113
    %v7169 = vmul.f32 %v7088, %v6118
    %v7170 = vmul.f32 %v7089, %v6123
    %v7171 = vmul.f32 %v7090, %v6128
    %v7172 = vmul.f32 %v7091, %v6133
    %v7173 = vmul.f32 %v7092, %v6138
    %v7174 = vmul.f32 %v7093, %v6143
    %v7175 = vmul.f32 %v7094, %v6148
    %v7176 = vmul.f32 %v7095, %v6153
    %v7177 = vmul.f32 %v7096, %v6158
    %v7178 = vmul.f32 %v7097, %v6163
    %v7179 = vmul.f32 %v7098, %v6168
    %v7180 = vmul.f32 %v7099, %v6173
    %v7181 = vmul.f32 %v7100, %v6178
    %v7182 = vmul.f32 %v7101, %v6183
    %v7183 = vmul.f32 %v7102, %v6188
    %v7184 = vmul.f32 %v7103, %v6193
    %v7185 = vmul.f32 %v7104, %v6198
    %v7186 = vmul.f32 %v7105, %v6203
    %v7187 = vmul.f32 %v7106, %v6208
    %v7188 = vmul.f32 %v7107, %v6213
    %v7189 = vmul.f32 %v7108, %v6218
    %v7190 = vmul.f32 %v7109, %v6223
    %v7191 = vmul.f32 %v7110, %v6228
    %v7192 = vmul.f32 %v7111, %v6233
    %v7193 = vmul.f32 %v7112, %v6238
    %v7194 = vmul.f32 %v7113, %v6243
    %v7195 = vmul.f32 %v7114, %v6248
    %v7196 = vmul.f32 %v7115, %v6253
    %v7197 = vmul.f32 %v7116, %v6258
    %v7198 = vmul.f32 %v7117, %v6263
    %v7199 = vmul.f32 %v7118, %v6268
    %v7200 = vmul.f32 %v7119, %v6273
    %v7201 = vmul.f32 %v7120, %v6278
    %v7202 = vmul.f32 %v7121, %v6283
    %v7203 = vmul.f32 %v7122, %v6288
    %v7204 = vmul.f32 %v7123, %v6293
    %v7205 = vmul.f32 %v7124, %v6298
    %v7206 = vmul.f32 %v7125, %v6303
    %v7207 = vmul.f32 %v7126, %v6308
    %v7208 = vmul.f32 %v7127, %v6313
    %v7209 = vmul.f32 %v7128, %v6318
    %v7210 = vmul.f32 %v7129, %v6323
    %v7211 = vmul.f32 %v7130, %v6328
    %v7212 = vmul.f32 %v7131, %v6333
    %v7213 = vmul.f32 %v7132, %v6338
    %v7214 = vmul.f32 %v7133, %v6343
    %v7215 = vmul.f32 %v7134, %v6348
    %v7216 = vmul.f32 %v7135, %v6353
    %v7217 = vmul.f32 %v7136, %v6358
    %v7218 = vmul.f32 %v7137, %v6363
    %v7219 = vmul.f32 %v7138, %v6368
    %v7220 = vmul.f32 %v7139, %v6373
    %v7221 = vmul.f32 %v7140, %v6378
    %v7222 = vmul.f32 %v7141, %v6383
    %7223 = vst [vmem:[#allocation2] sm:$0xff] 0.0
    %7224 = vst [vmem:[#allocation2 + $0x8] sm:$0xff] 0.0
    %7225 = vst [vmem:[#allocation2 + $0x10] sm:$0xff] 0.0
    %7226 = vst [vmem:[#allocation2 + $0x2a0] sm:$0xff] 0.0
    %7227 = vst [vmem:[#allocation2 + $0x2a8] sm:$0xff] 0.0
    %7228 = vst [vmem:[#allocation2 + $0x2b0] sm:$0xff] 0.0
    %7229 = vst [vmem:[#allocation2 + $0x18] sm:$0xff] %v7142
    %7230 = vst [vmem:[#allocation2 + $0x20] sm:$0xff] %v7143
    %7231 = vst [vmem:[#allocation2 + $0x28] sm:$0xff] %v7144
    %7232 = vst [vmem:[#allocation2 + $0x30] sm:$0xff] %v7145
    %7233 = vst [vmem:[#allocation2 + $0x38] sm:$0xff] %v7146
    %7234 = vst [vmem:[#allocation2 + $0x40] sm:$0xff] %v7147
    %7235 = vst [vmem:[#allocation2 + $0x48] sm:$0xff] %v7148
    %7236 = vst [vmem:[#allocation2 + $0x50] sm:$0xff] %v7149
    %7237 = vst [vmem:[#allocation2 + $0x58] sm:$0xff] %v7150
    %7238 = vst [vmem:[#allocation2 + $0x60] sm:$0xff] %v7151
    %7239 = vst [vmem:[#allocation2 + $0x68] sm:$0xff] %v7152
    %7240 = vst [vmem:[#allocation2 + $0x70] sm:$0xff] %v7153
    %7241 = vst [vmem:[#allocation2 + $0x78] sm:$0xff] %v7154
    %7242 = vst [vmem:[#allocation2 + $0x80] sm:$0xff] %v7155
    %7243 = vst [vmem:[#allocation2 + $0x88] sm:$0xff] %v7156
    %7244 = vst [vmem:[#allocation2 + $0x90] sm:$0xff] %v7157
    %7245 = vst [vmem:[#allocation2 + $0x98] sm:$0xff] %v7158
    %7246 = vst [vmem:[#allocation2 + $0xa0] sm:$0xff] %v7159
    %7247 = vst [vmem:[#allocation2 + $0xa8] sm:$0xff] %v7160
    %7248 = vst [vmem:[#allocation2 + $0xb0] sm:$0xff] %v7161
    %7249 = vst [vmem:[#allocation2 + $0xb8] sm:$0xff] %v7162
    %7250 = vst [vmem:[#allocation2 + $0xc0] sm:$0xff] %v7163
    %7251 = vst [vmem:[#allocation2 + $0xc8] sm:$0xff] %v7164
    %7252 = vst [vmem:[#allocation2 + $0xd0] sm:$0xff] %v7165
    %7253 = vst [vmem:[#allocation2 + $0xd8] sm:$0xff] %v7166
    %7254 = vst [vmem:[#allocation2 + $0xe0] sm:$0xff] %v7167
    %7255 = vst [vmem:[#allocation2 + $0xe8] sm:$0xff] %v7168
    %7256 = vst [vmem:[#allocation2 + $0xf0] sm:$0xff] %v7169
    %7257 = vst [vmem:[#allocation2 + $0xf8] sm:$0xff] %v7170
    %7258 = vst [vmem:[#allocation2 + $0x100] sm:$0xff] %v7171
    %7259 = vst [vmem:[#allocation2 + $0x108] sm:$0xff] %v7172
    %7260 = vst [vmem:[#allocation2 + $0x110] sm:$0xff] %v7173
    %7261 = vst [vmem:[#allocation2 + $0x118] sm:$0xff] %v7174
    %7262 = vst [vmem:[#allocation2 + $0x120] sm:$0xff] %v7175
    %7263 = vst [vmem:[#allocation2 + $0x128] sm:$0xff] %v7176
    %7264 = vst [vmem:[#allocation2 + $0x130] sm:$0xff] %v7177
    %7265 = vst [vmem:[#allocation2 + $0x138] sm:$0xff] %v7178
    %7266 = vst [vmem:[#allocation2 + $0x140] sm:$0xff] %v7179
    %7267 = vst [vmem:[#allocation2 + $0x148] sm:$0xff] %v7180
    %7268 = vst [vmem:[#allocation2 + $0x150] sm:$0xff] %v7181
    %7269 = vst [vmem:[#allocation2 + $0x158] sm:$0xff] %v7182
    %7270 = vst [vmem:[#allocation2 + $0x160] sm:$0xff] %v7183
    %7271 = vst [vmem:[#allocation2 + $0x168] sm:$0xff] %v7184
    %7272 = vst [vmem:[#allocation2 + $0x170] sm:$0xff] %v7185
    %7273 = vst [vmem:[#allocation2 + $0x178] sm:$0xff] %v7186
    %7274 = vst [vmem:[#allocation2 + $0x180] sm:$0xff] %v7187
    %7275 = vst [vmem:[#allocation2 + $0x188] sm:$0xff] %v7188
    %7276 = vst [vmem:[#allocation2 + $0x190] sm:$0xff] %v7189
    %7277 = vst [vmem:[#allocation2 + $0x198] sm:$0xff] %v7190
    %7278 = vst [vmem:[#allocation2 + $0x1a0] sm:$0xff] %v7191
    %7279 = vst [vmem:[#allocation2 + $0x1a8] sm:$0xff] %v7192
    %7280 = vst [vmem:[#allocation2 + $0x1b0] sm:$0xff] %v7193
    %7281 = vst [vmem:[#allocation2 + $0x1b8] sm:$0xff] %v7194
    %7282 = vst [vmem:[#allocation2 + $0x1c0] sm:$0xff] %v7195
    %7283 = vst [vmem:[#allocation2 + $0x1c8] sm:$0xff] %v7196
    %7284 = vst [vmem:[#allocation2 + $0x1d0] sm:$0xff] %v7197
    %7285 = vst [vmem:[#allocation2 + $0x1d8] sm:$0xff] %v7198
    %7286 = vst [vmem:[#allocation2 + $0x1e0] sm:$0xff] %v7199
    %7287 = vst [vmem:[#allocation2 + $0x1e8] sm:$0xff] %v7200
    %7288 = vst [vmem:[#allocation2 + $0x1f0] sm:$0xff] %v7201
    %7289 = vst [vmem:[#allocation2 + $0x1f8] sm:$0xff] %v7202
    %7290 = vst [vmem:[#allocation2 + $0x200] sm:$0xff] %v7203
    %7291 = vst [vmem:[#allocation2 + $0x208] sm:$0xff] %v7204
    %7292 = vst [vmem:[#allocation2 + $0x210] sm:$0xff] %v7205
    %7293 = vst [vmem:[#allocation2 + $0x218] sm:$0xff] %v7206
    %7294 = vst [vmem:[#allocation2 + $0x220] sm:$0xff] %v7207
    %7295 = vst [vmem:[#allocation2 + $0x228] sm:$0xff] %v7208
    %7296 = vst [vmem:[#allocation2 + $0x230] sm:$0xff] %v7209
    %7297 = vst [vmem:[#allocation2 + $0x238] sm:$0xff] %v7210
    %7298 = vst [vmem:[#allocation2 + $0x240] sm:$0xff] %v7211
    %7299 = vst [vmem:[#allocation2 + $0x248] sm:$0xff] %v7212
    %7300 = vst [vmem:[#allocation2 + $0x250] sm:$0xff] %v7213
    %7301 = vst [vmem:[#allocation2 + $0x258] sm:$0xff] %v7214
    %7302 = vst [vmem:[#allocation2 + $0x260] sm:$0xff] %v7215
    %7303 = vst [vmem:[#allocation2 + $0x268] sm:$0xff] %v7216
    %7304 = vst [vmem:[#allocation2 + $0x270] sm:$0xff] %v7217
    %7305 = vst [vmem:[#allocation2 + $0x278] sm:$0xff] %v7218
    %7306 = vst [vmem:[#allocation2 + $0x280] sm:$0xff] %v7219
    %7307 = vst [vmem:[#allocation2 + $0x288] sm:$0xff] %v7220
    %7308 = vst [vmem:[#allocation2 + $0x290] sm:$0xff] %v7221
    %7309 = vst [vmem:[#allocation2 + $0x298] sm:$0xff] %v7222
    %v7310 = vld [vmem:[#allocation2 + $0x5] sm:$0xff]
    %v7311 = vld [vmem:[#allocation2 + $0xd] sm:$0xff]
    %v7312 = vld [vmem:[#allocation2 + $0x15] sm:$0xff]
    %v7313 = vld [vmem:[#allocation2 + $0x1d] sm:$0xff]
    %v7314 = vld [vmem:[#allocation2 + $0x25] sm:$0xff]
    %v7315 = vld [vmem:[#allocation2 + $0x2d] sm:$0xff]
    %v7316 = vld [vmem:[#allocation2 + $0x35] sm:$0xff]
    %v7317 = vld [vmem:[#allocation2 + $0x3d] sm:$0xff]
    %v7318 = vld [vmem:[#allocation2 + $0x45] sm:$0xff]
    %v7319 = vld [vmem:[#allocation2 + $0x4d] sm:$0xff]
    %v7320 = vld [vmem:[#allocation2 + $0x55] sm:$0xff]
    %v7321 = vld [vmem:[#allocation2 + $0x5d] sm:$0xff]
    %v7322 = vld [vmem:[#allocation2 + $0x65] sm:$0xff]
    %v7323 = vld [vmem:[#allocation2 + $0x6d] sm:$0xff]
    %v7324 = vld [vmem:[#allocation2 + $0x75] sm:$0xff]
    %v7325 = vld [vmem:[#allocation2 + $0x7d] sm:$0xff]
    %v7326 = vld [vmem:[#allocation2 + $0x85] sm:$0xff]
    %v7327 = vld [vmem:[#allocation2 + $0x8d] sm:$0xff]
    %v7328 = vld [vmem:[#allocation2 + $0x95] sm:$0xff]
    %v7329 = vld [vmem:[#allocation2 + $0x9d] sm:$0xff]
    %v7330 = vld [vmem:[#allocation2 + $0xa5] sm:$0xff]
    %v7331 = vld [vmem:[#allocation2 + $0xad] sm:$0xff]
    %v7332 = vld [vmem:[#allocation2 + $0xb5] sm:$0xff]
    %v7333 = vld [vmem:[#allocation2 + $0xbd] sm:$0xff]
    %v7334 = vld [vmem:[#allocation2 + $0xc5] sm:$0xff]
    %v7335 = vld [vmem:[#allocation2 + $0xcd] sm:$0xff]
    %v7336 = vld [vmem:[#allocation2 + $0xd5] sm:$0xff]
    %v7337 = vld [vmem:[#allocation2 + $0xdd] sm:$0xff]
    %v7338 = vld [vmem:[#allocation2 + $0xe5] sm:$0xff]
    %v7339 = vld [vmem:[#allocation2 + $0xed] sm:$0xff]
    %v7340 = vld [vmem:[#allocation2 + $0xf5] sm:$0xff]
    %v7341 = vld [vmem:[#allocation2 + $0xfd] sm:$0xff]
    %v7342 = vld [vmem:[#allocation2 + $0x105] sm:$0xff]
    %v7343 = vld [vmem:[#allocation2 + $0x10d] sm:$0xff]
    %v7344 = vld [vmem:[#allocation2 + $0x115] sm:$0xff]
    %v7345 = vld [vmem:[#allocation2 + $0x11d] sm:$0xff]
    %v7346 = vld [vmem:[#allocation2 + $0x125] sm:$0xff]
    %v7347 = vld [vmem:[#allocation2 + $0x12d] sm:$0xff]
    %v7348 = vld [vmem:[#allocation2 + $0x135] sm:$0xff]
    %v7349 = vld [vmem:[#allocation2 + $0x13d] sm:$0xff]
    %v7350 = vld [vmem:[#allocation2 + $0x145] sm:$0xff]
    %v7351 = vld [vmem:[#allocation2 + $0x14d] sm:$0xff]
    %v7352 = vld [vmem:[#allocation2 + $0x155] sm:$0xff]
    %v7353 = vld [vmem:[#allocation2 + $0x15d] sm:$0xff]
    %v7354 = vld [vmem:[#allocation2 + $0x165] sm:$0xff]
    %v7355 = vld [vmem:[#allocation2 + $0x16d] sm:$0xff]
    %v7356 = vld [vmem:[#allocation2 + $0x175] sm:$0xff]
    %v7357 = vld [vmem:[#allocation2 + $0x17d] sm:$0xff]
    %v7358 = vld [vmem:[#allocation2 + $0x185] sm:$0xff]
    %v7359 = vld [vmem:[#allocation2 + $0x18d] sm:$0xff]
    %v7360 = vld [vmem:[#allocation2 + $0x195] sm:$0xff]
    %v7361 = vld [vmem:[#allocation2 + $0x19d] sm:$0xff]
    %v7362 = vld [vmem:[#allocation2 + $0x1a5] sm:$0xff]
    %v7363 = vld [vmem:[#allocation2 + $0x1ad] sm:$0xff]
    %v7364 = vld [vmem:[#allocation2 + $0x1b5] sm:$0xff]
    %v7365 = vld [vmem:[#allocation2 + $0x1bd] sm:$0xff]
    %v7366 = vld [vmem:[#allocation2 + $0x1c5] sm:$0xff]
    %v7367 = vld [vmem:[#allocation2 + $0x1cd] sm:$0xff]
    %v7368 = vld [vmem:[#allocation2 + $0x1d5] sm:$0xff]
    %v7369 = vld [vmem:[#allocation2 + $0x1dd] sm:$0xff]
    %v7370 = vld [vmem:[#allocation2 + $0x1e5] sm:$0xff]
    %v7371 = vld [vmem:[#allocation2 + $0x1ed] sm:$0xff]
    %v7372 = vld [vmem:[#allocation2 + $0x1f5] sm:$0xff]
    %v7373 = vld [vmem:[#allocation2 + $0x1fd] sm:$0xff]
    %v7374 = vld [vmem:[#allocation2 + $0x205] sm:$0xff]
    %v7375 = vld [vmem:[#allocation2 + $0x20d] sm:$0xff]
    %v7376 = vld [vmem:[#allocation2 + $0x215] sm:$0xff]
    %v7377 = vld [vmem:[#allocation2 + $0x21d] sm:$0xff]
    %v7378 = vld [vmem:[#allocation2 + $0x225] sm:$0xff]
    %v7379 = vld [vmem:[#allocation2 + $0x22d] sm:$0xff]
    %v7380 = vld [vmem:[#allocation2 + $0x235] sm:$0xff]
    %v7381 = vld [vmem:[#allocation2 + $0x23d] sm:$0xff]
    %v7382 = vld [vmem:[#allocation2 + $0x245] sm:$0xff]
    %v7383 = vld [vmem:[#allocation2 + $0x24d] sm:$0xff]
    %v7384 = vld [vmem:[#allocation2 + $0x255] sm:$0xff]
    %v7385 = vld [vmem:[#allocation2 + $0x25d] sm:$0xff]
    %v7386 = vld [vmem:[#allocation2 + $0x265] sm:$0xff]
    %v7387 = vld [vmem:[#allocation2 + $0x26d] sm:$0xff]
    %v7388 = vld [vmem:[#allocation2 + $0x275] sm:$0xff]
    %v7389 = vld [vmem:[#allocation2 + $0x27d] sm:$0xff]
    %v7390 = vld [vmem:[#allocation2 + $0x285] sm:$0xff]
    %v7391 = vld [vmem:[%s3] sm:$0xff]
    %v7392 = vld [vmem:[%s3 + $0x8] sm:$0xff]
    %v7393 = vld [vmem:[%s3 + $0x10] sm:$0xff]
    %v7394 = vld [vmem:[%s3 + $0x18] sm:$0xff]
    %v7395 = vld [vmem:[%s3 + $0x20] sm:$0xff]
    %v7396 = vld [vmem:[%s3 + $0x28] sm:$0xff]
    %v7397 = vld [vmem:[%s3 + $0x30] sm:$0xff]
    %v7398 = vld [vmem:[%s3 + $0x38] sm:$0xff]
    %v7399 = vld [vmem:[%s3 + $0x40] sm:$0xff]
    %v7400 = vld [vmem:[%s3 + $0x48] sm:$0xff]
    %v7401 = vld [vmem:[%s3 + $0x50] sm:$0xff]
    %v7402 = vld [vmem:[%s3 + $0x58] sm:$0xff]
    %v7403 = vld [vmem:[%s3 + $0x60] sm:$0xff]
    %v7404 = vld [vmem:[%s3 + $0x68] sm:$0xff]
    %v7405 = vld [vmem:[%s3 + $0x70] sm:$0xff]
    %v7406 = vld [vmem:[%s3 + $0x78] sm:$0xff]
    %v7407 = vld [vmem:[#allocation2 + $0x6] sm:$0xff]
    %v7408 = vld [vmem:[#allocation2 + $0xe] sm:$0xff]
    %v7409 = vld [vmem:[#allocation2 + $0x16] sm:$0xff]
    %v7410 = vld [vmem:[#allocation2 + $0x1e] sm:$0xff]
    %v7411 = vld [vmem:[#allocation2 + $0x26] sm:$0xff]
    %v7412 = vld [vmem:[#allocation2 + $0x2e] sm:$0xff]
    %v7413 = vld [vmem:[#allocation2 + $0x36] sm:$0xff]
    %v7414 = vld [vmem:[#allocation2 + $0x3e] sm:$0xff]
    %v7415 = vld [vmem:[#allocation2 + $0x46] sm:$0xff]
    %v7416 = vld [vmem:[#allocation2 + $0x4e] sm:$0xff]
    %v7417 = vld [vmem:[#allocation2 + $0x56] sm:$0xff]
    %v7418 = vld [vmem:[#allocation2 + $0x5e] sm:$0xff]
    %v7419 = vld [vmem:[#allocation2 + $0x66] sm:$0xff]
    %v7420 = vld [vmem:[#allocation2 + $0x6e] sm:$0xff]
    %v7421 = vld [vmem:[#allocation2 + $0x76] sm:$0xff]
    %v7422 = vld [vmem:[#allocation2 + $0x7e] sm:$0xff]
    %v7423 = vld [vmem:[#allocation2 + $0x86] sm:$0xff]
    %v7424 = vld [vmem:[#allocation2 + $0x8e] sm:$0xff]
    %v7425 = vld [vmem:[#allocation2 + $0x96] sm:$0xff]
    %v7426 = vld [vmem:[#allocation2 + $0x9e] sm:$0xff]
    %v7427 = vld [vmem:[#allocation2 + $0xa6] sm:$0xff]
    %v7428 = vld [vmem:[#allocation2 + $0xae] sm:$0xff]
    %v7429 = vld [vmem:[#allocation2 + $0xb6] sm:$0xff]
    %v7430 = vld [vmem:[#allocation2 + $0xbe] sm:$0xff]
    %v7431 = vld [vmem:[#allocation2 + $0xc6] sm:$0xff]
    %v7432 = vld [vmem:[#allocation2 + $0xce] sm:$0xff]
    %v7433 = vld [vmem:[#allocation2 + $0xd6] sm:$0xff]
    %v7434 = vld [vmem:[#allocation2 + $0xde] sm:$0xff]
    %v7435 = vld [vmem:[#allocation2 + $0xe6] sm:$0xff]
    %v7436 = vld [vmem:[#allocation2 + $0xee] sm:$0xff]
    %v7437 = vld [vmem:[#allocation2 + $0xf6] sm:$0xff]
    %v7438 = vld [vmem:[#allocation2 + $0xfe] sm:$0xff]
    %v7439 = vld [vmem:[#allocation2 + $0x106] sm:$0xff]
    %v7440 = vld [vmem:[#allocation2 + $0x10e] sm:$0xff]
    %v7441 = vld [vmem:[#allocation2 + $0x116] sm:$0xff]
    %v7442 = vld [vmem:[#allocation2 + $0x11e] sm:$0xff]
    %v7443 = vld [vmem:[#allocation2 + $0x126] sm:$0xff]
    %v7444 = vld [vmem:[#allocation2 + $0x12e] sm:$0xff]
    %v7445 = vld [vmem:[#allocation2 + $0x136] sm:$0xff]
    %v7446 = vld [vmem:[#allocation2 + $0x13e] sm:$0xff]
    %v7447 = vld [vmem:[#allocation2 + $0x146] sm:$0xff]
    %v7448 = vld [vmem:[#allocation2 + $0x14e] sm:$0xff]
    %v7449 = vld [vmem:[#allocation2 + $0x156] sm:$0xff]
    %v7450 = vld [vmem:[#allocation2 + $0x15e] sm:$0xff]
    %v7451 = vld [vmem:[#allocation2 + $0x166] sm:$0xff]
    %v7452 = vld [vmem:[#allocation2 + $0x16e] sm:$0xff]
    %v7453 = vld [vmem:[#allocation2 + $0x176] sm:$0xff]
    %v7454 = vld [vmem:[#allocation2 + $0x17e] sm:$0xff]
    %v7455 = vld [vmem:[#allocation2 + $0x186] sm:$0xff]
    %v7456 = vld [vmem:[#allocation2 + $0x18e] sm:$0xff]
    %v7457 = vld [vmem:[#allocation2 + $0x196] sm:$0xff]
    %v7458 = vld [vmem:[#allocation2 + $0x19e] sm:$0xff]
    %v7459 = vld [vmem:[#allocation2 + $0x1a6] sm:$0xff]
    %v7460 = vld [vmem:[#allocation2 + $0x1ae] sm:$0xff]
    %v7461 = vld [vmem:[#allocation2 + $0x1b6] sm:$0xff]
    %v7462 = vld [vmem:[#allocation2 + $0x1be] sm:$0xff]
    %v7463 = vld [vmem:[#allocation2 + $0x1c6] sm:$0xff]
    %v7464 = vld [vmem:[#allocation2 + $0x1ce] sm:$0xff]
    %v7465 = vld [vmem:[#allocation2 + $0x1d6] sm:$0xff]
    %v7466 = vld [vmem:[#allocation2 + $0x1de] sm:$0xff]
    %v7467 = vld [vmem:[#allocation2 + $0x1e6] sm:$0xff]
    %v7468 = vld [vmem:[#allocation2 + $0x1ee] sm:$0xff]
    %v7469 = vld [vmem:[#allocation2 + $0x1f6] sm:$0xff]
    %v7470 = vld [vmem:[#allocation2 + $0x1fe] sm:$0xff]
    %v7471 = vld [vmem:[#allocation2 + $0x206] sm:$0xff]
    %v7472 = vld [vmem:[#allocation2 + $0x20e] sm:$0xff]
    %v7473 = vld [vmem:[#allocation2 + $0x216] sm:$0xff]
    %v7474 = vld [vmem:[#allocation2 + $0x21e] sm:$0xff]
    %v7475 = vld [vmem:[#allocation2 + $0x226] sm:$0xff]
    %v7476 = vld [vmem:[#allocation2 + $0x22e] sm:$0xff]
    %v7477 = vld [vmem:[#allocation2 + $0x236] sm:$0xff]
    %v7478 = vld [vmem:[#allocation2 + $0x23e] sm:$0xff]
    %v7479 = vld [vmem:[#allocation2 + $0x246] sm:$0xff]
    %v7480 = vld [vmem:[#allocation2 + $0x24e] sm:$0xff]
    %v7481 = vld [vmem:[#allocation2 + $0x256] sm:$0xff]
    %v7482 = vld [vmem:[#allocation2 + $0x25e] sm:$0xff]
    %v7483 = vld [vmem:[#allocation2 + $0x266] sm:$0xff]
    %v7484 = vld [vmem:[#allocation2 + $0x26e] sm:$0xff]
    %v7485 = vld [vmem:[#allocation2 + $0x276] sm:$0xff]
    %v7486 = vld [vmem:[#allocation2 + $0x27e] sm:$0xff]
    %v7487 = vld [vmem:[#allocation2 + $0x286] sm:$0xff]
    %s7488 = scalar_lea.vmem %s3, 128
    %v7489 = vld [vmem:[%s7488] sm:$0xff]
    %v7490 = vld [vmem:[%s7488 + $0x8] sm:$0xff]
    %v7491 = vld [vmem:[%s7488 + $0x10] sm:$0xff]
    %v7492 = vld [vmem:[%s7488 + $0x18] sm:$0xff]
    %v7493 = vld [vmem:[%s7488 + $0x20] sm:$0xff]
    %v7494 = vld [vmem:[%s7488 + $0x28] sm:$0xff]
    %v7495 = vld [vmem:[%s7488 + $0x30] sm:$0xff]
    %v7496 = vld [vmem:[%s7488 + $0x38] sm:$0xff]
    %v7497 = vld [vmem:[%s7488 + $0x40] sm:$0xff]
    %v7498 = vld [vmem:[%s7488 + $0x48] sm:$0xff]
    %v7499 = vld [vmem:[%s7488 + $0x50] sm:$0xff]
    %v7500 = vld [vmem:[%s7488 + $0x58] sm:$0xff]
    %v7501 = vld [vmem:[%s7488 + $0x60] sm:$0xff]
    %v7502 = vld [vmem:[%s7488 + $0x68] sm:$0xff]
    %v7503 = vld [vmem:[%s7488 + $0x70] sm:$0xff]
    %v7504 = vld [vmem:[%s7488 + $0x78] sm:$0xff]
    %7505 = vmatpush.msra.mxu0 %v7504
    %7506 = vmatpush.msra.mxu0 %v7503
    %7507 = vmatpush.msra.mxu0 %v7502
    %7508 = vmatpush.msra.mxu0 %v7501
    %7509 = vmatpush.msra.mxu0 %v7500
    %7510 = vmatpush.msra.mxu0 %v7499
    %7511 = vmatpush.msra.mxu0 %v7498
    %7512 = vmatpush.msra.mxu0 %v7497
    %7513 = vmatpush.msra.mxu0 %v7496
    %7514 = vmatpush.msra.mxu0 %v7495
    %7515 = vmatpush.msra.mxu0 %v7494
    %7516 = vmatpush.msra.mxu0 %v7493
    %7517 = vmatpush.msra.mxu0 %v7492
    %7518 = vmatpush.msra.mxu0 %v7491
    %7519 = vmatpush.msra.mxu0 %v7490
    %7520 = vmatpush.msra.mxu0 %v7489
    %7521 = vmatmul.f32.gmra.mxu0 %v7407
    %v7522 = vpop.f32.mrf.mxu0
    %v7523 = vadd.f32 0.0, %v7522
    %7524 = vmatmul.f32.gmra.mxu0 %v7408
    %v7525 = vpop.f32.mrf.mxu0
    %v7526 = vadd.f32 0.0, %v7525
    %7527 = vmatmul.f32.gmra.mxu0 %v7409
    %v7528 = vpop.f32.mrf.mxu0
    %v7529 = vadd.f32 0.0, %v7528
    %7530 = vmatmul.f32.gmra.mxu0 %v7410
    %v7531 = vpop.f32.mrf.mxu0
    %v7532 = vadd.f32 0.0, %v7531
    %7533 = vmatmul.f32.gmra.mxu0 %v7411
    %v7534 = vpop.f32.mrf.mxu0
    %v7535 = vadd.f32 0.0, %v7534
    %7536 = vmatmul.f32.gmra.mxu0 %v7412
    %v7537 = vpop.f32.mrf.mxu0
    %v7538 = vadd.f32 0.0, %v7537
    %7539 = vmatmul.f32.gmra.mxu0 %v7413
    %v7540 = vpop.f32.mrf.mxu0
    %v7541 = vadd.f32 0.0, %v7540
    %7542 = vmatmul.f32.gmra.mxu0 %v7414
    %v7543 = vpop.f32.mrf.mxu0
    %v7544 = vadd.f32 0.0, %v7543
    %7545 = vmatmul.f32.gmra.mxu0 %v7415
    %v7546 = vpop.f32.mrf.mxu0
    %v7547 = vadd.f32 0.0, %v7546
    %7548 = vmatmul.f32.gmra.mxu0 %v7416
    %v7549 = vpop.f32.mrf.mxu0
    %v7550 = vadd.f32 0.0, %v7549
    %7551 = vmatmul.f32.gmra.mxu0 %v7417
    %v7552 = vpop.f32.mrf.mxu0
    %v7553 = vadd.f32 0.0, %v7552
    %7554 = vmatmul.f32.gmra.mxu0 %v7418
    %v7555 = vpop.f32.mrf.mxu0
    %v7556 = vadd.f32 0.0, %v7555
    %7557 = vmatmul.f32.gmra.mxu0 %v7419
    %v7558 = vpop.f32.mrf.mxu0
    %v7559 = vadd.f32 0.0, %v7558
    %7560 = vmatmul.f32.gmra.mxu0 %v7420
    %v7561 = vpop.f32.mrf.mxu0
    %v7562 = vadd.f32 0.0, %v7561
    %7563 = vmatmul.f32.gmra.mxu0 %v7421
    %v7564 = vpop.f32.mrf.mxu0
    %v7565 = vadd.f32 0.0, %v7564
    %7566 = vmatmul.f32.gmra.mxu0 %v7422
    %v7567 = vpop.f32.mrf.mxu0
    %v7568 = vadd.f32 0.0, %v7567
    %7569 = vmatmul.f32.gmra.mxu0 %v7423
    %v7570 = vpop.f32.mrf.mxu0
    %v7571 = vadd.f32 0.0, %v7570
    %7572 = vmatmul.f32.gmra.mxu0 %v7424
    %v7573 = vpop.f32.mrf.mxu0
    %v7574 = vadd.f32 0.0, %v7573
    %7575 = vmatmul.f32.gmra.mxu0 %v7425
    %v7576 = vpop.f32.mrf.mxu0
    %v7577 = vadd.f32 0.0, %v7576
    %7578 = vmatmul.f32.gmra.mxu0 %v7426
    %v7579 = vpop.f32.mrf.mxu0
    %v7580 = vadd.f32 0.0, %v7579
    %7581 = vmatmul.f32.gmra.mxu0 %v7427
    %v7582 = vpop.f32.mrf.mxu0
    %v7583 = vadd.f32 0.0, %v7582
    %7584 = vmatmul.f32.gmra.mxu0 %v7428
    %v7585 = vpop.f32.mrf.mxu0
    %v7586 = vadd.f32 0.0, %v7585
    %7587 = vmatmul.f32.gmra.mxu0 %v7429
    %v7588 = vpop.f32.mrf.mxu0
    %v7589 = vadd.f32 0.0, %v7588
    %7590 = vmatmul.f32.gmra.mxu0 %v7430
    %v7591 = vpop.f32.mrf.mxu0
    %v7592 = vadd.f32 0.0, %v7591
    %7593 = vmatmul.f32.gmra.mxu0 %v7431
    %v7594 = vpop.f32.mrf.mxu0
    %v7595 = vadd.f32 0.0, %v7594
    %7596 = vmatmul.f32.gmra.mxu0 %v7432
    %v7597 = vpop.f32.mrf.mxu0
    %v7598 = vadd.f32 0.0, %v7597
    %7599 = vmatmul.f32.gmra.mxu0 %v7433
    %v7600 = vpop.f32.mrf.mxu0
    %v7601 = vadd.f32 0.0, %v7600
    %7602 = vmatmul.f32.gmra.mxu0 %v7434
    %v7603 = vpop.f32.mrf.mxu0
    %v7604 = vadd.f32 0.0, %v7603
    %7605 = vmatmul.f32.gmra.mxu0 %v7435
    %v7606 = vpop.f32.mrf.mxu0
    %v7607 = vadd.f32 0.0, %v7606
    %7608 = vmatmul.f32.gmra.mxu0 %v7436
    %v7609 = vpop.f32.mrf.mxu0
    %v7610 = vadd.f32 0.0, %v7609
    %7611 = vmatmul.f32.gmra.mxu0 %v7437
    %v7612 = vpop.f32.mrf.mxu0
    %v7613 = vadd.f32 0.0, %v7612
    %7614 = vmatmul.f32.gmra.mxu0 %v7438
    %v7615 = vpop.f32.mrf.mxu0
    %v7616 = vadd.f32 0.0, %v7615
    %7617 = vmatmul.f32.gmra.mxu0 %v7439
    %v7618 = vpop.f32.mrf.mxu0
    %v7619 = vadd.f32 0.0, %v7618
    %7620 = vmatmul.f32.gmra.mxu0 %v7440
    %v7621 = vpop.f32.mrf.mxu0
    %v7622 = vadd.f32 0.0, %v7621
    %7623 = vmatmul.f32.gmra.mxu0 %v7441
    %v7624 = vpop.f32.mrf.mxu0
    %v7625 = vadd.f32 0.0, %v7624
    %7626 = vmatmul.f32.gmra.mxu0 %v7442
    %v7627 = vpop.f32.mrf.mxu0
    %v7628 = vadd.f32 0.0, %v7627
    %7629 = vmatmul.f32.gmra.mxu0 %v7443
    %v7630 = vpop.f32.mrf.mxu0
    %v7631 = vadd.f32 0.0, %v7630
    %7632 = vmatmul.f32.gmra.mxu0 %v7444
    %v7633 = vpop.f32.mrf.mxu0
    %v7634 = vadd.f32 0.0, %v7633
    %7635 = vmatmul.f32.gmra.mxu0 %v7445
    %v7636 = vpop.f32.mrf.mxu0
    %v7637 = vadd.f32 0.0, %v7636
    %7638 = vmatmul.f32.gmra.mxu0 %v7446
    %v7639 = vpop.f32.mrf.mxu0
    %v7640 = vadd.f32 0.0, %v7639
    %7641 = vmatmul.f32.gmra.mxu0 %v7447
    %v7642 = vpop.f32.mrf.mxu0
    %v7643 = vadd.f32 0.0, %v7642
    %7644 = vmatmul.f32.gmra.mxu0 %v7448
    %v7645 = vpop.f32.mrf.mxu0
    %v7646 = vadd.f32 0.0, %v7645
    %7647 = vmatmul.f32.gmra.mxu0 %v7449
    %v7648 = vpop.f32.mrf.mxu0
    %v7649 = vadd.f32 0.0, %v7648
    %7650 = vmatmul.f32.gmra.mxu0 %v7450
    %v7651 = vpop.f32.mrf.mxu0
    %v7652 = vadd.f32 0.0, %v7651
    %7653 = vmatmul.f32.gmra.mxu0 %v7451
    %v7654 = vpop.f32.mrf.mxu0
    %v7655 = vadd.f32 0.0, %v7654
    %7656 = vmatmul.f32.gmra.mxu0 %v7452
    %v7657 = vpop.f32.mrf.mxu0
    %v7658 = vadd.f32 0.0, %v7657
    %7659 = vmatmul.f32.gmra.mxu0 %v7453
    %v7660 = vpop.f32.mrf.mxu0
    %v7661 = vadd.f32 0.0, %v7660
    %7662 = vmatmul.f32.gmra.mxu0 %v7454
    %v7663 = vpop.f32.mrf.mxu0
    %v7664 = vadd.f32 0.0, %v7663
    %7665 = vmatmul.f32.gmra.mxu0 %v7455
    %v7666 = vpop.f32.mrf.mxu0
    %v7667 = vadd.f32 0.0, %v7666
    %7668 = vmatmul.f32.gmra.mxu0 %v7456
    %v7669 = vpop.f32.mrf.mxu0
    %v7670 = vadd.f32 0.0, %v7669
    %7671 = vmatmul.f32.gmra.mxu0 %v7457
    %v7672 = vpop.f32.mrf.mxu0
    %v7673 = vadd.f32 0.0, %v7672
    %7674 = vmatmul.f32.gmra.mxu0 %v7458
    %v7675 = vpop.f32.mrf.mxu0
    %v7676 = vadd.f32 0.0, %v7675
    %7677 = vmatmul.f32.gmra.mxu0 %v7459
    %v7678 = vpop.f32.mrf.mxu0
    %v7679 = vadd.f32 0.0, %v7678
    %7680 = vmatmul.f32.gmra.mxu0 %v7460
    %v7681 = vpop.f32.mrf.mxu0
    %v7682 = vadd.f32 0.0, %v7681
    %7683 = vmatmul.f32.gmra.mxu0 %v7461
    %v7684 = vpop.f32.mrf.mxu0
    %v7685 = vadd.f32 0.0, %v7684
    %7686 = vmatmul.f32.gmra.mxu0 %v7462
    %v7687 = vpop.f32.mrf.mxu0
    %v7688 = vadd.f32 0.0, %v7687
    %7689 = vmatmul.f32.gmra.mxu0 %v7463
    %v7690 = vpop.f32.mrf.mxu0
    %v7691 = vadd.f32 0.0, %v7690
    %7692 = vmatmul.f32.gmra.mxu0 %v7464
    %v7693 = vpop.f32.mrf.mxu0
    %v7694 = vadd.f32 0.0, %v7693
    %7695 = vmatmul.f32.gmra.mxu0 %v7465
    %v7696 = vpop.f32.mrf.mxu0
    %v7697 = vadd.f32 0.0, %v7696
    %7698 = vmatmul.f32.gmra.mxu0 %v7466
    %v7699 = vpop.f32.mrf.mxu0
    %v7700 = vadd.f32 0.0, %v7699
    %7701 = vmatmul.f32.gmra.mxu0 %v7467
    %v7702 = vpop.f32.mrf.mxu0
    %v7703 = vadd.f32 0.0, %v7702
    %7704 = vmatmul.f32.gmra.mxu0 %v7468
    %v7705 = vpop.f32.mrf.mxu0
    %v7706 = vadd.f32 0.0, %v7705
    %7707 = vmatmul.f32.gmra.mxu0 %v7469
    %v7708 = vpop.f32.mrf.mxu0
    %v7709 = vadd.f32 0.0, %v7708
    %7710 = vmatmul.f32.gmra.mxu0 %v7470
    %v7711 = vpop.f32.mrf.mxu0
    %v7712 = vadd.f32 0.0, %v7711
    %7713 = vmatmul.f32.gmra.mxu0 %v7471
    %v7714 = vpop.f32.mrf.mxu0
    %v7715 = vadd.f32 0.0, %v7714
    %7716 = vmatmul.f32.gmra.mxu0 %v7472
    %v7717 = vpop.f32.mrf.mxu0
    %v7718 = vadd.f32 0.0, %v7717
    %7719 = vmatmul.f32.gmra.mxu0 %v7473
    %v7720 = vpop.f32.mrf.mxu0
    %v7721 = vadd.f32 0.0, %v7720
    %7722 = vmatmul.f32.gmra.mxu0 %v7474
    %v7723 = vpop.f32.mrf.mxu0
    %v7724 = vadd.f32 0.0, %v7723
    %7725 = vmatmul.f32.gmra.mxu0 %v7475
    %v7726 = vpop.f32.mrf.mxu0
    %v7727 = vadd.f32 0.0, %v7726
    %7728 = vmatmul.f32.gmra.mxu0 %v7476
    %v7729 = vpop.f32.mrf.mxu0
    %v7730 = vadd.f32 0.0, %v7729
    %7731 = vmatmul.f32.gmra.mxu0 %v7477
    %v7732 = vpop.f32.mrf.mxu0
    %v7733 = vadd.f32 0.0, %v7732
    %7734 = vmatmul.f32.gmra.mxu0 %v7478
    %v7735 = vpop.f32.mrf.mxu0
    %v7736 = vadd.f32 0.0, %v7735
    %7737 = vmatmul.f32.gmra.mxu0 %v7479
    %v7738 = vpop.f32.mrf.mxu0
    %v7739 = vadd.f32 0.0, %v7738
    %7740 = vmatmul.f32.gmra.mxu0 %v7480
    %v7741 = vpop.f32.mrf.mxu0
    %v7742 = vadd.f32 0.0, %v7741
    %7743 = vmatmul.f32.gmra.mxu0 %v7481
    %v7744 = vpop.f32.mrf.mxu0
    %v7745 = vadd.f32 0.0, %v7744
    %7746 = vmatmul.f32.gmra.mxu0 %v7482
    %v7747 = vpop.f32.mrf.mxu0
    %v7748 = vadd.f32 0.0, %v7747
    %7749 = vmatmul.f32.gmra.mxu0 %v7483
    %v7750 = vpop.f32.mrf.mxu0
    %v7751 = vadd.f32 0.0, %v7750
    %7752 = vmatmul.f32.gmra.mxu0 %v7484
    %v7753 = vpop.f32.mrf.mxu0
    %v7754 = vadd.f32 0.0, %v7753
    %7755 = vmatmul.f32.gmra.mxu0 %v7485
    %v7756 = vpop.f32.mrf.mxu0
    %v7757 = vadd.f32 0.0, %v7756
    %7758 = vmatmul.f32.gmra.mxu0 %v7486
    %v7759 = vpop.f32.mrf.mxu0
    %v7760 = vadd.f32 0.0, %v7759
    %7761 = vmatmul.f32.gmra.mxu0 %v7487
    %v7762 = vpop.f32.mrf.mxu0
    %v7763 = vadd.f32 0.0, %v7762
    %7764 = vdwg.mxu0
    %7765 = vmatpush.msra.mxu0 %v7406
    %7766 = vmatpush.msra.mxu0 %v7405
    %7767 = vmatpush.msra.mxu0 %v7404
    %7768 = vmatpush.msra.mxu0 %v7403
    %7769 = vmatpush.msra.mxu0 %v7402
    %7770 = vmatpush.msra.mxu0 %v7401
    %7771 = vmatpush.msra.mxu0 %v7400
    %7772 = vmatpush.msra.mxu0 %v7399
    %7773 = vmatpush.msra.mxu0 %v7398
    %7774 = vmatpush.msra.mxu0 %v7397
    %7775 = vmatpush.msra.mxu0 %v7396
    %7776 = vmatpush.msra.mxu0 %v7395
    %7777 = vmatpush.msra.mxu0 %v7394
    %7778 = vmatpush.msra.mxu0 %v7393
    %7779 = vmatpush.msra.mxu0 %v7392
    %7780 = vmatpush.msra.mxu0 %v7391
    %7781 = vmatmul.f32.gmra.mxu0 %v7310
    %v7782 = vpop.f32.mrf.mxu0
    %v7783 = vadd.f32 %v7523, %v7782
    %7784 = vmatmul.f32.gmra.mxu0 %v7311
    %v7785 = vpop.f32.mrf.mxu0
    %v7786 = vadd.f32 %v7526, %v7785
    %7787 = vmatmul.f32.gmra.mxu0 %v7312
    %v7788 = vpop.f32.mrf.mxu0
    %v7789 = vadd.f32 %v7529, %v7788
    %7790 = vmatmul.f32.gmra.mxu0 %v7313
    %v7791 = vpop.f32.mrf.mxu0
    %v7792 = vadd.f32 %v7532, %v7791
    %7793 = vmatmul.f32.gmra.mxu0 %v7314
    %v7794 = vpop.f32.mrf.mxu0
    %v7795 = vadd.f32 %v7535, %v7794
    %7796 = vmatmul.f32.gmra.mxu0 %v7315
    %v7797 = vpop.f32.mrf.mxu0
    %v7798 = vadd.f32 %v7538, %v7797
    %7799 = vmatmul.f32.gmra.mxu0 %v7316
    %v7800 = vpop.f32.mrf.mxu0
    %v7801 = vadd.f32 %v7541, %v7800
    %7802 = vmatmul.f32.gmra.mxu0 %v7317
    %v7803 = vpop.f32.mrf.mxu0
    %v7804 = vadd.f32 %v7544, %v7803
    %7805 = vmatmul.f32.gmra.mxu0 %v7318
    %v7806 = vpop.f32.mrf.mxu0
    %v7807 = vadd.f32 %v7547, %v7806
    %7808 = vmatmul.f32.gmra.mxu0 %v7319
    %v7809 = vpop.f32.mrf.mxu0
    %v7810 = vadd.f32 %v7550, %v7809
    %7811 = vmatmul.f32.gmra.mxu0 %v7320
    %v7812 = vpop.f32.mrf.mxu0
    %v7813 = vadd.f32 %v7553, %v7812
    %7814 = vmatmul.f32.gmra.mxu0 %v7321
    %v7815 = vpop.f32.mrf.mxu0
    %v7816 = vadd.f32 %v7556, %v7815
    %7817 = vmatmul.f32.gmra.mxu0 %v7322
    %v7818 = vpop.f32.mrf.mxu0
    %v7819 = vadd.f32 %v7559, %v7818
    %7820 = vmatmul.f32.gmra.mxu0 %v7323
    %v7821 = vpop.f32.mrf.mxu0
    %v7822 = vadd.f32 %v7562, %v7821
    %7823 = vmatmul.f32.gmra.mxu0 %v7324
    %v7824 = vpop.f32.mrf.mxu0
    %v7825 = vadd.f32 %v7565, %v7824
    %7826 = vmatmul.f32.gmra.mxu0 %v7325
    %v7827 = vpop.f32.mrf.mxu0
    %v7828 = vadd.f32 %v7568, %v7827
    %7829 = vmatmul.f32.gmra.mxu0 %v7326
    %v7830 = vpop.f32.mrf.mxu0
    %v7831 = vadd.f32 %v7571, %v7830
    %7832 = vmatmul.f32.gmra.mxu0 %v7327
    %v7833 = vpop.f32.mrf.mxu0
    %v7834 = vadd.f32 %v7574, %v7833
    %7835 = vmatmul.f32.gmra.mxu0 %v7328
    %v7836 = vpop.f32.mrf.mxu0
    %v7837 = vadd.f32 %v7577, %v7836
    %7838 = vmatmul.f32.gmra.mxu0 %v7329
    %v7839 = vpop.f32.mrf.mxu0
    %v7840 = vadd.f32 %v7580, %v7839
    %7841 = vmatmul.f32.gmra.mxu0 %v7330
    %v7842 = vpop.f32.mrf.mxu0
    %v7843 = vadd.f32 %v7583, %v7842
    %7844 = vmatmul.f32.gmra.mxu0 %v7331
    %v7845 = vpop.f32.mrf.mxu0
    %v7846 = vadd.f32 %v7586, %v7845
    %7847 = vmatmul.f32.gmra.mxu0 %v7332
    %v7848 = vpop.f32.mrf.mxu0
    %v7849 = vadd.f32 %v7589, %v7848
    %7850 = vmatmul.f32.gmra.mxu0 %v7333
    %v7851 = vpop.f32.mrf.mxu0
    %v7852 = vadd.f32 %v7592, %v7851
    %7853 = vmatmul.f32.gmra.mxu0 %v7334
    %v7854 = vpop.f32.mrf.mxu0
    %v7855 = vadd.f32 %v7595, %v7854
    %7856 = vmatmul.f32.gmra.mxu0 %v7335
    %v7857 = vpop.f32.mrf.mxu0
    %v7858 = vadd.f32 %v7598, %v7857
    %7859 = vmatmul.f32.gmra.mxu0 %v7336
    %v7860 = vpop.f32.mrf.mxu0
    %v7861 = vadd.f32 %v7601, %v7860
    %7862 = vmatmul.f32.gmra.mxu0 %v7337
    %v7863 = vpop.f32.mrf.mxu0
    %v7864 = vadd.f32 %v7604, %v7863
    %7865 = vmatmul.f32.gmra.mxu0 %v7338
    %v7866 = vpop.f32.mrf.mxu0
    %v7867 = vadd.f32 %v7607, %v7866
    %7868 = vmatmul.f32.gmra.mxu0 %v7339
    %v7869 = vpop.f32.mrf.mxu0
    %v7870 = vadd.f32 %v7610, %v7869
    %7871 = vmatmul.f32.gmra.mxu0 %v7340
    %v7872 = vpop.f32.mrf.mxu0
    %v7873 = vadd.f32 %v7613, %v7872
    %7874 = vmatmul.f32.gmra.mxu0 %v7341
    %v7875 = vpop.f32.mrf.mxu0
    %v7876 = vadd.f32 %v7616, %v7875
    %7877 = vmatmul.f32.gmra.mxu0 %v7342
    %v7878 = vpop.f32.mrf.mxu0
    %v7879 = vadd.f32 %v7619, %v7878
    %7880 = vmatmul.f32.gmra.mxu0 %v7343
    %v7881 = vpop.f32.mrf.mxu0
    %v7882 = vadd.f32 %v7622, %v7881
    %7883 = vmatmul.f32.gmra.mxu0 %v7344
    %v7884 = vpop.f32.mrf.mxu0
    %v7885 = vadd.f32 %v7625, %v7884
    %7886 = vmatmul.f32.gmra.mxu0 %v7345
    %v7887 = vpop.f32.mrf.mxu0
    %v7888 = vadd.f32 %v7628, %v7887
    %7889 = vmatmul.f32.gmra.mxu0 %v7346
    %v7890 = vpop.f32.mrf.mxu0
    %v7891 = vadd.f32 %v7631, %v7890
    %7892 = vmatmul.f32.gmra.mxu0 %v7347
    %v7893 = vpop.f32.mrf.mxu0
    %v7894 = vadd.f32 %v7634, %v7893
    %7895 = vmatmul.f32.gmra.mxu0 %v7348
    %v7896 = vpop.f32.mrf.mxu0
    %v7897 = vadd.f32 %v7637, %v7896
    %7898 = vmatmul.f32.gmra.mxu0 %v7349
    %v7899 = vpop.f32.mrf.mxu0
    %v7900 = vadd.f32 %v7640, %v7899
    %7901 = vmatmul.f32.gmra.mxu0 %v7350
    %v7902 = vpop.f32.mrf.mxu0
    %v7903 = vadd.f32 %v7643, %v7902
    %7904 = vmatmul.f32.gmra.mxu0 %v7351
    %v7905 = vpop.f32.mrf.mxu0
    %v7906 = vadd.f32 %v7646, %v7905
    %7907 = vmatmul.f32.gmra.mxu0 %v7352
    %v7908 = vpop.f32.mrf.mxu0
    %v7909 = vadd.f32 %v7649, %v7908
    %7910 = vmatmul.f32.gmra.mxu0 %v7353
    %v7911 = vpop.f32.mrf.mxu0
    %v7912 = vadd.f32 %v7652, %v7911
    %7913 = vmatmul.f32.gmra.mxu0 %v7354
    %v7914 = vpop.f32.mrf.mxu0
    %v7915 = vadd.f32 %v7655, %v7914
    %7916 = vmatmul.f32.gmra.mxu0 %v7355
    %v7917 = vpop.f32.mrf.mxu0
    %v7918 = vadd.f32 %v7658, %v7917
    %7919 = vmatmul.f32.gmra.mxu0 %v7356
    %v7920 = vpop.f32.mrf.mxu0
    %v7921 = vadd.f32 %v7661, %v7920
    %7922 = vmatmul.f32.gmra.mxu0 %v7357
    %v7923 = vpop.f32.mrf.mxu0
    %v7924 = vadd.f32 %v7664, %v7923
    %7925 = vmatmul.f32.gmra.mxu0 %v7358
    %v7926 = vpop.f32.mrf.mxu0
    %v7927 = vadd.f32 %v7667, %v7926
    %7928 = vmatmul.f32.gmra.mxu0 %v7359
    %v7929 = vpop.f32.mrf.mxu0
    %v7930 = vadd.f32 %v7670, %v7929
    %7931 = vmatmul.f32.gmra.mxu0 %v7360
    %v7932 = vpop.f32.mrf.mxu0
    %v7933 = vadd.f32 %v7673, %v7932
    %7934 = vmatmul.f32.gmra.mxu0 %v7361
    %v7935 = vpop.f32.mrf.mxu0
    %v7936 = vadd.f32 %v7676, %v7935
    %7937 = vmatmul.f32.gmra.mxu0 %v7362
    %v7938 = vpop.f32.mrf.mxu0
    %v7939 = vadd.f32 %v7679, %v7938
    %7940 = vmatmul.f32.gmra.mxu0 %v7363
    %v7941 = vpop.f32.mrf.mxu0
    %v7942 = vadd.f32 %v7682, %v7941
    %7943 = vmatmul.f32.gmra.mxu0 %v7364
    %v7944 = vpop.f32.mrf.mxu0
    %v7945 = vadd.f32 %v7685, %v7944
    %7946 = vmatmul.f32.gmra.mxu0 %v7365
    %v7947 = vpop.f32.mrf.mxu0
    %v7948 = vadd.f32 %v7688, %v7947
    %7949 = vmatmul.f32.gmra.mxu0 %v7366
    %v7950 = vpop.f32.mrf.mxu0
    %v7951 = vadd.f32 %v7691, %v7950
    %7952 = vmatmul.f32.gmra.mxu0 %v7367
    %v7953 = vpop.f32.mrf.mxu0
    %v7954 = vadd.f32 %v7694, %v7953
    %7955 = vmatmul.f32.gmra.mxu0 %v7368
    %v7956 = vpop.f32.mrf.mxu0
    %v7957 = vadd.f32 %v7697, %v7956
    %7958 = vmatmul.f32.gmra.mxu0 %v7369
    %v7959 = vpop.f32.mrf.mxu0
    %v7960 = vadd.f32 %v7700, %v7959
    %7961 = vmatmul.f32.gmra.mxu0 %v7370
    %v7962 = vpop.f32.mrf.mxu0
    %v7963 = vadd.f32 %v7703, %v7962
    %7964 = vmatmul.f32.gmra.mxu0 %v7371
    %v7965 = vpop.f32.mrf.mxu0
    %v7966 = vadd.f32 %v7706, %v7965
    %7967 = vmatmul.f32.gmra.mxu0 %v7372
    %v7968 = vpop.f32.mrf.mxu0
    %v7969 = vadd.f32 %v7709, %v7968
    %7970 = vmatmul.f32.gmra.mxu0 %v7373
    %v7971 = vpop.f32.mrf.mxu0
    %v7972 = vadd.f32 %v7712, %v7971
    %7973 = vmatmul.f32.gmra.mxu0 %v7374
    %v7974 = vpop.f32.mrf.mxu0
    %v7975 = vadd.f32 %v7715, %v7974
    %7976 = vmatmul.f32.gmra.mxu0 %v7375
    %v7977 = vpop.f32.mrf.mxu0
    %v7978 = vadd.f32 %v7718, %v7977
    %7979 = vmatmul.f32.gmra.mxu0 %v7376
    %v7980 = vpop.f32.mrf.mxu0
    %v7981 = vadd.f32 %v7721, %v7980
    %7982 = vmatmul.f32.gmra.mxu0 %v7377
    %v7983 = vpop.f32.mrf.mxu0
    %v7984 = vadd.f32 %v7724, %v7983
    %7985 = vmatmul.f32.gmra.mxu0 %v7378
    %v7986 = vpop.f32.mrf.mxu0
    %v7987 = vadd.f32 %v7727, %v7986
    %7988 = vmatmul.f32.gmra.mxu0 %v7379
    %v7989 = vpop.f32.mrf.mxu0
    %v7990 = vadd.f32 %v7730, %v7989
    %7991 = vmatmul.f32.gmra.mxu0 %v7380
    %v7992 = vpop.f32.mrf.mxu0
    %v7993 = vadd.f32 %v7733, %v7992
    %7994 = vmatmul.f32.gmra.mxu0 %v7381
    %v7995 = vpop.f32.mrf.mxu0
    %v7996 = vadd.f32 %v7736, %v7995
    %7997 = vmatmul.f32.gmra.mxu0 %v7382
    %v7998 = vpop.f32.mrf.mxu0
    %v7999 = vadd.f32 %v7739, %v7998
    %8000 = vmatmul.f32.gmra.mxu0 %v7383
    %v8001 = vpop.f32.mrf.mxu0
    %v8002 = vadd.f32 %v7742, %v8001
    %8003 = vmatmul.f32.gmra.mxu0 %v7384
    %v8004 = vpop.f32.mrf.mxu0
    %v8005 = vadd.f32 %v7745, %v8004
    %8006 = vmatmul.f32.gmra.mxu0 %v7385
    %v8007 = vpop.f32.mrf.mxu0
    %v8008 = vadd.f32 %v7748, %v8007
    %8009 = vmatmul.f32.gmra.mxu0 %v7386
    %v8010 = vpop.f32.mrf.mxu0
    %v8011 = vadd.f32 %v7751, %v8010
    %8012 = vmatmul.f32.gmra.mxu0 %v7387
    %v8013 = vpop.f32.mrf.mxu0
    %v8014 = vadd.f32 %v7754, %v8013
    %8015 = vmatmul.f32.gmra.mxu0 %v7388
    %v8016 = vpop.f32.mrf.mxu0
    %v8017 = vadd.f32 %v7757, %v8016
    %8018 = vmatmul.f32.gmra.mxu0 %v7389
    %v8019 = vpop.f32.mrf.mxu0
    %v8020 = vadd.f32 %v7760, %v8019
    %8021 = vmatmul.f32.gmra.mxu0 %v7390
    %v8022 = vpop.f32.mrf.mxu0
    %v8023 = vadd.f32 %v7763, %v8022
    %8024 = vdwg.mxu0
    %v8025 = vld [vmem:[#allocation2 + $0x7] sm:$0xff]
    %v8026 = vld [vmem:[#allocation2 + $0xf] sm:$0xff]
    %v8027 = vld [vmem:[#allocation2 + $0x17] sm:$0xff]
    %v8028 = vld [vmem:[#allocation2 + $0x1f] sm:$0xff]
    %v8029 = vld [vmem:[#allocation2 + $0x27] sm:$0xff]
    %v8030 = vld [vmem:[#allocation2 + $0x2f] sm:$0xff]
    %v8031 = vld [vmem:[#allocation2 + $0x37] sm:$0xff]
    %v8032 = vld [vmem:[#allocation2 + $0x3f] sm:$0xff]
    %v8033 = vld [vmem:[#allocation2 + $0x47] sm:$0xff]
    %v8034 = vld [vmem:[#allocation2 + $0x4f] sm:$0xff]
    %v8035 = vld [vmem:[#allocation2 + $0x57] sm:$0xff]
    %v8036 = vld [vmem:[#allocation2 + $0x5f] sm:$0xff]
    %v8037 = vld [vmem:[#allocation2 + $0x67] sm:$0xff]
    %v8038 = vld [vmem:[#allocation2 + $0x6f] sm:$0xff]
    %v8039 = vld [vmem:[#allocation2 + $0x77] sm:$0xff]
    %v8040 = vld [vmem:[#allocation2 + $0x7f] sm:$0xff]
    %v8041 = vld [vmem:[#allocation2 + $0x87] sm:$0xff]
    %v8042 = vld [vmem:[#allocation2 + $0x8f] sm:$0xff]
    %v8043 = vld [vmem:[#allocation2 + $0x97] sm:$0xff]
    %v8044 = vld [vmem:[#allocation2 + $0x9f] sm:$0xff]
    %v8045 = vld [vmem:[#allocation2 + $0xa7] sm:$0xff]
    %v8046 = vld [vmem:[#allocation2 + $0xaf] sm:$0xff]
    %v8047 = vld [vmem:[#allocation2 + $0xb7] sm:$0xff]
    %v8048 = vld [vmem:[#allocation2 + $0xbf] sm:$0xff]
    %v8049 = vld [vmem:[#allocation2 + $0xc7] sm:$0xff]
    %v8050 = vld [vmem:[#allocation2 + $0xcf] sm:$0xff]
    %v8051 = vld [vmem:[#allocation2 + $0xd7] sm:$0xff]
    %v8052 = vld [vmem:[#allocation2 + $0xdf] sm:$0xff]
    %v8053 = vld [vmem:[#allocation2 + $0xe7] sm:$0xff]
    %v8054 = vld [vmem:[#allocation2 + $0xef] sm:$0xff]
    %v8055 = vld [vmem:[#allocation2 + $0xf7] sm:$0xff]
    %v8056 = vld [vmem:[#allocation2 + $0xff] sm:$0xff]
    %v8057 = vld [vmem:[#allocation2 + $0x107] sm:$0xff]
    %v8058 = vld [vmem:[#allocation2 + $0x10f] sm:$0xff]
    %v8059 = vld [vmem:[#allocation2 + $0x117] sm:$0xff]
    %v8060 = vld [vmem:[#allocation2 + $0x11f] sm:$0xff]
    %v8061 = vld [vmem:[#allocation2 + $0x127] sm:$0xff]
    %v8062 = vld [vmem:[#allocation2 + $0x12f] sm:$0xff]
    %v8063 = vld [vmem:[#allocation2 + $0x137] sm:$0xff]
    %v8064 = vld [vmem:[#allocation2 + $0x13f] sm:$0xff]
    %v8065 = vld [vmem:[#allocation2 + $0x147] sm:$0xff]
    %v8066 = vld [vmem:[#allocation2 + $0x14f] sm:$0xff]
    %v8067 = vld [vmem:[#allocation2 + $0x157] sm:$0xff]
    %v8068 = vld [vmem:[#allocation2 + $0x15f] sm:$0xff]
    %v8069 = vld [vmem:[#allocation2 + $0x167] sm:$0xff]
    %v8070 = vld [vmem:[#allocation2 + $0x16f] sm:$0xff]
    %v8071 = vld [vmem:[#allocation2 + $0x177] sm:$0xff]
    %v8072 = vld [vmem:[#allocation2 + $0x17f] sm:$0xff]
    %v8073 = vld [vmem:[#allocation2 + $0x187] sm:$0xff]
    %v8074 = vld [vmem:[#allocation2 + $0x18f] sm:$0xff]
    %v8075 = vld [vmem:[#allocation2 + $0x197] sm:$0xff]
    %v8076 = vld [vmem:[#allocation2 + $0x19f] sm:$0xff]
    %v8077 = vld [vmem:[#allocation2 + $0x1a7] sm:$0xff]
    %v8078 = vld [vmem:[#allocation2 + $0x1af] sm:$0xff]
    %v8079 = vld [vmem:[#allocation2 + $0x1b7] sm:$0xff]
    %v8080 = vld [vmem:[#allocation2 + $0x1bf] sm:$0xff]
    %v8081 = vld [vmem:[#allocation2 + $0x1c7] sm:$0xff]
    %v8082 = vld [vmem:[#allocation2 + $0x1cf] sm:$0xff]
    %v8083 = vld [vmem:[#allocation2 + $0x1d7] sm:$0xff]
    %v8084 = vld [vmem:[#allocation2 + $0x1df] sm:$0xff]
    %v8085 = vld [vmem:[#allocation2 + $0x1e7] sm:$0xff]
    %v8086 = vld [vmem:[#allocation2 + $0x1ef] sm:$0xff]
    %v8087 = vld [vmem:[#allocation2 + $0x1f7] sm:$0xff]
    %v8088 = vld [vmem:[#allocation2 + $0x1ff] sm:$0xff]
    %v8089 = vld [vmem:[#allocation2 + $0x207] sm:$0xff]
    %v8090 = vld [vmem:[#allocation2 + $0x20f] sm:$0xff]
    %v8091 = vld [vmem:[#allocation2 + $0x217] sm:$0xff]
    %v8092 = vld [vmem:[#allocation2 + $0x21f] sm:$0xff]
    %v8093 = vld [vmem:[#allocation2 + $0x227] sm:$0xff]
    %v8094 = vld [vmem:[#allocation2 + $0x22f] sm:$0xff]
    %v8095 = vld [vmem:[#allocation2 + $0x237] sm:$0xff]
    %v8096 = vld [vmem:[#allocation2 + $0x23f] sm:$0xff]
    %v8097 = vld [vmem:[#allocation2 + $0x247] sm:$0xff]
    %v8098 = vld [vmem:[#allocation2 + $0x24f] sm:$0xff]
    %v8099 = vld [vmem:[#allocation2 + $0x257] sm:$0xff]
    %v8100 = vld [vmem:[#allocation2 + $0x25f] sm:$0xff]
    %v8101 = vld [vmem:[#allocation2 + $0x267] sm:$0xff]
    %v8102 = vld [vmem:[#allocation2 + $0x26f] sm:$0xff]
    %v8103 = vld [vmem:[#allocation2 + $0x277] sm:$0xff]
    %v8104 = vld [vmem:[#allocation2 + $0x27f] sm:$0xff]
    %v8105 = vld [vmem:[#allocation2 + $0x287] sm:$0xff]
    %s8106 = scalar_lea.vmem %s3, 256
    %v8107 = vld [vmem:[%s8106] sm:$0xff]
    %v8108 = vld [vmem:[%s8106 + $0x8] sm:$0xff]
    %v8109 = vld [vmem:[%s8106 + $0x10] sm:$0xff]
    %v8110 = vld [vmem:[%s8106 + $0x18] sm:$0xff]
    %v8111 = vld [vmem:[%s8106 + $0x20] sm:$0xff]
    %v8112 = vld [vmem:[%s8106 + $0x28] sm:$0xff]
    %v8113 = vld [vmem:[%s8106 + $0x30] sm:$0xff]
    %v8114 = vld [vmem:[%s8106 + $0x38] sm:$0xff]
    %v8115 = vld [vmem:[%s8106 + $0x40] sm:$0xff]
    %v8116 = vld [vmem:[%s8106 + $0x48] sm:$0xff]
    %v8117 = vld [vmem:[%s8106 + $0x50] sm:$0xff]
    %v8118 = vld [vmem:[%s8106 + $0x58] sm:$0xff]
    %v8119 = vld [vmem:[%s8106 + $0x60] sm:$0xff]
    %v8120 = vld [vmem:[%s8106 + $0x68] sm:$0xff]
    %v8121 = vld [vmem:[%s8106 + $0x70] sm:$0xff]
    %v8122 = vld [vmem:[%s8106 + $0x78] sm:$0xff]
    %8123 = vmatpush.msra.mxu0 %v8122
    %8124 = vmatpush.msra.mxu0 %v8121
    %8125 = vmatpush.msra.mxu0 %v8120
    %8126 = vmatpush.msra.mxu0 %v8119
    %8127 = vmatpush.msra.mxu0 %v8118
    %8128 = vmatpush.msra.mxu0 %v8117
    %8129 = vmatpush.msra.mxu0 %v8116
    %8130 = vmatpush.msra.mxu0 %v8115
    %8131 = vmatpush.msra.mxu0 %v8114
    %8132 = vmatpush.msra.mxu0 %v8113
    %8133 = vmatpush.msra.mxu0 %v8112
    %8134 = vmatpush.msra.mxu0 %v8111
    %8135 = vmatpush.msra.mxu0 %v8110
    %8136 = vmatpush.msra.mxu0 %v8109
    %8137 = vmatpush.msra.mxu0 %v8108
    %8138 = vmatpush.msra.mxu0 %v8107
    %8139 = vmatmul.f32.gmra.mxu0 %v8025
    %v8140 = vpop.f32.mrf.mxu0
    %v8141 = vadd.f32 0.0, %v8140
    %8142 = vmatmul.f32.gmra.mxu0 %v8026
    %v8143 = vpop.f32.mrf.mxu0
    %v8144 = vadd.f32 0.0, %v8143
    %8145 = vmatmul.f32.gmra.mxu0 %v8027
    %v8146 = vpop.f32.mrf.mxu0
    %v8147 = vadd.f32 0.0, %v8146
    %8148 = vmatmul.f32.gmra.mxu0 %v8028
    %v8149 = vpop.f32.mrf.mxu0
    %v8150 = vadd.f32 0.0, %v8149
    %8151 = vmatmul.f32.gmra.mxu0 %v8029
    %v8152 = vpop.f32.mrf.mxu0
    %v8153 = vadd.f32 0.0, %v8152
    %8154 = vmatmul.f32.gmra.mxu0 %v8030
    %v8155 = vpop.f32.mrf.mxu0
    %v8156 = vadd.f32 0.0, %v8155
    %8157 = vmatmul.f32.gmra.mxu0 %v8031
    %v8158 = vpop.f32.mrf.mxu0
    %v8159 = vadd.f32 0.0, %v8158
    %8160 = vmatmul.f32.gmra.mxu0 %v8032
    %v8161 = vpop.f32.mrf.mxu0
    %v8162 = vadd.f32 0.0, %v8161
    %8163 = vmatmul.f32.gmra.mxu0 %v8033
    %v8164 = vpop.f32.mrf.mxu0
    %v8165 = vadd.f32 0.0, %v8164
    %8166 = vmatmul.f32.gmra.mxu0 %v8034
    %v8167 = vpop.f32.mrf.mxu0
    %v8168 = vadd.f32 0.0, %v8167
    %8169 = vmatmul.f32.gmra.mxu0 %v8035
    %v8170 = vpop.f32.mrf.mxu0
    %v8171 = vadd.f32 0.0, %v8170
    %8172 = vmatmul.f32.gmra.mxu0 %v8036
    %v8173 = vpop.f32.mrf.mxu0
    %v8174 = vadd.f32 0.0, %v8173
    %8175 = vmatmul.f32.gmra.mxu0 %v8037
    %v8176 = vpop.f32.mrf.mxu0
    %v8177 = vadd.f32 0.0, %v8176
    %8178 = vmatmul.f32.gmra.mxu0 %v8038
    %v8179 = vpop.f32.mrf.mxu0
    %v8180 = vadd.f32 0.0, %v8179
    %8181 = vmatmul.f32.gmra.mxu0 %v8039
    %v8182 = vpop.f32.mrf.mxu0
    %v8183 = vadd.f32 0.0, %v8182
    %8184 = vmatmul.f32.gmra.mxu0 %v8040
    %v8185 = vpop.f32.mrf.mxu0
    %v8186 = vadd.f32 0.0, %v8185
    %8187 = vmatmul.f32.gmra.mxu0 %v8041
    %v8188 = vpop.f32.mrf.mxu0
    %v8189 = vadd.f32 0.0, %v8188
    %8190 = vmatmul.f32.gmra.mxu0 %v8042
    %v8191 = vpop.f32.mrf.mxu0
    %v8192 = vadd.f32 0.0, %v8191
    %8193 = vmatmul.f32.gmra.mxu0 %v8043
    %v8194 = vpop.f32.mrf.mxu0
    %v8195 = vadd.f32 0.0, %v8194
    %8196 = vmatmul.f32.gmra.mxu0 %v8044
    %v8197 = vpop.f32.mrf.mxu0
    %v8198 = vadd.f32 0.0, %v8197
    %8199 = vmatmul.f32.gmra.mxu0 %v8045
    %v8200 = vpop.f32.mrf.mxu0
    %v8201 = vadd.f32 0.0, %v8200
    %8202 = vmatmul.f32.gmra.mxu0 %v8046
    %v8203 = vpop.f32.mrf.mxu0
    %v8204 = vadd.f32 0.0, %v8203
    %8205 = vmatmul.f32.gmra.mxu0 %v8047
    %v8206 = vpop.f32.mrf.mxu0
    %v8207 = vadd.f32 0.0, %v8206
    %8208 = vmatmul.f32.gmra.mxu0 %v8048
    %v8209 = vpop.f32.mrf.mxu0
    %v8210 = vadd.f32 0.0, %v8209
    %8211 = vmatmul.f32.gmra.mxu0 %v8049
    %v8212 = vpop.f32.mrf.mxu0
    %v8213 = vadd.f32 0.0, %v8212
    %8214 = vmatmul.f32.gmra.mxu0 %v8050
    %v8215 = vpop.f32.mrf.mxu0
    %v8216 = vadd.f32 0.0, %v8215
    %8217 = vmatmul.f32.gmra.mxu0 %v8051
    %v8218 = vpop.f32.mrf.mxu0
    %v8219 = vadd.f32 0.0, %v8218
    %8220 = vmatmul.f32.gmra.mxu0 %v8052
    %v8221 = vpop.f32.mrf.mxu0
    %v8222 = vadd.f32 0.0, %v8221
    %8223 = vmatmul.f32.gmra.mxu0 %v8053
    %v8224 = vpop.f32.mrf.mxu0
    %v8225 = vadd.f32 0.0, %v8224
    %8226 = vmatmul.f32.gmra.mxu0 %v8054
    %v8227 = vpop.f32.mrf.mxu0
    %v8228 = vadd.f32 0.0, %v8227
    %8229 = vmatmul.f32.gmra.mxu0 %v8055
    %v8230 = vpop.f32.mrf.mxu0
    %v8231 = vadd.f32 0.0, %v8230
    %8232 = vmatmul.f32.gmra.mxu0 %v8056
    %v8233 = vpop.f32.mrf.mxu0
    %v8234 = vadd.f32 0.0, %v8233
    %8235 = vmatmul.f32.gmra.mxu0 %v8057
    %v8236 = vpop.f32.mrf.mxu0
    %v8237 = vadd.f32 0.0, %v8236
    %8238 = vmatmul.f32.gmra.mxu0 %v8058
    %v8239 = vpop.f32.mrf.mxu0
    %v8240 = vadd.f32 0.0, %v8239
    %8241 = vmatmul.f32.gmra.mxu0 %v8059
    %v8242 = vpop.f32.mrf.mxu0
    %v8243 = vadd.f32 0.0, %v8242
    %8244 = vmatmul.f32.gmra.mxu0 %v8060
    %v8245 = vpop.f32.mrf.mxu0
    %v8246 = vadd.f32 0.0, %v8245
    %8247 = vmatmul.f32.gmra.mxu0 %v8061
    %v8248 = vpop.f32.mrf.mxu0
    %v8249 = vadd.f32 0.0, %v8248
    %8250 = vmatmul.f32.gmra.mxu0 %v8062
    %v8251 = vpop.f32.mrf.mxu0
    %v8252 = vadd.f32 0.0, %v8251
    %8253 = vmatmul.f32.gmra.mxu0 %v8063
    %v8254 = vpop.f32.mrf.mxu0
    %v8255 = vadd.f32 0.0, %v8254
    %8256 = vmatmul.f32.gmra.mxu0 %v8064
    %v8257 = vpop.f32.mrf.mxu0
    %v8258 = vadd.f32 0.0, %v8257
    %8259 = vmatmul.f32.gmra.mxu0 %v8065
    %v8260 = vpop.f32.mrf.mxu0
    %v8261 = vadd.f32 0.0, %v8260
    %8262 = vmatmul.f32.gmra.mxu0 %v8066
    %v8263 = vpop.f32.mrf.mxu0
    %v8264 = vadd.f32 0.0, %v8263
    %8265 = vmatmul.f32.gmra.mxu0 %v8067
    %v8266 = vpop.f32.mrf.mxu0
    %v8267 = vadd.f32 0.0, %v8266
    %8268 = vmatmul.f32.gmra.mxu0 %v8068
    %v8269 = vpop.f32.mrf.mxu0
    %v8270 = vadd.f32 0.0, %v8269
    %8271 = vmatmul.f32.gmra.mxu0 %v8069
    %v8272 = vpop.f32.mrf.mxu0
    %v8273 = vadd.f32 0.0, %v8272
    %8274 = vmatmul.f32.gmra.mxu0 %v8070
    %v8275 = vpop.f32.mrf.mxu0
    %v8276 = vadd.f32 0.0, %v8275
    %8277 = vmatmul.f32.gmra.mxu0 %v8071
    %v8278 = vpop.f32.mrf.mxu0
    %v8279 = vadd.f32 0.0, %v8278
    %8280 = vmatmul.f32.gmra.mxu0 %v8072
    %v8281 = vpop.f32.mrf.mxu0
    %v8282 = vadd.f32 0.0, %v8281
    %8283 = vmatmul.f32.gmra.mxu0 %v8073
    %v8284 = vpop.f32.mrf.mxu0
    %v8285 = vadd.f32 0.0, %v8284
    %8286 = vmatmul.f32.gmra.mxu0 %v8074
    %v8287 = vpop.f32.mrf.mxu0
    %v8288 = vadd.f32 0.0, %v8287
    %8289 = vmatmul.f32.gmra.mxu0 %v8075
    %v8290 = vpop.f32.mrf.mxu0
    %v8291 = vadd.f32 0.0, %v8290
    %8292 = vmatmul.f32.gmra.mxu0 %v8076
    %v8293 = vpop.f32.mrf.mxu0
    %v8294 = vadd.f32 0.0, %v8293
    %8295 = vmatmul.f32.gmra.mxu0 %v8077
    %v8296 = vpop.f32.mrf.mxu0
    %v8297 = vadd.f32 0.0, %v8296
    %8298 = vmatmul.f32.gmra.mxu0 %v8078
    %v8299 = vpop.f32.mrf.mxu0
    %v8300 = vadd.f32 0.0, %v8299
    %8301 = vmatmul.f32.gmra.mxu0 %v8079
    %v8302 = vpop.f32.mrf.mxu0
    %v8303 = vadd.f32 0.0, %v8302
    %8304 = vmatmul.f32.gmra.mxu0 %v8080
    %v8305 = vpop.f32.mrf.mxu0
    %v8306 = vadd.f32 0.0, %v8305
    %8307 = vmatmul.f32.gmra.mxu0 %v8081
    %v8308 = vpop.f32.mrf.mxu0
    %v8309 = vadd.f32 0.0, %v8308
    %8310 = vmatmul.f32.gmra.mxu0 %v8082
    %v8311 = vpop.f32.mrf.mxu0
    %v8312 = vadd.f32 0.0, %v8311
    %8313 = vmatmul.f32.gmra.mxu0 %v8083
    %v8314 = vpop.f32.mrf.mxu0
    %v8315 = vadd.f32 0.0, %v8314
    %8316 = vmatmul.f32.gmra.mxu0 %v8084
    %v8317 = vpop.f32.mrf.mxu0
    %v8318 = vadd.f32 0.0, %v8317
    %8319 = vmatmul.f32.gmra.mxu0 %v8085
    %v8320 = vpop.f32.mrf.mxu0
    %v8321 = vadd.f32 0.0, %v8320
    %8322 = vmatmul.f32.gmra.mxu0 %v8086
    %v8323 = vpop.f32.mrf.mxu0
    %v8324 = vadd.f32 0.0, %v8323
    %8325 = vmatmul.f32.gmra.mxu0 %v8087
    %v8326 = vpop.f32.mrf.mxu0
    %v8327 = vadd.f32 0.0, %v8326
    %8328 = vmatmul.f32.gmra.mxu0 %v8088
    %v8329 = vpop.f32.mrf.mxu0
    %v8330 = vadd.f32 0.0, %v8329
    %8331 = vmatmul.f32.gmra.mxu0 %v8089
    %v8332 = vpop.f32.mrf.mxu0
    %v8333 = vadd.f32 0.0, %v8332
    %8334 = vmatmul.f32.gmra.mxu0 %v8090
    %v8335 = vpop.f32.mrf.mxu0
    %v8336 = vadd.f32 0.0, %v8335
    %8337 = vmatmul.f32.gmra.mxu0 %v8091
    %v8338 = vpop.f32.mrf.mxu0
    %v8339 = vadd.f32 0.0, %v8338
    %8340 = vmatmul.f32.gmra.mxu0 %v8092
    %v8341 = vpop.f32.mrf.mxu0
    %v8342 = vadd.f32 0.0, %v8341
    %8343 = vmatmul.f32.gmra.mxu0 %v8093
    %v8344 = vpop.f32.mrf.mxu0
    %v8345 = vadd.f32 0.0, %v8344
    %8346 = vmatmul.f32.gmra.mxu0 %v8094
    %v8347 = vpop.f32.mrf.mxu0
    %v8348 = vadd.f32 0.0, %v8347
    %8349 = vmatmul.f32.gmra.mxu0 %v8095
    %v8350 = vpop.f32.mrf.mxu0
    %v8351 = vadd.f32 0.0, %v8350
    %8352 = vmatmul.f32.gmra.mxu0 %v8096
    %v8353 = vpop.f32.mrf.mxu0
    %v8354 = vadd.f32 0.0, %v8353
    %8355 = vmatmul.f32.gmra.mxu0 %v8097
    %v8356 = vpop.f32.mrf.mxu0
    %v8357 = vadd.f32 0.0, %v8356
    %8358 = vmatmul.f32.gmra.mxu0 %v8098
    %v8359 = vpop.f32.mrf.mxu0
    %v8360 = vadd.f32 0.0, %v8359
    %8361 = vmatmul.f32.gmra.mxu0 %v8099
    %v8362 = vpop.f32.mrf.mxu0
    %v8363 = vadd.f32 0.0, %v8362
    %8364 = vmatmul.f32.gmra.mxu0 %v8100
    %v8365 = vpop.f32.mrf.mxu0
    %v8366 = vadd.f32 0.0, %v8365
    %8367 = vmatmul.f32.gmra.mxu0 %v8101
    %v8368 = vpop.f32.mrf.mxu0
    %v8369 = vadd.f32 0.0, %v8368
    %8370 = vmatmul.f32.gmra.mxu0 %v8102
    %v8371 = vpop.f32.mrf.mxu0
    %v8372 = vadd.f32 0.0, %v8371
    %8373 = vmatmul.f32.gmra.mxu0 %v8103
    %v8374 = vpop.f32.mrf.mxu0
    %v8375 = vadd.f32 0.0, %v8374
    %8376 = vmatmul.f32.gmra.mxu0 %v8104
    %v8377 = vpop.f32.mrf.mxu0
    %v8378 = vadd.f32 0.0, %v8377
    %8379 = vmatmul.f32.gmra.mxu0 %v8105
    %v8380 = vpop.f32.mrf.mxu0
    %v8381 = vadd.f32 0.0, %v8380
    %8382 = vdwg.mxu0
    %v8383 = vadd.f32 %v7783, %v8141
    %v8384 = vadd.f32 %v7786, %v8144
    %v8385 = vadd.f32 %v7789, %v8147
    %v8386 = vadd.f32 %v7792, %v8150
    %v8387 = vadd.f32 %v7795, %v8153
    %v8388 = vadd.f32 %v7798, %v8156
    %v8389 = vadd.f32 %v7801, %v8159
    %v8390 = vadd.f32 %v7804, %v8162
    %v8391 = vadd.f32 %v7807, %v8165
    %v8392 = vadd.f32 %v7810, %v8168
    %v8393 = vadd.f32 %v7813, %v8171
    %v8394 = vadd.f32 %v7816, %v8174
    %v8395 = vadd.f32 %v7819, %v8177
    %v8396 = vadd.f32 %v7822, %v8180
    %v8397 = vadd.f32 %v7825, %v8183
    %v8398 = vadd.f32 %v7828, %v8186
    %v8399 = vadd.f32 %v7831, %v8189
    %v8400 = vadd.f32 %v7834, %v8192
    %v8401 = vadd.f32 %v7837, %v8195
    %v8402 = vadd.f32 %v7840, %v8198
    %v8403 = vadd.f32 %v7843, %v8201
    %v8404 = vadd.f32 %v7846, %v8204
    %v8405 = vadd.f32 %v7849, %v8207
    %v8406 = vadd.f32 %v7852, %v8210
    %v8407 = vadd.f32 %v7855, %v8213
    %v8408 = vadd.f32 %v7858, %v8216
    %v8409 = vadd.f32 %v7861, %v8219
    %v8410 = vadd.f32 %v7864, %v8222
    %v8411 = vadd.f32 %v7867, %v8225
    %v8412 = vadd.f32 %v7870, %v8228
    %v8413 = vadd.f32 %v7873, %v8231
    %v8414 = vadd.f32 %v7876, %v8234
    %v8415 = vadd.f32 %v7879, %v8237
    %v8416 = vadd.f32 %v7882, %v8240
    %v8417 = vadd.f32 %v7885, %v8243
    %v8418 = vadd.f32 %v7888, %v8246
    %v8419 = vadd.f32 %v7891, %v8249
    %v8420 = vadd.f32 %v7894, %v8252
    %v8421 = vadd.f32 %v7897, %v8255
    %v8422 = vadd.f32 %v7900, %v8258
    %v8423 = vadd.f32 %v7903, %v8261
    %v8424 = vadd.f32 %v7906, %v8264
    %v8425 = vadd.f32 %v7909, %v8267
    %v8426 = vadd.f32 %v7912, %v8270
    %v8427 = vadd.f32 %v7915, %v8273
    %v8428 = vadd.f32 %v7918, %v8276
    %v8429 = vadd.f32 %v7921, %v8279
    %v8430 = vadd.f32 %v7924, %v8282
    %v8431 = vadd.f32 %v7927, %v8285
    %v8432 = vadd.f32 %v7930, %v8288
    %v8433 = vadd.f32 %v7933, %v8291
    %v8434 = vadd.f32 %v7936, %v8294
    %v8435 = vadd.f32 %v7939, %v8297
    %v8436 = vadd.f32 %v7942, %v8300
    %v8437 = vadd.f32 %v7945, %v8303
    %v8438 = vadd.f32 %v7948, %v8306
    %v8439 = vadd.f32 %v7951, %v8309
    %v8440 = vadd.f32 %v7954, %v8312
    %v8441 = vadd.f32 %v7957, %v8315
    %v8442 = vadd.f32 %v7960, %v8318
    %v8443 = vadd.f32 %v7963, %v8321
    %v8444 = vadd.f32 %v7966, %v8324
    %v8445 = vadd.f32 %v7969, %v8327
    %v8446 = vadd.f32 %v7972, %v8330
    %v8447 = vadd.f32 %v7975, %v8333
    %v8448 = vadd.f32 %v7978, %v8336
    %v8449 = vadd.f32 %v7981, %v8339
    %v8450 = vadd.f32 %v7984, %v8342
    %v8451 = vadd.f32 %v7987, %v8345
    %v8452 = vadd.f32 %v7990, %v8348
    %v8453 = vadd.f32 %v7993, %v8351
    %v8454 = vadd.f32 %v7996, %v8354
    %v8455 = vadd.f32 %v7999, %v8357
    %v8456 = vadd.f32 %v8002, %v8360
    %v8457 = vadd.f32 %v8005, %v8363
    %v8458 = vadd.f32 %v8008, %v8366
    %v8459 = vadd.f32 %v8011, %v8369
    %v8460 = vadd.f32 %v8014, %v8372
    %v8461 = vadd.f32 %v8017, %v8375
    %v8462 = vadd.f32 %v8020, %v8378
    %v8463 = vadd.f32 %v8023, %v8381
    %v8464 = vld [vmem:[#allocation2 + $0x17] sm:$0xff]
    %v8465 = vld [vmem:[#allocation2 + $0x1f] sm:$0xff]
    %v8466 = vld [vmem:[#allocation2 + $0x27] sm:$0xff]
    %v8467 = vld [vmem:[#allocation2 + $0x2f] sm:$0xff]
    %v8468 = vld [vmem:[#allocation2 + $0x37] sm:$0xff]
    %v8469 = vld [vmem:[#allocation2 + $0x3f] sm:$0xff]
    %v8470 = vld [vmem:[#allocation2 + $0x47] sm:$0xff]
    %v8471 = vld [vmem:[#allocation2 + $0x4f] sm:$0xff]
    %v8472 = vld [vmem:[#allocation2 + $0x57] sm:$0xff]
    %v8473 = vld [vmem:[#allocation2 + $0x5f] sm:$0xff]
    %v8474 = vld [vmem:[#allocation2 + $0x67] sm:$0xff]
    %v8475 = vld [vmem:[#allocation2 + $0x6f] sm:$0xff]
    %v8476 = vld [vmem:[#allocation2 + $0x77] sm:$0xff]
    %v8477 = vld [vmem:[#allocation2 + $0x7f] sm:$0xff]
    %v8478 = vld [vmem:[#allocation2 + $0x87] sm:$0xff]
    %v8479 = vld [vmem:[#allocation2 + $0x8f] sm:$0xff]
    %v8480 = vld [vmem:[#allocation2 + $0x97] sm:$0xff]
    %v8481 = vld [vmem:[#allocation2 + $0x9f] sm:$0xff]
    %v8482 = vld [vmem:[#allocation2 + $0xa7] sm:$0xff]
    %v8483 = vld [vmem:[#allocation2 + $0xaf] sm:$0xff]
    %v8484 = vld [vmem:[#allocation2 + $0xb7] sm:$0xff]
    %v8485 = vld [vmem:[#allocation2 + $0xbf] sm:$0xff]
    %v8486 = vld [vmem:[#allocation2 + $0xc7] sm:$0xff]
    %v8487 = vld [vmem:[#allocation2 + $0xcf] sm:$0xff]
    %v8488 = vld [vmem:[#allocation2 + $0xd7] sm:$0xff]
    %v8489 = vld [vmem:[#allocation2 + $0xdf] sm:$0xff]
    %v8490 = vld [vmem:[#allocation2 + $0xe7] sm:$0xff]
    %v8491 = vld [vmem:[#allocation2 + $0xef] sm:$0xff]
    %v8492 = vld [vmem:[#allocation2 + $0xf7] sm:$0xff]
    %v8493 = vld [vmem:[#allocation2 + $0xff] sm:$0xff]
    %v8494 = vld [vmem:[#allocation2 + $0x107] sm:$0xff]
    %v8495 = vld [vmem:[#allocation2 + $0x10f] sm:$0xff]
    %v8496 = vld [vmem:[#allocation2 + $0x117] sm:$0xff]
    %v8497 = vld [vmem:[#allocation2 + $0x11f] sm:$0xff]
    %v8498 = vld [vmem:[#allocation2 + $0x127] sm:$0xff]
    %v8499 = vld [vmem:[#allocation2 + $0x12f] sm:$0xff]
    %v8500 = vld [vmem:[#allocation2 + $0x137] sm:$0xff]
    %v8501 = vld [vmem:[#allocation2 + $0x13f] sm:$0xff]
    %v8502 = vld [vmem:[#allocation2 + $0x147] sm:$0xff]
    %v8503 = vld [vmem:[#allocation2 + $0x14f] sm:$0xff]
    %v8504 = vld [vmem:[#allocation2 + $0x157] sm:$0xff]
    %v8505 = vld [vmem:[#allocation2 + $0x15f] sm:$0xff]
    %v8506 = vld [vmem:[#allocation2 + $0x167] sm:$0xff]
    %v8507 = vld [vmem:[#allocation2 + $0x16f] sm:$0xff]
    %v8508 = vld [vmem:[#allocation2 + $0x177] sm:$0xff]
    %v8509 = vld [vmem:[#allocation2 + $0x17f] sm:$0xff]
    %v8510 = vld [vmem:[#allocation2 + $0x187] sm:$0xff]
    %v8511 = vld [vmem:[#allocation2 + $0x18f] sm:$0xff]
    %v8512 = vld [vmem:[#allocation2 + $0x197] sm:$0xff]
    %v8513 = vld [vmem:[#allocation2 + $0x19f] sm:$0xff]
    %v8514 = vld [vmem:[#allocation2 + $0x1a7] sm:$0xff]
    %v8515 = vld [vmem:[#allocation2 + $0x1af] sm:$0xff]
    %v8516 = vld [vmem:[#allocation2 + $0x1b7] sm:$0xff]
    %v8517 = vld [vmem:[#allocation2 + $0x1bf] sm:$0xff]
    %v8518 = vld [vmem:[#allocation2 + $0x1c7] sm:$0xff]
    %v8519 = vld [vmem:[#allocation2 + $0x1cf] sm:$0xff]
    %v8520 = vld [vmem:[#allocation2 + $0x1d7] sm:$0xff]
    %v8521 = vld [vmem:[#allocation2 + $0x1df] sm:$0xff]
    %v8522 = vld [vmem:[#allocation2 + $0x1e7] sm:$0xff]
    %v8523 = vld [vmem:[#allocation2 + $0x1ef] sm:$0xff]
    %v8524 = vld [vmem:[#allocation2 + $0x1f7] sm:$0xff]
    %v8525 = vld [vmem:[#allocation2 + $0x1ff] sm:$0xff]
    %v8526 = vld [vmem:[#allocation2 + $0x207] sm:$0xff]
    %v8527 = vld [vmem:[#allocation2 + $0x20f] sm:$0xff]
    %v8528 = vld [vmem:[#allocation2 + $0x217] sm:$0xff]
    %v8529 = vld [vmem:[#allocation2 + $0x21f] sm:$0xff]
    %v8530 = vld [vmem:[#allocation2 + $0x227] sm:$0xff]
    %v8531 = vld [vmem:[#allocation2 + $0x22f] sm:$0xff]
    %v8532 = vld [vmem:[#allocation2 + $0x237] sm:$0xff]
    %v8533 = vld [vmem:[#allocation2 + $0x23f] sm:$0xff]
    %v8534 = vld [vmem:[#allocation2 + $0x247] sm:$0xff]
    %v8535 = vld [vmem:[#allocation2 + $0x24f] sm:$0xff]
    %v8536 = vld [vmem:[#allocation2 + $0x257] sm:$0xff]
    %v8537 = vld [vmem:[#allocation2 + $0x25f] sm:$0xff]
    %v8538 = vld [vmem:[#allocation2 + $0x267] sm:$0xff]
    %v8539 = vld [vmem:[#allocation2 + $0x26f] sm:$0xff]
    %v8540 = vld [vmem:[#allocation2 + $0x277] sm:$0xff]
    %v8541 = vld [vmem:[#allocation2 + $0x27f] sm:$0xff]
    %v8542 = vld [vmem:[#allocation2 + $0x287] sm:$0xff]
    %v8543 = vld [vmem:[#allocation2 + $0x28f] sm:$0xff]
    %v8544 = vld [vmem:[#allocation2 + $0x297] sm:$0xff]
    %s8545 = scalar_lea.vmem %s3, 384
    %v8546 = vld [vmem:[%s8545] sm:$0xff]
    %v8547 = vld [vmem:[%s8545 + $0x8] sm:$0xff]
    %v8548 = vld [vmem:[%s8545 + $0x10] sm:$0xff]
    %v8549 = vld [vmem:[%s8545 + $0x18] sm:$0xff]
    %v8550 = vld [vmem:[%s8545 + $0x20] sm:$0xff]
    %v8551 = vld [vmem:[%s8545 + $0x28] sm:$0xff]
    %v8552 = vld [vmem:[%s8545 + $0x30] sm:$0xff]
    %v8553 = vld [vmem:[%s8545 + $0x38] sm:$0xff]
    %v8554 = vld [vmem:[%s8545 + $0x40] sm:$0xff]
    %v8555 = vld [vmem:[%s8545 + $0x48] sm:$0xff]
    %v8556 = vld [vmem:[%s8545 + $0x50] sm:$0xff]
    %v8557 = vld [vmem:[%s8545 + $0x58] sm:$0xff]
    %v8558 = vld [vmem:[%s8545 + $0x60] sm:$0xff]
    %v8559 = vld [vmem:[%s8545 + $0x68] sm:$0xff]
    %v8560 = vld [vmem:[%s8545 + $0x70] sm:$0xff]
    %v8561 = vld [vmem:[%s8545 + $0x78] sm:$0xff]
    %8562 = vmatpush.msra.mxu0 %v8561
    %8563 = vmatpush.msra.mxu0 %v8560
    %8564 = vmatpush.msra.mxu0 %v8559
    %8565 = vmatpush.msra.mxu0 %v8558
    %8566 = vmatpush.msra.mxu0 %v8557
    %8567 = vmatpush.msra.mxu0 %v8556
    %8568 = vmatpush.msra.mxu0 %v8555
    %8569 = vmatpush.msra.mxu0 %v8554
    %8570 = vmatpush.msra.mxu0 %v8553
    %8571 = vmatpush.msra.mxu0 %v8552
    %8572 = vmatpush.msra.mxu0 %v8551
    %8573 = vmatpush.msra.mxu0 %v8550
    %8574 = vmatpush.msra.mxu0 %v8549
    %8575 = vmatpush.msra.mxu0 %v8548
    %8576 = vmatpush.msra.mxu0 %v8547
    %8577 = vmatpush.msra.mxu0 %v8546
    %8578 = vmatmul.f32.gmra.mxu0 %v8464
    %v8579 = vpop.f32.mrf.mxu0
    %v8580 = vadd.f32 0.0, %v8579
    %8581 = vmatmul.f32.gmra.mxu0 %v8465
    %v8582 = vpop.f32.mrf.mxu0
    %v8583 = vadd.f32 0.0, %v8582
    %8584 = vmatmul.f32.gmra.mxu0 %v8466
    %v8585 = vpop.f32.mrf.mxu0
    %v8586 = vadd.f32 0.0, %v8585
    %8587 = vmatmul.f32.gmra.mxu0 %v8467
    %v8588 = vpop.f32.mrf.mxu0
    %v8589 = vadd.f32 0.0, %v8588
    %8590 = vmatmul.f32.gmra.mxu0 %v8468
    %v8591 = vpop.f32.mrf.mxu0
    %v8592 = vadd.f32 0.0, %v8591
    %8593 = vmatmul.f32.gmra.mxu0 %v8469
    %v8594 = vpop.f32.mrf.mxu0
    %v8595 = vadd.f32 0.0, %v8594
    %8596 = vmatmul.f32.gmra.mxu0 %v8470
    %v8597 = vpop.f32.mrf.mxu0
    %v8598 = vadd.f32 0.0, %v8597
    %8599 = vmatmul.f32.gmra.mxu0 %v8471
    %v8600 = vpop.f32.mrf.mxu0
    %v8601 = vadd.f32 0.0, %v8600
    %8602 = vmatmul.f32.gmra.mxu0 %v8472
    %v8603 = vpop.f32.mrf.mxu0
    %v8604 = vadd.f32 0.0, %v8603
    %8605 = vmatmul.f32.gmra.mxu0 %v8473
    %v8606 = vpop.f32.mrf.mxu0
    %v8607 = vadd.f32 0.0, %v8606
    %8608 = vmatmul.f32.gmra.mxu0 %v8474
    %v8609 = vpop.f32.mrf.mxu0
    %v8610 = vadd.f32 0.0, %v8609
    %8611 = vmatmul.f32.gmra.mxu0 %v8475
    %v8612 = vpop.f32.mrf.mxu0
    %v8613 = vadd.f32 0.0, %v8612
    %8614 = vmatmul.f32.gmra.mxu0 %v8476
    %v8615 = vpop.f32.mrf.mxu0
    %v8616 = vadd.f32 0.0, %v8615
    %8617 = vmatmul.f32.gmra.mxu0 %v8477
    %v8618 = vpop.f32.mrf.mxu0
    %v8619 = vadd.f32 0.0, %v8618
    %8620 = vmatmul.f32.gmra.mxu0 %v8478
    %v8621 = vpop.f32.mrf.mxu0
    %v8622 = vadd.f32 0.0, %v8621
    %8623 = vmatmul.f32.gmra.mxu0 %v8479
    %v8624 = vpop.f32.mrf.mxu0
    %v8625 = vadd.f32 0.0, %v8624
    %8626 = vmatmul.f32.gmra.mxu0 %v8480
    %v8627 = vpop.f32.mrf.mxu0
    %v8628 = vadd.f32 0.0, %v8627
    %8629 = vmatmul.f32.gmra.mxu0 %v8481
    %v8630 = vpop.f32.mrf.mxu0
    %v8631 = vadd.f32 0.0, %v8630
    %8632 = vmatmul.f32.gmra.mxu0 %v8482
    %v8633 = vpop.f32.mrf.mxu0
    %v8634 = vadd.f32 0.0, %v8633
    %8635 = vmatmul.f32.gmra.mxu0 %v8483
    %v8636 = vpop.f32.mrf.mxu0
    %v8637 = vadd.f32 0.0, %v8636
    %8638 = vmatmul.f32.gmra.mxu0 %v8484
    %v8639 = vpop.f32.mrf.mxu0
    %v8640 = vadd.f32 0.0, %v8639
    %8641 = vmatmul.f32.gmra.mxu0 %v8485
    %v8642 = vpop.f32.mrf.mxu0
    %v8643 = vadd.f32 0.0, %v8642
    %8644 = vmatmul.f32.gmra.mxu0 %v8486
    %v8645 = vpop.f32.mrf.mxu0
    %v8646 = vadd.f32 0.0, %v8645
    %8647 = vmatmul.f32.gmra.mxu0 %v8487
    %v8648 = vpop.f32.mrf.mxu0
    %v8649 = vadd.f32 0.0, %v8648
    %8650 = vmatmul.f32.gmra.mxu0 %v8488
    %v8651 = vpop.f32.mrf.mxu0
    %v8652 = vadd.f32 0.0, %v8651
    %8653 = vmatmul.f32.gmra.mxu0 %v8489
    %v8654 = vpop.f32.mrf.mxu0
    %v8655 = vadd.f32 0.0, %v8654
    %8656 = vmatmul.f32.gmra.mxu0 %v8490
    %v8657 = vpop.f32.mrf.mxu0
    %v8658 = vadd.f32 0.0, %v8657
    %8659 = vmatmul.f32.gmra.mxu0 %v8491
    %v8660 = vpop.f32.mrf.mxu0
    %v8661 = vadd.f32 0.0, %v8660
    %8662 = vmatmul.f32.gmra.mxu0 %v8492
    %v8663 = vpop.f32.mrf.mxu0
    %v8664 = vadd.f32 0.0, %v8663
    %8665 = vmatmul.f32.gmra.mxu0 %v8493
    %v8666 = vpop.f32.mrf.mxu0
    %v8667 = vadd.f32 0.0, %v8666
    %8668 = vmatmul.f32.gmra.mxu0 %v8494
    %v8669 = vpop.f32.mrf.mxu0
    %v8670 = vadd.f32 0.0, %v8669
    %8671 = vmatmul.f32.gmra.mxu0 %v8495
    %v8672 = vpop.f32.mrf.mxu0
    %v8673 = vadd.f32 0.0, %v8672
    %8674 = vmatmul.f32.gmra.mxu0 %v8496
    %v8675 = vpop.f32.mrf.mxu0
    %v8676 = vadd.f32 0.0, %v8675
    %8677 = vmatmul.f32.gmra.mxu0 %v8497
    %v8678 = vpop.f32.mrf.mxu0
    %v8679 = vadd.f32 0.0, %v8678
    %8680 = vmatmul.f32.gmra.mxu0 %v8498
    %v8681 = vpop.f32.mrf.mxu0
    %v8682 = vadd.f32 0.0, %v8681
    %8683 = vmatmul.f32.gmra.mxu0 %v8499
    %v8684 = vpop.f32.mrf.mxu0
    %v8685 = vadd.f32 0.0, %v8684
    %8686 = vmatmul.f32.gmra.mxu0 %v8500
    %v8687 = vpop.f32.mrf.mxu0
    %v8688 = vadd.f32 0.0, %v8687
    %8689 = vmatmul.f32.gmra.mxu0 %v8501
    %v8690 = vpop.f32.mrf.mxu0
    %v8691 = vadd.f32 0.0, %v8690
    %8692 = vmatmul.f32.gmra.mxu0 %v8502
    %v8693 = vpop.f32.mrf.mxu0
    %v8694 = vadd.f32 0.0, %v8693
    %8695 = vmatmul.f32.gmra.mxu0 %v8503
    %v8696 = vpop.f32.mrf.mxu0
    %v8697 = vadd.f32 0.0, %v8696
    %8698 = vmatmul.f32.gmra.mxu0 %v8504
    %v8699 = vpop.f32.mrf.mxu0
    %v8700 = vadd.f32 0.0, %v8699
    %8701 = vmatmul.f32.gmra.mxu0 %v8505
    %v8702 = vpop.f32.mrf.mxu0
    %v8703 = vadd.f32 0.0, %v8702
    %8704 = vmatmul.f32.gmra.mxu0 %v8506
    %v8705 = vpop.f32.mrf.mxu0
    %v8706 = vadd.f32 0.0, %v8705
    %8707 = vmatmul.f32.gmra.mxu0 %v8507
    %v8708 = vpop.f32.mrf.mxu0
    %v8709 = vadd.f32 0.0, %v8708
    %8710 = vmatmul.f32.gmra.mxu0 %v8508
    %v8711 = vpop.f32.mrf.mxu0
    %v8712 = vadd.f32 0.0, %v8711
    %8713 = vmatmul.f32.gmra.mxu0 %v8509
    %v8714 = vpop.f32.mrf.mxu0
    %v8715 = vadd.f32 0.0, %v8714
    %8716 = vmatmul.f32.gmra.mxu0 %v8510
    %v8717 = vpop.f32.mrf.mxu0
    %v8718 = vadd.f32 0.0, %v8717
    %8719 = vmatmul.f32.gmra.mxu0 %v8511
    %v8720 = vpop.f32.mrf.mxu0
    %v8721 = vadd.f32 0.0, %v8720
    %8722 = vmatmul.f32.gmra.mxu0 %v8512
    %v8723 = vpop.f32.mrf.mxu0
    %v8724 = vadd.f32 0.0, %v8723
    %8725 = vmatmul.f32.gmra.mxu0 %v8513
    %v8726 = vpop.f32.mrf.mxu0
    %v8727 = vadd.f32 0.0, %v8726
    %8728 = vmatmul.f32.gmra.mxu0 %v8514
    %v8729 = vpop.f32.mrf.mxu0
    %v8730 = vadd.f32 0.0, %v8729
    %8731 = vmatmul.f32.gmra.mxu0 %v8515
    %v8732 = vpop.f32.mrf.mxu0
    %v8733 = vadd.f32 0.0, %v8732
    %8734 = vmatmul.f32.gmra.mxu0 %v8516
    %v8735 = vpop.f32.mrf.mxu0
    %v8736 = vadd.f32 0.0, %v8735
    %8737 = vmatmul.f32.gmra.mxu0 %v8517
    %v8738 = vpop.f32.mrf.mxu0
    %v8739 = vadd.f32 0.0, %v8738
    %8740 = vmatmul.f32.gmra.mxu0 %v8518
    %v8741 = vpop.f32.mrf.mxu0
    %v8742 = vadd.f32 0.0, %v8741
    %8743 = vmatmul.f32.gmra.mxu0 %v8519
    %v8744 = vpop.f32.mrf.mxu0
    %v8745 = vadd.f32 0.0, %v8744
    %8746 = vmatmul.f32.gmra.mxu0 %v8520
    %v8747 = vpop.f32.mrf.mxu0
    %v8748 = vadd.f32 0.0, %v8747
    %8749 = vmatmul.f32.gmra.mxu0 %v8521
    %v8750 = vpop.f32.mrf.mxu0
    %v8751 = vadd.f32 0.0, %v8750
    %8752 = vmatmul.f32.gmra.mxu0 %v8522
    %v8753 = vpop.f32.mrf.mxu0
    %v8754 = vadd.f32 0.0, %v8753
    %8755 = vmatmul.f32.gmra.mxu0 %v8523
    %v8756 = vpop.f32.mrf.mxu0
    %v8757 = vadd.f32 0.0, %v8756
    %8758 = vmatmul.f32.gmra.mxu0 %v8524
    %v8759 = vpop.f32.mrf.mxu0
    %v8760 = vadd.f32 0.0, %v8759
    %8761 = vmatmul.f32.gmra.mxu0 %v8525
    %v8762 = vpop.f32.mrf.mxu0
    %v8763 = vadd.f32 0.0, %v8762
    %8764 = vmatmul.f32.gmra.mxu0 %v8526
    %v8765 = vpop.f32.mrf.mxu0
    %v8766 = vadd.f32 0.0, %v8765
    %8767 = vmatmul.f32.gmra.mxu0 %v8527
    %v8768 = vpop.f32.mrf.mxu0
    %v8769 = vadd.f32 0.0, %v8768
    %8770 = vmatmul.f32.gmra.mxu0 %v8528
    %v8771 = vpop.f32.mrf.mxu0
    %v8772 = vadd.f32 0.0, %v8771
    %8773 = vmatmul.f32.gmra.mxu0 %v8529
    %v8774 = vpop.f32.mrf.mxu0
    %v8775 = vadd.f32 0.0, %v8774
    %8776 = vmatmul.f32.gmra.mxu0 %v8530
    %v8777 = vpop.f32.mrf.mxu0
    %v8778 = vadd.f32 0.0, %v8777
    %8779 = vmatmul.f32.gmra.mxu0 %v8531
    %v8780 = vpop.f32.mrf.mxu0
    %v8781 = vadd.f32 0.0, %v8780
    %8782 = vmatmul.f32.gmra.mxu0 %v8532
    %v8783 = vpop.f32.mrf.mxu0
    %v8784 = vadd.f32 0.0, %v8783
    %8785 = vmatmul.f32.gmra.mxu0 %v8533
    %v8786 = vpop.f32.mrf.mxu0
    %v8787 = vadd.f32 0.0, %v8786
    %8788 = vmatmul.f32.gmra.mxu0 %v8534
    %v8789 = vpop.f32.mrf.mxu0
    %v8790 = vadd.f32 0.0, %v8789
    %8791 = vmatmul.f32.gmra.mxu0 %v8535
    %v8792 = vpop.f32.mrf.mxu0
    %v8793 = vadd.f32 0.0, %v8792
    %8794 = vmatmul.f32.gmra.mxu0 %v8536
    %v8795 = vpop.f32.mrf.mxu0
    %v8796 = vadd.f32 0.0, %v8795
    %8797 = vmatmul.f32.gmra.mxu0 %v8537
    %v8798 = vpop.f32.mrf.mxu0
    %v8799 = vadd.f32 0.0, %v8798
    %8800 = vmatmul.f32.gmra.mxu0 %v8538
    %v8801 = vpop.f32.mrf.mxu0
    %v8802 = vadd.f32 0.0, %v8801
    %8803 = vmatmul.f32.gmra.mxu0 %v8539
    %v8804 = vpop.f32.mrf.mxu0
    %v8805 = vadd.f32 0.0, %v8804
    %8806 = vmatmul.f32.gmra.mxu0 %v8540
    %v8807 = vpop.f32.mrf.mxu0
    %v8808 = vadd.f32 0.0, %v8807
    %8809 = vmatmul.f32.gmra.mxu0 %v8541
    %v8810 = vpop.f32.mrf.mxu0
    %v8811 = vadd.f32 0.0, %v8810
    %8812 = vmatmul.f32.gmra.mxu0 %v8542
    %v8813 = vpop.f32.mrf.mxu0
    %v8814 = vadd.f32 0.0, %v8813
    %8815 = vmatmul.f32.gmra.mxu0 %v8543
    %v8816 = vpop.f32.mrf.mxu0
    %v8817 = vadd.f32 0.0, %v8816
    %8818 = vmatmul.f32.gmra.mxu0 %v8544
    %v8819 = vpop.f32.mrf.mxu0
    %v8820 = vadd.f32 0.0, %v8819
    %8821 = vdwg.mxu0
    %v8822 = vadd.f32 %v8383, %v8580
    %v8823 = vadd.f32 %v8384, %v8583
    %v8824 = vadd.f32 %v8385, %v8586
    %v8825 = vadd.f32 %v8386, %v8589
    %v8826 = vadd.f32 %v8387, %v8592
    %v8827 = vadd.f32 %v8388, %v8595
    %v8828 = vadd.f32 %v8389, %v8598
    %v8829 = vadd.f32 %v8390, %v8601
    %v8830 = vadd.f32 %v8391, %v8604
    %v8831 = vadd.f32 %v8392, %v8607
    %v8832 = vadd.f32 %v8393, %v8610
    %v8833 = vadd.f32 %v8394, %v8613
    %v8834 = vadd.f32 %v8395, %v8616
    %v8835 = vadd.f32 %v8396, %v8619
    %v8836 = vadd.f32 %v8397, %v8622
    %v8837 = vadd.f32 %v8398, %v8625
    %v8838 = vadd.f32 %v8399, %v8628
    %v8839 = vadd.f32 %v8400, %v8631
    %v8840 = vadd.f32 %v8401, %v8634
    %v8841 = vadd.f32 %v8402, %v8637
    %v8842 = vadd.f32 %v8403, %v8640
    %v8843 = vadd.f32 %v8404, %v8643
    %v8844 = vadd.f32 %v8405, %v8646
    %v8845 = vadd.f32 %v8406, %v8649
    %v8846 = vadd.f32 %v8407, %v8652
    %v8847 = vadd.f32 %v8408, %v8655
    %v8848 = vadd.f32 %v8409, %v8658
    %v8849 = vadd.f32 %v8410, %v8661
    %v8850 = vadd.f32 %v8411, %v8664
    %v8851 = vadd.f32 %v8412, %v8667
    %v8852 = vadd.f32 %v8413, %v8670
    %v8853 = vadd.f32 %v8414, %v8673
    %v8854 = vadd.f32 %v8415, %v8676
    %v8855 = vadd.f32 %v8416, %v8679
    %v8856 = vadd.f32 %v8417, %v8682
    %v8857 = vadd.f32 %v8418, %v8685
    %v8858 = vadd.f32 %v8419, %v8688
    %v8859 = vadd.f32 %v8420, %v8691
    %v8860 = vadd.f32 %v8421, %v8694
    %v8861 = vadd.f32 %v8422, %v8697
    %v8862 = vadd.f32 %v8423, %v8700
    %v8863 = vadd.f32 %v8424, %v8703
    %v8864 = vadd.f32 %v8425, %v8706
    %v8865 = vadd.f32 %v8426, %v8709
    %v8866 = vadd.f32 %v8427, %v8712
    %v8867 = vadd.f32 %v8428, %v8715
    %v8868 = vadd.f32 %v8429, %v8718
    %v8869 = vadd.f32 %v8430, %v8721
    %v8870 = vadd.f32 %v8431, %v8724
    %v8871 = vadd.f32 %v8432, %v8727
    %v8872 = vadd.f32 %v8433, %v8730
    %v8873 = vadd.f32 %v8434, %v8733
    %v8874 = vadd.f32 %v8435, %v8736
    %v8875 = vadd.f32 %v8436, %v8739
    %v8876 = vadd.f32 %v8437, %v8742
    %v8877 = vadd.f32 %v8438, %v8745
    %v8878 = vadd.f32 %v8439, %v8748
    %v8879 = vadd.f32 %v8440, %v8751
    %v8880 = vadd.f32 %v8441, %v8754
    %v8881 = vadd.f32 %v8442, %v8757
    %v8882 = vadd.f32 %v8443, %v8760
    %v8883 = vadd.f32 %v8444, %v8763
    %v8884 = vadd.f32 %v8445, %v8766
    %v8885 = vadd.f32 %v8446, %v8769
    %v8886 = vadd.f32 %v8447, %v8772
    %v8887 = vadd.f32 %v8448, %v8775
    %v8888 = vadd.f32 %v8449, %v8778
    %v8889 = vadd.f32 %v8450, %v8781
    %v8890 = vadd.f32 %v8451, %v8784
    %v8891 = vadd.f32 %v8452, %v8787
    %v8892 = vadd.f32 %v8453, %v8790
    %v8893 = vadd.f32 %v8454, %v8793
    %v8894 = vadd.f32 %v8455, %v8796
    %v8895 = vadd.f32 %v8456, %v8799
    %v8896 = vadd.f32 %v8457, %v8802
    %v8897 = vadd.f32 %v8458, %v8805
    %v8898 = vadd.f32 %v8459, %v8808
    %v8899 = vadd.f32 %v8460, %v8811
    %v8900 = vadd.f32 %v8461, %v8814
    %v8901 = vadd.f32 %v8462, %v8817
    %v8902 = vadd.f32 %v8463, %v8820
    %v8903 = vld [vmem:[#allocation2 + $0x18] sm:$0xff]
    %v8904 = vld [vmem:[#allocation2 + $0x20] sm:$0xff]
    %v8905 = vld [vmem:[#allocation2 + $0x28] sm:$0xff]
    %v8906 = vld [vmem:[#allocation2 + $0x30] sm:$0xff]
    %v8907 = vld [vmem:[#allocation2 + $0x38] sm:$0xff]
    %v8908 = vld [vmem:[#allocation2 + $0x40] sm:$0xff]
    %v8909 = vld [vmem:[#allocation2 + $0x48] sm:$0xff]
    %v8910 = vld [vmem:[#allocation2 + $0x50] sm:$0xff]
    %v8911 = vld [vmem:[#allocation2 + $0x58] sm:$0xff]
    %v8912 = vld [vmem:[#allocation2 + $0x60] sm:$0xff]
    %v8913 = vld [vmem:[#allocation2 + $0x68] sm:$0xff]
    %v8914 = vld [vmem:[#allocation2 + $0x70] sm:$0xff]
    %v8915 = vld [vmem:[#allocation2 + $0x78] sm:$0xff]
    %v8916 = vld [vmem:[#allocation2 + $0x80] sm:$0xff]
    %v8917 = vld [vmem:[#allocation2 + $0x88] sm:$0xff]
    %v8918 = vld [vmem:[#allocation2 + $0x90] sm:$0xff]
    %v8919 = vld [vmem:[#allocation2 + $0x98] sm:$0xff]
    %v8920 = vld [vmem:[#allocation2 + $0xa0] sm:$0xff]
    %v8921 = vld [vmem:[#allocation2 + $0xa8] sm:$0xff]
    %v8922 = vld [vmem:[#allocation2 + $0xb0] sm:$0xff]
    %v8923 = vld [vmem:[#allocation2 + $0xb8] sm:$0xff]
    %v8924 = vld [vmem:[#allocation2 + $0xc0] sm:$0xff]
    %v8925 = vld [vmem:[#allocation2 + $0xc8] sm:$0xff]
    %v8926 = vld [vmem:[#allocation2 + $0xd0] sm:$0xff]
    %v8927 = vld [vmem:[#allocation2 + $0xd8] sm:$0xff]
    %v8928 = vld [vmem:[#allocation2 + $0xe0] sm:$0xff]
    %v8929 = vld [vmem:[#allocation2 + $0xe8] sm:$0xff]
    %v8930 = vld [vmem:[#allocation2 + $0xf0] sm:$0xff]
    %v8931 = vld [vmem:[#allocation2 + $0xf8] sm:$0xff]
    %v8932 = vld [vmem:[#allocation2 + $0x100] sm:$0xff]
    %v8933 = vld [vmem:[#allocation2 + $0x108] sm:$0xff]
    %v8934 = vld [vmem:[#allocation2 + $0x110] sm:$0xff]
    %v8935 = vld [vmem:[#allocation2 + $0x118] sm:$0xff]
    %v8936 = vld [vmem:[#allocation2 + $0x120] sm:$0xff]
    %v8937 = vld [vmem:[#allocation2 + $0x128] sm:$0xff]
    %v8938 = vld [vmem:[#allocation2 + $0x130] sm:$0xff]
    %v8939 = vld [vmem:[#allocation2 + $0x138] sm:$0xff]
    %v8940 = vld [vmem:[#allocation2 + $0x140] sm:$0xff]
    %v8941 = vld [vmem:[#allocation2 + $0x148] sm:$0xff]
    %v8942 = vld [vmem:[#allocation2 + $0x150] sm:$0xff]
    %v8943 = vld [vmem:[#allocation2 + $0x158] sm:$0xff]
    %v8944 = vld [vmem:[#allocation2 + $0x160] sm:$0xff]
    %v8945 = vld [vmem:[#allocation2 + $0x168] sm:$0xff]
    %v8946 = vld [vmem:[#allocation2 + $0x170] sm:$0xff]
    %v8947 = vld [vmem:[#allocation2 + $0x178] sm:$0xff]
    %v8948 = vld [vmem:[#allocation2 + $0x180] sm:$0xff]
    %v8949 = vld [vmem:[#allocation2 + $0x188] sm:$0xff]
    %v8950 = vld [vmem:[#allocation2 + $0x190] sm:$0xff]
    %v8951 = vld [vmem:[#allocation2 + $0x198] sm:$0xff]
    %v8952 = vld [vmem:[#allocation2 + $0x1a0] sm:$0xff]
    %v8953 = vld [vmem:[#allocation2 + $0x1a8] sm:$0xff]
    %v8954 = vld [vmem:[#allocation2 + $0x1b0] sm:$0xff]
    %v8955 = vld [vmem:[#allocation2 + $0x1b8] sm:$0xff]
    %v8956 = vld [vmem:[#allocation2 + $0x1c0] sm:$0xff]
    %v8957 = vld [vmem:[#allocation2 + $0x1c8] sm:$0xff]
    %v8958 = vld [vmem:[#allocation2 + $0x1d0] sm:$0xff]
    %v8959 = vld [vmem:[#allocation2 + $0x1d8] sm:$0xff]
    %v8960 = vld [vmem:[#allocation2 + $0x1e0] sm:$0xff]
    %v8961 = vld [vmem:[#allocation2 + $0x1e8] sm:$0xff]
    %v8962 = vld [vmem:[#allocation2 + $0x1f0] sm:$0xff]
    %v8963 = vld [vmem:[#allocation2 + $0x1f8] sm:$0xff]
    %v8964 = vld [vmem:[#allocation2 + $0x200] sm:$0xff]
    %v8965 = vld [vmem:[#allocation2 + $0x208] sm:$0xff]
    %v8966 = vld [vmem:[#allocation2 + $0x210] sm:$0xff]
    %v8967 = vld [vmem:[#allocation2 + $0x218] sm:$0xff]
    %v8968 = vld [vmem:[#allocation2 + $0x220] sm:$0xff]
    %v8969 = vld [vmem:[#allocation2 + $0x228] sm:$0xff]
    %v8970 = vld [vmem:[#allocation2 + $0x230] sm:$0xff]
    %v8971 = vld [vmem:[#allocation2 + $0x238] sm:$0xff]
    %v8972 = vld [vmem:[#allocation2 + $0x240] sm:$0xff]
    %v8973 = vld [vmem:[#allocation2 + $0x248] sm:$0xff]
    %v8974 = vld [vmem:[#allocation2 + $0x250] sm:$0xff]
    %v8975 = vld [vmem:[#allocation2 + $0x258] sm:$0xff]
    %v8976 = vld [vmem:[#allocation2 + $0x260] sm:$0xff]
    %v8977 = vld [vmem:[#allocation2 + $0x268] sm:$0xff]
    %v8978 = vld [vmem:[#allocation2 + $0x270] sm:$0xff]
    %v8979 = vld [vmem:[#allocation2 + $0x278] sm:$0xff]
    %v8980 = vld [vmem:[#allocation2 + $0x280] sm:$0xff]
    %v8981 = vld [vmem:[#allocation2 + $0x288] sm:$0xff]
    %v8982 = vld [vmem:[#allocation2 + $0x290] sm:$0xff]
    %v8983 = vld [vmem:[#allocation2 + $0x298] sm:$0xff]
    %s8984 = scalar_lea.vmem %s3, 512
    %v8985 = vld [vmem:[%s8984] sm:$0xff]
    %v8986 = vld [vmem:[%s8984 + $0x8] sm:$0xff]
    %v8987 = vld [vmem:[%s8984 + $0x10] sm:$0xff]
    %v8988 = vld [vmem:[%s8984 + $0x18] sm:$0xff]
    %v8989 = vld [vmem:[%s8984 + $0x20] sm:$0xff]
    %v8990 = vld [vmem:[%s8984 + $0x28] sm:$0xff]
    %v8991 = vld [vmem:[%s8984 + $0x30] sm:$0xff]
    %v8992 = vld [vmem:[%s8984 + $0x38] sm:$0xff]
    %v8993 = vld [vmem:[%s8984 + $0x40] sm:$0xff]
    %v8994 = vld [vmem:[%s8984 + $0x48] sm:$0xff]
    %v8995 = vld [vmem:[%s8984 + $0x50] sm:$0xff]
    %v8996 = vld [vmem:[%s8984 + $0x58] sm:$0xff]
    %v8997 = vld [vmem:[%s8984 + $0x60] sm:$0xff]
    %v8998 = vld [vmem:[%s8984 + $0x68] sm:$0xff]
    %v8999 = vld [vmem:[%s8984 + $0x70] sm:$0xff]
    %v9000 = vld [vmem:[%s8984 + $0x78] sm:$0xff]
    %9001 = vmatpush.msra.mxu0 %v9000
    %9002 = vmatpush.msra.mxu0 %v8999
    %9003 = vmatpush.msra.mxu0 %v8998
    %9004 = vmatpush.msra.mxu0 %v8997
    %9005 = vmatpush.msra.mxu0 %v8996
    %9006 = vmatpush.msra.mxu0 %v8995
    %9007 = vmatpush.msra.mxu0 %v8994
    %9008 = vmatpush.msra.mxu0 %v8993
    %9009 = vmatpush.msra.mxu0 %v8992
    %9010 = vmatpush.msra.mxu0 %v8991
    %9011 = vmatpush.msra.mxu0 %v8990
    %9012 = vmatpush.msra.mxu0 %v8989
    %9013 = vmatpush.msra.mxu0 %v8988
    %9014 = vmatpush.msra.mxu0 %v8987
    %9015 = vmatpush.msra.mxu0 %v8986
    %9016 = vmatpush.msra.mxu0 %v8985
    %9017 = vmatmul.f32.gmra.mxu0 %v8903
    %v9018 = vpop.f32.mrf.mxu0
    %v9019 = vadd.f32 0.0, %v9018
    %9020 = vmatmul.f32.gmra.mxu0 %v8904
    %v9021 = vpop.f32.mrf.mxu0
    %v9022 = vadd.f32 0.0, %v9021
    %9023 = vmatmul.f32.gmra.mxu0 %v8905
    %v9024 = vpop.f32.mrf.mxu0
    %v9025 = vadd.f32 0.0, %v9024
    %9026 = vmatmul.f32.gmra.mxu0 %v8906
    %v9027 = vpop.f32.mrf.mxu0
    %v9028 = vadd.f32 0.0, %v9027
    %9029 = vmatmul.f32.gmra.mxu0 %v8907
    %v9030 = vpop.f32.mrf.mxu0
    %v9031 = vadd.f32 0.0, %v9030
    %9032 = vmatmul.f32.gmra.mxu0 %v8908
    %v9033 = vpop.f32.mrf.mxu0
    %v9034 = vadd.f32 0.0, %v9033
    %9035 = vmatmul.f32.gmra.mxu0 %v8909
    %v9036 = vpop.f32.mrf.mxu0
    %v9037 = vadd.f32 0.0, %v9036
    %9038 = vmatmul.f32.gmra.mxu0 %v8910
    %v9039 = vpop.f32.mrf.mxu0
    %v9040 = vadd.f32 0.0, %v9039
    %9041 = vmatmul.f32.gmra.mxu0 %v8911
    %v9042 = vpop.f32.mrf.mxu0
    %v9043 = vadd.f32 0.0, %v9042
    %9044 = vmatmul.f32.gmra.mxu0 %v8912
    %v9045 = vpop.f32.mrf.mxu0
    %v9046 = vadd.f32 0.0, %v9045
    %9047 = vmatmul.f32.gmra.mxu0 %v8913
    %v9048 = vpop.f32.mrf.mxu0
    %v9049 = vadd.f32 0.0, %v9048
    %9050 = vmatmul.f32.gmra.mxu0 %v8914
    %v9051 = vpop.f32.mrf.mxu0
    %v9052 = vadd.f32 0.0, %v9051
    %9053 = vmatmul.f32.gmra.mxu0 %v8915
    %v9054 = vpop.f32.mrf.mxu0
    %v9055 = vadd.f32 0.0, %v9054
    %9056 = vmatmul.f32.gmra.mxu0 %v8916
    %v9057 = vpop.f32.mrf.mxu0
    %v9058 = vadd.f32 0.0, %v9057
    %9059 = vmatmul.f32.gmra.mxu0 %v8917
    %v9060 = vpop.f32.mrf.mxu0
    %v9061 = vadd.f32 0.0, %v9060
    %9062 = vmatmul.f32.gmra.mxu0 %v8918
    %v9063 = vpop.f32.mrf.mxu0
    %v9064 = vadd.f32 0.0, %v9063
    %9065 = vmatmul.f32.gmra.mxu0 %v8919
    %v9066 = vpop.f32.mrf.mxu0
    %v9067 = vadd.f32 0.0, %v9066
    %9068 = vmatmul.f32.gmra.mxu0 %v8920
    %v9069 = vpop.f32.mrf.mxu0
    %v9070 = vadd.f32 0.0, %v9069
    %9071 = vmatmul.f32.gmra.mxu0 %v8921
    %v9072 = vpop.f32.mrf.mxu0
    %v9073 = vadd.f32 0.0, %v9072
    %9074 = vmatmul.f32.gmra.mxu0 %v8922
    %v9075 = vpop.f32.mrf.mxu0
    %v9076 = vadd.f32 0.0, %v9075
    %9077 = vmatmul.f32.gmra.mxu0 %v8923
    %v9078 = vpop.f32.mrf.mxu0
    %v9079 = vadd.f32 0.0, %v9078
    %9080 = vmatmul.f32.gmra.mxu0 %v8924
    %v9081 = vpop.f32.mrf.mxu0
    %v9082 = vadd.f32 0.0, %v9081
    %9083 = vmatmul.f32.gmra.mxu0 %v8925
    %v9084 = vpop.f32.mrf.mxu0
    %v9085 = vadd.f32 0.0, %v9084
    %9086 = vmatmul.f32.gmra.mxu0 %v8926
    %v9087 = vpop.f32.mrf.mxu0
    %v9088 = vadd.f32 0.0, %v9087
    %9089 = vmatmul.f32.gmra.mxu0 %v8927
    %v9090 = vpop.f32.mrf.mxu0
    %v9091 = vadd.f32 0.0, %v9090
    %9092 = vmatmul.f32.gmra.mxu0 %v8928
    %v9093 = vpop.f32.mrf.mxu0
    %v9094 = vadd.f32 0.0, %v9093
    %9095 = vmatmul.f32.gmra.mxu0 %v8929
    %v9096 = vpop.f32.mrf.mxu0
    %v9097 = vadd.f32 0.0, %v9096
    %9098 = vmatmul.f32.gmra.mxu0 %v8930
    %v9099 = vpop.f32.mrf.mxu0
    %v9100 = vadd.f32 0.0, %v9099
    %9101 = vmatmul.f32.gmra.mxu0 %v8931
    %v9102 = vpop.f32.mrf.mxu0
    %v9103 = vadd.f32 0.0, %v9102
    %9104 = vmatmul.f32.gmra.mxu0 %v8932
    %v9105 = vpop.f32.mrf.mxu0
    %v9106 = vadd.f32 0.0, %v9105
    %9107 = vmatmul.f32.gmra.mxu0 %v8933
    %v9108 = vpop.f32.mrf.mxu0
    %v9109 = vadd.f32 0.0, %v9108
    %9110 = vmatmul.f32.gmra.mxu0 %v8934
    %v9111 = vpop.f32.mrf.mxu0
    %v9112 = vadd.f32 0.0, %v9111
    %9113 = vmatmul.f32.gmra.mxu0 %v8935
    %v9114 = vpop.f32.mrf.mxu0
    %v9115 = vadd.f32 0.0, %v9114
    %9116 = vmatmul.f32.gmra.mxu0 %v8936
    %v9117 = vpop.f32.mrf.mxu0
    %v9118 = vadd.f32 0.0, %v9117
    %9119 = vmatmul.f32.gmra.mxu0 %v8937
    %v9120 = vpop.f32.mrf.mxu0
    %v9121 = vadd.f32 0.0, %v9120
    %9122 = vmatmul.f32.gmra.mxu0 %v8938
    %v9123 = vpop.f32.mrf.mxu0
    %v9124 = vadd.f32 0.0, %v9123
    %9125 = vmatmul.f32.gmra.mxu0 %v8939
    %v9126 = vpop.f32.mrf.mxu0
    %v9127 = vadd.f32 0.0, %v9126
    %9128 = vmatmul.f32.gmra.mxu0 %v8940
    %v9129 = vpop.f32.mrf.mxu0
    %v9130 = vadd.f32 0.0, %v9129
    %9131 = vmatmul.f32.gmra.mxu0 %v8941
    %v9132 = vpop.f32.mrf.mxu0
    %v9133 = vadd.f32 0.0, %v9132
    %9134 = vmatmul.f32.gmra.mxu0 %v8942
    %v9135 = vpop.f32.mrf.mxu0
    %v9136 = vadd.f32 0.0, %v9135
    %9137 = vmatmul.f32.gmra.mxu0 %v8943
    %v9138 = vpop.f32.mrf.mxu0
    %v9139 = vadd.f32 0.0, %v9138
    %9140 = vmatmul.f32.gmra.mxu0 %v8944
    %v9141 = vpop.f32.mrf.mxu0
    %v9142 = vadd.f32 0.0, %v9141
    %9143 = vmatmul.f32.gmra.mxu0 %v8945
    %v9144 = vpop.f32.mrf.mxu0
    %v9145 = vadd.f32 0.0, %v9144
    %9146 = vmatmul.f32.gmra.mxu0 %v8946
    %v9147 = vpop.f32.mrf.mxu0
    %v9148 = vadd.f32 0.0, %v9147
    %9149 = vmatmul.f32.gmra.mxu0 %v8947
    %v9150 = vpop.f32.mrf.mxu0
    %v9151 = vadd.f32 0.0, %v9150
    %9152 = vmatmul.f32.gmra.mxu0 %v8948
    %v9153 = vpop.f32.mrf.mxu0
    %v9154 = vadd.f32 0.0, %v9153
    %9155 = vmatmul.f32.gmra.mxu0 %v8949
    %v9156 = vpop.f32.mrf.mxu0
    %v9157 = vadd.f32 0.0, %v9156
    %9158 = vmatmul.f32.gmra.mxu0 %v8950
    %v9159 = vpop.f32.mrf.mxu0
    %v9160 = vadd.f32 0.0, %v9159
    %9161 = vmatmul.f32.gmra.mxu0 %v8951
    %v9162 = vpop.f32.mrf.mxu0
    %v9163 = vadd.f32 0.0, %v9162
    %9164 = vmatmul.f32.gmra.mxu0 %v8952
    %v9165 = vpop.f32.mrf.mxu0
    %v9166 = vadd.f32 0.0, %v9165
    %9167 = vmatmul.f32.gmra.mxu0 %v8953
    %v9168 = vpop.f32.mrf.mxu0
    %v9169 = vadd.f32 0.0, %v9168
    %9170 = vmatmul.f32.gmra.mxu0 %v8954
    %v9171 = vpop.f32.mrf.mxu0
    %v9172 = vadd.f32 0.0, %v9171
    %9173 = vmatmul.f32.gmra.mxu0 %v8955
    %v9174 = vpop.f32.mrf.mxu0
    %v9175 = vadd.f32 0.0, %v9174
    %9176 = vmatmul.f32.gmra.mxu0 %v8956
    %v9177 = vpop.f32.mrf.mxu0
    %v9178 = vadd.f32 0.0, %v9177
    %9179 = vmatmul.f32.gmra.mxu0 %v8957
    %v9180 = vpop.f32.mrf.mxu0
    %v9181 = vadd.f32 0.0, %v9180
    %9182 = vmatmul.f32.gmra.mxu0 %v8958
    %v9183 = vpop.f32.mrf.mxu0
    %v9184 = vadd.f32 0.0, %v9183
    %9185 = vmatmul.f32.gmra.mxu0 %v8959
    %v9186 = vpop.f32.mrf.mxu0
    %v9187 = vadd.f32 0.0, %v9186
    %9188 = vmatmul.f32.gmra.mxu0 %v8960
    %v9189 = vpop.f32.mrf.mxu0
    %v9190 = vadd.f32 0.0, %v9189
    %9191 = vmatmul.f32.gmra.mxu0 %v8961
    %v9192 = vpop.f32.mrf.mxu0
    %v9193 = vadd.f32 0.0, %v9192
    %9194 = vmatmul.f32.gmra.mxu0 %v8962
    %v9195 = vpop.f32.mrf.mxu0
    %v9196 = vadd.f32 0.0, %v9195
    %9197 = vmatmul.f32.gmra.mxu0 %v8963
    %v9198 = vpop.f32.mrf.mxu0
    %v9199 = vadd.f32 0.0, %v9198
    %9200 = vmatmul.f32.gmra.mxu0 %v8964
    %v9201 = vpop.f32.mrf.mxu0
    %v9202 = vadd.f32 0.0, %v9201
    %9203 = vmatmul.f32.gmra.mxu0 %v8965
    %v9204 = vpop.f32.mrf.mxu0
    %v9205 = vadd.f32 0.0, %v9204
    %9206 = vmatmul.f32.gmra.mxu0 %v8966
    %v9207 = vpop.f32.mrf.mxu0
    %v9208 = vadd.f32 0.0, %v9207
    %9209 = vmatmul.f32.gmra.mxu0 %v8967
    %v9210 = vpop.f32.mrf.mxu0
    %v9211 = vadd.f32 0.0, %v9210
    %9212 = vmatmul.f32.gmra.mxu0 %v8968
    %v9213 = vpop.f32.mrf.mxu0
    %v9214 = vadd.f32 0.0, %v9213
    %9215 = vmatmul.f32.gmra.mxu0 %v8969
    %v9216 = vpop.f32.mrf.mxu0
    %v9217 = vadd.f32 0.0, %v9216
    %9218 = vmatmul.f32.gmra.mxu0 %v8970
    %v9219 = vpop.f32.mrf.mxu0
    %v9220 = vadd.f32 0.0, %v9219
    %9221 = vmatmul.f32.gmra.mxu0 %v8971
    %v9222 = vpop.f32.mrf.mxu0
    %v9223 = vadd.f32 0.0, %v9222
    %9224 = vmatmul.f32.gmra.mxu0 %v8972
    %v9225 = vpop.f32.mrf.mxu0
    %v9226 = vadd.f32 0.0, %v9225
    %9227 = vmatmul.f32.gmra.mxu0 %v8973
    %v9228 = vpop.f32.mrf.mxu0
    %v9229 = vadd.f32 0.0, %v9228
    %9230 = vmatmul.f32.gmra.mxu0 %v8974
    %v9231 = vpop.f32.mrf.mxu0
    %v9232 = vadd.f32 0.0, %v9231
    %9233 = vmatmul.f32.gmra.mxu0 %v8975
    %v9234 = vpop.f32.mrf.mxu0
    %v9235 = vadd.f32 0.0, %v9234
    %9236 = vmatmul.f32.gmra.mxu0 %v8976
    %v9237 = vpop.f32.mrf.mxu0
    %v9238 = vadd.f32 0.0, %v9237
    %9239 = vmatmul.f32.gmra.mxu0 %v8977
    %v9240 = vpop.f32.mrf.mxu0
    %v9241 = vadd.f32 0.0, %v9240
    %9242 = vmatmul.f32.gmra.mxu0 %v8978
    %v9243 = vpop.f32.mrf.mxu0
    %v9244 = vadd.f32 0.0, %v9243
    %9245 = vmatmul.f32.gmra.mxu0 %v8979
    %v9246 = vpop.f32.mrf.mxu0
    %v9247 = vadd.f32 0.0, %v9246
    %9248 = vmatmul.f32.gmra.mxu0 %v8980
    %v9249 = vpop.f32.mrf.mxu0
    %v9250 = vadd.f32 0.0, %v9249
    %9251 = vmatmul.f32.gmra.mxu0 %v8981
    %v9252 = vpop.f32.mrf.mxu0
    %v9253 = vadd.f32 0.0, %v9252
    %9254 = vmatmul.f32.gmra.mxu0 %v8982
    %v9255 = vpop.f32.mrf.mxu0
    %v9256 = vadd.f32 0.0, %v9255
    %9257 = vmatmul.f32.gmra.mxu0 %v8983
    %v9258 = vpop.f32.mrf.mxu0
    %v9259 = vadd.f32 0.0, %v9258
    %9260 = vdwg.mxu0
    %v9261 = vadd.f32 %v8822, %v9019
    %v9262 = vadd.f32 %v8823, %v9022
    %v9263 = vadd.f32 %v8824, %v9025
    %v9264 = vadd.f32 %v8825, %v9028
    %v9265 = vadd.f32 %v8826, %v9031
    %v9266 = vadd.f32 %v8827, %v9034
    %v9267 = vadd.f32 %v8828, %v9037
    %v9268 = vadd.f32 %v8829, %v9040
    %v9269 = vadd.f32 %v8830, %v9043
    %v9270 = vadd.f32 %v8831, %v9046
    %v9271 = vadd.f32 %v8832, %v9049
    %v9272 = vadd.f32 %v8833, %v9052
    %v9273 = vadd.f32 %v8834, %v9055
    %v9274 = vadd.f32 %v8835, %v9058
    %v9275 = vadd.f32 %v8836, %v9061
    %v9276 = vadd.f32 %v8837, %v9064
    %v9277 = vadd.f32 %v8838, %v9067
    %v9278 = vadd.f32 %v8839, %v9070
    %v9279 = vadd.f32 %v8840, %v9073
    %v9280 = vadd.f32 %v8841, %v9076
    %v9281 = vadd.f32 %v8842, %v9079
    %v9282 = vadd.f32 %v8843, %v9082
    %v9283 = vadd.f32 %v8844, %v9085
    %v9284 = vadd.f32 %v8845, %v9088
    %v9285 = vadd.f32 %v8846, %v9091
    %v9286 = vadd.f32 %v8847, %v9094
    %v9287 = vadd.f32 %v8848, %v9097
    %v9288 = vadd.f32 %v8849, %v9100
    %v9289 = vadd.f32 %v8850, %v9103
    %v9290 = vadd.f32 %v8851, %v9106
    %v9291 = vadd.f32 %v8852, %v9109
    %v9292 = vadd.f32 %v8853, %v9112
    %v9293 = vadd.f32 %v8854, %v9115
    %v9294 = vadd.f32 %v8855, %v9118
    %v9295 = vadd.f32 %v8856, %v9121
    %v9296 = vadd.f32 %v8857, %v9124
    %v9297 = vadd.f32 %v8858, %v9127
    %v9298 = vadd.f32 %v8859, %v9130
    %v9299 = vadd.f32 %v8860, %v9133
    %v9300 = vadd.f32 %v8861, %v9136
    %v9301 = vadd.f32 %v8862, %v9139
    %v9302 = vadd.f32 %v8863, %v9142
    %v9303 = vadd.f32 %v8864, %v9145
    %v9304 = vadd.f32 %v8865, %v9148
    %v9305 = vadd.f32 %v8866, %v9151
    %v9306 = vadd.f32 %v8867, %v9154
    %v9307 = vadd.f32 %v8868, %v9157
    %v9308 = vadd.f32 %v8869, %v9160
    %v9309 = vadd.f32 %v8870, %v9163
    %v9310 = vadd.f32 %v8871, %v9166
    %v9311 = vadd.f32 %v8872, %v9169
    %v9312 = vadd.f32 %v8873, %v9172
    %v9313 = vadd.f32 %v8874, %v9175
    %v9314 = vadd.f32 %v8875, %v9178
    %v9315 = vadd.f32 %v8876, %v9181
    %v9316 = vadd.f32 %v8877, %v9184
    %v9317 = vadd.f32 %v8878, %v9187
    %v9318 = vadd.f32 %v8879, %v9190
    %v9319 = vadd.f32 %v8880, %v9193
    %v9320 = vadd.f32 %v8881, %v9196
    %v9321 = vadd.f32 %v8882, %v9199
    %v9322 = vadd.f32 %v8883, %v9202
    %v9323 = vadd.f32 %v8884, %v9205
    %v9324 = vadd.f32 %v8885, %v9208
    %v9325 = vadd.f32 %v8886, %v9211
    %v9326 = vadd.f32 %v8887, %v9214
    %v9327 = vadd.f32 %v8888, %v9217
    %v9328 = vadd.f32 %v8889, %v9220
    %v9329 = vadd.f32 %v8890, %v9223
    %v9330 = vadd.f32 %v8891, %v9226
    %v9331 = vadd.f32 %v8892, %v9229
    %v9332 = vadd.f32 %v8893, %v9232
    %v9333 = vadd.f32 %v8894, %v9235
    %v9334 = vadd.f32 %v8895, %v9238
    %v9335 = vadd.f32 %v8896, %v9241
    %v9336 = vadd.f32 %v8897, %v9244
    %v9337 = vadd.f32 %v8898, %v9247
    %v9338 = vadd.f32 %v8899, %v9250
    %v9339 = vadd.f32 %v8900, %v9253
    %v9340 = vadd.f32 %v8901, %v9256
    %v9341 = vadd.f32 %v8902, %v9259
    %v9342 = vld [vmem:[#allocation2 + $0x19] sm:$0xff]
    %v9343 = vld [vmem:[#allocation2 + $0x21] sm:$0xff]
    %v9344 = vld [vmem:[#allocation2 + $0x29] sm:$0xff]
    %v9345 = vld [vmem:[#allocation2 + $0x31] sm:$0xff]
    %v9346 = vld [vmem:[#allocation2 + $0x39] sm:$0xff]
    %v9347 = vld [vmem:[#allocation2 + $0x41] sm:$0xff]
    %v9348 = vld [vmem:[#allocation2 + $0x49] sm:$0xff]
    %v9349 = vld [vmem:[#allocation2 + $0x51] sm:$0xff]
    %v9350 = vld [vmem:[#allocation2 + $0x59] sm:$0xff]
    %v9351 = vld [vmem:[#allocation2 + $0x61] sm:$0xff]
    %v9352 = vld [vmem:[#allocation2 + $0x69] sm:$0xff]
    %v9353 = vld [vmem:[#allocation2 + $0x71] sm:$0xff]
    %v9354 = vld [vmem:[#allocation2 + $0x79] sm:$0xff]
    %v9355 = vld [vmem:[#allocation2 + $0x81] sm:$0xff]
    %v9356 = vld [vmem:[#allocation2 + $0x89] sm:$0xff]
    %v9357 = vld [vmem:[#allocation2 + $0x91] sm:$0xff]
    %v9358 = vld [vmem:[#allocation2 + $0x99] sm:$0xff]
    %v9359 = vld [vmem:[#allocation2 + $0xa1] sm:$0xff]
    %v9360 = vld [vmem:[#allocation2 + $0xa9] sm:$0xff]
    %v9361 = vld [vmem:[#allocation2 + $0xb1] sm:$0xff]
    %v9362 = vld [vmem:[#allocation2 + $0xb9] sm:$0xff]
    %v9363 = vld [vmem:[#allocation2 + $0xc1] sm:$0xff]
    %v9364 = vld [vmem:[#allocation2 + $0xc9] sm:$0xff]
    %v9365 = vld [vmem:[#allocation2 + $0xd1] sm:$0xff]
    %v9366 = vld [vmem:[#allocation2 + $0xd9] sm:$0xff]
    %v9367 = vld [vmem:[#allocation2 + $0xe1] sm:$0xff]
    %v9368 = vld [vmem:[#allocation2 + $0xe9] sm:$0xff]
    %v9369 = vld [vmem:[#allocation2 + $0xf1] sm:$0xff]
    %v9370 = vld [vmem:[#allocation2 + $0xf9] sm:$0xff]
    %v9371 = vld [vmem:[#allocation2 + $0x101] sm:$0xff]
    %v9372 = vld [vmem:[#allocation2 + $0x109] sm:$0xff]
    %v9373 = vld [vmem:[#allocation2 + $0x111] sm:$0xff]
    %v9374 = vld [vmem:[#allocation2 + $0x119] sm:$0xff]
    %v9375 = vld [vmem:[#allocation2 + $0x121] sm:$0xff]
    %v9376 = vld [vmem:[#allocation2 + $0x129] sm:$0xff]
    %v9377 = vld [vmem:[#allocation2 + $0x131] sm:$0xff]
    %v9378 = vld [vmem:[#allocation2 + $0x139] sm:$0xff]
    %v9379 = vld [vmem:[#allocation2 + $0x141] sm:$0xff]
    %v9380 = vld [vmem:[#allocation2 + $0x149] sm:$0xff]
    %v9381 = vld [vmem:[#allocation2 + $0x151] sm:$0xff]
    %v9382 = vld [vmem:[#allocation2 + $0x159] sm:$0xff]
    %v9383 = vld [vmem:[#allocation2 + $0x161] sm:$0xff]
    %v9384 = vld [vmem:[#allocation2 + $0x169] sm:$0xff]
    %v9385 = vld [vmem:[#allocation2 + $0x171] sm:$0xff]
    %v9386 = vld [vmem:[#allocation2 + $0x179] sm:$0xff]
    %v9387 = vld [vmem:[#allocation2 + $0x181] sm:$0xff]
    %v9388 = vld [vmem:[#allocation2 + $0x189] sm:$0xff]
    %v9389 = vld [vmem:[#allocation2 + $0x191] sm:$0xff]
    %v9390 = vld [vmem:[#allocation2 + $0x199] sm:$0xff]
    %v9391 = vld [vmem:[#allocation2 + $0x1a1] sm:$0xff]
    %v9392 = vld [vmem:[#allocation2 + $0x1a9] sm:$0xff]
    %v9393 = vld [vmem:[#allocation2 + $0x1b1] sm:$0xff]
    %v9394 = vld [vmem:[#allocation2 + $0x1b9] sm:$0xff]
    %v9395 = vld [vmem:[#allocation2 + $0x1c1] sm:$0xff]
    %v9396 = vld [vmem:[#allocation2 + $0x1c9] sm:$0xff]
    %v9397 = vld [vmem:[#allocation2 + $0x1d1] sm:$0xff]
    %v9398 = vld [vmem:[#allocation2 + $0x1d9] sm:$0xff]
    %v9399 = vld [vmem:[#allocation2 + $0x1e1] sm:$0xff]
    %v9400 = vld [vmem:[#allocation2 + $0x1e9] sm:$0xff]
    %v9401 = vld [vmem:[#allocation2 + $0x1f1] sm:$0xff]
    %v9402 = vld [vmem:[#allocation2 + $0x1f9] sm:$0xff]
    %v9403 = vld [vmem:[#allocation2 + $0x201] sm:$0xff]
    %v9404 = vld [vmem:[#allocation2 + $0x209] sm:$0xff]
    %v9405 = vld [vmem:[#allocation2 + $0x211] sm:$0xff]
    %v9406 = vld [vmem:[#allocation2 + $0x219] sm:$0xff]
    %v9407 = vld [vmem:[#allocation2 + $0x221] sm:$0xff]
    %v9408 = vld [vmem:[#allocation2 + $0x229] sm:$0xff]
    %v9409 = vld [vmem:[#allocation2 + $0x231] sm:$0xff]
    %v9410 = vld [vmem:[#allocation2 + $0x239] sm:$0xff]
    %v9411 = vld [vmem:[#allocation2 + $0x241] sm:$0xff]
    %v9412 = vld [vmem:[#allocation2 + $0x249] sm:$0xff]
    %v9413 = vld [vmem:[#allocation2 + $0x251] sm:$0xff]
    %v9414 = vld [vmem:[#allocation2 + $0x259] sm:$0xff]
    %v9415 = vld [vmem:[#allocation2 + $0x261] sm:$0xff]
    %v9416 = vld [vmem:[#allocation2 + $0x269] sm:$0xff]
    %v9417 = vld [vmem:[#allocation2 + $0x271] sm:$0xff]
    %v9418 = vld [vmem:[#allocation2 + $0x279] sm:$0xff]
    %v9419 = vld [vmem:[#allocation2 + $0x281] sm:$0xff]
    %v9420 = vld [vmem:[#allocation2 + $0x289] sm:$0xff]
    %v9421 = vld [vmem:[#allocation2 + $0x291] sm:$0xff]
    %v9422 = vld [vmem:[#allocation2 + $0x299] sm:$0xff]
    %s9423 = scalar_lea.vmem %s3, 640
    %v9424 = vld [vmem:[%s9423] sm:$0xff]
    %v9425 = vld [vmem:[%s9423 + $0x8] sm:$0xff]
    %v9426 = vld [vmem:[%s9423 + $0x10] sm:$0xff]
    %v9427 = vld [vmem:[%s9423 + $0x18] sm:$0xff]
    %v9428 = vld [vmem:[%s9423 + $0x20] sm:$0xff]
    %v9429 = vld [vmem:[%s9423 + $0x28] sm:$0xff]
    %v9430 = vld [vmem:[%s9423 + $0x30] sm:$0xff]
    %v9431 = vld [vmem:[%s9423 + $0x38] sm:$0xff]
    %v9432 = vld [vmem:[%s9423 + $0x40] sm:$0xff]
    %v9433 = vld [vmem:[%s9423 + $0x48] sm:$0xff]
    %v9434 = vld [vmem:[%s9423 + $0x50] sm:$0xff]
    %v9435 = vld [vmem:[%s9423 + $0x58] sm:$0xff]
    %v9436 = vld [vmem:[%s9423 + $0x60] sm:$0xff]
    %v9437 = vld [vmem:[%s9423 + $0x68] sm:$0xff]
    %v9438 = vld [vmem:[%s9423 + $0x70] sm:$0xff]
    %v9439 = vld [vmem:[%s9423 + $0x78] sm:$0xff]
    %9440 = vmatpush.msra.mxu0 %v9439
    %9441 = vmatpush.msra.mxu0 %v9438
    %9442 = vmatpush.msra.mxu0 %v9437
    %9443 = vmatpush.msra.mxu0 %v9436
    %9444 = vmatpush.msra.mxu0 %v9435
    %9445 = vmatpush.msra.mxu0 %v9434
    %9446 = vmatpush.msra.mxu0 %v9433
    %9447 = vmatpush.msra.mxu0 %v9432
    %9448 = vmatpush.msra.mxu0 %v9431
    %9449 = vmatpush.msra.mxu0 %v9430
    %9450 = vmatpush.msra.mxu0 %v9429
    %9451 = vmatpush.msra.mxu0 %v9428
    %9452 = vmatpush.msra.mxu0 %v9427
    %9453 = vmatpush.msra.mxu0 %v9426
    %9454 = vmatpush.msra.mxu0 %v9425
    %9455 = vmatpush.msra.mxu0 %v9424
    %9456 = vmatmul.f32.gmra.mxu0 %v9342
    %v9457 = vpop.f32.mrf.mxu0
    %v9458 = vadd.f32 0.0, %v9457
    %9459 = vmatmul.f32.gmra.mxu0 %v9343
    %v9460 = vpop.f32.mrf.mxu0
    %v9461 = vadd.f32 0.0, %v9460
    %9462 = vmatmul.f32.gmra.mxu0 %v9344
    %v9463 = vpop.f32.mrf.mxu0
    %v9464 = vadd.f32 0.0, %v9463
    %9465 = vmatmul.f32.gmra.mxu0 %v9345
    %v9466 = vpop.f32.mrf.mxu0
    %v9467 = vadd.f32 0.0, %v9466
    %9468 = vmatmul.f32.gmra.mxu0 %v9346
    %v9469 = vpop.f32.mrf.mxu0
    %v9470 = vadd.f32 0.0, %v9469
    %9471 = vmatmul.f32.gmra.mxu0 %v9347
    %v9472 = vpop.f32.mrf.mxu0
    %v9473 = vadd.f32 0.0, %v9472
    %9474 = vmatmul.f32.gmra.mxu0 %v9348
    %v9475 = vpop.f32.mrf.mxu0
    %v9476 = vadd.f32 0.0, %v9475
    %9477 = vmatmul.f32.gmra.mxu0 %v9349
    %v9478 = vpop.f32.mrf.mxu0
    %v9479 = vadd.f32 0.0, %v9478
    %9480 = vmatmul.f32.gmra.mxu0 %v9350
    %v9481 = vpop.f32.mrf.mxu0
    %v9482 = vadd.f32 0.0, %v9481
    %9483 = vmatmul.f32.gmra.mxu0 %v9351
    %v9484 = vpop.f32.mrf.mxu0
    %v9485 = vadd.f32 0.0, %v9484
    %9486 = vmatmul.f32.gmra.mxu0 %v9352
    %v9487 = vpop.f32.mrf.mxu0
    %v9488 = vadd.f32 0.0, %v9487
    %9489 = vmatmul.f32.gmra.mxu0 %v9353
    %v9490 = vpop.f32.mrf.mxu0
    %v9491 = vadd.f32 0.0, %v9490
    %9492 = vmatmul.f32.gmra.mxu0 %v9354
    %v9493 = vpop.f32.mrf.mxu0
    %v9494 = vadd.f32 0.0, %v9493
    %9495 = vmatmul.f32.gmra.mxu0 %v9355
    %v9496 = vpop.f32.mrf.mxu0
    %v9497 = vadd.f32 0.0, %v9496
    %9498 = vmatmul.f32.gmra.mxu0 %v9356
    %v9499 = vpop.f32.mrf.mxu0
    %v9500 = vadd.f32 0.0, %v9499
    %9501 = vmatmul.f32.gmra.mxu0 %v9357
    %v9502 = vpop.f32.mrf.mxu0
    %v9503 = vadd.f32 0.0, %v9502
    %9504 = vmatmul.f32.gmra.mxu0 %v9358
    %v9505 = vpop.f32.mrf.mxu0
    %v9506 = vadd.f32 0.0, %v9505
    %9507 = vmatmul.f32.gmra.mxu0 %v9359
    %v9508 = vpop.f32.mrf.mxu0
    %v9509 = vadd.f32 0.0, %v9508
    %9510 = vmatmul.f32.gmra.mxu0 %v9360
    %v9511 = vpop.f32.mrf.mxu0
    %v9512 = vadd.f32 0.0, %v9511
    %9513 = vmatmul.f32.gmra.mxu0 %v9361
    %v9514 = vpop.f32.mrf.mxu0
    %v9515 = vadd.f32 0.0, %v9514
    %9516 = vmatmul.f32.gmra.mxu0 %v9362
    %v9517 = vpop.f32.mrf.mxu0
    %v9518 = vadd.f32 0.0, %v9517
    %9519 = vmatmul.f32.gmra.mxu0 %v9363
    %v9520 = vpop.f32.mrf.mxu0
    %v9521 = vadd.f32 0.0, %v9520
    %9522 = vmatmul.f32.gmra.mxu0 %v9364
    %v9523 = vpop.f32.mrf.mxu0
    %v9524 = vadd.f32 0.0, %v9523
    %9525 = vmatmul.f32.gmra.mxu0 %v9365
    %v9526 = vpop.f32.mrf.mxu0
    %v9527 = vadd.f32 0.0, %v9526
    %9528 = vmatmul.f32.gmra.mxu0 %v9366
    %v9529 = vpop.f32.mrf.mxu0
    %v9530 = vadd.f32 0.0, %v9529
    %9531 = vmatmul.f32.gmra.mxu0 %v9367
    %v9532 = vpop.f32.mrf.mxu0
    %v9533 = vadd.f32 0.0, %v9532
    %9534 = vmatmul.f32.gmra.mxu0 %v9368
    %v9535 = vpop.f32.mrf.mxu0
    %v9536 = vadd.f32 0.0, %v9535
    %9537 = vmatmul.f32.gmra.mxu0 %v9369
    %v9538 = vpop.f32.mrf.mxu0
    %v9539 = vadd.f32 0.0, %v9538
    %9540 = vmatmul.f32.gmra.mxu0 %v9370
    %v9541 = vpop.f32.mrf.mxu0
    %v9542 = vadd.f32 0.0, %v9541
    %9543 = vmatmul.f32.gmra.mxu0 %v9371
    %v9544 = vpop.f32.mrf.mxu0
    %v9545 = vadd.f32 0.0, %v9544
    %9546 = vmatmul.f32.gmra.mxu0 %v9372
    %v9547 = vpop.f32.mrf.mxu0
    %v9548 = vadd.f32 0.0, %v9547
    %9549 = vmatmul.f32.gmra.mxu0 %v9373
    %v9550 = vpop.f32.mrf.mxu0
    %v9551 = vadd.f32 0.0, %v9550
    %9552 = vmatmul.f32.gmra.mxu0 %v9374
    %v9553 = vpop.f32.mrf.mxu0
    %v9554 = vadd.f32 0.0, %v9553
    %9555 = vmatmul.f32.gmra.mxu0 %v9375
    %v9556 = vpop.f32.mrf.mxu0
    %v9557 = vadd.f32 0.0, %v9556
    %9558 = vmatmul.f32.gmra.mxu0 %v9376
    %v9559 = vpop.f32.mrf.mxu0
    %v9560 = vadd.f32 0.0, %v9559
    %9561 = vmatmul.f32.gmra.mxu0 %v9377
    %v9562 = vpop.f32.mrf.mxu0
    %v9563 = vadd.f32 0.0, %v9562
    %9564 = vmatmul.f32.gmra.mxu0 %v9378
    %v9565 = vpop.f32.mrf.mxu0
    %v9566 = vadd.f32 0.0, %v9565
    %9567 = vmatmul.f32.gmra.mxu0 %v9379
    %v9568 = vpop.f32.mrf.mxu0
    %v9569 = vadd.f32 0.0, %v9568
    %9570 = vmatmul.f32.gmra.mxu0 %v9380
    %v9571 = vpop.f32.mrf.mxu0
    %v9572 = vadd.f32 0.0, %v9571
    %9573 = vmatmul.f32.gmra.mxu0 %v9381
    %v9574 = vpop.f32.mrf.mxu0
    %v9575 = vadd.f32 0.0, %v9574
    %9576 = vmatmul.f32.gmra.mxu0 %v9382
    %v9577 = vpop.f32.mrf.mxu0
    %v9578 = vadd.f32 0.0, %v9577
    %9579 = vmatmul.f32.gmra.mxu0 %v9383
    %v9580 = vpop.f32.mrf.mxu0
    %v9581 = vadd.f32 0.0, %v9580
    %9582 = vmatmul.f32.gmra.mxu0 %v9384
    %v9583 = vpop.f32.mrf.mxu0
    %v9584 = vadd.f32 0.0, %v9583
    %9585 = vmatmul.f32.gmra.mxu0 %v9385
    %v9586 = vpop.f32.mrf.mxu0
    %v9587 = vadd.f32 0.0, %v9586
    %9588 = vmatmul.f32.gmra.mxu0 %v9386
    %v9589 = vpop.f32.mrf.mxu0
    %v9590 = vadd.f32 0.0, %v9589
    %9591 = vmatmul.f32.gmra.mxu0 %v9387
    %v9592 = vpop.f32.mrf.mxu0
    %v9593 = vadd.f32 0.0, %v9592
    %9594 = vmatmul.f32.gmra.mxu0 %v9388
    %v9595 = vpop.f32.mrf.mxu0
    %v9596 = vadd.f32 0.0, %v9595
    %9597 = vmatmul.f32.gmra.mxu0 %v9389
    %v9598 = vpop.f32.mrf.mxu0
    %v9599 = vadd.f32 0.0, %v9598
    %9600 = vmatmul.f32.gmra.mxu0 %v9390
    %v9601 = vpop.f32.mrf.mxu0
    %v9602 = vadd.f32 0.0, %v9601
    %9603 = vmatmul.f32.gmra.mxu0 %v9391
    %v9604 = vpop.f32.mrf.mxu0
    %v9605 = vadd.f32 0.0, %v9604
    %9606 = vmatmul.f32.gmra.mxu0 %v9392
    %v9607 = vpop.f32.mrf.mxu0
    %v9608 = vadd.f32 0.0, %v9607
    %9609 = vmatmul.f32.gmra.mxu0 %v9393
    %v9610 = vpop.f32.mrf.mxu0
    %v9611 = vadd.f32 0.0, %v9610
    %9612 = vmatmul.f32.gmra.mxu0 %v9394
    %v9613 = vpop.f32.mrf.mxu0
    %v9614 = vadd.f32 0.0, %v9613
    %9615 = vmatmul.f32.gmra.mxu0 %v9395
    %v9616 = vpop.f32.mrf.mxu0
    %v9617 = vadd.f32 0.0, %v9616
    %9618 = vmatmul.f32.gmra.mxu0 %v9396
    %v9619 = vpop.f32.mrf.mxu0
    %v9620 = vadd.f32 0.0, %v9619
    %9621 = vmatmul.f32.gmra.mxu0 %v9397
    %v9622 = vpop.f32.mrf.mxu0
    %v9623 = vadd.f32 0.0, %v9622
    %9624 = vmatmul.f32.gmra.mxu0 %v9398
    %v9625 = vpop.f32.mrf.mxu0
    %v9626 = vadd.f32 0.0, %v9625
    %9627 = vmatmul.f32.gmra.mxu0 %v9399
    %v9628 = vpop.f32.mrf.mxu0
    %v9629 = vadd.f32 0.0, %v9628
    %9630 = vmatmul.f32.gmra.mxu0 %v9400
    %v9631 = vpop.f32.mrf.mxu0
    %v9632 = vadd.f32 0.0, %v9631
    %9633 = vmatmul.f32.gmra.mxu0 %v9401
    %v9634 = vpop.f32.mrf.mxu0
    %v9635 = vadd.f32 0.0, %v9634
    %9636 = vmatmul.f32.gmra.mxu0 %v9402
    %v9637 = vpop.f32.mrf.mxu0
    %v9638 = vadd.f32 0.0, %v9637
    %9639 = vmatmul.f32.gmra.mxu0 %v9403
    %v9640 = vpop.f32.mrf.mxu0
    %v9641 = vadd.f32 0.0, %v9640
    %9642 = vmatmul.f32.gmra.mxu0 %v9404
    %v9643 = vpop.f32.mrf.mxu0
    %v9644 = vadd.f32 0.0, %v9643
    %9645 = vmatmul.f32.gmra.mxu0 %v9405
    %v9646 = vpop.f32.mrf.mxu0
    %v9647 = vadd.f32 0.0, %v9646
    %9648 = vmatmul.f32.gmra.mxu0 %v9406
    %v9649 = vpop.f32.mrf.mxu0
    %v9650 = vadd.f32 0.0, %v9649
    %9651 = vmatmul.f32.gmra.mxu0 %v9407
    %v9652 = vpop.f32.mrf.mxu0
    %v9653 = vadd.f32 0.0, %v9652
    %9654 = vmatmul.f32.gmra.mxu0 %v9408
    %v9655 = vpop.f32.mrf.mxu0
    %v9656 = vadd.f32 0.0, %v9655
    %9657 = vmatmul.f32.gmra.mxu0 %v9409
    %v9658 = vpop.f32.mrf.mxu0
    %v9659 = vadd.f32 0.0, %v9658
    %9660 = vmatmul.f32.gmra.mxu0 %v9410
    %v9661 = vpop.f32.mrf.mxu0
    %v9662 = vadd.f32 0.0, %v9661
    %9663 = vmatmul.f32.gmra.mxu0 %v9411
    %v9664 = vpop.f32.mrf.mxu0
    %v9665 = vadd.f32 0.0, %v9664
    %9666 = vmatmul.f32.gmra.mxu0 %v9412
    %v9667 = vpop.f32.mrf.mxu0
    %v9668 = vadd.f32 0.0, %v9667
    %9669 = vmatmul.f32.gmra.mxu0 %v9413
    %v9670 = vpop.f32.mrf.mxu0
    %v9671 = vadd.f32 0.0, %v9670
    %9672 = vmatmul.f32.gmra.mxu0 %v9414
    %v9673 = vpop.f32.mrf.mxu0
    %v9674 = vadd.f32 0.0, %v9673
    %9675 = vmatmul.f32.gmra.mxu0 %v9415
    %v9676 = vpop.f32.mrf.mxu0
    %v9677 = vadd.f32 0.0, %v9676
    %9678 = vmatmul.f32.gmra.mxu0 %v9416
    %v9679 = vpop.f32.mrf.mxu0
    %v9680 = vadd.f32 0.0, %v9679
    %9681 = vmatmul.f32.gmra.mxu0 %v9417
    %v9682 = vpop.f32.mrf.mxu0
    %v9683 = vadd.f32 0.0, %v9682
    %9684 = vmatmul.f32.gmra.mxu0 %v9418
    %v9685 = vpop.f32.mrf.mxu0
    %v9686 = vadd.f32 0.0, %v9685
    %9687 = vmatmul.f32.gmra.mxu0 %v9419
    %v9688 = vpop.f32.mrf.mxu0
    %v9689 = vadd.f32 0.0, %v9688
    %9690 = vmatmul.f32.gmra.mxu0 %v9420
    %v9691 = vpop.f32.mrf.mxu0
    %v9692 = vadd.f32 0.0, %v9691
    %9693 = vmatmul.f32.gmra.mxu0 %v9421
    %v9694 = vpop.f32.mrf.mxu0
    %v9695 = vadd.f32 0.0, %v9694
    %9696 = vmatmul.f32.gmra.mxu0 %v9422
    %v9697 = vpop.f32.mrf.mxu0
    %v9698 = vadd.f32 0.0, %v9697
    %9699 = vdwg.mxu0
    %v9700 = vadd.f32 %v9261, %v9458
    %v9701 = vadd.f32 %v9262, %v9461
    %v9702 = vadd.f32 %v9263, %v9464
    %v9703 = vadd.f32 %v9264, %v9467
    %v9704 = vadd.f32 %v9265, %v9470
    %v9705 = vadd.f32 %v9266, %v9473
    %v9706 = vadd.f32 %v9267, %v9476
    %v9707 = vadd.f32 %v9268, %v9479
    %v9708 = vadd.f32 %v9269, %v9482
    %v9709 = vadd.f32 %v9270, %v9485
    %v9710 = vadd.f32 %v9271, %v9488
    %v9711 = vadd.f32 %v9272, %v9491
    %v9712 = vadd.f32 %v9273, %v9494
    %v9713 = vadd.f32 %v9274, %v9497
    %v9714 = vadd.f32 %v9275, %v9500
    %v9715 = vadd.f32 %v9276, %v9503
    %v9716 = vadd.f32 %v9277, %v9506
    %v9717 = vadd.f32 %v9278, %v9509
    %v9718 = vadd.f32 %v9279, %v9512
    %v9719 = vadd.f32 %v9280, %v9515
    %v9720 = vadd.f32 %v9281, %v9518
    %v9721 = vadd.f32 %v9282, %v9521
    %v9722 = vadd.f32 %v9283, %v9524
    %v9723 = vadd.f32 %v9284, %v9527
    %v9724 = vadd.f32 %v9285, %v9530
    %v9725 = vadd.f32 %v9286, %v9533
    %v9726 = vadd.f32 %v9287, %v9536
    %v9727 = vadd.f32 %v9288, %v9539
    %v9728 = vadd.f32 %v9289, %v9542
    %v9729 = vadd.f32 %v9290, %v9545
    %v9730 = vadd.f32 %v9291, %v9548
    %v9731 = vadd.f32 %v9292, %v9551
    %v9732 = vadd.f32 %v9293, %v9554
    %v9733 = vadd.f32 %v9294, %v9557
    %v9734 = vadd.f32 %v9295, %v9560
    %v9735 = vadd.f32 %v9296, %v9563
    %v9736 = vadd.f32 %v9297, %v9566
    %v9737 = vadd.f32 %v9298, %v9569
    %v9738 = vadd.f32 %v9299, %v9572
    %v9739 = vadd.f32 %v9300, %v9575
    %v9740 = vadd.f32 %v9301, %v9578
    %v9741 = vadd.f32 %v9302, %v9581
    %v9742 = vadd.f32 %v9303, %v9584
    %v9743 = vadd.f32 %v9304, %v9587
    %v9744 = vadd.f32 %v9305, %v9590
    %v9745 = vadd.f32 %v9306, %v9593
    %v9746 = vadd.f32 %v9307, %v9596
    %v9747 = vadd.f32 %v9308, %v9599
    %v9748 = vadd.f32 %v9309, %v9602
    %v9749 = vadd.f32 %v9310, %v9605
    %v9750 = vadd.f32 %v9311, %v9608
    %v9751 = vadd.f32 %v9312, %v9611
    %v9752 = vadd.f32 %v9313, %v9614
    %v9753 = vadd.f32 %v9314, %v9617
    %v9754 = vadd.f32 %v9315, %v9620
    %v9755 = vadd.f32 %v9316, %v9623
    %v9756 = vadd.f32 %v9317, %v9626
    %v9757 = vadd.f32 %v9318, %v9629
    %v9758 = vadd.f32 %v9319, %v9632
    %v9759 = vadd.f32 %v9320, %v9635
    %v9760 = vadd.f32 %v9321, %v9638
    %v9761 = vadd.f32 %v9322, %v9641
    %v9762 = vadd.f32 %v9323, %v9644
    %v9763 = vadd.f32 %v9324, %v9647
    %v9764 = vadd.f32 %v9325, %v9650
    %v9765 = vadd.f32 %v9326, %v9653
    %v9766 = vadd.f32 %v9327, %v9656
    %v9767 = vadd.f32 %v9328, %v9659
    %v9768 = vadd.f32 %v9329, %v9662
    %v9769 = vadd.f32 %v9330, %v9665
    %v9770 = vadd.f32 %v9331, %v9668
    %v9771 = vadd.f32 %v9332, %v9671
    %v9772 = vadd.f32 %v9333, %v9674
    %v9773 = vadd.f32 %v9334, %v9677
    %v9774 = vadd.f32 %v9335, %v9680
    %v9775 = vadd.f32 %v9336, %v9683
    %v9776 = vadd.f32 %v9337, %v9686
    %v9777 = vadd.f32 %v9338, %v9689
    %v9778 = vadd.f32 %v9339, %v9692
    %v9779 = vadd.f32 %v9340, %v9695
    %v9780 = vadd.f32 %v9341, %v9698
    %v9781 = vld [vmem:[#allocation2 + $0x29] sm:$0xff]
    %v9782 = vld [vmem:[#allocation2 + $0x31] sm:$0xff]
    %v9783 = vld [vmem:[#allocation2 + $0x39] sm:$0xff]
    %v9784 = vld [vmem:[#allocation2 + $0x41] sm:$0xff]
    %v9785 = vld [vmem:[#allocation2 + $0x49] sm:$0xff]
    %v9786 = vld [vmem:[#allocation2 + $0x51] sm:$0xff]
    %v9787 = vld [vmem:[#allocation2 + $0x59] sm:$0xff]
    %v9788 = vld [vmem:[#allocation2 + $0x61] sm:$0xff]
    %v9789 = vld [vmem:[#allocation2 + $0x69] sm:$0xff]
    %v9790 = vld [vmem:[#allocation2 + $0x71] sm:$0xff]
    %v9791 = vld [vmem:[#allocation2 + $0x79] sm:$0xff]
    %v9792 = vld [vmem:[#allocation2 + $0x81] sm:$0xff]
    %v9793 = vld [vmem:[#allocation2 + $0x89] sm:$0xff]
    %v9794 = vld [vmem:[#allocation2 + $0x91] sm:$0xff]
    %v9795 = vld [vmem:[#allocation2 + $0x99] sm:$0xff]
    %v9796 = vld [vmem:[#allocation2 + $0xa1] sm:$0xff]
    %v9797 = vld [vmem:[#allocation2 + $0xa9] sm:$0xff]
    %v9798 = vld [vmem:[#allocation2 + $0xb1] sm:$0xff]
    %v9799 = vld [vmem:[#allocation2 + $0xb9] sm:$0xff]
    %v9800 = vld [vmem:[#allocation2 + $0xc1] sm:$0xff]
    %v9801 = vld [vmem:[#allocation2 + $0xc9] sm:$0xff]
    %v9802 = vld [vmem:[#allocation2 + $0xd1] sm:$0xff]
    %v9803 = vld [vmem:[#allocation2 + $0xd9] sm:$0xff]
    %v9804 = vld [vmem:[#allocation2 + $0xe1] sm:$0xff]
    %v9805 = vld [vmem:[#allocation2 + $0xe9] sm:$0xff]
    %v9806 = vld [vmem:[#allocation2 + $0xf1] sm:$0xff]
    %v9807 = vld [vmem:[#allocation2 + $0xf9] sm:$0xff]
    %v9808 = vld [vmem:[#allocation2 + $0x101] sm:$0xff]
    %v9809 = vld [vmem:[#allocation2 + $0x109] sm:$0xff]
    %v9810 = vld [vmem:[#allocation2 + $0x111] sm:$0xff]
    %v9811 = vld [vmem:[#allocation2 + $0x119] sm:$0xff]
    %v9812 = vld [vmem:[#allocation2 + $0x121] sm:$0xff]
    %v9813 = vld [vmem:[#allocation2 + $0x129] sm:$0xff]
    %v9814 = vld [vmem:[#allocation2 + $0x131] sm:$0xff]
    %v9815 = vld [vmem:[#allocation2 + $0x139] sm:$0xff]
    %v9816 = vld [vmem:[#allocation2 + $0x141] sm:$0xff]
    %v9817 = vld [vmem:[#allocation2 + $0x149] sm:$0xff]
    %v9818 = vld [vmem:[#allocation2 + $0x151] sm:$0xff]
    %v9819 = vld [vmem:[#allocation2 + $0x159] sm:$0xff]
    %v9820 = vld [vmem:[#allocation2 + $0x161] sm:$0xff]
    %v9821 = vld [vmem:[#allocation2 + $0x169] sm:$0xff]
    %v9822 = vld [vmem:[#allocation2 + $0x171] sm:$0xff]
    %v9823 = vld [vmem:[#allocation2 + $0x179] sm:$0xff]
    %v9824 = vld [vmem:[#allocation2 + $0x181] sm:$0xff]
    %v9825 = vld [vmem:[#allocation2 + $0x189] sm:$0xff]
    %v9826 = vld [vmem:[#allocation2 + $0x191] sm:$0xff]
    %v9827 = vld [vmem:[#allocation2 + $0x199] sm:$0xff]
    %v9828 = vld [vmem:[#allocation2 + $0x1a1] sm:$0xff]
    %v9829 = vld [vmem:[#allocation2 + $0x1a9] sm:$0xff]
    %v9830 = vld [vmem:[#allocation2 + $0x1b1] sm:$0xff]
    %v9831 = vld [vmem:[#allocation2 + $0x1b9] sm:$0xff]
    %v9832 = vld [vmem:[#allocation2 + $0x1c1] sm:$0xff]
    %v9833 = vld [vmem:[#allocation2 + $0x1c9] sm:$0xff]
    %v9834 = vld [vmem:[#allocation2 + $0x1d1] sm:$0xff]
    %v9835 = vld [vmem:[#allocation2 + $0x1d9] sm:$0xff]
    %v9836 = vld [vmem:[#allocation2 + $0x1e1] sm:$0xff]
    %v9837 = vld [vmem:[#allocation2 + $0x1e9] sm:$0xff]
    %v9838 = vld [vmem:[#allocation2 + $0x1f1] sm:$0xff]
    %v9839 = vld [vmem:[#allocation2 + $0x1f9] sm:$0xff]
    %v9840 = vld [vmem:[#allocation2 + $0x201] sm:$0xff]
    %v9841 = vld [vmem:[#allocation2 + $0x209] sm:$0xff]
    %v9842 = vld [vmem:[#allocation2 + $0x211] sm:$0xff]
    %v9843 = vld [vmem:[#allocation2 + $0x219] sm:$0xff]
    %v9844 = vld [vmem:[#allocation2 + $0x221] sm:$0xff]
    %v9845 = vld [vmem:[#allocation2 + $0x229] sm:$0xff]
    %v9846 = vld [vmem:[#allocation2 + $0x231] sm:$0xff]
    %v9847 = vld [vmem:[#allocation2 + $0x239] sm:$0xff]
    %v9848 = vld [vmem:[#allocation2 + $0x241] sm:$0xff]
    %v9849 = vld [vmem:[#allocation2 + $0x249] sm:$0xff]
    %v9850 = vld [vmem:[#allocation2 + $0x251] sm:$0xff]
    %v9851 = vld [vmem:[#allocation2 + $0x259] sm:$0xff]
    %v9852 = vld [vmem:[#allocation2 + $0x261] sm:$0xff]
    %v9853 = vld [vmem:[#allocation2 + $0x269] sm:$0xff]
    %v9854 = vld [vmem:[#allocation2 + $0x271] sm:$0xff]
    %v9855 = vld [vmem:[#allocation2 + $0x279] sm:$0xff]
    %v9856 = vld [vmem:[#allocation2 + $0x281] sm:$0xff]
    %v9857 = vld [vmem:[#allocation2 + $0x289] sm:$0xff]
    %v9858 = vld [vmem:[#allocation2 + $0x291] sm:$0xff]
    %v9859 = vld [vmem:[#allocation2 + $0x299] sm:$0xff]
    %v9860 = vld [vmem:[#allocation2 + $0x2a1] sm:$0xff]
    %v9861 = vld [vmem:[#allocation2 + $0x2a9] sm:$0xff]
    %s9862 = scalar_lea.vmem %s3, 768
    %v9863 = vld [vmem:[%s9862] sm:$0xff]
    %v9864 = vld [vmem:[%s9862 + $0x8] sm:$0xff]
    %v9865 = vld [vmem:[%s9862 + $0x10] sm:$0xff]
    %v9866 = vld [vmem:[%s9862 + $0x18] sm:$0xff]
    %v9867 = vld [vmem:[%s9862 + $0x20] sm:$0xff]
    %v9868 = vld [vmem:[%s9862 + $0x28] sm:$0xff]
    %v9869 = vld [vmem:[%s9862 + $0x30] sm:$0xff]
    %v9870 = vld [vmem:[%s9862 + $0x38] sm:$0xff]
    %v9871 = vld [vmem:[%s9862 + $0x40] sm:$0xff]
    %v9872 = vld [vmem:[%s9862 + $0x48] sm:$0xff]
    %v9873 = vld [vmem:[%s9862 + $0x50] sm:$0xff]
    %v9874 = vld [vmem:[%s9862 + $0x58] sm:$0xff]
    %v9875 = vld [vmem:[%s9862 + $0x60] sm:$0xff]
    %v9876 = vld [vmem:[%s9862 + $0x68] sm:$0xff]
    %v9877 = vld [vmem:[%s9862 + $0x70] sm:$0xff]
    %v9878 = vld [vmem:[%s9862 + $0x78] sm:$0xff]
    %9879 = vmatpush.msra.mxu0 %v9878
    %9880 = vmatpush.msra.mxu0 %v9877
    %9881 = vmatpush.msra.mxu0 %v9876
    %9882 = vmatpush.msra.mxu0 %v9875
    %9883 = vmatpush.msra.mxu0 %v9874
    %9884 = vmatpush.msra.mxu0 %v9873
    %9885 = vmatpush.msra.mxu0 %v9872
    %9886 = vmatpush.msra.mxu0 %v9871
    %9887 = vmatpush.msra.mxu0 %v9870
    %9888 = vmatpush.msra.mxu0 %v9869
    %9889 = vmatpush.msra.mxu0 %v9868
    %9890 = vmatpush.msra.mxu0 %v9867
    %9891 = vmatpush.msra.mxu0 %v9866
    %9892 = vmatpush.msra.mxu0 %v9865
    %9893 = vmatpush.msra.mxu0 %v9864
    %9894 = vmatpush.msra.mxu0 %v9863
    %9895 = vmatmul.f32.gmra.mxu0 %v9781
    %v9896 = vpop.f32.mrf.mxu0
    %v9897 = vadd.f32 0.0, %v9896
    %9898 = vmatmul.f32.gmra.mxu0 %v9782
    %v9899 = vpop.f32.mrf.mxu0
    %v9900 = vadd.f32 0.0, %v9899
    %9901 = vmatmul.f32.gmra.mxu0 %v9783
    %v9902 = vpop.f32.mrf.mxu0
    %v9903 = vadd.f32 0.0, %v9902
    %9904 = vmatmul.f32.gmra.mxu0 %v9784
    %v9905 = vpop.f32.mrf.mxu0
    %v9906 = vadd.f32 0.0, %v9905
    %9907 = vmatmul.f32.gmra.mxu0 %v9785
    %v9908 = vpop.f32.mrf.mxu0
    %v9909 = vadd.f32 0.0, %v9908
    %9910 = vmatmul.f32.gmra.mxu0 %v9786
    %v9911 = vpop.f32.mrf.mxu0
    %v9912 = vadd.f32 0.0, %v9911
    %9913 = vmatmul.f32.gmra.mxu0 %v9787
    %v9914 = vpop.f32.mrf.mxu0
    %v9915 = vadd.f32 0.0, %v9914
    %9916 = vmatmul.f32.gmra.mxu0 %v9788
    %v9917 = vpop.f32.mrf.mxu0
    %v9918 = vadd.f32 0.0, %v9917
    %9919 = vmatmul.f32.gmra.mxu0 %v9789
    %v9920 = vpop.f32.mrf.mxu0
    %v9921 = vadd.f32 0.0, %v9920
    %9922 = vmatmul.f32.gmra.mxu0 %v9790
    %v9923 = vpop.f32.mrf.mxu0
    %v9924 = vadd.f32 0.0, %v9923
    %9925 = vmatmul.f32.gmra.mxu0 %v9791
    %v9926 = vpop.f32.mrf.mxu0
    %v9927 = vadd.f32 0.0, %v9926
    %9928 = vmatmul.f32.gmra.mxu0 %v9792
    %v9929 = vpop.f32.mrf.mxu0
    %v9930 = vadd.f32 0.0, %v9929
    %9931 = vmatmul.f32.gmra.mxu0 %v9793
    %v9932 = vpop.f32.mrf.mxu0
    %v9933 = vadd.f32 0.0, %v9932
    %9934 = vmatmul.f32.gmra.mxu0 %v9794
    %v9935 = vpop.f32.mrf.mxu0
    %v9936 = vadd.f32 0.0, %v9935
    %9937 = vmatmul.f32.gmra.mxu0 %v9795
    %v9938 = vpop.f32.mrf.mxu0
    %v9939 = vadd.f32 0.0, %v9938
    %9940 = vmatmul.f32.gmra.mxu0 %v9796
    %v9941 = vpop.f32.mrf.mxu0
    %v9942 = vadd.f32 0.0, %v9941
    %9943 = vmatmul.f32.gmra.mxu0 %v9797
    %v9944 = vpop.f32.mrf.mxu0
    %v9945 = vadd.f32 0.0, %v9944
    %9946 = vmatmul.f32.gmra.mxu0 %v9798
    %v9947 = vpop.f32.mrf.mxu0
    %v9948 = vadd.f32 0.0, %v9947
    %9949 = vmatmul.f32.gmra.mxu0 %v9799
    %v9950 = vpop.f32.mrf.mxu0
    %v9951 = vadd.f32 0.0, %v9950
    %9952 = vmatmul.f32.gmra.mxu0 %v9800
    %v9953 = vpop.f32.mrf.mxu0
    %v9954 = vadd.f32 0.0, %v9953
    %9955 = vmatmul.f32.gmra.mxu0 %v9801
    %v9956 = vpop.f32.mrf.mxu0
    %v9957 = vadd.f32 0.0, %v9956
    %9958 = vmatmul.f32.gmra.mxu0 %v9802
    %v9959 = vpop.f32.mrf.mxu0
    %v9960 = vadd.f32 0.0, %v9959
    %9961 = vmatmul.f32.gmra.mxu0 %v9803
    %v9962 = vpop.f32.mrf.mxu0
    %v9963 = vadd.f32 0.0, %v9962
    %9964 = vmatmul.f32.gmra.mxu0 %v9804
    %v9965 = vpop.f32.mrf.mxu0
    %v9966 = vadd.f32 0.0, %v9965
    %9967 = vmatmul.f32.gmra.mxu0 %v9805
    %v9968 = vpop.f32.mrf.mxu0
    %v9969 = vadd.f32 0.0, %v9968
    %9970 = vmatmul.f32.gmra.mxu0 %v9806
    %v9971 = vpop.f32.mrf.mxu0
    %v9972 = vadd.f32 0.0, %v9971
    %9973 = vmatmul.f32.gmra.mxu0 %v9807
    %v9974 = vpop.f32.mrf.mxu0
    %v9975 = vadd.f32 0.0, %v9974
    %9976 = vmatmul.f32.gmra.mxu0 %v9808
    %v9977 = vpop.f32.mrf.mxu0
    %v9978 = vadd.f32 0.0, %v9977
    %9979 = vmatmul.f32.gmra.mxu0 %v9809
    %v9980 = vpop.f32.mrf.mxu0
    %v9981 = vadd.f32 0.0, %v9980
    %9982 = vmatmul.f32.gmra.mxu0 %v9810
    %v9983 = vpop.f32.mrf.mxu0
    %v9984 = vadd.f32 0.0, %v9983
    %9985 = vmatmul.f32.gmra.mxu0 %v9811
    %v9986 = vpop.f32.mrf.mxu0
    %v9987 = vadd.f32 0.0, %v9986
    %9988 = vmatmul.f32.gmra.mxu0 %v9812
    %v9989 = vpop.f32.mrf.mxu0
    %v9990 = vadd.f32 0.0, %v9989
    %9991 = vmatmul.f32.gmra.mxu0 %v9813
    %v9992 = vpop.f32.mrf.mxu0
    %v9993 = vadd.f32 0.0, %v9992
    %9994 = vmatmul.f32.gmra.mxu0 %v9814
    %v9995 = vpop.f32.mrf.mxu0
    %v9996 = vadd.f32 0.0, %v9995
    %9997 = vmatmul.f32.gmra.mxu0 %v9815
    %v9998 = vpop.f32.mrf.mxu0
    %v9999 = vadd.f32 0.0, %v9998
    %10000 = vmatmul.f32.gmra.mxu0 %v9816
    %v10001 = vpop.f32.mrf.mxu0
    %v10002 = vadd.f32 0.0, %v10001
    %10003 = vmatmul.f32.gmra.mxu0 %v9817
    %v10004 = vpop.f32.mrf.mxu0
    %v10005 = vadd.f32 0.0, %v10004
    %10006 = vmatmul.f32.gmra.mxu0 %v9818
    %v10007 = vpop.f32.mrf.mxu0
    %v10008 = vadd.f32 0.0, %v10007
    %10009 = vmatmul.f32.gmra.mxu0 %v9819
    %v10010 = vpop.f32.mrf.mxu0
    %v10011 = vadd.f32 0.0, %v10010
    %10012 = vmatmul.f32.gmra.mxu0 %v9820
    %v10013 = vpop.f32.mrf.mxu0
    %v10014 = vadd.f32 0.0, %v10013
    %10015 = vmatmul.f32.gmra.mxu0 %v9821
    %v10016 = vpop.f32.mrf.mxu0
    %v10017 = vadd.f32 0.0, %v10016
    %10018 = vmatmul.f32.gmra.mxu0 %v9822
    %v10019 = vpop.f32.mrf.mxu0
    %v10020 = vadd.f32 0.0, %v10019
    %10021 = vmatmul.f32.gmra.mxu0 %v9823
    %v10022 = vpop.f32.mrf.mxu0
    %v10023 = vadd.f32 0.0, %v10022
    %10024 = vmatmul.f32.gmra.mxu0 %v9824
    %v10025 = vpop.f32.mrf.mxu0
    %v10026 = vadd.f32 0.0, %v10025
    %10027 = vmatmul.f32.gmra.mxu0 %v9825
    %v10028 = vpop.f32.mrf.mxu0
    %v10029 = vadd.f32 0.0, %v10028
    %10030 = vmatmul.f32.gmra.mxu0 %v9826
    %v10031 = vpop.f32.mrf.mxu0
    %v10032 = vadd.f32 0.0, %v10031
    %10033 = vmatmul.f32.gmra.mxu0 %v9827
    %v10034 = vpop.f32.mrf.mxu0
    %v10035 = vadd.f32 0.0, %v10034
    %10036 = vmatmul.f32.gmra.mxu0 %v9828
    %v10037 = vpop.f32.mrf.mxu0
    %v10038 = vadd.f32 0.0, %v10037
    %10039 = vmatmul.f32.gmra.mxu0 %v9829
    %v10040 = vpop.f32.mrf.mxu0
    %v10041 = vadd.f32 0.0, %v10040
    %10042 = vmatmul.f32.gmra.mxu0 %v9830
    %v10043 = vpop.f32.mrf.mxu0
    %v10044 = vadd.f32 0.0, %v10043
    %10045 = vmatmul.f32.gmra.mxu0 %v9831
    %v10046 = vpop.f32.mrf.mxu0
    %v10047 = vadd.f32 0.0, %v10046
    %10048 = vmatmul.f32.gmra.mxu0 %v9832
    %v10049 = vpop.f32.mrf.mxu0
    %v10050 = vadd.f32 0.0, %v10049
    %10051 = vmatmul.f32.gmra.mxu0 %v9833
    %v10052 = vpop.f32.mrf.mxu0
    %v10053 = vadd.f32 0.0, %v10052
    %10054 = vmatmul.f32.gmra.mxu0 %v9834
    %v10055 = vpop.f32.mrf.mxu0
    %v10056 = vadd.f32 0.0, %v10055
    %10057 = vmatmul.f32.gmra.mxu0 %v9835
    %v10058 = vpop.f32.mrf.mxu0
    %v10059 = vadd.f32 0.0, %v10058
    %10060 = vmatmul.f32.gmra.mxu0 %v9836
    %v10061 = vpop.f32.mrf.mxu0
    %v10062 = vadd.f32 0.0, %v10061
    %10063 = vmatmul.f32.gmra.mxu0 %v9837
    %v10064 = vpop.f32.mrf.mxu0
    %v10065 = vadd.f32 0.0, %v10064
    %10066 = vmatmul.f32.gmra.mxu0 %v9838
    %v10067 = vpop.f32.mrf.mxu0
    %v10068 = vadd.f32 0.0, %v10067
    %10069 = vmatmul.f32.gmra.mxu0 %v9839
    %v10070 = vpop.f32.mrf.mxu0
    %v10071 = vadd.f32 0.0, %v10070
    %10072 = vmatmul.f32.gmra.mxu0 %v9840
    %v10073 = vpop.f32.mrf.mxu0
    %v10074 = vadd.f32 0.0, %v10073
    %10075 = vmatmul.f32.gmra.mxu0 %v9841
    %v10076 = vpop.f32.mrf.mxu0
    %v10077 = vadd.f32 0.0, %v10076
    %10078 = vmatmul.f32.gmra.mxu0 %v9842
    %v10079 = vpop.f32.mrf.mxu0
    %v10080 = vadd.f32 0.0, %v10079
    %10081 = vmatmul.f32.gmra.mxu0 %v9843
    %v10082 = vpop.f32.mrf.mxu0
    %v10083 = vadd.f32 0.0, %v10082
    %10084 = vmatmul.f32.gmra.mxu0 %v9844
    %v10085 = vpop.f32.mrf.mxu0
    %v10086 = vadd.f32 0.0, %v10085
    %10087 = vmatmul.f32.gmra.mxu0 %v9845
    %v10088 = vpop.f32.mrf.mxu0
    %v10089 = vadd.f32 0.0, %v10088
    %10090 = vmatmul.f32.gmra.mxu0 %v9846
    %v10091 = vpop.f32.mrf.mxu0
    %v10092 = vadd.f32 0.0, %v10091
    %10093 = vmatmul.f32.gmra.mxu0 %v9847
    %v10094 = vpop.f32.mrf.mxu0
    %v10095 = vadd.f32 0.0, %v10094
    %10096 = vmatmul.f32.gmra.mxu0 %v9848
    %v10097 = vpop.f32.mrf.mxu0
    %v10098 = vadd.f32 0.0, %v10097
    %10099 = vmatmul.f32.gmra.mxu0 %v9849
    %v10100 = vpop.f32.mrf.mxu0
    %v10101 = vadd.f32 0.0, %v10100
    %10102 = vmatmul.f32.gmra.mxu0 %v9850
    %v10103 = vpop.f32.mrf.mxu0
    %v10104 = vadd.f32 0.0, %v10103
    %10105 = vmatmul.f32.gmra.mxu0 %v9851
    %v10106 = vpop.f32.mrf.mxu0
    %v10107 = vadd.f32 0.0, %v10106
    %10108 = vmatmul.f32.gmra.mxu0 %v9852
    %v10109 = vpop.f32.mrf.mxu0
    %v10110 = vadd.f32 0.0, %v10109
    %10111 = vmatmul.f32.gmra.mxu0 %v9853
    %v10112 = vpop.f32.mrf.mxu0
    %v10113 = vadd.f32 0.0, %v10112
    %10114 = vmatmul.f32.gmra.mxu0 %v9854
    %v10115 = vpop.f32.mrf.mxu0
    %v10116 = vadd.f32 0.0, %v10115
    %10117 = vmatmul.f32.gmra.mxu0 %v9855
    %v10118 = vpop.f32.mrf.mxu0
    %v10119 = vadd.f32 0.0, %v10118
    %10120 = vmatmul.f32.gmra.mxu0 %v9856
    %v10121 = vpop.f32.mrf.mxu0
    %v10122 = vadd.f32 0.0, %v10121
    %10123 = vmatmul.f32.gmra.mxu0 %v9857
    %v10124 = vpop.f32.mrf.mxu0
    %v10125 = vadd.f32 0.0, %v10124
    %10126 = vmatmul.f32.gmra.mxu0 %v9858
    %v10127 = vpop.f32.mrf.mxu0
    %v10128 = vadd.f32 0.0, %v10127
    %10129 = vmatmul.f32.gmra.mxu0 %v9859
    %v10130 = vpop.f32.mrf.mxu0
    %v10131 = vadd.f32 0.0, %v10130
    %10132 = vmatmul.f32.gmra.mxu0 %v9860
    %v10133 = vpop.f32.mrf.mxu0
    %v10134 = vadd.f32 0.0, %v10133
    %10135 = vmatmul.f32.gmra.mxu0 %v9861
    %v10136 = vpop.f32.mrf.mxu0
    %v10137 = vadd.f32 0.0, %v10136
    %10138 = vdwg.mxu0
    %v10139 = vadd.f32 %v9700, %v9897
    %v10140 = vadd.f32 %v9701, %v9900
    %v10141 = vadd.f32 %v9702, %v9903
    %v10142 = vadd.f32 %v9703, %v9906
    %v10143 = vadd.f32 %v9704, %v9909
    %v10144 = vadd.f32 %v9705, %v9912
    %v10145 = vadd.f32 %v9706, %v9915
    %v10146 = vadd.f32 %v9707, %v9918
    %v10147 = vadd.f32 %v9708, %v9921
    %v10148 = vadd.f32 %v9709, %v9924
    %v10149 = vadd.f32 %v9710, %v9927
    %v10150 = vadd.f32 %v9711, %v9930
    %v10151 = vadd.f32 %v9712, %v9933
    %v10152 = vadd.f32 %v9713, %v9936
    %v10153 = vadd.f32 %v9714, %v9939
    %v10154 = vadd.f32 %v9715, %v9942
    %v10155 = vadd.f32 %v9716, %v9945
    %v10156 = vadd.f32 %v9717, %v9948
    %v10157 = vadd.f32 %v9718, %v9951
    %v10158 = vadd.f32 %v9719, %v9954
    %v10159 = vadd.f32 %v9720, %v9957
    %v10160 = vadd.f32 %v9721, %v9960
    %v10161 = vadd.f32 %v9722, %v9963
    %v10162 = vadd.f32 %v9723, %v9966
    %v10163 = vadd.f32 %v9724, %v9969
    %v10164 = vadd.f32 %v9725, %v9972
    %v10165 = vadd.f32 %v9726, %v9975
    %v10166 = vadd.f32 %v9727, %v9978
    %v10167 = vadd.f32 %v9728, %v9981
    %v10168 = vadd.f32 %v9729, %v9984
    %v10169 = vadd.f32 %v9730, %v9987
    %v10170 = vadd.f32 %v9731, %v9990
    %v10171 = vadd.f32 %v9732, %v9993
    %v10172 = vadd.f32 %v9733, %v9996
    %v10173 = vadd.f32 %v9734, %v9999
    %v10174 = vadd.f32 %v9735, %v10002
    %v10175 = vadd.f32 %v9736, %v10005
    %v10176 = vadd.f32 %v9737, %v10008
    %v10177 = vadd.f32 %v9738, %v10011
    %v10178 = vadd.f32 %v9739, %v10014
    %v10179 = vadd.f32 %v9740, %v10017
    %v10180 = vadd.f32 %v9741, %v10020
    %v10181 = vadd.f32 %v9742, %v10023
    %v10182 = vadd.f32 %v9743, %v10026
    %v10183 = vadd.f32 %v9744, %v10029
    %v10184 = vadd.f32 %v9745, %v10032
    %v10185 = vadd.f32 %v9746, %v10035
    %v10186 = vadd.f32 %v9747, %v10038
    %v10187 = vadd.f32 %v9748, %v10041
    %v10188 = vadd.f32 %v9749, %v10044
    %v10189 = vadd.f32 %v9750, %v10047
    %v10190 = vadd.f32 %v9751, %v10050
    %v10191 = vadd.f32 %v9752, %v10053
    %v10192 = vadd.f32 %v9753, %v10056
    %v10193 = vadd.f32 %v9754, %v10059
    %v10194 = vadd.f32 %v9755, %v10062
    %v10195 = vadd.f32 %v9756, %v10065
    %v10196 = vadd.f32 %v9757, %v10068
    %v10197 = vadd.f32 %v9758, %v10071
    %v10198 = vadd.f32 %v9759, %v10074
    %v10199 = vadd.f32 %v9760, %v10077
    %v10200 = vadd.f32 %v9761, %v10080
    %v10201 = vadd.f32 %v9762, %v10083
    %v10202 = vadd.f32 %v9763, %v10086
    %v10203 = vadd.f32 %v9764, %v10089
    %v10204 = vadd.f32 %v9765, %v10092
    %v10205 = vadd.f32 %v9766, %v10095
    %v10206 = vadd.f32 %v9767, %v10098
    %v10207 = vadd.f32 %v9768, %v10101
    %v10208 = vadd.f32 %v9769, %v10104
    %v10209 = vadd.f32 %v9770, %v10107
    %v10210 = vadd.f32 %v9771, %v10110
    %v10211 = vadd.f32 %v9772, %v10113
    %v10212 = vadd.f32 %v9773, %v10116
    %v10213 = vadd.f32 %v9774, %v10119
    %v10214 = vadd.f32 %v9775, %v10122
    %v10215 = vadd.f32 %v9776, %v10125
    %v10216 = vadd.f32 %v9777, %v10128
    %v10217 = vadd.f32 %v9778, %v10131
    %v10218 = vadd.f32 %v9779, %v10134
    %v10219 = vadd.f32 %v9780, %v10137
    %v10220 = vld [vmem:[#allocation2 + $0x2a] sm:$0xff]
    %v10221 = vld [vmem:[#allocation2 + $0x32] sm:$0xff]
    %v10222 = vld [vmem:[#allocation2 + $0x3a] sm:$0xff]
    %v10223 = vld [vmem:[#allocation2 + $0x42] sm:$0xff]
    %v10224 = vld [vmem:[#allocation2 + $0x4a] sm:$0xff]
    %v10225 = vld [vmem:[#allocation2 + $0x52] sm:$0xff]
    %v10226 = vld [vmem:[#allocation2 + $0x5a] sm:$0xff]
    %v10227 = vld [vmem:[#allocation2 + $0x62] sm:$0xff]
    %v10228 = vld [vmem:[#allocation2 + $0x6a] sm:$0xff]
    %v10229 = vld [vmem:[#allocation2 + $0x72] sm:$0xff]
    %v10230 = vld [vmem:[#allocation2 + $0x7a] sm:$0xff]
    %v10231 = vld [vmem:[#allocation2 + $0x82] sm:$0xff]
    %v10232 = vld [vmem:[#allocation2 + $0x8a] sm:$0xff]
    %v10233 = vld [vmem:[#allocation2 + $0x92] sm:$0xff]
    %v10234 = vld [vmem:[#allocation2 + $0x9a] sm:$0xff]
    %v10235 = vld [vmem:[#allocation2 + $0xa2] sm:$0xff]
    %v10236 = vld [vmem:[#allocation2 + $0xaa] sm:$0xff]
    %v10237 = vld [vmem:[#allocation2 + $0xb2] sm:$0xff]
    %v10238 = vld [vmem:[#allocation2 + $0xba] sm:$0xff]
    %v10239 = vld [vmem:[#allocation2 + $0xc2] sm:$0xff]
    %v10240 = vld [vmem:[#allocation2 + $0xca] sm:$0xff]
    %v10241 = vld [vmem:[#allocation2 + $0xd2] sm:$0xff]
    %v10242 = vld [vmem:[#allocation2 + $0xda] sm:$0xff]
    %v10243 = vld [vmem:[#allocation2 + $0xe2] sm:$0xff]
    %v10244 = vld [vmem:[#allocation2 + $0xea] sm:$0xff]
    %v10245 = vld [vmem:[#allocation2 + $0xf2] sm:$0xff]
    %v10246 = vld [vmem:[#allocation2 + $0xfa] sm:$0xff]
    %v10247 = vld [vmem:[#allocation2 + $0x102] sm:$0xff]
    %v10248 = vld [vmem:[#allocation2 + $0x10a] sm:$0xff]
    %v10249 = vld [vmem:[#allocation2 + $0x112] sm:$0xff]
    %v10250 = vld [vmem:[#allocation2 + $0x11a] sm:$0xff]
    %v10251 = vld [vmem:[#allocation2 + $0x122] sm:$0xff]
    %v10252 = vld [vmem:[#allocation2 + $0x12a] sm:$0xff]
    %v10253 = vld [vmem:[#allocation2 + $0x132] sm:$0xff]
    %v10254 = vld [vmem:[#allocation2 + $0x13a] sm:$0xff]
    %v10255 = vld [vmem:[#allocation2 + $0x142] sm:$0xff]
    %v10256 = vld [vmem:[#allocation2 + $0x14a] sm:$0xff]
    %v10257 = vld [vmem:[#allocation2 + $0x152] sm:$0xff]
    %v10258 = vld [vmem:[#allocation2 + $0x15a] sm:$0xff]
    %v10259 = vld [vmem:[#allocation2 + $0x162] sm:$0xff]
    %v10260 = vld [vmem:[#allocation2 + $0x16a] sm:$0xff]
    %v10261 = vld [vmem:[#allocation2 + $0x172] sm:$0xff]
    %v10262 = vld [vmem:[#allocation2 + $0x17a] sm:$0xff]
    %v10263 = vld [vmem:[#allocation2 + $0x182] sm:$0xff]
    %v10264 = vld [vmem:[#allocation2 + $0x18a] sm:$0xff]
    %v10265 = vld [vmem:[#allocation2 + $0x192] sm:$0xff]
    %v10266 = vld [vmem:[#allocation2 + $0x19a] sm:$0xff]
    %v10267 = vld [vmem:[#allocation2 + $0x1a2] sm:$0xff]
    %v10268 = vld [vmem:[#allocation2 + $0x1aa] sm:$0xff]
    %v10269 = vld [vmem:[#allocation2 + $0x1b2] sm:$0xff]
    %v10270 = vld [vmem:[#allocation2 + $0x1ba] sm:$0xff]
    %v10271 = vld [vmem:[#allocation2 + $0x1c2] sm:$0xff]
    %v10272 = vld [vmem:[#allocation2 + $0x1ca] sm:$0xff]
    %v10273 = vld [vmem:[#allocation2 + $0x1d2] sm:$0xff]
    %v10274 = vld [vmem:[#allocation2 + $0x1da] sm:$0xff]
    %v10275 = vld [vmem:[#allocation2 + $0x1e2] sm:$0xff]
    %v10276 = vld [vmem:[#allocation2 + $0x1ea] sm:$0xff]
    %v10277 = vld [vmem:[#allocation2 + $0x1f2] sm:$0xff]
    %v10278 = vld [vmem:[#allocation2 + $0x1fa] sm:$0xff]
    %v10279 = vld [vmem:[#allocation2 + $0x202] sm:$0xff]
    %v10280 = vld [vmem:[#allocation2 + $0x20a] sm:$0xff]
    %v10281 = vld [vmem:[#allocation2 + $0x212] sm:$0xff]
    %v10282 = vld [vmem:[#allocation2 + $0x21a] sm:$0xff]
    %v10283 = vld [vmem:[#allocation2 + $0x222] sm:$0xff]
    %v10284 = vld [vmem:[#allocation2 + $0x22a] sm:$0xff]
    %v10285 = vld [vmem:[#allocation2 + $0x232] sm:$0xff]
    %v10286 = vld [vmem:[#allocation2 + $0x23a] sm:$0xff]
    %v10287 = vld [vmem:[#allocation2 + $0x242] sm:$0xff]
    %v10288 = vld [vmem:[#allocation2 + $0x24a] sm:$0xff]
    %v10289 = vld [vmem:[#allocation2 + $0x252] sm:$0xff]
    %v10290 = vld [vmem:[#allocation2 + $0x25a] sm:$0xff]
    %v10291 = vld [vmem:[#allocation2 + $0x262] sm:$0xff]
    %v10292 = vld [vmem:[#allocation2 + $0x26a] sm:$0xff]
    %v10293 = vld [vmem:[#allocation2 + $0x272] sm:$0xff]
    %v10294 = vld [vmem:[#allocation2 + $0x27a] sm:$0xff]
    %v10295 = vld [vmem:[#allocation2 + $0x282] sm:$0xff]
    %v10296 = vld [vmem:[#allocation2 + $0x28a] sm:$0xff]
    %v10297 = vld [vmem:[#allocation2 + $0x292] sm:$0xff]
    %v10298 = vld [vmem:[#allocation2 + $0x29a] sm:$0xff]
    %v10299 = vld [vmem:[#allocation2 + $0x2a2] sm:$0xff]
    %v10300 = vld [vmem:[#allocation2 + $0x2aa] sm:$0xff]
    %s10301 = scalar_lea.vmem %s3, 896
    %v10302 = vld [vmem:[%s10301] sm:$0xff]
    %v10303 = vld [vmem:[%s10301 + $0x8] sm:$0xff]
    %v10304 = vld [vmem:[%s10301 + $0x10] sm:$0xff]
    %v10305 = vld [vmem:[%s10301 + $0x18] sm:$0xff]
    %v10306 = vld [vmem:[%s10301 + $0x20] sm:$0xff]
    %v10307 = vld [vmem:[%s10301 + $0x28] sm:$0xff]
    %v10308 = vld [vmem:[%s10301 + $0x30] sm:$0xff]
    %v10309 = vld [vmem:[%s10301 + $0x38] sm:$0xff]
    %v10310 = vld [vmem:[%s10301 + $0x40] sm:$0xff]
    %v10311 = vld [vmem:[%s10301 + $0x48] sm:$0xff]
    %v10312 = vld [vmem:[%s10301 + $0x50] sm:$0xff]
    %v10313 = vld [vmem:[%s10301 + $0x58] sm:$0xff]
    %v10314 = vld [vmem:[%s10301 + $0x60] sm:$0xff]
    %v10315 = vld [vmem:[%s10301 + $0x68] sm:$0xff]
    %v10316 = vld [vmem:[%s10301 + $0x70] sm:$0xff]
    %v10317 = vld [vmem:[%s10301 + $0x78] sm:$0xff]
    %10318 = vmatpush.msra.mxu0 %v10317
    %10319 = vmatpush.msra.mxu0 %v10316
    %10320 = vmatpush.msra.mxu0 %v10315
    %10321 = vmatpush.msra.mxu0 %v10314
    %10322 = vmatpush.msra.mxu0 %v10313
    %10323 = vmatpush.msra.mxu0 %v10312
    %10324 = vmatpush.msra.mxu0 %v10311
    %10325 = vmatpush.msra.mxu0 %v10310
    %10326 = vmatpush.msra.mxu0 %v10309
    %10327 = vmatpush.msra.mxu0 %v10308
    %10328 = vmatpush.msra.mxu0 %v10307
    %10329 = vmatpush.msra.mxu0 %v10306
    %10330 = vmatpush.msra.mxu0 %v10305
    %10331 = vmatpush.msra.mxu0 %v10304
    %10332 = vmatpush.msra.mxu0 %v10303
    %10333 = vmatpush.msra.mxu0 %v10302
    %10334 = vmatmul.f32.gmra.mxu0 %v10220
    %v10335 = vpop.f32.mrf.mxu0
    %v10336 = vadd.f32 0.0, %v10335
    %10337 = vmatmul.f32.gmra.mxu0 %v10221
    %v10338 = vpop.f32.mrf.mxu0
    %v10339 = vadd.f32 0.0, %v10338
    %10340 = vmatmul.f32.gmra.mxu0 %v10222
    %v10341 = vpop.f32.mrf.mxu0
    %v10342 = vadd.f32 0.0, %v10341
    %10343 = vmatmul.f32.gmra.mxu0 %v10223
    %v10344 = vpop.f32.mrf.mxu0
    %v10345 = vadd.f32 0.0, %v10344
    %10346 = vmatmul.f32.gmra.mxu0 %v10224
    %v10347 = vpop.f32.mrf.mxu0
    %v10348 = vadd.f32 0.0, %v10347
    %10349 = vmatmul.f32.gmra.mxu0 %v10225
    %v10350 = vpop.f32.mrf.mxu0
    %v10351 = vadd.f32 0.0, %v10350
    %10352 = vmatmul.f32.gmra.mxu0 %v10226
    %v10353 = vpop.f32.mrf.mxu0
    %v10354 = vadd.f32 0.0, %v10353
    %10355 = vmatmul.f32.gmra.mxu0 %v10227
    %v10356 = vpop.f32.mrf.mxu0
    %v10357 = vadd.f32 0.0, %v10356
    %10358 = vmatmul.f32.gmra.mxu0 %v10228
    %v10359 = vpop.f32.mrf.mxu0
    %v10360 = vadd.f32 0.0, %v10359
    %10361 = vmatmul.f32.gmra.mxu0 %v10229
    %v10362 = vpop.f32.mrf.mxu0
    %v10363 = vadd.f32 0.0, %v10362
    %10364 = vmatmul.f32.gmra.mxu0 %v10230
    %v10365 = vpop.f32.mrf.mxu0
    %v10366 = vadd.f32 0.0, %v10365
    %10367 = vmatmul.f32.gmra.mxu0 %v10231
    %v10368 = vpop.f32.mrf.mxu0
    %v10369 = vadd.f32 0.0, %v10368
    %10370 = vmatmul.f32.gmra.mxu0 %v10232
    %v10371 = vpop.f32.mrf.mxu0
    %v10372 = vadd.f32 0.0, %v10371
    %10373 = vmatmul.f32.gmra.mxu0 %v10233
    %v10374 = vpop.f32.mrf.mxu0
    %v10375 = vadd.f32 0.0, %v10374
    %10376 = vmatmul.f32.gmra.mxu0 %v10234
    %v10377 = vpop.f32.mrf.mxu0
    %v10378 = vadd.f32 0.0, %v10377
    %10379 = vmatmul.f32.gmra.mxu0 %v10235
    %v10380 = vpop.f32.mrf.mxu0
    %v10381 = vadd.f32 0.0, %v10380
    %10382 = vmatmul.f32.gmra.mxu0 %v10236
    %v10383 = vpop.f32.mrf.mxu0
    %v10384 = vadd.f32 0.0, %v10383
    %10385 = vmatmul.f32.gmra.mxu0 %v10237
    %v10386 = vpop.f32.mrf.mxu0
    %v10387 = vadd.f32 0.0, %v10386
    %10388 = vmatmul.f32.gmra.mxu0 %v10238
    %v10389 = vpop.f32.mrf.mxu0
    %v10390 = vadd.f32 0.0, %v10389
    %10391 = vmatmul.f32.gmra.mxu0 %v10239
    %v10392 = vpop.f32.mrf.mxu0
    %v10393 = vadd.f32 0.0, %v10392
    %10394 = vmatmul.f32.gmra.mxu0 %v10240
    %v10395 = vpop.f32.mrf.mxu0
    %v10396 = vadd.f32 0.0, %v10395
    %10397 = vmatmul.f32.gmra.mxu0 %v10241
    %v10398 = vpop.f32.mrf.mxu0
    %v10399 = vadd.f32 0.0, %v10398
    %10400 = vmatmul.f32.gmra.mxu0 %v10242
    %v10401 = vpop.f32.mrf.mxu0
    %v10402 = vadd.f32 0.0, %v10401
    %10403 = vmatmul.f32.gmra.mxu0 %v10243
    %v10404 = vpop.f32.mrf.mxu0
    %v10405 = vadd.f32 0.0, %v10404
    %10406 = vmatmul.f32.gmra.mxu0 %v10244
    %v10407 = vpop.f32.mrf.mxu0
    %v10408 = vadd.f32 0.0, %v10407
    %10409 = vmatmul.f32.gmra.mxu0 %v10245
    %v10410 = vpop.f32.mrf.mxu0
    %v10411 = vadd.f32 0.0, %v10410
    %10412 = vmatmul.f32.gmra.mxu0 %v10246
    %v10413 = vpop.f32.mrf.mxu0
    %v10414 = vadd.f32 0.0, %v10413
    %10415 = vmatmul.f32.gmra.mxu0 %v10247
    %v10416 = vpop.f32.mrf.mxu0
    %v10417 = vadd.f32 0.0, %v10416
    %10418 = vmatmul.f32.gmra.mxu0 %v10248
    %v10419 = vpop.f32.mrf.mxu0
    %v10420 = vadd.f32 0.0, %v10419
    %10421 = vmatmul.f32.gmra.mxu0 %v10249
    %v10422 = vpop.f32.mrf.mxu0
    %v10423 = vadd.f32 0.0, %v10422
    %10424 = vmatmul.f32.gmra.mxu0 %v10250
    %v10425 = vpop.f32.mrf.mxu0
    %v10426 = vadd.f32 0.0, %v10425
    %10427 = vmatmul.f32.gmra.mxu0 %v10251
    %v10428 = vpop.f32.mrf.mxu0
    %v10429 = vadd.f32 0.0, %v10428
    %10430 = vmatmul.f32.gmra.mxu0 %v10252
    %v10431 = vpop.f32.mrf.mxu0
    %v10432 = vadd.f32 0.0, %v10431
    %10433 = vmatmul.f32.gmra.mxu0 %v10253
    %v10434 = vpop.f32.mrf.mxu0
    %v10435 = vadd.f32 0.0, %v10434
    %10436 = vmatmul.f32.gmra.mxu0 %v10254
    %v10437 = vpop.f32.mrf.mxu0
    %v10438 = vadd.f32 0.0, %v10437
    %10439 = vmatmul.f32.gmra.mxu0 %v10255
    %v10440 = vpop.f32.mrf.mxu0
    %v10441 = vadd.f32 0.0, %v10440
    %10442 = vmatmul.f32.gmra.mxu0 %v10256
    %v10443 = vpop.f32.mrf.mxu0
    %v10444 = vadd.f32 0.0, %v10443
    %10445 = vmatmul.f32.gmra.mxu0 %v10257
    %v10446 = vpop.f32.mrf.mxu0
    %v10447 = vadd.f32 0.0, %v10446
    %10448 = vmatmul.f32.gmra.mxu0 %v10258
    %v10449 = vpop.f32.mrf.mxu0
    %v10450 = vadd.f32 0.0, %v10449
    %10451 = vmatmul.f32.gmra.mxu0 %v10259
    %v10452 = vpop.f32.mrf.mxu0
    %v10453 = vadd.f32 0.0, %v10452
    %10454 = vmatmul.f32.gmra.mxu0 %v10260
    %v10455 = vpop.f32.mrf.mxu0
    %v10456 = vadd.f32 0.0, %v10455
    %10457 = vmatmul.f32.gmra.mxu0 %v10261
    %v10458 = vpop.f32.mrf.mxu0
    %v10459 = vadd.f32 0.0, %v10458
    %10460 = vmatmul.f32.gmra.mxu0 %v10262
    %v10461 = vpop.f32.mrf.mxu0
    %v10462 = vadd.f32 0.0, %v10461
    %10463 = vmatmul.f32.gmra.mxu0 %v10263
    %v10464 = vpop.f32.mrf.mxu0
    %v10465 = vadd.f32 0.0, %v10464
    %10466 = vmatmul.f32.gmra.mxu0 %v10264
    %v10467 = vpop.f32.mrf.mxu0
    %v10468 = vadd.f32 0.0, %v10467
    %10469 = vmatmul.f32.gmra.mxu0 %v10265
    %v10470 = vpop.f32.mrf.mxu0
    %v10471 = vadd.f32 0.0, %v10470
    %10472 = vmatmul.f32.gmra.mxu0 %v10266
    %v10473 = vpop.f32.mrf.mxu0
    %v10474 = vadd.f32 0.0, %v10473
    %10475 = vmatmul.f32.gmra.mxu0 %v10267
    %v10476 = vpop.f32.mrf.mxu0
    %v10477 = vadd.f32 0.0, %v10476
    %10478 = vmatmul.f32.gmra.mxu0 %v10268
    %v10479 = vpop.f32.mrf.mxu0
    %v10480 = vadd.f32 0.0, %v10479
    %10481 = vmatmul.f32.gmra.mxu0 %v10269
    %v10482 = vpop.f32.mrf.mxu0
    %v10483 = vadd.f32 0.0, %v10482
    %10484 = vmatmul.f32.gmra.mxu0 %v10270
    %v10485 = vpop.f32.mrf.mxu0
    %v10486 = vadd.f32 0.0, %v10485
    %10487 = vmatmul.f32.gmra.mxu0 %v10271
    %v10488 = vpop.f32.mrf.mxu0
    %v10489 = vadd.f32 0.0, %v10488
    %10490 = vmatmul.f32.gmra.mxu0 %v10272
    %v10491 = vpop.f32.mrf.mxu0
    %v10492 = vadd.f32 0.0, %v10491
    %10493 = vmatmul.f32.gmra.mxu0 %v10273
    %v10494 = vpop.f32.mrf.mxu0
    %v10495 = vadd.f32 0.0, %v10494
    %10496 = vmatmul.f32.gmra.mxu0 %v10274
    %v10497 = vpop.f32.mrf.mxu0
    %v10498 = vadd.f32 0.0, %v10497
    %10499 = vmatmul.f32.gmra.mxu0 %v10275
    %v10500 = vpop.f32.mrf.mxu0
    %v10501 = vadd.f32 0.0, %v10500
    %10502 = vmatmul.f32.gmra.mxu0 %v10276
    %v10503 = vpop.f32.mrf.mxu0
    %v10504 = vadd.f32 0.0, %v10503
    %10505 = vmatmul.f32.gmra.mxu0 %v10277
    %v10506 = vpop.f32.mrf.mxu0
    %v10507 = vadd.f32 0.0, %v10506
    %10508 = vmatmul.f32.gmra.mxu0 %v10278
    %v10509 = vpop.f32.mrf.mxu0
    %v10510 = vadd.f32 0.0, %v10509
    %10511 = vmatmul.f32.gmra.mxu0 %v10279
    %v10512 = vpop.f32.mrf.mxu0
    %v10513 = vadd.f32 0.0, %v10512
    %10514 = vmatmul.f32.gmra.mxu0 %v10280
    %v10515 = vpop.f32.mrf.mxu0
    %v10516 = vadd.f32 0.0, %v10515
    %10517 = vmatmul.f32.gmra.mxu0 %v10281
    %v10518 = vpop.f32.mrf.mxu0
    %v10519 = vadd.f32 0.0, %v10518
    %10520 = vmatmul.f32.gmra.mxu0 %v10282
    %v10521 = vpop.f32.mrf.mxu0
    %v10522 = vadd.f32 0.0, %v10521
    %10523 = vmatmul.f32.gmra.mxu0 %v10283
    %v10524 = vpop.f32.mrf.mxu0
    %v10525 = vadd.f32 0.0, %v10524
    %10526 = vmatmul.f32.gmra.mxu0 %v10284
    %v10527 = vpop.f32.mrf.mxu0
    %v10528 = vadd.f32 0.0, %v10527
    %10529 = vmatmul.f32.gmra.mxu0 %v10285
    %v10530 = vpop.f32.mrf.mxu0
    %v10531 = vadd.f32 0.0, %v10530
    %10532 = vmatmul.f32.gmra.mxu0 %v10286
    %v10533 = vpop.f32.mrf.mxu0
    %v10534 = vadd.f32 0.0, %v10533
    %10535 = vmatmul.f32.gmra.mxu0 %v10287
    %v10536 = vpop.f32.mrf.mxu0
    %v10537 = vadd.f32 0.0, %v10536
    %10538 = vmatmul.f32.gmra.mxu0 %v10288
    %v10539 = vpop.f32.mrf.mxu0
    %v10540 = vadd.f32 0.0, %v10539
    %10541 = vmatmul.f32.gmra.mxu0 %v10289
    %v10542 = vpop.f32.mrf.mxu0
    %v10543 = vadd.f32 0.0, %v10542
    %10544 = vmatmul.f32.gmra.mxu0 %v10290
    %v10545 = vpop.f32.mrf.mxu0
    %v10546 = vadd.f32 0.0, %v10545
    %10547 = vmatmul.f32.gmra.mxu0 %v10291
    %v10548 = vpop.f32.mrf.mxu0
    %v10549 = vadd.f32 0.0, %v10548
    %10550 = vmatmul.f32.gmra.mxu0 %v10292
    %v10551 = vpop.f32.mrf.mxu0
    %v10552 = vadd.f32 0.0, %v10551
    %10553 = vmatmul.f32.gmra.mxu0 %v10293
    %v10554 = vpop.f32.mrf.mxu0
    %v10555 = vadd.f32 0.0, %v10554
    %10556 = vmatmul.f32.gmra.mxu0 %v10294
    %v10557 = vpop.f32.mrf.mxu0
    %v10558 = vadd.f32 0.0, %v10557
    %10559 = vmatmul.f32.gmra.mxu0 %v10295
    %v10560 = vpop.f32.mrf.mxu0
    %v10561 = vadd.f32 0.0, %v10560
    %10562 = vmatmul.f32.gmra.mxu0 %v10296
    %v10563 = vpop.f32.mrf.mxu0
    %v10564 = vadd.f32 0.0, %v10563
    %10565 = vmatmul.f32.gmra.mxu0 %v10297
    %v10566 = vpop.f32.mrf.mxu0
    %v10567 = vadd.f32 0.0, %v10566
    %10568 = vmatmul.f32.gmra.mxu0 %v10298
    %v10569 = vpop.f32.mrf.mxu0
    %v10570 = vadd.f32 0.0, %v10569
    %10571 = vmatmul.f32.gmra.mxu0 %v10299
    %v10572 = vpop.f32.mrf.mxu0
    %v10573 = vadd.f32 0.0, %v10572
    %10574 = vmatmul.f32.gmra.mxu0 %v10300
    %v10575 = vpop.f32.mrf.mxu0
    %v10576 = vadd.f32 0.0, %v10575
    %10577 = vdwg.mxu0
    %v10578 = vadd.f32 %v10139, %v10336
    %v10579 = vadd.f32 %v10140, %v10339
    %v10580 = vadd.f32 %v10141, %v10342
    %v10581 = vadd.f32 %v10142, %v10345
    %v10582 = vadd.f32 %v10143, %v10348
    %v10583 = vadd.f32 %v10144, %v10351
    %v10584 = vadd.f32 %v10145, %v10354
    %v10585 = vadd.f32 %v10146, %v10357
    %v10586 = vadd.f32 %v10147, %v10360
    %v10587 = vadd.f32 %v10148, %v10363
    %v10588 = vadd.f32 %v10149, %v10366
    %v10589 = vadd.f32 %v10150, %v10369
    %v10590 = vadd.f32 %v10151, %v10372
    %v10591 = vadd.f32 %v10152, %v10375
    %v10592 = vadd.f32 %v10153, %v10378
    %v10593 = vadd.f32 %v10154, %v10381
    %v10594 = vadd.f32 %v10155, %v10384
    %v10595 = vadd.f32 %v10156, %v10387
    %v10596 = vadd.f32 %v10157, %v10390
    %v10597 = vadd.f32 %v10158, %v10393
    %v10598 = vadd.f32 %v10159, %v10396
    %v10599 = vadd.f32 %v10160, %v10399
    %v10600 = vadd.f32 %v10161, %v10402
    %v10601 = vadd.f32 %v10162, %v10405
    %v10602 = vadd.f32 %v10163, %v10408
    %v10603 = vadd.f32 %v10164, %v10411
    %v10604 = vadd.f32 %v10165, %v10414
    %v10605 = vadd.f32 %v10166, %v10417
    %v10606 = vadd.f32 %v10167, %v10420
    %v10607 = vadd.f32 %v10168, %v10423
    %v10608 = vadd.f32 %v10169, %v10426
    %v10609 = vadd.f32 %v10170, %v10429
    %v10610 = vadd.f32 %v10171, %v10432
    %v10611 = vadd.f32 %v10172, %v10435
    %v10612 = vadd.f32 %v10173, %v10438
    %v10613 = vadd.f32 %v10174, %v10441
    %v10614 = vadd.f32 %v10175, %v10444
    %v10615 = vadd.f32 %v10176, %v10447
    %v10616 = vadd.f32 %v10177, %v10450
    %v10617 = vadd.f32 %v10178, %v10453
    %v10618 = vadd.f32 %v10179, %v10456
    %v10619 = vadd.f32 %v10180, %v10459
    %v10620 = vadd.f32 %v10181, %v10462
    %v10621 = vadd.f32 %v10182, %v10465
    %v10622 = vadd.f32 %v10183, %v10468
    %v10623 = vadd.f32 %v10184, %v10471
    %v10624 = vadd.f32 %v10185, %v10474
    %v10625 = vadd.f32 %v10186, %v10477
    %v10626 = vadd.f32 %v10187, %v10480
    %v10627 = vadd.f32 %v10188, %v10483
    %v10628 = vadd.f32 %v10189, %v10486
    %v10629 = vadd.f32 %v10190, %v10489
    %v10630 = vadd.f32 %v10191, %v10492
    %v10631 = vadd.f32 %v10192, %v10495
    %v10632 = vadd.f32 %v10193, %v10498
    %v10633 = vadd.f32 %v10194, %v10501
    %v10634 = vadd.f32 %v10195, %v10504
    %v10635 = vadd.f32 %v10196, %v10507
    %v10636 = vadd.f32 %v10197, %v10510
    %v10637 = vadd.f32 %v10198, %v10513
    %v10638 = vadd.f32 %v10199, %v10516
    %v10639 = vadd.f32 %v10200, %v10519
    %v10640 = vadd.f32 %v10201, %v10522
    %v10641 = vadd.f32 %v10202, %v10525
    %v10642 = vadd.f32 %v10203, %v10528
    %v10643 = vadd.f32 %v10204, %v10531
    %v10644 = vadd.f32 %v10205, %v10534
    %v10645 = vadd.f32 %v10206, %v10537
    %v10646 = vadd.f32 %v10207, %v10540
    %v10647 = vadd.f32 %v10208, %v10543
    %v10648 = vadd.f32 %v10209, %v10546
    %v10649 = vadd.f32 %v10210, %v10549
    %v10650 = vadd.f32 %v10211, %v10552
    %v10651 = vadd.f32 %v10212, %v10555
    %v10652 = vadd.f32 %v10213, %v10558
    %v10653 = vadd.f32 %v10214, %v10561
    %v10654 = vadd.f32 %v10215, %v10564
    %v10655 = vadd.f32 %v10216, %v10567
    %v10656 = vadd.f32 %v10217, %v10570
    %v10657 = vadd.f32 %v10218, %v10573
    %v10658 = vadd.f32 %v10219, %v10576
    %v10659 = vld [vmem:[#allocation2 + $0x2b] sm:$0xff]
    %v10660 = vld [vmem:[#allocation2 + $0x33] sm:$0xff]
    %v10661 = vld [vmem:[#allocation2 + $0x3b] sm:$0xff]
    %v10662 = vld [vmem:[#allocation2 + $0x43] sm:$0xff]
    %v10663 = vld [vmem:[#allocation2 + $0x4b] sm:$0xff]
    %v10664 = vld [vmem:[#allocation2 + $0x53] sm:$0xff]
    %v10665 = vld [vmem:[#allocation2 + $0x5b] sm:$0xff]
    %v10666 = vld [vmem:[#allocation2 + $0x63] sm:$0xff]
    %v10667 = vld [vmem:[#allocation2 + $0x6b] sm:$0xff]
    %v10668 = vld [vmem:[#allocation2 + $0x73] sm:$0xff]
    %v10669 = vld [vmem:[#allocation2 + $0x7b] sm:$0xff]
    %v10670 = vld [vmem:[#allocation2 + $0x83] sm:$0xff]
    %v10671 = vld [vmem:[#allocation2 + $0x8b] sm:$0xff]
    %v10672 = vld [vmem:[#allocation2 + $0x93] sm:$0xff]
    %v10673 = vld [vmem:[#allocation2 + $0x9b] sm:$0xff]
    %v10674 = vld [vmem:[#allocation2 + $0xa3] sm:$0xff]
    %v10675 = vld [vmem:[#allocation2 + $0xab] sm:$0xff]
    %v10676 = vld [vmem:[#allocation2 + $0xb3] sm:$0xff]
    %v10677 = vld [vmem:[#allocation2 + $0xbb] sm:$0xff]
    %v10678 = vld [vmem:[#allocation2 + $0xc3] sm:$0xff]
    %v10679 = vld [vmem:[#allocation2 + $0xcb] sm:$0xff]
    %v10680 = vld [vmem:[#allocation2 + $0xd3] sm:$0xff]
    %v10681 = vld [vmem:[#allocation2 + $0xdb] sm:$0xff]
    %v10682 = vld [vmem:[#allocation2 + $0xe3] sm:$0xff]
    %v10683 = vld [vmem:[#allocation2 + $0xeb] sm:$0xff]
    %v10684 = vld [vmem:[#allocation2 + $0xf3] sm:$0xff]
    %v10685 = vld [vmem:[#allocation2 + $0xfb] sm:$0xff]
    %v10686 = vld [vmem:[#allocation2 + $0x103] sm:$0xff]
    %v10687 = vld [vmem:[#allocation2 + $0x10b] sm:$0xff]
    %v10688 = vld [vmem:[#allocation2 + $0x113] sm:$0xff]
    %v10689 = vld [vmem:[#allocation2 + $0x11b] sm:$0xff]
    %v10690 = vld [vmem:[#allocation2 + $0x123] sm:$0xff]
    %v10691 = vld [vmem:[#allocation2 + $0x12b] sm:$0xff]
    %v10692 = vld [vmem:[#allocation2 + $0x133] sm:$0xff]
    %v10693 = vld [vmem:[#allocation2 + $0x13b] sm:$0xff]
    %v10694 = vld [vmem:[#allocation2 + $0x143] sm:$0xff]
    %v10695 = vld [vmem:[#allocation2 + $0x14b] sm:$0xff]
    %v10696 = vld [vmem:[#allocation2 + $0x153] sm:$0xff]
    %v10697 = vld [vmem:[#allocation2 + $0x15b] sm:$0xff]
    %v10698 = vld [vmem:[#allocation2 + $0x163] sm:$0xff]
    %v10699 = vld [vmem:[#allocation2 + $0x16b] sm:$0xff]
    %v10700 = vld [vmem:[#allocation2 + $0x173] sm:$0xff]
    %v10701 = vld [vmem:[#allocation2 + $0x17b] sm:$0xff]
    %v10702 = vld [vmem:[#allocation2 + $0x183] sm:$0xff]
    %v10703 = vld [vmem:[#allocation2 + $0x18b] sm:$0xff]
    %v10704 = vld [vmem:[#allocation2 + $0x193] sm:$0xff]
    %v10705 = vld [vmem:[#allocation2 + $0x19b] sm:$0xff]
    %v10706 = vld [vmem:[#allocation2 + $0x1a3] sm:$0xff]
    %v10707 = vld [vmem:[#allocation2 + $0x1ab] sm:$0xff]
    %v10708 = vld [vmem:[#allocation2 + $0x1b3] sm:$0xff]
    %v10709 = vld [vmem:[#allocation2 + $0x1bb] sm:$0xff]
    %v10710 = vld [vmem:[#allocation2 + $0x1c3] sm:$0xff]
    %v10711 = vld [vmem:[#allocation2 + $0x1cb] sm:$0xff]
    %v10712 = vld [vmem:[#allocation2 + $0x1d3] sm:$0xff]
    %v10713 = vld [vmem:[#allocation2 + $0x1db] sm:$0xff]
    %v10714 = vld [vmem:[#allocation2 + $0x1e3] sm:$0xff]
    %v10715 = vld [vmem:[#allocation2 + $0x1eb] sm:$0xff]
    %v10716 = vld [vmem:[#allocation2 + $0x1f3] sm:$0xff]
    %v10717 = vld [vmem:[#allocation2 + $0x1fb] sm:$0xff]
    %v10718 = vld [vmem:[#allocation2 + $0x203] sm:$0xff]
    %v10719 = vld [vmem:[#allocation2 + $0x20b] sm:$0xff]
    %v10720 = vld [vmem:[#allocation2 + $0x213] sm:$0xff]
    %v10721 = vld [vmem:[#allocation2 + $0x21b] sm:$0xff]
    %v10722 = vld [vmem:[#allocation2 + $0x223] sm:$0xff]
    %v10723 = vld [vmem:[#allocation2 + $0x22b] sm:$0xff]
    %v10724 = vld [vmem:[#allocation2 + $0x233] sm:$0xff]
    %v10725 = vld [vmem:[#allocation2 + $0x23b] sm:$0xff]
    %v10726 = vld [vmem:[#allocation2 + $0x243] sm:$0xff]
    %v10727 = vld [vmem:[#allocation2 + $0x24b] sm:$0xff]
    %v10728 = vld [vmem:[#allocation2 + $0x253] sm:$0xff]
    %v10729 = vld [vmem:[#allocation2 + $0x25b] sm:$0xff]
    %v10730 = vld [vmem:[#allocation2 + $0x263] sm:$0xff]
    %v10731 = vld [vmem:[#allocation2 + $0x26b] sm:$0xff]
    %v10732 = vld [vmem:[#allocation2 + $0x273] sm:$0xff]
    %v10733 = vld [vmem:[#allocation2 + $0x27b] sm:$0xff]
    %v10734 = vld [vmem:[#allocation2 + $0x283] sm:$0xff]
    %v10735 = vld [vmem:[#allocation2 + $0x28b] sm:$0xff]
    %v10736 = vld [vmem:[#allocation2 + $0x293] sm:$0xff]
    %v10737 = vld [vmem:[#allocation2 + $0x29b] sm:$0xff]
    %v10738 = vld [vmem:[#allocation2 + $0x2a3] sm:$0xff]
    %v10739 = vld [vmem:[#allocation2 + $0x2ab] sm:$0xff]
    %s10740 = scalar_lea.vmem %s3, 1024
    %v10741 = vld [vmem:[%s10740] sm:$0xff]
    %v10742 = vld [vmem:[%s10740 + $0x8] sm:$0xff]
    %v10743 = vld [vmem:[%s10740 + $0x10] sm:$0xff]
    %v10744 = vld [vmem:[%s10740 + $0x18] sm:$0xff]
    %v10745 = vld [vmem:[%s10740 + $0x20] sm:$0xff]
    %v10746 = vld [vmem:[%s10740 + $0x28] sm:$0xff]
    %v10747 = vld [vmem:[%s10740 + $0x30] sm:$0xff]
    %v10748 = vld [vmem:[%s10740 + $0x38] sm:$0xff]
    %v10749 = vld [vmem:[%s10740 + $0x40] sm:$0xff]
    %v10750 = vld [vmem:[%s10740 + $0x48] sm:$0xff]
    %v10751 = vld [vmem:[%s10740 + $0x50] sm:$0xff]
    %v10752 = vld [vmem:[%s10740 + $0x58] sm:$0xff]
    %v10753 = vld [vmem:[%s10740 + $0x60] sm:$0xff]
    %v10754 = vld [vmem:[%s10740 + $0x68] sm:$0xff]
    %v10755 = vld [vmem:[%s10740 + $0x70] sm:$0xff]
    %v10756 = vld [vmem:[%s10740 + $0x78] sm:$0xff]
    %10757 = vmatpush.msra.mxu0 %v10756
    %10758 = vmatpush.msra.mxu0 %v10755
    %10759 = vmatpush.msra.mxu0 %v10754
    %10760 = vmatpush.msra.mxu0 %v10753
    %10761 = vmatpush.msra.mxu0 %v10752
    %10762 = vmatpush.msra.mxu0 %v10751
    %10763 = vmatpush.msra.mxu0 %v10750
    %10764 = vmatpush.msra.mxu0 %v10749
    %10765 = vmatpush.msra.mxu0 %v10748
    %10766 = vmatpush.msra.mxu0 %v10747
    %10767 = vmatpush.msra.mxu0 %v10746
    %10768 = vmatpush.msra.mxu0 %v10745
    %10769 = vmatpush.msra.mxu0 %v10744
    %10770 = vmatpush.msra.mxu0 %v10743
    %10771 = vmatpush.msra.mxu0 %v10742
    %10772 = vmatpush.msra.mxu0 %v10741
    %10773 = vmatmul.f32.gmra.mxu0 %v10659
    %v10774 = vpop.f32.mrf.mxu0
    %v10775 = vadd.f32 0.0, %v10774
    %10776 = vmatmul.f32.gmra.mxu0 %v10660
    %v10777 = vpop.f32.mrf.mxu0
    %v10778 = vadd.f32 0.0, %v10777
    %10779 = vmatmul.f32.gmra.mxu0 %v10661
    %v10780 = vpop.f32.mrf.mxu0
    %v10781 = vadd.f32 0.0, %v10780
    %10782 = vmatmul.f32.gmra.mxu0 %v10662
    %v10783 = vpop.f32.mrf.mxu0
    %v10784 = vadd.f32 0.0, %v10783
    %10785 = vmatmul.f32.gmra.mxu0 %v10663
    %v10786 = vpop.f32.mrf.mxu0
    %v10787 = vadd.f32 0.0, %v10786
    %10788 = vmatmul.f32.gmra.mxu0 %v10664
    %v10789 = vpop.f32.mrf.mxu0
    %v10790 = vadd.f32 0.0, %v10789
    %10791 = vmatmul.f32.gmra.mxu0 %v10665
    %v10792 = vpop.f32.mrf.mxu0
    %v10793 = vadd.f32 0.0, %v10792
    %10794 = vmatmul.f32.gmra.mxu0 %v10666
    %v10795 = vpop.f32.mrf.mxu0
    %v10796 = vadd.f32 0.0, %v10795
    %10797 = vmatmul.f32.gmra.mxu0 %v10667
    %v10798 = vpop.f32.mrf.mxu0
    %v10799 = vadd.f32 0.0, %v10798
    %10800 = vmatmul.f32.gmra.mxu0 %v10668
    %v10801 = vpop.f32.mrf.mxu0
    %v10802 = vadd.f32 0.0, %v10801
    %10803 = vmatmul.f32.gmra.mxu0 %v10669
    %v10804 = vpop.f32.mrf.mxu0
    %v10805 = vadd.f32 0.0, %v10804
    %10806 = vmatmul.f32.gmra.mxu0 %v10670
    %v10807 = vpop.f32.mrf.mxu0
    %v10808 = vadd.f32 0.0, %v10807
    %10809 = vmatmul.f32.gmra.mxu0 %v10671
    %v10810 = vpop.f32.mrf.mxu0
    %v10811 = vadd.f32 0.0, %v10810
    %10812 = vmatmul.f32.gmra.mxu0 %v10672
    %v10813 = vpop.f32.mrf.mxu0
    %v10814 = vadd.f32 0.0, %v10813
    %10815 = vmatmul.f32.gmra.mxu0 %v10673
    %v10816 = vpop.f32.mrf.mxu0
    %v10817 = vadd.f32 0.0, %v10816
    %10818 = vmatmul.f32.gmra.mxu0 %v10674
    %v10819 = vpop.f32.mrf.mxu0
    %v10820 = vadd.f32 0.0, %v10819
    %10821 = vmatmul.f32.gmra.mxu0 %v10675
    %v10822 = vpop.f32.mrf.mxu0
    %v10823 = vadd.f32 0.0, %v10822
    %10824 = vmatmul.f32.gmra.mxu0 %v10676
    %v10825 = vpop.f32.mrf.mxu0
    %v10826 = vadd.f32 0.0, %v10825
    %10827 = vmatmul.f32.gmra.mxu0 %v10677
    %v10828 = vpop.f32.mrf.mxu0
    %v10829 = vadd.f32 0.0, %v10828
    %10830 = vmatmul.f32.gmra.mxu0 %v10678
    %v10831 = vpop.f32.mrf.mxu0
    %v10832 = vadd.f32 0.0, %v10831
    %10833 = vmatmul.f32.gmra.mxu0 %v10679
    %v10834 = vpop.f32.mrf.mxu0
    %v10835 = vadd.f32 0.0, %v10834
    %10836 = vmatmul.f32.gmra.mxu0 %v10680
    %v10837 = vpop.f32.mrf.mxu0
    %v10838 = vadd.f32 0.0, %v10837
    %10839 = vmatmul.f32.gmra.mxu0 %v10681
    %v10840 = vpop.f32.mrf.mxu0
    %v10841 = vadd.f32 0.0, %v10840
    %10842 = vmatmul.f32.gmra.mxu0 %v10682
    %v10843 = vpop.f32.mrf.mxu0
    %v10844 = vadd.f32 0.0, %v10843
    %10845 = vmatmul.f32.gmra.mxu0 %v10683
    %v10846 = vpop.f32.mrf.mxu0
    %v10847 = vadd.f32 0.0, %v10846
    %10848 = vmatmul.f32.gmra.mxu0 %v10684
    %v10849 = vpop.f32.mrf.mxu0
    %v10850 = vadd.f32 0.0, %v10849
    %10851 = vmatmul.f32.gmra.mxu0 %v10685
    %v10852 = vpop.f32.mrf.mxu0
    %v10853 = vadd.f32 0.0, %v10852
    %10854 = vmatmul.f32.gmra.mxu0 %v10686
    %v10855 = vpop.f32.mrf.mxu0
    %v10856 = vadd.f32 0.0, %v10855
    %10857 = vmatmul.f32.gmra.mxu0 %v10687
    %v10858 = vpop.f32.mrf.mxu0
    %v10859 = vadd.f32 0.0, %v10858
    %10860 = vmatmul.f32.gmra.mxu0 %v10688
    %v10861 = vpop.f32.mrf.mxu0
    %v10862 = vadd.f32 0.0, %v10861
    %10863 = vmatmul.f32.gmra.mxu0 %v10689
    %v10864 = vpop.f32.mrf.mxu0
    %v10865 = vadd.f32 0.0, %v10864
    %10866 = vmatmul.f32.gmra.mxu0 %v10690
    %v10867 = vpop.f32.mrf.mxu0
    %v10868 = vadd.f32 0.0, %v10867
    %10869 = vmatmul.f32.gmra.mxu0 %v10691
    %v10870 = vpop.f32.mrf.mxu0
    %v10871 = vadd.f32 0.0, %v10870
    %10872 = vmatmul.f32.gmra.mxu0 %v10692
    %v10873 = vpop.f32.mrf.mxu0
    %v10874 = vadd.f32 0.0, %v10873
    %10875 = vmatmul.f32.gmra.mxu0 %v10693
    %v10876 = vpop.f32.mrf.mxu0
    %v10877 = vadd.f32 0.0, %v10876
    %10878 = vmatmul.f32.gmra.mxu0 %v10694
    %v10879 = vpop.f32.mrf.mxu0
    %v10880 = vadd.f32 0.0, %v10879
    %10881 = vmatmul.f32.gmra.mxu0 %v10695
    %v10882 = vpop.f32.mrf.mxu0
    %v10883 = vadd.f32 0.0, %v10882
    %10884 = vmatmul.f32.gmra.mxu0 %v10696
    %v10885 = vpop.f32.mrf.mxu0
    %v10886 = vadd.f32 0.0, %v10885
    %10887 = vmatmul.f32.gmra.mxu0 %v10697
    %v10888 = vpop.f32.mrf.mxu0
    %v10889 = vadd.f32 0.0, %v10888
    %10890 = vmatmul.f32.gmra.mxu0 %v10698
    %v10891 = vpop.f32.mrf.mxu0
    %v10892 = vadd.f32 0.0, %v10891
    %10893 = vmatmul.f32.gmra.mxu0 %v10699
    %v10894 = vpop.f32.mrf.mxu0
    %v10895 = vadd.f32 0.0, %v10894
    %10896 = vmatmul.f32.gmra.mxu0 %v10700
    %v10897 = vpop.f32.mrf.mxu0
    %v10898 = vadd.f32 0.0, %v10897
    %10899 = vmatmul.f32.gmra.mxu0 %v10701
    %v10900 = vpop.f32.mrf.mxu0
    %v10901 = vadd.f32 0.0, %v10900
    %10902 = vmatmul.f32.gmra.mxu0 %v10702
    %v10903 = vpop.f32.mrf.mxu0
    %v10904 = vadd.f32 0.0, %v10903
    %10905 = vmatmul.f32.gmra.mxu0 %v10703
    %v10906 = vpop.f32.mrf.mxu0
    %v10907 = vadd.f32 0.0, %v10906
    %10908 = vmatmul.f32.gmra.mxu0 %v10704
    %v10909 = vpop.f32.mrf.mxu0
    %v10910 = vadd.f32 0.0, %v10909
    %10911 = vmatmul.f32.gmra.mxu0 %v10705
    %v10912 = vpop.f32.mrf.mxu0
    %v10913 = vadd.f32 0.0, %v10912
    %10914 = vmatmul.f32.gmra.mxu0 %v10706
    %v10915 = vpop.f32.mrf.mxu0
    %v10916 = vadd.f32 0.0, %v10915
    %10917 = vmatmul.f32.gmra.mxu0 %v10707
    %v10918 = vpop.f32.mrf.mxu0
    %v10919 = vadd.f32 0.0, %v10918
    %10920 = vmatmul.f32.gmra.mxu0 %v10708
    %v10921 = vpop.f32.mrf.mxu0
    %v10922 = vadd.f32 0.0, %v10921
    %10923 = vmatmul.f32.gmra.mxu0 %v10709
    %v10924 = vpop.f32.mrf.mxu0
    %v10925 = vadd.f32 0.0, %v10924
    %10926 = vmatmul.f32.gmra.mxu0 %v10710
    %v10927 = vpop.f32.mrf.mxu0
    %v10928 = vadd.f32 0.0, %v10927
    %10929 = vmatmul.f32.gmra.mxu0 %v10711
    %v10930 = vpop.f32.mrf.mxu0
    %v10931 = vadd.f32 0.0, %v10930
    %10932 = vmatmul.f32.gmra.mxu0 %v10712
    %v10933 = vpop.f32.mrf.mxu0
    %v10934 = vadd.f32 0.0, %v10933
    %10935 = vmatmul.f32.gmra.mxu0 %v10713
    %v10936 = vpop.f32.mrf.mxu0
    %v10937 = vadd.f32 0.0, %v10936
    %10938 = vmatmul.f32.gmra.mxu0 %v10714
    %v10939 = vpop.f32.mrf.mxu0
    %v10940 = vadd.f32 0.0, %v10939
    %10941 = vmatmul.f32.gmra.mxu0 %v10715
    %v10942 = vpop.f32.mrf.mxu0
    %v10943 = vadd.f32 0.0, %v10942
    %10944 = vmatmul.f32.gmra.mxu0 %v10716
    %v10945 = vpop.f32.mrf.mxu0
    %v10946 = vadd.f32 0.0, %v10945
    %10947 = vmatmul.f32.gmra.mxu0 %v10717
    %v10948 = vpop.f32.mrf.mxu0
    %v10949 = vadd.f32 0.0, %v10948
    %10950 = vmatmul.f32.gmra.mxu0 %v10718
    %v10951 = vpop.f32.mrf.mxu0
    %v10952 = vadd.f32 0.0, %v10951
    %10953 = vmatmul.f32.gmra.mxu0 %v10719
    %v10954 = vpop.f32.mrf.mxu0
    %v10955 = vadd.f32 0.0, %v10954
    %10956 = vmatmul.f32.gmra.mxu0 %v10720
    %v10957 = vpop.f32.mrf.mxu0
    %v10958 = vadd.f32 0.0, %v10957
    %10959 = vmatmul.f32.gmra.mxu0 %v10721
    %v10960 = vpop.f32.mrf.mxu0
    %v10961 = vadd.f32 0.0, %v10960
    %10962 = vmatmul.f32.gmra.mxu0 %v10722
    %v10963 = vpop.f32.mrf.mxu0
    %v10964 = vadd.f32 0.0, %v10963
    %10965 = vmatmul.f32.gmra.mxu0 %v10723
    %v10966 = vpop.f32.mrf.mxu0
    %v10967 = vadd.f32 0.0, %v10966
    %10968 = vmatmul.f32.gmra.mxu0 %v10724
    %v10969 = vpop.f32.mrf.mxu0
    %v10970 = vadd.f32 0.0, %v10969
    %10971 = vmatmul.f32.gmra.mxu0 %v10725
    %v10972 = vpop.f32.mrf.mxu0
    %v10973 = vadd.f32 0.0, %v10972
    %10974 = vmatmul.f32.gmra.mxu0 %v10726
    %v10975 = vpop.f32.mrf.mxu0
    %v10976 = vadd.f32 0.0, %v10975
    %10977 = vmatmul.f32.gmra.mxu0 %v10727
    %v10978 = vpop.f32.mrf.mxu0
    %v10979 = vadd.f32 0.0, %v10978
    %10980 = vmatmul.f32.gmra.mxu0 %v10728
    %v10981 = vpop.f32.mrf.mxu0
    %v10982 = vadd.f32 0.0, %v10981
    %10983 = vmatmul.f32.gmra.mxu0 %v10729
    %v10984 = vpop.f32.mrf.mxu0
    %v10985 = vadd.f32 0.0, %v10984
    %10986 = vmatmul.f32.gmra.mxu0 %v10730
    %v10987 = vpop.f32.mrf.mxu0
    %v10988 = vadd.f32 0.0, %v10987
    %10989 = vmatmul.f32.gmra.mxu0 %v10731
    %v10990 = vpop.f32.mrf.mxu0
    %v10991 = vadd.f32 0.0, %v10990
    %10992 = vmatmul.f32.gmra.mxu0 %v10732
    %v10993 = vpop.f32.mrf.mxu0
    %v10994 = vadd.f32 0.0, %v10993
    %10995 = vmatmul.f32.gmra.mxu0 %v10733
    %v10996 = vpop.f32.mrf.mxu0
    %v10997 = vadd.f32 0.0, %v10996
    %10998 = vmatmul.f32.gmra.mxu0 %v10734
    %v10999 = vpop.f32.mrf.mxu0
    %v11000 = vadd.f32 0.0, %v10999
    %11001 = vmatmul.f32.gmra.mxu0 %v10735
    %v11002 = vpop.f32.mrf.mxu0
    %v11003 = vadd.f32 0.0, %v11002
    %11004 = vmatmul.f32.gmra.mxu0 %v10736
    %v11005 = vpop.f32.mrf.mxu0
    %v11006 = vadd.f32 0.0, %v11005
    %11007 = vmatmul.f32.gmra.mxu0 %v10737
    %v11008 = vpop.f32.mrf.mxu0
    %v11009 = vadd.f32 0.0, %v11008
    %11010 = vmatmul.f32.gmra.mxu0 %v10738
    %v11011 = vpop.f32.mrf.mxu0
    %v11012 = vadd.f32 0.0, %v11011
    %11013 = vmatmul.f32.gmra.mxu0 %v10739
    %v11014 = vpop.f32.mrf.mxu0
    %v11015 = vadd.f32 0.0, %v11014
    %11016 = vdwg.mxu0
    %v11017 = vadd.f32 %v10578, %v10775
    %v11018 = vadd.f32 %v10579, %v10778
    %v11019 = vadd.f32 %v10580, %v10781
    %v11020 = vadd.f32 %v10581, %v10784
    %v11021 = vadd.f32 %v10582, %v10787
    %v11022 = vadd.f32 %v10583, %v10790
    %v11023 = vadd.f32 %v10584, %v10793
    %v11024 = vadd.f32 %v10585, %v10796
    %v11025 = vadd.f32 %v10586, %v10799
    %v11026 = vadd.f32 %v10587, %v10802
    %v11027 = vadd.f32 %v10588, %v10805
    %v11028 = vadd.f32 %v10589, %v10808
    %v11029 = vadd.f32 %v10590, %v10811
    %v11030 = vadd.f32 %v10591, %v10814
    %v11031 = vadd.f32 %v10592, %v10817
    %v11032 = vadd.f32 %v10593, %v10820
    %v11033 = vadd.f32 %v10594, %v10823
    %v11034 = vadd.f32 %v10595, %v10826
    %v11035 = vadd.f32 %v10596, %v10829
    %v11036 = vadd.f32 %v10597, %v10832
    %v11037 = vadd.f32 %v10598, %v10835
    %v11038 = vadd.f32 %v10599, %v10838
    %v11039 = vadd.f32 %v10600, %v10841
    %v11040 = vadd.f32 %v10601, %v10844
    %v11041 = vadd.f32 %v10602, %v10847
    %v11042 = vadd.f32 %v10603, %v10850
    %v11043 = vadd.f32 %v10604, %v10853
    %v11044 = vadd.f32 %v10605, %v10856
    %v11045 = vadd.f32 %v10606, %v10859
    %v11046 = vadd.f32 %v10607, %v10862
    %v11047 = vadd.f32 %v10608, %v10865
    %v11048 = vadd.f32 %v10609, %v10868
    %v11049 = vadd.f32 %v10610, %v10871
    %v11050 = vadd.f32 %v10611, %v10874
    %v11051 = vadd.f32 %v10612, %v10877
    %v11052 = vadd.f32 %v10613, %v10880
    %v11053 = vadd.f32 %v10614, %v10883
    %v11054 = vadd.f32 %v10615, %v10886
    %v11055 = vadd.f32 %v10616, %v10889
    %v11056 = vadd.f32 %v10617, %v10892
    %v11057 = vadd.f32 %v10618, %v10895
    %v11058 = vadd.f32 %v10619, %v10898
    %v11059 = vadd.f32 %v10620, %v10901
    %v11060 = vadd.f32 %v10621, %v10904
    %v11061 = vadd.f32 %v10622, %v10907
    %v11062 = vadd.f32 %v10623, %v10910
    %v11063 = vadd.f32 %v10624, %v10913
    %v11064 = vadd.f32 %v10625, %v10916
    %v11065 = vadd.f32 %v10626, %v10919
    %v11066 = vadd.f32 %v10627, %v10922
    %v11067 = vadd.f32 %v10628, %v10925
    %v11068 = vadd.f32 %v10629, %v10928
    %v11069 = vadd.f32 %v10630, %v10931
    %v11070 = vadd.f32 %v10631, %v10934
    %v11071 = vadd.f32 %v10632, %v10937
    %v11072 = vadd.f32 %v10633, %v10940
    %v11073 = vadd.f32 %v10634, %v10943
    %v11074 = vadd.f32 %v10635, %v10946
    %v11075 = vadd.f32 %v10636, %v10949
    %v11076 = vadd.f32 %v10637, %v10952
    %v11077 = vadd.f32 %v10638, %v10955
    %v11078 = vadd.f32 %v10639, %v10958
    %v11079 = vadd.f32 %v10640, %v10961
    %v11080 = vadd.f32 %v10641, %v10964
    %v11081 = vadd.f32 %v10642, %v10967
    %v11082 = vadd.f32 %v10643, %v10970
    %v11083 = vadd.f32 %v10644, %v10973
    %v11084 = vadd.f32 %v10645, %v10976
    %v11085 = vadd.f32 %v10646, %v10979
    %v11086 = vadd.f32 %v10647, %v10982
    %v11087 = vadd.f32 %v10648, %v10985
    %v11088 = vadd.f32 %v10649, %v10988
    %v11089 = vadd.f32 %v10650, %v10991
    %v11090 = vadd.f32 %v10651, %v10994
    %v11091 = vadd.f32 %v10652, %v10997
    %v11092 = vadd.f32 %v10653, %v11000
    %v11093 = vadd.f32 %v10654, %v11003
    %v11094 = vadd.f32 %v10655, %v11006
    %v11095 = vadd.f32 %v10656, %v11009
    %v11096 = vadd.f32 %v10657, %v11012
    %v11097 = vadd.f32 %v10658, %v11015
    %v11098 = vmul.f32 %v11017, %v5983
    %v11099 = vmul.f32 %v11018, %v5988
    %v11100 = vmul.f32 %v11019, %v5993
    %v11101 = vmul.f32 %v11020, %v5998
    %v11102 = vmul.f32 %v11021, %v6003
    %v11103 = vmul.f32 %v11022, %v6008
    %v11104 = vmul.f32 %v11023, %v6013
    %v11105 = vmul.f32 %v11024, %v6018
    %v11106 = vmul.f32 %v11025, %v6023
    %v11107 = vmul.f32 %v11026, %v6028
    %v11108 = vmul.f32 %v11027, %v6033
    %v11109 = vmul.f32 %v11028, %v6038
    %v11110 = vmul.f32 %v11029, %v6043
    %v11111 = vmul.f32 %v11030, %v6048
    %v11112 = vmul.f32 %v11031, %v6053
    %v11113 = vmul.f32 %v11032, %v6058
    %v11114 = vmul.f32 %v11033, %v6063
    %v11115 = vmul.f32 %v11034, %v6068
    %v11116 = vmul.f32 %v11035, %v6073
    %v11117 = vmul.f32 %v11036, %v6078
    %v11118 = vmul.f32 %v11037, %v6083
    %v11119 = vmul.f32 %v11038, %v6088
    %v11120 = vmul.f32 %v11039, %v6093
    %v11121 = vmul.f32 %v11040, %v6098
    %v11122 = vmul.f32 %v11041, %v6103
    %v11123 = vmul.f32 %v11042, %v6108
    %v11124 = vmul.f32 %v11043, %v6113
    %v11125 = vmul.f32 %v11044, %v6118
    %v11126 = vmul.f32 %v11045, %v6123
    %v11127 = vmul.f32 %v11046, %v6128
    %v11128 = vmul.f32 %v11047, %v6133
    %v11129 = vmul.f32 %v11048, %v6138
    %v11130 = vmul.f32 %v11049, %v6143
    %v11131 = vmul.f32 %v11050, %v6148
    %v11132 = vmul.f32 %v11051, %v6153
    %v11133 = vmul.f32 %v11052, %v6158
    %v11134 = vmul.f32 %v11053, %v6163
    %v11135 = vmul.f32 %v11054, %v6168
    %v11136 = vmul.f32 %v11055, %v6173
    %v11137 = vmul.f32 %v11056, %v6178
    %v11138 = vmul.f32 %v11057, %v6183
    %v11139 = vmul.f32 %v11058, %v6188
    %v11140 = vmul.f32 %v11059, %v6193
    %v11141 = vmul.f32 %v11060, %v6198
    %v11142 = vmul.f32 %v11061, %v6203
    %v11143 = vmul.f32 %v11062, %v6208
    %v11144 = vmul.f32 %v11063, %v6213
    %v11145 = vmul.f32 %v11064, %v6218
    %v11146 = vmul.f32 %v11065, %v6223
    %v11147 = vmul.f32 %v11066, %v6228
    %v11148 = vmul.f32 %v11067, %v6233
    %v11149 = vmul.f32 %v11068, %v6238
    %v11150 = vmul.f32 %v11069, %v6243
    %v11151 = vmul.f32 %v11070, %v6248
    %v11152 = vmul.f32 %v11071, %v6253
    %v11153 = vmul.f32 %v11072, %v6258
    %v11154 = vmul.f32 %v11073, %v6263
    %v11155 = vmul.f32 %v11074, %v6268
    %v11156 = vmul.f32 %v11075, %v6273
    %v11157 = vmul.f32 %v11076, %v6278
    %v11158 = vmul.f32 %v11077, %v6283
    %v11159 = vmul.f32 %v11078, %v6288
    %v11160 = vmul.f32 %v11079, %v6293
    %v11161 = vmul.f32 %v11080, %v6298
    %v11162 = vmul.f32 %v11081, %v6303
    %v11163 = vmul.f32 %v11082, %v6308
    %v11164 = vmul.f32 %v11083, %v6313
    %v11165 = vmul.f32 %v11084, %v6318
    %v11166 = vmul.f32 %v11085, %v6323
    %v11167 = vmul.f32 %v11086, %v6328
    %v11168 = vmul.f32 %v11087, %v6333
    %v11169 = vmul.f32 %v11088, %v6338
    %v11170 = vmul.f32 %v11089, %v6343
    %v11171 = vmul.f32 %v11090, %v6348
    %v11172 = vmul.f32 %v11091, %v6353
    %v11173 = vmul.f32 %v11092, %v6358
    %v11174 = vmul.f32 %v11093, %v6363
    %v11175 = vmul.f32 %v11094, %v6368
    %v11176 = vmul.f32 %v11095, %v6373
    %v11177 = vmul.f32 %v11096, %v6378
    %v11178 = vmul.f32 %v11097, %v6383
    %v11179 = vadd.f32 %v11098, %v11099
    %v11180 = vadd.f32 %v11179, %v11100
    %v11181 = vadd.f32 %v11180, %v11101
    %v11182 = vadd.f32 %v11181, %v11102
    %v11183 = vadd.f32 %v11182, %v11103
    %v11184 = vadd.f32 %v11183, %v11104
    %v11185 = vadd.f32 %v11184, %v11105
    %v11186 = vadd.f32 %v11185, %v11106
    %v11187 = vadd.f32 %v11186, %v11107
    %v11188 = vadd.f32 %v11187, %v11108
    %v11189 = vadd.f32 %v11188, %v11109
    %v11190 = vadd.f32 %v11189, %v11110
    %v11191 = vadd.f32 %v11190, %v11111
    %v11192 = vadd.f32 %v11191, %v11112
    %v11193 = vadd.f32 %v11192, %v11113
    %v11194 = vadd.f32 %v11193, %v11114
    %v11195 = vadd.f32 %v11194, %v11115
    %v11196 = vadd.f32 %v11195, %v11116
    %v11197 = vadd.f32 %v11196, %v11117
    %v11198 = vadd.f32 %v11197, %v11118
    %v11199 = vadd.f32 %v11198, %v11119
    %v11200 = vadd.f32 %v11199, %v11120
    %v11201 = vadd.f32 %v11200, %v11121
    %v11202 = vadd.f32 %v11201, %v11122
    %v11203 = vadd.f32 %v11202, %v11123
    %v11204 = vadd.f32 %v11203, %v11124
    %v11205 = vadd.f32 %v11204, %v11125
    %v11206 = vadd.f32 %v11205, %v11126
    %v11207 = vadd.f32 %v11206, %v11127
    %v11208 = vadd.f32 %v11207, %v11128
    %v11209 = vadd.f32 %v11208, %v11129
    %v11210 = vadd.f32 %v11209, %v11130
    %v11211 = vadd.f32 %v11210, %v11131
    %v11212 = vadd.f32 %v11211, %v11132
    %v11213 = vadd.f32 %v11212, %v11133
    %v11214 = vadd.f32 %v11213, %v11134
    %v11215 = vadd.f32 %v11214, %v11135
    %v11216 = vadd.f32 %v11215, %v11136
    %v11217 = vadd.f32 %v11216, %v11137
    %v11218 = vadd.f32 %v11217, %v11138
    %v11219 = vadd.f32 %v11218, %v11139
    %v11220 = vadd.f32 %v11219, %v11140
    %v11221 = vadd.f32 %v11220, %v11141
    %v11222 = vadd.f32 %v11221, %v11142
    %v11223 = vadd.f32 %v11222, %v11143
    %v11224 = vadd.f32 %v11223, %v11144
    %v11225 = vadd.f32 %v11224, %v11145
    %v11226 = vadd.f32 %v11225, %v11146
    %v11227 = vadd.f32 %v11226, %v11147
    %v11228 = vadd.f32 %v11227, %v11148
    %v11229 = vadd.f32 %v11228, %v11149
    %v11230 = vadd.f32 %v11229, %v11150
    %v11231 = vadd.f32 %v11230, %v11151
    %v11232 = vadd.f32 %v11231, %v11152
    %v11233 = vadd.f32 %v11232, %v11153
    %v11234 = vadd.f32 %v11233, %v11154
    %v11235 = vadd.f32 %v11234, %v11155
    %v11236 = vadd.f32 %v11235, %v11156
    %v11237 = vadd.f32 %v11236, %v11157
    %v11238 = vadd.f32 %v11237, %v11158
    %v11239 = vadd.f32 %v11238, %v11159
    %v11240 = vadd.f32 %v11239, %v11160
    %v11241 = vadd.f32 %v11240, %v11161
    %v11242 = vadd.f32 %v11241, %v11162
    %v11243 = vadd.f32 %v11242, %v11163
    %v11244 = vadd.f32 %v11243, %v11164
    %v11245 = vadd.f32 %v11244, %v11165
    %v11246 = vadd.f32 %v11245, %v11166
    %v11247 = vadd.f32 %v11246, %v11167
    %v11248 = vadd.f32 %v11247, %v11168
    %v11249 = vadd.f32 %v11248, %v11169
    %v11250 = vadd.f32 %v11249, %v11170
    %v11251 = vadd.f32 %v11250, %v11171
    %v11252 = vadd.f32 %v11251, %v11172
    %v11253 = vadd.f32 %v11252, %v11173
    %v11254 = vadd.f32 %v11253, %v11174
    %v11255 = vadd.f32 %v11254, %v11175
    %v11256 = vadd.f32 %v11255, %v11176
    %v11257 = vadd.f32 %v11256, %v11177
    %v11258 = vadd.f32 %v11257, %v11178
    %v11259 = vrot.slane %v11258, 4
    %v11260 = vadd.f32 %v11258, %v11259
    %v11261 = vrot.slane %v11260, 2
    %v11262 = vadd.f32 %v11260, %v11261
    %v11263 = vrot.slane %v11262, 1
    %v11264 = vadd.f32 %v11262, %v11263
    %v11265 = vmul.f32 %v11098, %v11017
    %v11266 = vmul.f32 %v11099, %v11018
    %v11267 = vmul.f32 %v11100, %v11019
    %v11268 = vmul.f32 %v11101, %v11020
    %v11269 = vmul.f32 %v11102, %v11021
    %v11270 = vmul.f32 %v11103, %v11022
    %v11271 = vmul.f32 %v11104, %v11023
    %v11272 = vmul.f32 %v11105, %v11024
    %v11273 = vmul.f32 %v11106, %v11025
    %v11274 = vmul.f32 %v11107, %v11026
    %v11275 = vmul.f32 %v11108, %v11027
    %v11276 = vmul.f32 %v11109, %v11028
    %v11277 = vmul.f32 %v11110, %v11029
    %v11278 = vmul.f32 %v11111, %v11030
    %v11279 = vmul.f32 %v11112, %v11031
    %v11280 = vmul.f32 %v11113, %v11032
    %v11281 = vmul.f32 %v11114, %v11033
    %v11282 = vmul.f32 %v11115, %v11034
    %v11283 = vmul.f32 %v11116, %v11035
    %v11284 = vmul.f32 %v11117, %v11036
    %v11285 = vmul.f32 %v11118, %v11037
    %v11286 = vmul.f32 %v11119, %v11038
    %v11287 = vmul.f32 %v11120, %v11039
    %v11288 = vmul.f32 %v11121, %v11040
    %v11289 = vmul.f32 %v11122, %v11041
    %v11290 = vmul.f32 %v11123, %v11042
    %v11291 = vmul.f32 %v11124, %v11043
    %v11292 = vmul.f32 %v11125, %v11044
    %v11293 = vmul.f32 %v11126, %v11045
    %v11294 = vmul.f32 %v11127, %v11046
    %v11295 = vmul.f32 %v11128, %v11047
    %v11296 = vmul.f32 %v11129, %v11048
    %v11297 = vmul.f32 %v11130, %v11049
    %v11298 = vmul.f32 %v11131, %v11050
    %v11299 = vmul.f32 %v11132, %v11051
    %v11300 = vmul.f32 %v11133, %v11052
    %v11301 = vmul.f32 %v11134, %v11053
    %v11302 = vmul.f32 %v11135, %v11054
    %v11303 = vmul.f32 %v11136, %v11055
    %v11304 = vmul.f32 %v11137, %v11056
    %v11305 = vmul.f32 %v11138, %v11057
    %v11306 = vmul.f32 %v11139, %v11058
    %v11307 = vmul.f32 %v11140, %v11059
    %v11308 = vmul.f32 %v11141, %v11060
    %v11309 = vmul.f32 %v11142, %v11061
    %v11310 = vmul.f32 %v11143, %v11062
    %v11311 = vmul.f32 %v11144, %v11063
    %v11312 = vmul.f32 %v11145, %v11064
    %v11313 = vmul.f32 %v11146, %v11065
    %v11314 = vmul.f32 %v11147, %v11066
    %v11315 = vmul.f32 %v11148, %v11067
    %v11316 = vmul.f32 %v11149, %v11068
    %v11317 = vmul.f32 %v11150, %v11069
    %v11318 = vmul.f32 %v11151, %v11070
    %v11319 = vmul.f32 %v11152, %v11071
    %v11320 = vmul.f32 %v11153, %v11072
    %v11321 = vmul.f32 %v11154, %v11073
    %v11322 = vmul.f32 %v11155, %v11074
    %v11323 = vmul.f32 %v11156, %v11075
    %v11324 = vmul.f32 %v11157, %v11076
    %v11325 = vmul.f32 %v11158, %v11077
    %v11326 = vmul.f32 %v11159, %v11078
    %v11327 = vmul.f32 %v11160, %v11079
    %v11328 = vmul.f32 %v11161, %v11080
    %v11329 = vmul.f32 %v11162, %v11081
    %v11330 = vmul.f32 %v11163, %v11082
    %v11331 = vmul.f32 %v11164, %v11083
    %v11332 = vmul.f32 %v11165, %v11084
    %v11333 = vmul.f32 %v11166, %v11085
    %v11334 = vmul.f32 %v11167, %v11086
    %v11335 = vmul.f32 %v11168, %v11087
    %v11336 = vmul.f32 %v11169, %v11088
    %v11337 = vmul.f32 %v11170, %v11089
    %v11338 = vmul.f32 %v11171, %v11090
    %v11339 = vmul.f32 %v11172, %v11091
    %v11340 = vmul.f32 %v11173, %v11092
    %v11341 = vmul.f32 %v11174, %v11093
    %v11342 = vmul.f32 %v11175, %v11094
    %v11343 = vmul.f32 %v11176, %v11095
    %v11344 = vmul.f32 %v11177, %v11096
    %v11345 = vmul.f32 %v11178, %v11097
    %v11346 = vadd.f32 %v11265, %v11266
    %v11347 = vadd.f32 %v11346, %v11267
    %v11348 = vadd.f32 %v11347, %v11268
    %v11349 = vadd.f32 %v11348, %v11269
    %v11350 = vadd.f32 %v11349, %v11270
    %v11351 = vadd.f32 %v11350, %v11271
    %v11352 = vadd.f32 %v11351, %v11272
    %v11353 = vadd.f32 %v11352, %v11273
    %v11354 = vadd.f32 %v11353, %v11274
    %v11355 = vadd.f32 %v11354, %v11275
    %v11356 = vadd.f32 %v11355, %v11276
    %v11357 = vadd.f32 %v11356, %v11277
    %v11358 = vadd.f32 %v11357, %v11278
    %v11359 = vadd.f32 %v11358, %v11279
    %v11360 = vadd.f32 %v11359, %v11280
    %v11361 = vadd.f32 %v11360, %v11281
    %v11362 = vadd.f32 %v11361, %v11282
    %v11363 = vadd.f32 %v11362, %v11283
    %v11364 = vadd.f32 %v11363, %v11284
    %v11365 = vadd.f32 %v11364, %v11285
    %v11366 = vadd.f32 %v11365, %v11286
    %v11367 = vadd.f32 %v11366, %v11287
    %v11368 = vadd.f32 %v11367, %v11288
    %v11369 = vadd.f32 %v11368, %v11289
    %v11370 = vadd.f32 %v11369, %v11290
    %v11371 = vadd.f32 %v11370, %v11291
    %v11372 = vadd.f32 %v11371, %v11292
    %v11373 = vadd.f32 %v11372, %v11293
    %v11374 = vadd.f32 %v11373, %v11294
    %v11375 = vadd.f32 %v11374, %v11295
    %v11376 = vadd.f32 %v11375, %v11296
    %v11377 = vadd.f32 %v11376, %v11297
    %v11378 = vadd.f32 %v11377, %v11298
    %v11379 = vadd.f32 %v11378, %v11299
    %v11380 = vadd.f32 %v11379, %v11300
    %v11381 = vadd.f32 %v11380, %v11301
    %v11382 = vadd.f32 %v11381, %v11302
    %v11383 = vadd.f32 %v11382, %v11303
    %v11384 = vadd.f32 %v11383, %v11304
    %v11385 = vadd.f32 %v11384, %v11305
    %v11386 = vadd.f32 %v11385, %v11306
    %v11387 = vadd.f32 %v11386, %v11307
    %v11388 = vadd.f32 %v11387, %v11308
    %v11389 = vadd.f32 %v11388, %v11309
    %v11390 = vadd.f32 %v11389, %v11310
    %v11391 = vadd.f32 %v11390, %v11311
    %v11392 = vadd.f32 %v11391, %v11312
    %v11393 = vadd.f32 %v11392, %v11313
    %v11394 = vadd.f32 %v11393, %v11314
    %v11395 = vadd.f32 %v11394, %v11315
    %v11396 = vadd.f32 %v11395, %v11316
    %v11397 = vadd.f32 %v11396, %v11317
    %v11398 = vadd.f32 %v11397, %v11318
    %v11399 = vadd.f32 %v11398, %v11319
    %v11400 = vadd.f32 %v11399, %v11320
    %v11401 = vadd.f32 %v11400, %v11321
    %v11402 = vadd.f32 %v11401, %v11322
    %v11403 = vadd.f32 %v11402, %v11323
    %v11404 = vadd.f32 %v11403, %v11324
    %v11405 = vadd.f32 %v11404, %v11325
    %v11406 = vadd.f32 %v11405, %v11326
    %v11407 = vadd.f32 %v11406, %v11327
    %v11408 = vadd.f32 %v11407, %v11328
    %v11409 = vadd.f32 %v11408, %v11329
    %v11410 = vadd.f32 %v11409, %v11330
    %v11411 = vadd.f32 %v11410, %v11331
    %v11412 = vadd.f32 %v11411, %v11332
    %v11413 = vadd.f32 %v11412, %v11333
    %v11414 = vadd.f32 %v11413, %v11334
    %v11415 = vadd.f32 %v11414, %v11335
    %v11416 = vadd.f32 %v11415, %v11336
    %v11417 = vadd.f32 %v11416, %v11337
    %v11418 = vadd.f32 %v11417, %v11338
    %v11419 = vadd.f32 %v11418, %v11339
    %v11420 = vadd.f32 %v11419, %v11340
    %v11421 = vadd.f32 %v11420, %v11341
    %v11422 = vadd.f32 %v11421, %v11342
    %v11423 = vadd.f32 %v11422, %v11343
    %v11424 = vadd.f32 %v11423, %v11344
    %v11425 = vadd.f32 %v11424, %v11345
    %v11426 = vrot.slane %v11425, 4
    %v11427 = vadd.f32 %v11425, %v11426
    %v11428 = vrot.slane %v11427, 2
    %v11429 = vadd.f32 %v11427, %v11428
    %v11430 = vrot.slane %v11429, 1
    %v11431 = vadd.f32 %v11429, %v11430
    %v11432 = vmul.f32 %v11264, 0.001953125
    %v11433 = vmul.f32 %v11431, 0.001953125
    %v11434 = vmul.f32 %v11432, %v11432
    %v11435 = vsub.f32 %v11433, %v11434
    %v11436 = vmax.f32 %v11435, 0.0
    %v11437 = vadd.f32 %v11436, 1e-05
    %v11438 = vrsqrt.pop %v11437
    %v11439 = vmul.f32 %v11438, %v11437
    %v11440 = vmul.f32 %v11439, %v11438
    %v11441 = vmul.f32 0.5, %v11440
    %v11442 = vsub.f32 1.5, %v11441
    %v11443 = vmul.f32 %v11438, %v11442
    %vm11444 = vweird.f32 %v11437
    %vm11445 = vweird.f32 %v11438
    %vm11446 = vmor %vm11444, %vm11445
    %v11447 = vsel %vm11446, %v11438, %v11443
    %v11448 = vld [vmem:[%s0 + $0x18] sm:$0xff]
    %v11449 = vld [vmem:[%s0 + $0x20] sm:$0xff]
    %v11450 = vld [vmem:[%s0 + $0x28] sm:$0xff]
    %v11451 = vld [vmem:[%s0 + $0x30] sm:$0xff]
    %v11452 = vld [vmem:[%s0 + $0x38] sm:$0xff]
    %v11453 = vld [vmem:[%s0 + $0x40] sm:$0xff]
    %v11454 = vld [vmem:[%s0 + $0x48] sm:$0xff]
    %v11455 = vld [vmem:[%s0 + $0x50] sm:$0xff]
    %v11456 = vld [vmem:[%s0 + $0x58] sm:$0xff]
    %v11457 = vld [vmem:[%s0 + $0x60] sm:$0xff]
    %v11458 = vld [vmem:[%s0 + $0x68] sm:$0xff]
    %v11459 = vld [vmem:[%s0 + $0x70] sm:$0xff]
    %v11460 = vld [vmem:[%s0 + $0x78] sm:$0xff]
    %v11461 = vld [vmem:[%s0 + $0x80] sm:$0xff]
    %v11462 = vld [vmem:[%s0 + $0x88] sm:$0xff]
    %v11463 = vld [vmem:[%s0 + $0x90] sm:$0xff]
    %v11464 = vld [vmem:[%s0 + $0x98] sm:$0xff]
    %v11465 = vld [vmem:[%s0 + $0xa0] sm:$0xff]
    %v11466 = vld [vmem:[%s0 + $0xa8] sm:$0xff]
    %v11467 = vld [vmem:[%s0 + $0xb0] sm:$0xff]
    %v11468 = vld [vmem:[%s0 + $0xb8] sm:$0xff]
    %v11469 = vld [vmem:[%s0 + $0xc0] sm:$0xff]
    %v11470 = vld [vmem:[%s0 + $0xc8] sm:$0xff]
    %v11471 = vld [vmem:[%s0 + $0xd0] sm:$0xff]
    %v11472 = vld [vmem:[%s0 + $0xd8] sm:$0xff]
    %v11473 = vld [vmem:[%s0 + $0xe0] sm:$0xff]
    %v11474 = vld [vmem:[%s0 + $0xe8] sm:$0xff]
    %v11475 = vld [vmem:[%s0 + $0xf0] sm:$0xff]
    %v11476 = vld [vmem:[%s0 + $0xf8] sm:$0xff]
    %v11477 = vld [vmem:[%s0 + $0x100] sm:$0xff]
    %v11478 = vld [vmem:[%s0 + $0x108] sm:$0xff]
    %v11479 = vld [vmem:[%s0 + $0x110] sm:$0xff]
    %v11480 = vld [vmem:[%s0 + $0x118] sm:$0xff]
    %v11481 = vld [vmem:[%s0 + $0x120] sm:$0xff]
    %v11482 = vld [vmem:[%s0 + $0x128] sm:$0xff]
    %v11483 = vld [vmem:[%s0 + $0x130] sm:$0xff]
    %v11484 = vld [vmem:[%s0 + $0x138] sm:$0xff]
    %v11485 = vld [vmem:[%s0 + $0x140] sm:$0xff]
    %v11486 = vld [vmem:[%s0 + $0x148] sm:$0xff]
    %v11487 = vld [vmem:[%s0 + $0x150] sm:$0xff]
    %v11488 = vld [vmem:[%s0 + $0x158] sm:$0xff]
    %v11489 = vld [vmem:[%s0 + $0x160] sm:$0xff]
    %v11490 = vld [vmem:[%s0 + $0x168] sm:$0xff]
    %v11491 = vld [vmem:[%s0 + $0x170] sm:$0xff]
    %v11492 = vld [vmem:[%s0 + $0x178] sm:$0xff]
    %v11493 = vld [vmem:[%s0 + $0x180] sm:$0xff]
    %v11494 = vld [vmem:[%s0 + $0x188] sm:$0xff]
    %v11495 = vld [vmem:[%s0 + $0x190] sm:$0xff]
    %v11496 = vld [vmem:[%s0 + $0x198] sm:$0xff]
    %v11497 = vld [vmem:[%s0 + $0x1a0] sm:$0xff]
    %v11498 = vld [vmem:[%s0 + $0x1a8] sm:$0xff]
    %v11499 = vld [vmem:[%s0 + $0x1b0] sm:$0xff]
    %v11500 = vld [vmem:[%s0 + $0x1b8] sm:$0xff]
    %v11501 = vld [vmem:[%s0 + $0x1c0] sm:$0xff]
    %v11502 = vld [vmem:[%s0 + $0x1c8] sm:$0xff]
    %v11503 = vld [vmem:[%s0 + $0x1d0] sm:$0xff]
    %v11504 = vld [vmem:[%s0 + $0x1d8] sm:$0xff]
    %v11505 = vld [vmem:[%s0 + $0x1e0] sm:$0xff]
    %v11506 = vld [vmem:[%s0 + $0x1e8] sm:$0xff]
    %v11507 = vld [vmem:[%s0 + $0x1f0] sm:$0xff]
    %v11508 = vld [vmem:[%s0 + $0x1f8] sm:$0xff]
    %v11509 = vld [vmem:[%s0 + $0x200] sm:$0xff]
    %v11510 = vld [vmem:[%s0 + $0x208] sm:$0xff]
    %v11511 = vld [vmem:[%s0 + $0x210] sm:$0xff]
    %v11512 = vld [vmem:[%s0 + $0x218] sm:$0xff]
    %v11513 = vld [vmem:[%s0 + $0x220] sm:$0xff]
    %v11514 = vld [vmem:[%s0 + $0x228] sm:$0xff]
    %v11515 = vld [vmem:[%s0 + $0x230] sm:$0xff]
    %v11516 = vld [vmem:[%s0 + $0x238] sm:$0xff]
    %v11517 = vld [vmem:[%s0 + $0x240] sm:$0xff]
    %v11518 = vld [vmem:[%s0 + $0x248] sm:$0xff]
    %v11519 = vld [vmem:[%s0 + $0x250] sm:$0xff]
    %v11520 = vld [vmem:[%s0 + $0x258] sm:$0xff]
    %v11521 = vld [vmem:[%s0 + $0x260] sm:$0xff]
    %v11522 = vld [vmem:[%s0 + $0x268] sm:$0xff]
    %v11523 = vld [vmem:[%s0 + $0x270] sm:$0xff]
    %v11524 = vld [vmem:[%s0 + $0x278] sm:$0xff]
    %v11525 = vld [vmem:[%s0 + $0x280] sm:$0xff]
    %v11526 = vld [vmem:[%s0 + $0x288] sm:$0xff]
    %v11527 = vld [vmem:[%s0 + $0x290] sm:$0xff]
    %v11528 = vld [vmem:[%s0 + $0x298] sm:$0xff]
    %v11529 = vld [vmem:[%s4] sm:$0xf]
    %v11531 = vsel %vm276, %v11448, 0
    %v11534 = vsel %vm276, %v11449, 0
    %v11537 = vsel %vm276, %v11450, 0
    %v11540 = vsel %vm276, %v11451, 0
    %v11543 = vsel %vm276, %v11452, 0
    %v11546 = vsel %vm276, %v11453, 0
    %v11549 = vsel %vm276, %v11454, 0
    %v11552 = vsel %vm276, %v11455, 0
    %v11555 = vsel %vm276, %v11456, 0
    %v11558 = vsel %vm276, %v11457, 0
    %v11561 = vsel %vm276, %v11458, 0
    %v11564 = vsel %vm276, %v11459, 0
    %v11567 = vsel %vm276, %v11460, 0
    %v11570 = vsel %vm276, %v11461, 0
    %v11573 = vsel %vm276, %v11462, 0
    %v11576 = vsel %vm276, %v11463, 0
    %v11579 = vsel %vm276, %v11464, 0
    %v11582 = vsel %vm276, %v11465, 0
    %v11585 = vsel %vm276, %v11466, 0
    %v11588 = vsel %vm276, %v11467, 0
    %v11591 = vsel %vm276, %v11468, 0
    %v11594 = vsel %vm276, %v11469, 0
    %v11597 = vsel %vm276, %v11470, 0
    %v11600 = vsel %vm276, %v11471, 0
    %v11603 = vsel %vm276, %v11472, 0
    %v11606 = vsel %vm276, %v11473, 0
    %v11609 = vsel %vm276, %v11474, 0
    %v11612 = vsel %vm276, %v11475, 0
    %v11615 = vsel %vm276, %v11476, 0
    %v11618 = vsel %vm276, %v11477, 0
    %v11621 = vsel %vm276, %v11478, 0
    %v11624 = vsel %vm276, %v11479, 0
    %v11627 = vsel %vm276, %v11480, 0
    %v11630 = vsel %vm276, %v11481, 0
    %v11633 = vsel %vm276, %v11482, 0
    %v11636 = vsel %vm276, %v11483, 0
    %v11639 = vsel %vm276, %v11484, 0
    %v11642 = vsel %vm276, %v11485, 0
    %v11645 = vsel %vm276, %v11486, 0
    %v11648 = vsel %vm276, %v11487, 0
    %v11651 = vsel %vm276, %v11488, 0
    %v11654 = vsel %vm276, %v11489, 0
    %v11657 = vsel %vm276, %v11490, 0
    %v11660 = vsel %vm276, %v11491, 0
    %v11663 = vsel %vm276, %v11492, 0
    %v11666 = vsel %vm276, %v11493, 0
    %v11669 = vsel %vm276, %v11494, 0
    %v11672 = vsel %vm276, %v11495, 0
    %v11675 = vsel %vm276, %v11496, 0
    %v11678 = vsel %vm276, %v11497, 0
    %v11681 = vsel %vm276, %v11498, 0
    %v11684 = vsel %vm276, %v11499, 0
    %v11687 = vsel %vm276, %v11500, 0
    %v11690 = vsel %vm276, %v11501, 0
    %v11693 = vsel %vm276, %v11502, 0
    %v11696 = vsel %vm276, %v11503, 0
    %v11699 = vsel %vm276, %v11504, 0
    %v11702 = vsel %vm276, %v11505, 0
    %v11705 = vsel %vm276, %v11506, 0
    %v11708 = vsel %vm276, %v11507, 0
    %v11711 = vsel %vm276, %v11508, 0
    %v11714 = vsel %vm276, %v11509, 0
    %v11717 = vsel %vm276, %v11510, 0
    %v11720 = vsel %vm276, %v11511, 0
    %v11723 = vsel %vm276, %v11512, 0
    %v11726 = vsel %vm276, %v11513, 0
    %v11729 = vsel %vm276, %v11514, 0
    %v11732 = vsel %vm276, %v11515, 0
    %v11735 = vsel %vm276, %v11516, 0
    %v11738 = vsel %vm276, %v11517, 0
    %v11741 = vsel %vm276, %v11518, 0
    %v11744 = vsel %vm276, %v11519, 0
    %v11747 = vsel %vm276, %v11520, 0
    %v11750 = vsel %vm276, %v11521, 0
    %v11753 = vsel %vm276, %v11522, 0
    %v11756 = vsel %vm276, %v11523, 0
    %v11759 = vsel %vm276, %v11524, 0
    %v11762 = vsel %vm276, %v11525, 0
    %v11765 = vsel %vm276, %v11526, 0
    %v11768 = vsel %vm276, %v11527, 0
    %v11771 = vsel %vm276, %v11528, 0
    %v11774 = vsel %vm520, %v11529, 0
    %11776 = vmatpush.msra.mxu0 0.0
    %11777 = vmatpush.msra.mxu0 0.0
    %11778 = vmatpush.msra.mxu0 0.0
    %11779 = vmatpush.msra.mxu0 0.0
    %11780 = vmatpush.msra.mxu0 0.0
    %11781 = vmatpush.msra.mxu0 0.0
    %11782 = vmatpush.msra.mxu0 0.0
    %11783 = vmatpush.msra.mxu0 0.0
    %11784 = vmatpush.msra.mxu0 0.0
    %11785 = vmatpush.msra.mxu0 0.0
    %11786 = vmatpush.msra.mxu0 0.0
    %11787 = vmatpush.msra.mxu0 0.0
    %11788 = vmatpush.msra.mxu0 0.0
    %11789 = vmatpush.msra.mxu0 0.0
    %11790 = vmatpush.msra.mxu0 0.0
    %11791 = vmatpush.msra.mxu0 %v11774
    %11792 = vmatmul.f32.gmra.mxu0 %v11531
    %v11793 = vpop.f32.mrf.mxu0
    %v11794 = vadd.f32 0.0, %v11793
    %11795 = vmatmul.f32.gmra.mxu0 %v11534
    %v11796 = vpop.f32.mrf.mxu0
    %v11797 = vadd.f32 0.0, %v11796
    %11798 = vmatmul.f32.gmra.mxu0 %v11537
    %v11799 = vpop.f32.mrf.mxu0
    %v11800 = vadd.f32 0.0, %v11799
    %11801 = vmatmul.f32.gmra.mxu0 %v11540
    %v11802 = vpop.f32.mrf.mxu0
    %v11803 = vadd.f32 0.0, %v11802
    %11804 = vmatmul.f32.gmra.mxu0 %v11543
    %v11805 = vpop.f32.mrf.mxu0
    %v11806 = vadd.f32 0.0, %v11805
    %11807 = vmatmul.f32.gmra.mxu0 %v11546
    %v11808 = vpop.f32.mrf.mxu0
    %v11809 = vadd.f32 0.0, %v11808
    %11810 = vmatmul.f32.gmra.mxu0 %v11549
    %v11811 = vpop.f32.mrf.mxu0
    %v11812 = vadd.f32 0.0, %v11811
    %11813 = vmatmul.f32.gmra.mxu0 %v11552
    %v11814 = vpop.f32.mrf.mxu0
    %v11815 = vadd.f32 0.0, %v11814
    %11816 = vmatmul.f32.gmra.mxu0 %v11555
    %v11817 = vpop.f32.mrf.mxu0
    %v11818 = vadd.f32 0.0, %v11817
    %11819 = vmatmul.f32.gmra.mxu0 %v11558
    %v11820 = vpop.f32.mrf.mxu0
    %v11821 = vadd.f32 0.0, %v11820
    %11822 = vmatmul.f32.gmra.mxu0 %v11561
    %v11823 = vpop.f32.mrf.mxu0
    %v11824 = vadd.f32 0.0, %v11823
    %11825 = vmatmul.f32.gmra.mxu0 %v11564
    %v11826 = vpop.f32.mrf.mxu0
    %v11827 = vadd.f32 0.0, %v11826
    %11828 = vmatmul.f32.gmra.mxu0 %v11567
    %v11829 = vpop.f32.mrf.mxu0
    %v11830 = vadd.f32 0.0, %v11829
    %11831 = vmatmul.f32.gmra.mxu0 %v11570
    %v11832 = vpop.f32.mrf.mxu0
    %v11833 = vadd.f32 0.0, %v11832
    %11834 = vmatmul.f32.gmra.mxu0 %v11573
    %v11835 = vpop.f32.mrf.mxu0
    %v11836 = vadd.f32 0.0, %v11835
    %11837 = vmatmul.f32.gmra.mxu0 %v11576
    %v11838 = vpop.f32.mrf.mxu0
    %v11839 = vadd.f32 0.0, %v11838
    %11840 = vmatmul.f32.gmra.mxu0 %v11579
    %v11841 = vpop.f32.mrf.mxu0
    %v11842 = vadd.f32 0.0, %v11841
    %11843 = vmatmul.f32.gmra.mxu0 %v11582
    %v11844 = vpop.f32.mrf.mxu0
    %v11845 = vadd.f32 0.0, %v11844
    %11846 = vmatmul.f32.gmra.mxu0 %v11585
    %v11847 = vpop.f32.mrf.mxu0
    %v11848 = vadd.f32 0.0, %v11847
    %11849 = vmatmul.f32.gmra.mxu0 %v11588
    %v11850 = vpop.f32.mrf.mxu0
    %v11851 = vadd.f32 0.0, %v11850
    %11852 = vmatmul.f32.gmra.mxu0 %v11591
    %v11853 = vpop.f32.mrf.mxu0
    %v11854 = vadd.f32 0.0, %v11853
    %11855 = vmatmul.f32.gmra.mxu0 %v11594
    %v11856 = vpop.f32.mrf.mxu0
    %v11857 = vadd.f32 0.0, %v11856
    %11858 = vmatmul.f32.gmra.mxu0 %v11597
    %v11859 = vpop.f32.mrf.mxu0
    %v11860 = vadd.f32 0.0, %v11859
    %11861 = vmatmul.f32.gmra.mxu0 %v11600
    %v11862 = vpop.f32.mrf.mxu0
    %v11863 = vadd.f32 0.0, %v11862
    %11864 = vmatmul.f32.gmra.mxu0 %v11603
    %v11865 = vpop.f32.mrf.mxu0
    %v11866 = vadd.f32 0.0, %v11865
    %11867 = vmatmul.f32.gmra.mxu0 %v11606
    %v11868 = vpop.f32.mrf.mxu0
    %v11869 = vadd.f32 0.0, %v11868
    %11870 = vmatmul.f32.gmra.mxu0 %v11609
    %v11871 = vpop.f32.mrf.mxu0
    %v11872 = vadd.f32 0.0, %v11871
    %11873 = vmatmul.f32.gmra.mxu0 %v11612
    %v11874 = vpop.f32.mrf.mxu0
    %v11875 = vadd.f32 0.0, %v11874
    %11876 = vmatmul.f32.gmra.mxu0 %v11615
    %v11877 = vpop.f32.mrf.mxu0
    %v11878 = vadd.f32 0.0, %v11877
    %11879 = vmatmul.f32.gmra.mxu0 %v11618
    %v11880 = vpop.f32.mrf.mxu0
    %v11881 = vadd.f32 0.0, %v11880
    %11882 = vmatmul.f32.gmra.mxu0 %v11621
    %v11883 = vpop.f32.mrf.mxu0
    %v11884 = vadd.f32 0.0, %v11883
    %11885 = vmatmul.f32.gmra.mxu0 %v11624
    %v11886 = vpop.f32.mrf.mxu0
    %v11887 = vadd.f32 0.0, %v11886
    %11888 = vmatmul.f32.gmra.mxu0 %v11627
    %v11889 = vpop.f32.mrf.mxu0
    %v11890 = vadd.f32 0.0, %v11889
    %11891 = vmatmul.f32.gmra.mxu0 %v11630
    %v11892 = vpop.f32.mrf.mxu0
    %v11893 = vadd.f32 0.0, %v11892
    %11894 = vmatmul.f32.gmra.mxu0 %v11633
    %v11895 = vpop.f32.mrf.mxu0
    %v11896 = vadd.f32 0.0, %v11895
    %11897 = vmatmul.f32.gmra.mxu0 %v11636
    %v11898 = vpop.f32.mrf.mxu0
    %v11899 = vadd.f32 0.0, %v11898
    %11900 = vmatmul.f32.gmra.mxu0 %v11639
    %v11901 = vpop.f32.mrf.mxu0
    %v11902 = vadd.f32 0.0, %v11901
    %11903 = vmatmul.f32.gmra.mxu0 %v11642
    %v11904 = vpop.f32.mrf.mxu0
    %v11905 = vadd.f32 0.0, %v11904
    %11906 = vmatmul.f32.gmra.mxu0 %v11645
    %v11907 = vpop.f32.mrf.mxu0
    %v11908 = vadd.f32 0.0, %v11907
    %11909 = vmatmul.f32.gmra.mxu0 %v11648
    %v11910 = vpop.f32.mrf.mxu0
    %v11911 = vadd.f32 0.0, %v11910
    %11912 = vmatmul.f32.gmra.mxu0 %v11651
    %v11913 = vpop.f32.mrf.mxu0
    %v11914 = vadd.f32 0.0, %v11913
    %11915 = vmatmul.f32.gmra.mxu0 %v11654
    %v11916 = vpop.f32.mrf.mxu0
    %v11917 = vadd.f32 0.0, %v11916
    %11918 = vmatmul.f32.gmra.mxu0 %v11657
    %v11919 = vpop.f32.mrf.mxu0
    %v11920 = vadd.f32 0.0, %v11919
    %11921 = vmatmul.f32.gmra.mxu0 %v11660
    %v11922 = vpop.f32.mrf.mxu0
    %v11923 = vadd.f32 0.0, %v11922
    %11924 = vmatmul.f32.gmra.mxu0 %v11663
    %v11925 = vpop.f32.mrf.mxu0
    %v11926 = vadd.f32 0.0, %v11925
    %11927 = vmatmul.f32.gmra.mxu0 %v11666
    %v11928 = vpop.f32.mrf.mxu0
    %v11929 = vadd.f32 0.0, %v11928
    %11930 = vmatmul.f32.gmra.mxu0 %v11669
    %v11931 = vpop.f32.mrf.mxu0
    %v11932 = vadd.f32 0.0, %v11931
    %11933 = vmatmul.f32.gmra.mxu0 %v11672
    %v11934 = vpop.f32.mrf.mxu0
    %v11935 = vadd.f32 0.0, %v11934
    %11936 = vmatmul.f32.gmra.mxu0 %v11675
    %v11937 = vpop.f32.mrf.mxu0
    %v11938 = vadd.f32 0.0, %v11937
    %11939 = vmatmul.f32.gmra.mxu0 %v11678
    %v11940 = vpop.f32.mrf.mxu0
    %v11941 = vadd.f32 0.0, %v11940
    %11942 = vmatmul.f32.gmra.mxu0 %v11681
    %v11943 = vpop.f32.mrf.mxu0
    %v11944 = vadd.f32 0.0, %v11943
    %11945 = vmatmul.f32.gmra.mxu0 %v11684
    %v11946 = vpop.f32.mrf.mxu0
    %v11947 = vadd.f32 0.0, %v11946
    %11948 = vmatmul.f32.gmra.mxu0 %v11687
    %v11949 = vpop.f32.mrf.mxu0
    %v11950 = vadd.f32 0.0, %v11949
    %11951 = vmatmul.f32.gmra.mxu0 %v11690
    %v11952 = vpop.f32.mrf.mxu0
    %v11953 = vadd.f32 0.0, %v11952
    %11954 = vmatmul.f32.gmra.mxu0 %v11693
    %v11955 = vpop.f32.mrf.mxu0
    %v11956 = vadd.f32 0.0, %v11955
    %11957 = vmatmul.f32.gmra.mxu0 %v11696
    %v11958 = vpop.f32.mrf.mxu0
    %v11959 = vadd.f32 0.0, %v11958
    %11960 = vmatmul.f32.gmra.mxu0 %v11699
    %v11961 = vpop.f32.mrf.mxu0
    %v11962 = vadd.f32 0.0, %v11961
    %11963 = vmatmul.f32.gmra.mxu0 %v11702
    %v11964 = vpop.f32.mrf.mxu0
    %v11965 = vadd.f32 0.0, %v11964
    %11966 = vmatmul.f32.gmra.mxu0 %v11705
    %v11967 = vpop.f32.mrf.mxu0
    %v11968 = vadd.f32 0.0, %v11967
    %11969 = vmatmul.f32.gmra.mxu0 %v11708
    %v11970 = vpop.f32.mrf.mxu0
    %v11971 = vadd.f32 0.0, %v11970
    %11972 = vmatmul.f32.gmra.mxu0 %v11711
    %v11973 = vpop.f32.mrf.mxu0
    %v11974 = vadd.f32 0.0, %v11973
    %11975 = vmatmul.f32.gmra.mxu0 %v11714
    %v11976 = vpop.f32.mrf.mxu0
    %v11977 = vadd.f32 0.0, %v11976
    %11978 = vmatmul.f32.gmra.mxu0 %v11717
    %v11979 = vpop.f32.mrf.mxu0
    %v11980 = vadd.f32 0.0, %v11979
    %11981 = vmatmul.f32.gmra.mxu0 %v11720
    %v11982 = vpop.f32.mrf.mxu0
    %v11983 = vadd.f32 0.0, %v11982
    %11984 = vmatmul.f32.gmra.mxu0 %v11723
    %v11985 = vpop.f32.mrf.mxu0
    %v11986 = vadd.f32 0.0, %v11985
    %11987 = vmatmul.f32.gmra.mxu0 %v11726
    %v11988 = vpop.f32.mrf.mxu0
    %v11989 = vadd.f32 0.0, %v11988
    %11990 = vmatmul.f32.gmra.mxu0 %v11729
    %v11991 = vpop.f32.mrf.mxu0
    %v11992 = vadd.f32 0.0, %v11991
    %11993 = vmatmul.f32.gmra.mxu0 %v11732
    %v11994 = vpop.f32.mrf.mxu0
    %v11995 = vadd.f32 0.0, %v11994
    %11996 = vmatmul.f32.gmra.mxu0 %v11735
    %v11997 = vpop.f32.mrf.mxu0
    %v11998 = vadd.f32 0.0, %v11997
    %11999 = vmatmul.f32.gmra.mxu0 %v11738
    %v12000 = vpop.f32.mrf.mxu0
    %v12001 = vadd.f32 0.0, %v12000
    %12002 = vmatmul.f32.gmra.mxu0 %v11741
    %v12003 = vpop.f32.mrf.mxu0
    %v12004 = vadd.f32 0.0, %v12003
    %12005 = vmatmul.f32.gmra.mxu0 %v11744
    %v12006 = vpop.f32.mrf.mxu0
    %v12007 = vadd.f32 0.0, %v12006
    %12008 = vmatmul.f32.gmra.mxu0 %v11747
    %v12009 = vpop.f32.mrf.mxu0
    %v12010 = vadd.f32 0.0, %v12009
    %12011 = vmatmul.f32.gmra.mxu0 %v11750
    %v12012 = vpop.f32.mrf.mxu0
    %v12013 = vadd.f32 0.0, %v12012
    %12014 = vmatmul.f32.gmra.mxu0 %v11753
    %v12015 = vpop.f32.mrf.mxu0
    %v12016 = vadd.f32 0.0, %v12015
    %12017 = vmatmul.f32.gmra.mxu0 %v11756
    %v12018 = vpop.f32.mrf.mxu0
    %v12019 = vadd.f32 0.0, %v12018
    %12020 = vmatmul.f32.gmra.mxu0 %v11759
    %v12021 = vpop.f32.mrf.mxu0
    %v12022 = vadd.f32 0.0, %v12021
    %12023 = vmatmul.f32.gmra.mxu0 %v11762
    %v12024 = vpop.f32.mrf.mxu0
    %v12025 = vadd.f32 0.0, %v12024
    %12026 = vmatmul.f32.gmra.mxu0 %v11765
    %v12027 = vpop.f32.mrf.mxu0
    %v12028 = vadd.f32 0.0, %v12027
    %12029 = vmatmul.f32.gmra.mxu0 %v11768
    %v12030 = vpop.f32.mrf.mxu0
    %v12031 = vadd.f32 0.0, %v12030
    %12032 = vmatmul.f32.gmra.mxu0 %v11771
    %v12033 = vpop.f32.mrf.mxu0
    %v12034 = vadd.f32 0.0, %v12033
    %12035 = vdwg.mxu0
    %v12036 = vmul.f32 %v11794, %v5983
    %v12037 = vmul.f32 %v11797, %v5988
    %v12038 = vmul.f32 %v11800, %v5993
    %v12039 = vmul.f32 %v11803, %v5998
    %v12040 = vmul.f32 %v11806, %v6003
    %v12041 = vmul.f32 %v11809, %v6008
    %v12042 = vmul.f32 %v11812, %v6013
    %v12043 = vmul.f32 %v11815, %v6018
    %v12044 = vmul.f32 %v11818, %v6023
    %v12045 = vmul.f32 %v11821, %v6028
    %v12046 = vmul.f32 %v11824, %v6033
    %v12047 = vmul.f32 %v11827, %v6038
    %v12048 = vmul.f32 %v11830, %v6043
    %v12049 = vmul.f32 %v11833, %v6048
    %v12050 = vmul.f32 %v11836, %v6053
    %v12051 = vmul.f32 %v11839, %v6058
    %v12052 = vmul.f32 %v11842, %v6063
    %v12053 = vmul.f32 %v11845, %v6068
    %v12054 = vmul.f32 %v11848, %v6073
    %v12055 = vmul.f32 %v11851, %v6078
    %v12056 = vmul.f32 %v11854, %v6083
    %v12057 = vmul.f32 %v11857, %v6088
    %v12058 = vmul.f32 %v11860, %v6093
    %v12059 = vmul.f32 %v11863, %v6098
    %v12060 = vmul.f32 %v11866, %v6103
    %v12061 = vmul.f32 %v11869, %v6108
    %v12062 = vmul.f32 %v11872, %v6113
    %v12063 = vmul.f32 %v11875, %v6118
    %v12064 = vmul.f32 %v11878, %v6123
    %v12065 = vmul.f32 %v11881, %v6128
    %v12066 = vmul.f32 %v11884, %v6133
    %v12067 = vmul.f32 %v11887, %v6138
    %v12068 = vmul.f32 %v11890, %v6143
    %v12069 = vmul.f32 %v11893, %v6148
    %v12070 = vmul.f32 %v11896, %v6153
    %v12071 = vmul.f32 %v11899, %v6158
    %v12072 = vmul.f32 %v11902, %v6163
    %v12073 = vmul.f32 %v11905, %v6168
    %v12074 = vmul.f32 %v11908, %v6173
    %v12075 = vmul.f32 %v11911, %v6178
    %v12076 = vmul.f32 %v11914, %v6183
    %v12077 = vmul.f32 %v11917, %v6188
    %v12078 = vmul.f32 %v11920, %v6193
    %v12079 = vmul.f32 %v11923, %v6198
    %v12080 = vmul.f32 %v11926, %v6203
    %v12081 = vmul.f32 %v11929, %v6208
    %v12082 = vmul.f32 %v11932, %v6213
    %v12083 = vmul.f32 %v11935, %v6218
    %v12084 = vmul.f32 %v11938, %v6223
    %v12085 = vmul.f32 %v11941, %v6228
    %v12086 = vmul.f32 %v11944, %v6233
    %v12087 = vmul.f32 %v11947, %v6238
    %v12088 = vmul.f32 %v11950, %v6243
    %v12089 = vmul.f32 %v11953, %v6248
    %v12090 = vmul.f32 %v11956, %v6253
    %v12091 = vmul.f32 %v11959, %v6258
    %v12092 = vmul.f32 %v11962, %v6263
    %v12093 = vmul.f32 %v11965, %v6268
    %v12094 = vmul.f32 %v11968, %v6273
    %v12095 = vmul.f32 %v11971, %v6278
    %v12096 = vmul.f32 %v11974, %v6283
    %v12097 = vmul.f32 %v11977, %v6288
    %v12098 = vmul.f32 %v11980, %v6293
    %v12099 = vmul.f32 %v11983, %v6298
    %v12100 = vmul.f32 %v11986, %v6303
    %v12101 = vmul.f32 %v11989, %v6308
    %v12102 = vmul.f32 %v11992, %v6313
    %v12103 = vmul.f32 %v11995, %v6318
    %v12104 = vmul.f32 %v11998, %v6323
    %v12105 = vmul.f32 %v12001, %v6328
    %v12106 = vmul.f32 %v12004, %v6333
    %v12107 = vmul.f32 %v12007, %v6338
    %v12108 = vmul.f32 %v12010, %v6343
    %v12109 = vmul.f32 %v12013, %v6348
    %v12110 = vmul.f32 %v12016, %v6353
    %v12111 = vmul.f32 %v12019, %v6358
    %v12112 = vmul.f32 %v12022, %v6363
    %v12113 = vmul.f32 %v12025, %v6368
    %v12114 = vmul.f32 %v12028, %v6373
    %v12115 = vmul.f32 %v12031, %v6378
    %v12116 = vmul.f32 %v12034, %v6383
    %v12117 = vadd.f32 %v12036, %v12037
    %v12118 = vadd.f32 %v12117, %v12038
    %v12119 = vadd.f32 %v12118, %v12039
    %v12120 = vadd.f32 %v12119, %v12040
    %v12121 = vadd.f32 %v12120, %v12041
    %v12122 = vadd.f32 %v12121, %v12042
    %v12123 = vadd.f32 %v12122, %v12043
    %v12124 = vadd.f32 %v12123, %v12044
    %v12125 = vadd.f32 %v12124, %v12045
    %v12126 = vadd.f32 %v12125, %v12046
    %v12127 = vadd.f32 %v12126, %v12047
    %v12128 = vadd.f32 %v12127, %v12048
    %v12129 = vadd.f32 %v12128, %v12049
    %v12130 = vadd.f32 %v12129, %v12050
    %v12131 = vadd.f32 %v12130, %v12051
    %v12132 = vadd.f32 %v12131, %v12052
    %v12133 = vadd.f32 %v12132, %v12053
    %v12134 = vadd.f32 %v12133, %v12054
    %v12135 = vadd.f32 %v12134, %v12055
    %v12136 = vadd.f32 %v12135, %v12056
    %v12137 = vadd.f32 %v12136, %v12057
    %v12138 = vadd.f32 %v12137, %v12058
    %v12139 = vadd.f32 %v12138, %v12059
    %v12140 = vadd.f32 %v12139, %v12060
    %v12141 = vadd.f32 %v12140, %v12061
    %v12142 = vadd.f32 %v12141, %v12062
    %v12143 = vadd.f32 %v12142, %v12063
    %v12144 = vadd.f32 %v12143, %v12064
    %v12145 = vadd.f32 %v12144, %v12065
    %v12146 = vadd.f32 %v12145, %v12066
    %v12147 = vadd.f32 %v12146, %v12067
    %v12148 = vadd.f32 %v12147, %v12068
    %v12149 = vadd.f32 %v12148, %v12069
    %v12150 = vadd.f32 %v12149, %v12070
    %v12151 = vadd.f32 %v12150, %v12071
    %v12152 = vadd.f32 %v12151, %v12072
    %v12153 = vadd.f32 %v12152, %v12073
    %v12154 = vadd.f32 %v12153, %v12074
    %v12155 = vadd.f32 %v12154, %v12075
    %v12156 = vadd.f32 %v12155, %v12076
    %v12157 = vadd.f32 %v12156, %v12077
    %v12158 = vadd.f32 %v12157, %v12078
    %v12159 = vadd.f32 %v12158, %v12079
    %v12160 = vadd.f32 %v12159, %v12080
    %v12161 = vadd.f32 %v12160, %v12081
    %v12162 = vadd.f32 %v12161, %v12082
    %v12163 = vadd.f32 %v12162, %v12083
    %v12164 = vadd.f32 %v12163, %v12084
    %v12165 = vadd.f32 %v12164, %v12085
    %v12166 = vadd.f32 %v12165, %v12086
    %v12167 = vadd.f32 %v12166, %v12087
    %v12168 = vadd.f32 %v12167, %v12088
    %v12169 = vadd.f32 %v12168, %v12089
    %v12170 = vadd.f32 %v12169, %v12090
    %v12171 = vadd.f32 %v12170, %v12091
    %v12172 = vadd.f32 %v12171, %v12092
    %v12173 = vadd.f32 %v12172, %v12093
    %v12174 = vadd.f32 %v12173, %v12094
    %v12175 = vadd.f32 %v12174, %v12095
    %v12176 = vadd.f32 %v12175, %v12096
    %v12177 = vadd.f32 %v12176, %v12097
    %v12178 = vadd.f32 %v12177, %v12098
    %v12179 = vadd.f32 %v12178, %v12099
    %v12180 = vadd.f32 %v12179, %v12100
    %v12181 = vadd.f32 %v12180, %v12101
    %v12182 = vadd.f32 %v12181, %v12102
    %v12183 = vadd.f32 %v12182, %v12103
    %v12184 = vadd.f32 %v12183, %v12104
    %v12185 = vadd.f32 %v12184, %v12105
    %v12186 = vadd.f32 %v12185, %v12106
    %v12187 = vadd.f32 %v12186, %v12107
    %v12188 = vadd.f32 %v12187, %v12108
    %v12189 = vadd.f32 %v12188, %v12109
    %v12190 = vadd.f32 %v12189, %v12110
    %v12191 = vadd.f32 %v12190, %v12111
    %v12192 = vadd.f32 %v12191, %v12112
    %v12193 = vadd.f32 %v12192, %v12113
    %v12194 = vadd.f32 %v12193, %v12114
    %v12195 = vadd.f32 %v12194, %v12115
    %v12196 = vadd.f32 %v12195, %v12116
    %v12197 = vrot.slane %v12196, 4
    %v12198 = vadd.f32 %v12196, %v12197
    %v12199 = vrot.slane %v12198, 2
    %v12200 = vadd.f32 %v12198, %v12199
    %v12201 = vrot.slane %v12200, 1
    %v12202 = vadd.f32 %v12200, %v12201
    %v12203 = vmul.f32 %v12036, %v11794
    %v12204 = vmul.f32 %v12037, %v11797
    %v12205 = vmul.f32 %v12038, %v11800
    %v12206 = vmul.f32 %v12039, %v11803
    %v12207 = vmul.f32 %v12040, %v11806
    %v12208 = vmul.f32 %v12041, %v11809
    %v12209 = vmul.f32 %v12042, %v11812
    %v12210 = vmul.f32 %v12043, %v11815
    %v12211 = vmul.f32 %v12044, %v11818
    %v12212 = vmul.f32 %v12045, %v11821
    %v12213 = vmul.f32 %v12046, %v11824
    %v12214 = vmul.f32 %v12047, %v11827
    %v12215 = vmul.f32 %v12048, %v11830
    %v12216 = vmul.f32 %v12049, %v11833
    %v12217 = vmul.f32 %v12050, %v11836
    %v12218 = vmul.f32 %v12051, %v11839
    %v12219 = vmul.f32 %v12052, %v11842
    %v12220 = vmul.f32 %v12053, %v11845
    %v12221 = vmul.f32 %v12054, %v11848
    %v12222 = vmul.f32 %v12055, %v11851
    %v12223 = vmul.f32 %v12056, %v11854
    %v12224 = vmul.f32 %v12057, %v11857
    %v12225 = vmul.f32 %v12058, %v11860
    %v12226 = vmul.f32 %v12059, %v11863
    %v12227 = vmul.f32 %v12060, %v11866
    %v12228 = vmul.f32 %v12061, %v11869
    %v12229 = vmul.f32 %v12062, %v11872
    %v12230 = vmul.f32 %v12063, %v11875
    %v12231 = vmul.f32 %v12064, %v11878
    %v12232 = vmul.f32 %v12065, %v11881
    %v12233 = vmul.f32 %v12066, %v11884
    %v12234 = vmul.f32 %v12067, %v11887
    %v12235 = vmul.f32 %v12068, %v11890
    %v12236 = vmul.f32 %v12069, %v11893
    %v12237 = vmul.f32 %v12070, %v11896
    %v12238 = vmul.f32 %v12071, %v11899
    %v12239 = vmul.f32 %v12072, %v11902
    %v12240 = vmul.f32 %v12073, %v11905
    %v12241 = vmul.f32 %v12074, %v11908
    %v12242 = vmul.f32 %v12075, %v11911
    %v12243 = vmul.f32 %v12076, %v11914
    %v12244 = vmul.f32 %v12077, %v11917
    %v12245 = vmul.f32 %v12078, %v11920
    %v12246 = vmul.f32 %v12079, %v11923
    %v12247 = vmul.f32 %v12080, %v11926
    %v12248 = vmul.f32 %v12081, %v11929
    %v12249 = vmul.f32 %v12082, %v11932
    %v12250 = vmul.f32 %v12083, %v11935
    %v12251 = vmul.f32 %v12084, %v11938
    %v12252 = vmul.f32 %v12085, %v11941
    %v12253 = vmul.f32 %v12086, %v11944
    %v12254 = vmul.f32 %v12087, %v11947
    %v12255 = vmul.f32 %v12088, %v11950
    %v12256 = vmul.f32 %v12089, %v11953
    %v12257 = vmul.f32 %v12090, %v11956
    %v12258 = vmul.f32 %v12091, %v11959
    %v12259 = vmul.f32 %v12092, %v11962
    %v12260 = vmul.f32 %v12093, %v11965
    %v12261 = vmul.f32 %v12094, %v11968
    %v12262 = vmul.f32 %v12095, %v11971
    %v12263 = vmul.f32 %v12096, %v11974
    %v12264 = vmul.f32 %v12097, %v11977
    %v12265 = vmul.f32 %v12098, %v11980
    %v12266 = vmul.f32 %v12099, %v11983
    %v12267 = vmul.f32 %v12100, %v11986
    %v12268 = vmul.f32 %v12101, %v11989
    %v12269 = vmul.f32 %v12102, %v11992
    %v12270 = vmul.f32 %v12103, %v11995
    %v12271 = vmul.f32 %v12104, %v11998
    %v12272 = vmul.f32 %v12105, %v12001
    %v12273 = vmul.f32 %v12106, %v12004
    %v12274 = vmul.f32 %v12107, %v12007
    %v12275 = vmul.f32 %v12108, %v12010
    %v12276 = vmul.f32 %v12109, %v12013
    %v12277 = vmul.f32 %v12110, %v12016
    %v12278 = vmul.f32 %v12111, %v12019
    %v12279 = vmul.f32 %v12112, %v12022
    %v12280 = vmul.f32 %v12113, %v12025
    %v12281 = vmul.f32 %v12114, %v12028
    %v12282 = vmul.f32 %v12115, %v12031
    %v12283 = vmul.f32 %v12116, %v12034
    %v12284 = vadd.f32 %v12203, %v12204
    %v12285 = vadd.f32 %v12284, %v12205
    %v12286 = vadd.f32 %v12285, %v12206
    %v12287 = vadd.f32 %v12286, %v12207
    %v12288 = vadd.f32 %v12287, %v12208
    %v12289 = vadd.f32 %v12288, %v12209
    %v12290 = vadd.f32 %v12289, %v12210
    %v12291 = vadd.f32 %v12290, %v12211
    %v12292 = vadd.f32 %v12291, %v12212
    %v12293 = vadd.f32 %v12292, %v12213
    %v12294 = vadd.f32 %v12293, %v12214
    %v12295 = vadd.f32 %v12294, %v12215
    %v12296 = vadd.f32 %v12295, %v12216
    %v12297 = vadd.f32 %v12296, %v12217
    %v12298 = vadd.f32 %v12297, %v12218
    %v12299 = vadd.f32 %v12298, %v12219
    %v12300 = vadd.f32 %v12299, %v12220
    %v12301 = vadd.f32 %v12300, %v12221
    %v12302 = vadd.f32 %v12301, %v12222
    %v12303 = vadd.f32 %v12302, %v12223
    %v12304 = vadd.f32 %v12303, %v12224
    %v12305 = vadd.f32 %v12304, %v12225
    %v12306 = vadd.f32 %v12305, %v12226
    %v12307 = vadd.f32 %v12306, %v12227
    %v12308 = vadd.f32 %v12307, %v12228
    %v12309 = vadd.f32 %v12308, %v12229
    %v12310 = vadd.f32 %v12309, %v12230
    %v12311 = vadd.f32 %v12310, %v12231
    %v12312 = vadd.f32 %v12311, %v12232
    %v12313 = vadd.f32 %v12312, %v12233
    %v12314 = vadd.f32 %v12313, %v12234
    %v12315 = vadd.f32 %v12314, %v12235
    %v12316 = vadd.f32 %v12315, %v12236
    %v12317 = vadd.f32 %v12316, %v12237
    %v12318 = vadd.f32 %v12317, %v12238
    %v12319 = vadd.f32 %v12318, %v12239
    %v12320 = vadd.f32 %v12319, %v12240
    %v12321 = vadd.f32 %v12320, %v12241
    %v12322 = vadd.f32 %v12321, %v12242
    %v12323 = vadd.f32 %v12322, %v12243
    %v12324 = vadd.f32 %v12323, %v12244
    %v12325 = vadd.f32 %v12324, %v12245
    %v12326 = vadd.f32 %v12325, %v12246
    %v12327 = vadd.f32 %v12326, %v12247
    %v12328 = vadd.f32 %v12327, %v12248
    %v12329 = vadd.f32 %v12328, %v12249
    %v12330 = vadd.f32 %v12329, %v12250
    %v12331 = vadd.f32 %v12330, %v12251
    %v12332 = vadd.f32 %v12331, %v12252
    %v12333 = vadd.f32 %v12332, %v12253
    %v12334 = vadd.f32 %v12333, %v12254
    %v12335 = vadd.f32 %v12334, %v12255
    %v12336 = vadd.f32 %v12335, %v12256
    %v12337 = vadd.f32 %v12336, %v12257
    %v12338 = vadd.f32 %v12337, %v12258
    %v12339 = vadd.f32 %v12338, %v12259
    %v12340 = vadd.f32 %v12339, %v12260
    %v12341 = vadd.f32 %v12340, %v12261
    %v12342 = vadd.f32 %v12341, %v12262
    %v12343 = vadd.f32 %v12342, %v12263
    %v12344 = vadd.f32 %v12343, %v12264
    %v12345 = vadd.f32 %v12344, %v12265
    %v12346 = vadd.f32 %v12345, %v12266
    %v12347 = vadd.f32 %v12346, %v12267
    %v12348 = vadd.f32 %v12347, %v12268
    %v12349 = vadd.f32 %v12348, %v12269
    %v12350 = vadd.f32 %v12349, %v12270
    %v12351 = vadd.f32 %v12350, %v12271
    %v12352 = vadd.f32 %v12351, %v12272
    %v12353 = vadd.f32 %v12352, %v12273
    %v12354 = vadd.f32 %v12353, %v12274
    %v12355 = vadd.f32 %v12354, %v12275
    %v12356 = vadd.f32 %v12355, %v12276
    %v12357 = vadd.f32 %v12356, %v12277
    %v12358 = vadd.f32 %v12357, %v12278
    %v12359 = vadd.f32 %v12358, %v12279
    %v12360 = vadd.f32 %v12359, %v12280
    %v12361 = vadd.f32 %v12360, %v12281
    %v12362 = vadd.f32 %v12361, %v12282
    %v12363 = vadd.f32 %v12362, %v12283
    %v12364 = vrot.slane %v12363, 4
    %v12365 = vadd.f32 %v12363, %v12364
    %v12366 = vrot.slane %v12365, 2
    %v12367 = vadd.f32 %v12365, %v12366
    %v12368 = vrot.slane %v12367, 1
    %v12369 = vadd.f32 %v12367, %v12368
    %v12370 = vmul.f32 %v12202, 0.001953125
    %v12371 = vmul.f32 %v12369, 0.001953125
    %v12372 = vmul.f32 %v12370, %v12370
    %v12373 = vsub.f32 %v12371, %v12372
    %v12374 = vmax.f32 %v12373, 0.0
    %v12375 = vadd.f32 %v12374, 1e-05
    %v12376 = vrsqrt.pop %v12375
    %v12377 = vmul.f32 %v12376, %v12375
    %v12378 = vmul.f32 %v12377, %v12376
    %v12379 = vmul.f32 0.5, %v12378
    %v12380 = vsub.f32 1.5, %v12379
    %v12381 = vmul.f32 %v12376, %v12380
    %vm12382 = vweird.f32 %v12375
    %vm12383 = vweird.f32 %v12376
    %vm12384 = vmor %vm12382, %vm12383
    %v12385 = vsel %vm12384, %v12376, %v12381
    %v12386 = vsub.f32 %v11017, %v11432
    %v12387 = vsub.f32 %v11018, %v11432
    %v12388 = vsub.f32 %v11019, %v11432
    %v12389 = vsub.f32 %v11020, %v11432
    %v12390 = vsub.f32 %v11021, %v11432
    %v12391 = vsub.f32 %v11022, %v11432
    %v12392 = vsub.f32 %v11023, %v11432
    %v12393 = vsub.f32 %v11024, %v11432
    %v12394 = vsub.f32 %v11025, %v11432
    %v12395 = vsub.f32 %v11026, %v11432
    %v12396 = vsub.f32 %v11027, %v11432
    %v12397 = vsub.f32 %v11028, %v11432
    %v12398 = vsub.f32 %v11029, %v11432
    %v12399 = vsub.f32 %v11030, %v11432
    %v12400 = vsub.f32 %v11031, %v11432
    %v12401 = vsub.f32 %v11032, %v11432
    %v12402 = vsub.f32 %v11033, %v11432
    %v12403 = vsub.f32 %v11034, %v11432
    %v12404 = vsub.f32 %v11035, %v11432
    %v12405 = vsub.f32 %v11036, %v11432
    %v12406 = vsub.f32 %v11037, %v11432
    %v12407 = vsub.f32 %v11038, %v11432
    %v12408 = vsub.f32 %v11039, %v11432
    %v12409 = vsub.f32 %v11040, %v11432
    %v12410 = vsub.f32 %v11041, %v11432
    %v12411 = vsub.f32 %v11042, %v11432
    %v12412 = vsub.f32 %v11043, %v11432
    %v12413 = vsub.f32 %v11044, %v11432
    %v12414 = vsub.f32 %v11045, %v11432
    %v12415 = vsub.f32 %v11046, %v11432
    %v12416 = vsub.f32 %v11047, %v11432
    %v12417 = vsub.f32 %v11048, %v11432
    %v12418 = vsub.f32 %v11049, %v11432
    %v12419 = vsub.f32 %v11050, %v11432
    %v12420 = vsub.f32 %v11051, %v11432
    %v12421 = vsub.f32 %v11052, %v11432
    %v12422 = vsub.f32 %v11053, %v11432
    %v12423 = vsub.f32 %v11054, %v11432
    %v12424 = vsub.f32 %v11055, %v11432
    %v12425 = vsub.f32 %v11056, %v11432
    %v12426 = vsub.f32 %v11057, %v11432
    %v12427 = vsub.f32 %v11058, %v11432
    %v12428 = vsub.f32 %v11059, %v11432
    %v12429 = vsub.f32 %v11060, %v11432
    %v12430 = vsub.f32 %v11061, %v11432
    %v12431 = vsub.f32 %v11062, %v11432
    %v12432 = vsub.f32 %v11063, %v11432
    %v12433 = vsub.f32 %v11064, %v11432
    %v12434 = vsub.f32 %v11065, %v11432
    %v12435 = vsub.f32 %v11066, %v11432
    %v12436 = vsub.f32 %v11067, %v11432
    %v12437 = vsub.f32 %v11068, %v11432
    %v12438 = vsub.f32 %v11069, %v11432
    %v12439 = vsub.f32 %v11070, %v11432
    %v12440 = vsub.f32 %v11071, %v11432
    %v12441 = vsub.f32 %v11072, %v11432
    %v12442 = vsub.f32 %v11073, %v11432
    %v12443 = vsub.f32 %v11074, %v11432
    %v12444 = vsub.f32 %v11075, %v11432
    %v12445 = vsub.f32 %v11076, %v11432
    %v12446 = vsub.f32 %v11077, %v11432
    %v12447 = vsub.f32 %v11078, %v11432
    %v12448 = vsub.f32 %v11079, %v11432
    %v12449 = vsub.f32 %v11080, %v11432
    %v12450 = vsub.f32 %v11081, %v11432
    %v12451 = vsub.f32 %v11082, %v11432
    %v12452 = vsub.f32 %v11083, %v11432
    %v12453 = vsub.f32 %v11084, %v11432
    %v12454 = vsub.f32 %v11085, %v11432
    %v12455 = vsub.f32 %v11086, %v11432
    %v12456 = vsub.f32 %v11087, %v11432
    %v12457 = vsub.f32 %v11088, %v11432
    %v12458 = vsub.f32 %v11089, %v11432
    %v12459 = vsub.f32 %v11090, %v11432
    %v12460 = vsub.f32 %v11091, %v11432
    %v12461 = vsub.f32 %v11092, %v11432
    %v12462 = vsub.f32 %v11093, %v11432
    %v12463 = vsub.f32 %v11094, %v11432
    %v12464 = vsub.f32 %v11095, %v11432
    %v12465 = vsub.f32 %v11096, %v11432
    %v12466 = vsub.f32 %v11097, %v11432
    %v12467 = vmul.f32 %v12386, %v11447
    %v12468 = vmul.f32 %v12387, %v11447
    %v12469 = vmul.f32 %v12388, %v11447
    %v12470 = vmul.f32 %v12389, %v11447
    %v12471 = vmul.f32 %v12390, %v11447
    %v12472 = vmul.f32 %v12391, %v11447
    %v12473 = vmul.f32 %v12392, %v11447
    %v12474 = vmul.f32 %v12393, %v11447
    %v12475 = vmul.f32 %v12394, %v11447
    %v12476 = vmul.f32 %v12395, %v11447
    %v12477 = vmul.f32 %v12396, %v11447
    %v12478 = vmul.f32 %v12397, %v11447
    %v12479 = vmul.f32 %v12398, %v11447
    %v12480 = vmul.f32 %v12399, %v11447
    %v12481 = vmul.f32 %v12400, %v11447
    %v12482 = vmul.f32 %v12401, %v11447
    %v12483 = vmul.f32 %v12402, %v11447
    %v12484 = vmul.f32 %v12403, %v11447
    %v12485 = vmul.f32 %v12404, %v11447
    %v12486 = vmul.f32 %v12405, %v11447
    %v12487 = vmul.f32 %v12406, %v11447
    %v12488 = vmul.f32 %v12407, %v11447
    %v12489 = vmul.f32 %v12408, %v11447
    %v12490 = vmul.f32 %v12409, %v11447
    %v12491 = vmul.f32 %v12410, %v11447
    %v12492 = vmul.f32 %v12411, %v11447
    %v12493 = vmul.f32 %v12412, %v11447
    %v12494 = vmul.f32 %v12413, %v11447
    %v12495 = vmul.f32 %v12414, %v11447
    %v12496 = vmul.f32 %v12415, %v11447
    %v12497 = vmul.f32 %v12416, %v11447
    %v12498 = vmul.f32 %v12417, %v11447
    %v12499 = vmul.f32 %v12418, %v11447
    %v12500 = vmul.f32 %v12419, %v11447
    %v12501 = vmul.f32 %v12420, %v11447
    %v12502 = vmul.f32 %v12421, %v11447
    %v12503 = vmul.f32 %v12422, %v11447
    %v12504 = vmul.f32 %v12423, %v11447
    %v12505 = vmul.f32 %v12424, %v11447
    %v12506 = vmul.f32 %v12425, %v11447
    %v12507 = vmul.f32 %v12426, %v11447
    %v12508 = vmul.f32 %v12427, %v11447
    %v12509 = vmul.f32 %v12428, %v11447
    %v12510 = vmul.f32 %v12429, %v11447
    %v12511 = vmul.f32 %v12430, %v11447
    %v12512 = vmul.f32 %v12431, %v11447
    %v12513 = vmul.f32 %v12432, %v11447
    %v12514 = vmul.f32 %v12433, %v11447
    %v12515 = vmul.f32 %v12434, %v11447
    %v12516 = vmul.f32 %v12435, %v11447
    %v12517 = vmul.f32 %v12436, %v11447
    %v12518 = vmul.f32 %v12437, %v11447
    %v12519 = vmul.f32 %v12438, %v11447
    %v12520 = vmul.f32 %v12439, %v11447
    %v12521 = vmul.f32 %v12440, %v11447
    %v12522 = vmul.f32 %v12441, %v11447
    %v12523 = vmul.f32 %v12442, %v11447
    %v12524 = vmul.f32 %v12443, %v11447
    %v12525 = vmul.f32 %v12444, %v11447
    %v12526 = vmul.f32 %v12445, %v11447
    %v12527 = vmul.f32 %v12446, %v11447
    %v12528 = vmul.f32 %v12447, %v11447
    %v12529 = vmul.f32 %v12448, %v11447
    %v12530 = vmul.f32 %v12449, %v11447
    %v12531 = vmul.f32 %v12450, %v11447
    %v12532 = vmul.f32 %v12451, %v11447
    %v12533 = vmul.f32 %v12452, %v11447
    %v12534 = vmul.f32 %v12453, %v11447
    %v12535 = vmul.f32 %v12454, %v11447
    %v12536 = vmul.f32 %v12455, %v11447
    %v12537 = vmul.f32 %v12456, %v11447
    %v12538 = vmul.f32 %v12457, %v11447
    %v12539 = vmul.f32 %v12458, %v11447
    %v12540 = vmul.f32 %v12459, %v11447
    %v12541 = vmul.f32 %v12460, %v11447
    %v12542 = vmul.f32 %v12461, %v11447
    %v12543 = vmul.f32 %v12462, %v11447
    %v12544 = vmul.f32 %v12463, %v11447
    %v12545 = vmul.f32 %v12464, %v11447
    %v12546 = vmul.f32 %v12465, %v11447
    %v12547 = vmul.f32 %v12466, %v11447
    %v12548 = vperm.slane %v107, 0
    %v12549 = vmul.f32 %v12467, %v12548
    %v12550 = vmul.f32 %v12468, %v12548
    %v12551 = vmul.f32 %v12469, %v12548
    %v12552 = vmul.f32 %v12470, %v12548
    %v12553 = vmul.f32 %v12471, %v12548
    %v12554 = vmul.f32 %v12472, %v12548
    %v12555 = vmul.f32 %v12473, %v12548
    %v12556 = vmul.f32 %v12474, %v12548
    %v12557 = vmul.f32 %v12475, %v12548
    %v12558 = vmul.f32 %v12476, %v12548
    %v12559 = vmul.f32 %v12477, %v12548
    %v12560 = vmul.f32 %v12478, %v12548
    %v12561 = vmul.f32 %v12479, %v12548
    %v12562 = vmul.f32 %v12480, %v12548
    %v12563 = vmul.f32 %v12481, %v12548
    %v12564 = vmul.f32 %v12482, %v12548
    %v12565 = vmul.f32 %v12483, %v12548
    %v12566 = vmul.f32 %v12484, %v12548
    %v12567 = vmul.f32 %v12485, %v12548
    %v12568 = vmul.f32 %v12486, %v12548
    %v12569 = vmul.f32 %v12487, %v12548
    %v12570 = vmul.f32 %v12488, %v12548
    %v12571 = vmul.f32 %v12489, %v12548
    %v12572 = vmul.f32 %v12490, %v12548
    %v12573 = vmul.f32 %v12491, %v12548
    %v12574 = vmul.f32 %v12492, %v12548
    %v12575 = vmul.f32 %v12493, %v12548
    %v12576 = vmul.f32 %v12494, %v12548
    %v12577 = vmul.f32 %v12495, %v12548
    %v12578 = vmul.f32 %v12496, %v12548
    %v12579 = vmul.f32 %v12497, %v12548
    %v12580 = vmul.f32 %v12498, %v12548
    %v12581 = vmul.f32 %v12499, %v12548
    %v12582 = vmul.f32 %v12500, %v12548
    %v12583 = vmul.f32 %v12501, %v12548
    %v12584 = vmul.f32 %v12502, %v12548
    %v12585 = vmul.f32 %v12503, %v12548
    %v12586 = vmul.f32 %v12504, %v12548
    %v12587 = vmul.f32 %v12505, %v12548
    %v12588 = vmul.f32 %v12506, %v12548
    %v12589 = vmul.f32 %v12507, %v12548
    %v12590 = vmul.f32 %v12508, %v12548
    %v12591 = vmul.f32 %v12509, %v12548
    %v12592 = vmul.f32 %v12510, %v12548
    %v12593 = vmul.f32 %v12511, %v12548
    %v12594 = vmul.f32 %v12512, %v12548
    %v12595 = vmul.f32 %v12513, %v12548
    %v12596 = vmul.f32 %v12514, %v12548
    %v12597 = vmul.f32 %v12515, %v12548
    %v12598 = vmul.f32 %v12516, %v12548
    %v12599 = vmul.f32 %v12517, %v12548
    %v12600 = vmul.f32 %v12518, %v12548
    %v12601 = vmul.f32 %v12519, %v12548
    %v12602 = vmul.f32 %v12520, %v12548
    %v12603 = vmul.f32 %v12521, %v12548
    %v12604 = vmul.f32 %v12522, %v12548
    %v12605 = vmul.f32 %v12523, %v12548
    %v12606 = vmul.f32 %v12524, %v12548
    %v12607 = vmul.f32 %v12525, %v12548
    %v12608 = vmul.f32 %v12526, %v12548
    %v12609 = vmul.f32 %v12527, %v12548
    %v12610 = vmul.f32 %v12528, %v12548
    %v12611 = vmul.f32 %v12529, %v12548
    %v12612 = vmul.f32 %v12530, %v12548
    %v12613 = vmul.f32 %v12531, %v12548
    %v12614 = vmul.f32 %v12532, %v12548
    %v12615 = vmul.f32 %v12533, %v12548
    %v12616 = vmul.f32 %v12534, %v12548
    %v12617 = vmul.f32 %v12535, %v12548
    %v12618 = vmul.f32 %v12536, %v12548
    %v12619 = vmul.f32 %v12537, %v12548
    %v12620 = vmul.f32 %v12538, %v12548
    %v12621 = vmul.f32 %v12539, %v12548
    %v12622 = vmul.f32 %v12540, %v12548
    %v12623 = vmul.f32 %v12541, %v12548
    %v12624 = vmul.f32 %v12542, %v12548
    %v12625 = vmul.f32 %v12543, %v12548
    %v12626 = vmul.f32 %v12544, %v12548
    %v12627 = vmul.f32 %v12545, %v12548
    %v12628 = vmul.f32 %v12546, %v12548
    %v12629 = vmul.f32 %v12547, %v12548
    %v12630 = vperm.slane %v108, 0
    %v12631 = vadd.f32 %v12549, %v12630
    %v12632 = vadd.f32 %v12550, %v12630
    %v12633 = vadd.f32 %v12551, %v12630
    %v12634 = vadd.f32 %v12552, %v12630
    %v12635 = vadd.f32 %v12553, %v12630
    %v12636 = vadd.f32 %v12554, %v12630
    %v12637 = vadd.f32 %v12555, %v12630
    %v12638 = vadd.f32 %v12556, %v12630
    %v12639 = vadd.f32 %v12557, %v12630
    %v12640 = vadd.f32 %v12558, %v12630
    %v12641 = vadd.f32 %v12559, %v12630
    %v12642 = vadd.f32 %v12560, %v12630
    %v12643 = vadd.f32 %v12561, %v12630
    %v12644 = vadd.f32 %v12562, %v12630
    %v12645 = vadd.f32 %v12563, %v12630
    %v12646 = vadd.f32 %v12564, %v12630
    %v12647 = vadd.f32 %v12565, %v12630
    %v12648 = vadd.f32 %v12566, %v12630
    %v12649 = vadd.f32 %v12567, %v12630
    %v12650 = vadd.f32 %v12568, %v12630
    %v12651 = vadd.f32 %v12569, %v12630
    %v12652 = vadd.f32 %v12570, %v12630
    %v12653 = vadd.f32 %v12571, %v12630
    %v12654 = vadd.f32 %v12572, %v12630
    %v12655 = vadd.f32 %v12573, %v12630
    %v12656 = vadd.f32 %v12574, %v12630
    %v12657 = vadd.f32 %v12575, %v12630
    %v12658 = vadd.f32 %v12576, %v12630
    %v12659 = vadd.f32 %v12577, %v12630
    %v12660 = vadd.f32 %v12578, %v12630
    %v12661 = vadd.f32 %v12579, %v12630
    %v12662 = vadd.f32 %v12580, %v12630
    %v12663 = vadd.f32 %v12581, %v12630
    %v12664 = vadd.f32 %v12582, %v12630
    %v12665 = vadd.f32 %v12583, %v12630
    %v12666 = vadd.f32 %v12584, %v12630
    %v12667 = vadd.f32 %v12585, %v12630
    %v12668 = vadd.f32 %v12586, %v12630
    %v12669 = vadd.f32 %v12587, %v12630
    %v12670 = vadd.f32 %v12588, %v12630
    %v12671 = vadd.f32 %v12589, %v12630
    %v12672 = vadd.f32 %v12590, %v12630
    %v12673 = vadd.f32 %v12591, %v12630
    %v12674 = vadd.f32 %v12592, %v12630
    %v12675 = vadd.f32 %v12593, %v12630
    %v12676 = vadd.f32 %v12594, %v12630
    %v12677 = vadd.f32 %v12595, %v12630
    %v12678 = vadd.f32 %v12596, %v12630
    %v12679 = vadd.f32 %v12597, %v12630
    %v12680 = vadd.f32 %v12598, %v12630
    %v12681 = vadd.f32 %v12599, %v12630
    %v12682 = vadd.f32 %v12600, %v12630
    %v12683 = vadd.f32 %v12601, %v12630
    %v12684 = vadd.f32 %v12602, %v12630
    %v12685 = vadd.f32 %v12603, %v12630
    %v12686 = vadd.f32 %v12604, %v12630
    %v12687 = vadd.f32 %v12605, %v12630
    %v12688 = vadd.f32 %v12606, %v12630
    %v12689 = vadd.f32 %v12607, %v12630
    %v12690 = vadd.f32 %v12608, %v12630
    %v12691 = vadd.f32 %v12609, %v12630
    %v12692 = vadd.f32 %v12610, %v12630
    %v12693 = vadd.f32 %v12611, %v12630
    %v12694 = vadd.f32 %v12612, %v12630
    %v12695 = vadd.f32 %v12613, %v12630
    %v12696 = vadd.f32 %v12614, %v12630
    %v12697 = vadd.f32 %v12615, %v12630
    %v12698 = vadd.f32 %v12616, %v12630
    %v12699 = vadd.f32 %v12617, %v12630
    %v12700 = vadd.f32 %v12618, %v12630
    %v12701 = vadd.f32 %v12619, %v12630
    %v12702 = vadd.f32 %v12620, %v12630
    %v12703 = vadd.f32 %v12621, %v12630
    %v12704 = vadd.f32 %v12622, %v12630
    %v12705 = vadd.f32 %v12623, %v12630
    %v12706 = vadd.f32 %v12624, %v12630
    %v12707 = vadd.f32 %v12625, %v12630
    %v12708 = vadd.f32 %v12626, %v12630
    %v12709 = vadd.f32 %v12627, %v12630
    %v12710 = vadd.f32 %v12628, %v12630
    %v12711 = vadd.f32 %v12629, %v12630
    %v12712 = vsub.f32 %v11794, %v12370
    %v12713 = vsub.f32 %v11797, %v12370
    %v12714 = vsub.f32 %v11800, %v12370
    %v12715 = vsub.f32 %v11803, %v12370
    %v12716 = vsub.f32 %v11806, %v12370
    %v12717 = vsub.f32 %v11809, %v12370
    %v12718 = vsub.f32 %v11812, %v12370
    %v12719 = vsub.f32 %v11815, %v12370
    %v12720 = vsub.f32 %v11818, %v12370
    %v12721 = vsub.f32 %v11821, %v12370
    %v12722 = vsub.f32 %v11824, %v12370
    %v12723 = vsub.f32 %v11827, %v12370
    %v12724 = vsub.f32 %v11830, %v12370
    %v12725 = vsub.f32 %v11833, %v12370
    %v12726 = vsub.f32 %v11836, %v12370
    %v12727 = vsub.f32 %v11839, %v12370
    %v12728 = vsub.f32 %v11842, %v12370
    %v12729 = vsub.f32 %v11845, %v12370
    %v12730 = vsub.f32 %v11848, %v12370
    %v12731 = vsub.f32 %v11851, %v12370
    %v12732 = vsub.f32 %v11854, %v12370
    %v12733 = vsub.f32 %v11857, %v12370
    %v12734 = vsub.f32 %v11860, %v12370
    %v12735 = vsub.f32 %v11863, %v12370
    %v12736 = vsub.f32 %v11866, %v12370
    %v12737 = vsub.f32 %v11869, %v12370
    %v12738 = vsub.f32 %v11872, %v12370
    %v12739 = vsub.f32 %v11875, %v12370
    %v12740 = vsub.f32 %v11878, %v12370
    %v12741 = vsub.f32 %v11881, %v12370
    %v12742 = vsub.f32 %v11884, %v12370
    %v12743 = vsub.f32 %v11887, %v12370
    %v12744 = vsub.f32 %v11890, %v12370
    %v12745 = vsub.f32 %v11893, %v12370
    %v12746 = vsub.f32 %v11896, %v12370
    %v12747 = vsub.f32 %v11899, %v12370
    %v12748 = vsub.f32 %v11902, %v12370
    %v12749 = vsub.f32 %v11905, %v12370
    %v12750 = vsub.f32 %v11908, %v12370
    %v12751 = vsub.f32 %v11911, %v12370
    %v12752 = vsub.f32 %v11914, %v12370
    %v12753 = vsub.f32 %v11917, %v12370
    %v12754 = vsub.f32 %v11920, %v12370
    %v12755 = vsub.f32 %v11923, %v12370
    %v12756 = vsub.f32 %v11926, %v12370
    %v12757 = vsub.f32 %v11929, %v12370
    %v12758 = vsub.f32 %v11932, %v12370
    %v12759 = vsub.f32 %v11935, %v12370
    %v12760 = vsub.f32 %v11938, %v12370
    %v12761 = vsub.f32 %v11941, %v12370
    %v12762 = vsub.f32 %v11944, %v12370
    %v12763 = vsub.f32 %v11947, %v12370
    %v12764 = vsub.f32 %v11950, %v12370
    %v12765 = vsub.f32 %v11953, %v12370
    %v12766 = vsub.f32 %v11956, %v12370
    %v12767 = vsub.f32 %v11959, %v12370
    %v12768 = vsub.f32 %v11962, %v12370
    %v12769 = vsub.f32 %v11965, %v12370
    %v12770 = vsub.f32 %v11968, %v12370
    %v12771 = vsub.f32 %v11971, %v12370
    %v12772 = vsub.f32 %v11974, %v12370
    %v12773 = vsub.f32 %v11977, %v12370
    %v12774 = vsub.f32 %v11980, %v12370
    %v12775 = vsub.f32 %v11983, %v12370
    %v12776 = vsub.f32 %v11986, %v12370
    %v12777 = vsub.f32 %v11989, %v12370
    %v12778 = vsub.f32 %v11992, %v12370
    %v12779 = vsub.f32 %v11995, %v12370
    %v12780 = vsub.f32 %v11998, %v12370
    %v12781 = vsub.f32 %v12001, %v12370
    %v12782 = vsub.f32 %v12004, %v12370
    %v12783 = vsub.f32 %v12007, %v12370
    %v12784 = vsub.f32 %v12010, %v12370
    %v12785 = vsub.f32 %v12013, %v12370
    %v12786 = vsub.f32 %v12016, %v12370
    %v12787 = vsub.f32 %v12019, %v12370
    %v12788 = vsub.f32 %v12022, %v12370
    %v12789 = vsub.f32 %v12025, %v12370
    %v12790 = vsub.f32 %v12028, %v12370
    %v12791 = vsub.f32 %v12031, %v12370
    %v12792 = vsub.f32 %v12034, %v12370
    %v12793 = vmul.f32 %v12712, %v12385
    %v12794 = vmul.f32 %v12713, %v12385
    %v12795 = vmul.f32 %v12714, %v12385
    %v12796 = vmul.f32 %v12715, %v12385
    %v12797 = vmul.f32 %v12716, %v12385
    %v12798 = vmul.f32 %v12717, %v12385
    %v12799 = vmul.f32 %v12718, %v12385
    %v12800 = vmul.f32 %v12719, %v12385
    %v12801 = vmul.f32 %v12720, %v12385
    %v12802 = vmul.f32 %v12721, %v12385
    %v12803 = vmul.f32 %v12722, %v12385
    %v12804 = vmul.f32 %v12723, %v12385
    %v12805 = vmul.f32 %v12724, %v12385
    %v12806 = vmul.f32 %v12725, %v12385
    %v12807 = vmul.f32 %v12726, %v12385
    %v12808 = vmul.f32 %v12727, %v12385
    %v12809 = vmul.f32 %v12728, %v12385
    %v12810 = vmul.f32 %v12729, %v12385
    %v12811 = vmul.f32 %v12730, %v12385
    %v12812 = vmul.f32 %v12731, %v12385
    %v12813 = vmul.f32 %v12732, %v12385
    %v12814 = vmul.f32 %v12733, %v12385
    %v12815 = vmul.f32 %v12734, %v12385
    %v12816 = vmul.f32 %v12735, %v12385
    %v12817 = vmul.f32 %v12736, %v12385
    %v12818 = vmul.f32 %v12737, %v12385
    %v12819 = vmul.f32 %v12738, %v12385
    %v12820 = vmul.f32 %v12739, %v12385
    %v12821 = vmul.f32 %v12740, %v12385
    %v12822 = vmul.f32 %v12741, %v12385
    %v12823 = vmul.f32 %v12742, %v12385
    %v12824 = vmul.f32 %v12743, %v12385
    %v12825 = vmul.f32 %v12744, %v12385
    %v12826 = vmul.f32 %v12745, %v12385
    %v12827 = vmul.f32 %v12746, %v12385
    %v12828 = vmul.f32 %v12747, %v12385
    %v12829 = vmul.f32 %v12748, %v12385
    %v12830 = vmul.f32 %v12749, %v12385
    %v12831 = vmul.f32 %v12750, %v12385
    %v12832 = vmul.f32 %v12751, %v12385
    %v12833 = vmul.f32 %v12752, %v12385
    %v12834 = vmul.f32 %v12753, %v12385
    %v12835 = vmul.f32 %v12754, %v12385
    %v12836 = vmul.f32 %v12755, %v12385
    %v12837 = vmul.f32 %v12756, %v12385
    %v12838 = vmul.f32 %v12757, %v12385
    %v12839 = vmul.f32 %v12758, %v12385
    %v12840 = vmul.f32 %v12759, %v12385
    %v12841 = vmul.f32 %v12760, %v12385
    %v12842 = vmul.f32 %v12761, %v12385
    %v12843 = vmul.f32 %v12762, %v12385
    %v12844 = vmul.f32 %v12763, %v12385
    %v12845 = vmul.f32 %v12764, %v12385
    %v12846 = vmul.f32 %v12765, %v12385
    %v12847 = vmul.f32 %v12766, %v12385
    %v12848 = vmul.f32 %v12767, %v12385
    %v12849 = vmul.f32 %v12768, %v12385
    %v12850 = vmul.f32 %v12769, %v12385
    %v12851 = vmul.f32 %v12770, %v12385
    %v12852 = vmul.f32 %v12771, %v12385
    %v12853 = vmul.f32 %v12772, %v12385
    %v12854 = vmul.f32 %v12773, %v12385
    %v12855 = vmul.f32 %v12774, %v12385
    %v12856 = vmul.f32 %v12775, %v12385
    %v12857 = vmul.f32 %v12776, %v12385
    %v12858 = vmul.f32 %v12777, %v12385
    %v12859 = vmul.f32 %v12778, %v12385
    %v12860 = vmul.f32 %v12779, %v12385
    %v12861 = vmul.f32 %v12780, %v12385
    %v12862 = vmul.f32 %v12781, %v12385
    %v12863 = vmul.f32 %v12782, %v12385
    %v12864 = vmul.f32 %v12783, %v12385
    %v12865 = vmul.f32 %v12784, %v12385
    %v12866 = vmul.f32 %v12785, %v12385
    %v12867 = vmul.f32 %v12786, %v12385
    %v12868 = vmul.f32 %v12787, %v12385
    %v12869 = vmul.f32 %v12788, %v12385
    %v12870 = vmul.f32 %v12789, %v12385
    %v12871 = vmul.f32 %v12790, %v12385
    %v12872 = vmul.f32 %v12791, %v12385
    %v12873 = vmul.f32 %v12792, %v12385
    %v12874 = vperm.slane %v109, 0
    %v12875 = vmul.f32 %v12793, %v12874
    %v12876 = vmul.f32 %v12794, %v12874
    %v12877 = vmul.f32 %v12795, %v12874
    %v12878 = vmul.f32 %v12796, %v12874
    %v12879 = vmul.f32 %v12797, %v12874
    %v12880 = vmul.f32 %v12798, %v12874
    %v12881 = vmul.f32 %v12799, %v12874
    %v12882 = vmul.f32 %v12800, %v12874
    %v12883 = vmul.f32 %v12801, %v12874
    %v12884 = vmul.f32 %v12802, %v12874
    %v12885 = vmul.f32 %v12803, %v12874
    %v12886 = vmul.f32 %v12804, %v12874
    %v12887 = vmul.f32 %v12805, %v12874
    %v12888 = vmul.f32 %v12806, %v12874
    %v12889 = vmul.f32 %v12807, %v12874
    %v12890 = vmul.f32 %v12808, %v12874
    %v12891 = vmul.f32 %v12809, %v12874
    %v12892 = vmul.f32 %v12810, %v12874
    %v12893 = vmul.f32 %v12811, %v12874
    %v12894 = vmul.f32 %v12812, %v12874
    %v12895 = vmul.f32 %v12813, %v12874
    %v12896 = vmul.f32 %v12814, %v12874
    %v12897 = vmul.f32 %v12815, %v12874
    %v12898 = vmul.f32 %v12816, %v12874
    %v12899 = vmul.f32 %v12817, %v12874
    %v12900 = vmul.f32 %v12818, %v12874
    %v12901 = vmul.f32 %v12819, %v12874
    %v12902 = vmul.f32 %v12820, %v12874
    %v12903 = vmul.f32 %v12821, %v12874
    %v12904 = vmul.f32 %v12822, %v12874
    %v12905 = vmul.f32 %v12823, %v12874
    %v12906 = vmul.f32 %v12824, %v12874
    %v12907 = vmul.f32 %v12825, %v12874
    %v12908 = vmul.f32 %v12826, %v12874
    %v12909 = vmul.f32 %v12827, %v12874
    %v12910 = vmul.f32 %v12828, %v12874
    %v12911 = vmul.f32 %v12829, %v12874
    %v12912 = vmul.f32 %v12830, %v12874
    %v12913 = vmul.f32 %v12831, %v12874
    %v12914 = vmul.f32 %v12832, %v12874
    %v12915 = vmul.f32 %v12833, %v12874
    %v12916 = vmul.f32 %v12834, %v12874
    %v12917 = vmul.f32 %v12835, %v12874
    %v12918 = vmul.f32 %v12836, %v12874
    %v12919 = vmul.f32 %v12837, %v12874
    %v12920 = vmul.f32 %v12838, %v12874
    %v12921 = vmul.f32 %v12839, %v12874
    %v12922 = vmul.f32 %v12840, %v12874
    %v12923 = vmul.f32 %v12841, %v12874
    %v12924 = vmul.f32 %v12842, %v12874
    %v12925 = vmul.f32 %v12843, %v12874
    %v12926 = vmul.f32 %v12844, %v12874
    %v12927 = vmul.f32 %v12845, %v12874
    %v12928 = vmul.f32 %v12846, %v12874
    %v12929 = vmul.f32 %v12847, %v12874
    %v12930 = vmul.f32 %v12848, %v12874
    %v12931 = vmul.f32 %v12849, %v12874
    %v12932 = vmul.f32 %v12850, %v12874
    %v12933 = vmul.f32 %v12851, %v12874
    %v12934 = vmul.f32 %v12852, %v12874
    %v12935 = vmul.f32 %v12853, %v12874
    %v12936 = vmul.f32 %v12854, %v12874
    %v12937 = vmul.f32 %v12855, %v12874
    %v12938 = vmul.f32 %v12856, %v12874
    %v12939 = vmul.f32 %v12857, %v12874
    %v12940 = vmul.f32 %v12858, %v12874
    %v12941 = vmul.f32 %v12859, %v12874
    %v12942 = vmul.f32 %v12860, %v12874
    %v12943 = vmul.f32 %v12861, %v12874
    %v12944 = vmul.f32 %v12862, %v12874
    %v12945 = vmul.f32 %v12863, %v12874
    %v12946 = vmul.f32 %v12864, %v12874
    %v12947 = vmul.f32 %v12865, %v12874
    %v12948 = vmul.f32 %v12866, %v12874
    %v12949 = vmul.f32 %v12867, %v12874
    %v12950 = vmul.f32 %v12868, %v12874
    %v12951 = vmul.f32 %v12869, %v12874
    %v12952 = vmul.f32 %v12870, %v12874
    %v12953 = vmul.f32 %v12871, %v12874
    %v12954 = vmul.f32 %v12872, %v12874
    %v12955 = vmul.f32 %v12873, %v12874
    %v12956 = vadd.f32 %v12631, %v12875
    %v12957 = vadd.f32 %v12632, %v12876
    %v12958 = vadd.f32 %v12633, %v12877
    %v12959 = vadd.f32 %v12634, %v12878
    %v12960 = vadd.f32 %v12635, %v12879
    %v12961 = vadd.f32 %v12636, %v12880
    %v12962 = vadd.f32 %v12637, %v12881
    %v12963 = vadd.f32 %v12638, %v12882
    %v12964 = vadd.f32 %v12639, %v12883
    %v12965 = vadd.f32 %v12640, %v12884
    %v12966 = vadd.f32 %v12641, %v12885
    %v12967 = vadd.f32 %v12642, %v12886
    %v12968 = vadd.f32 %v12643, %v12887
    %v12969 = vadd.f32 %v12644, %v12888
    %v12970 = vadd.f32 %v12645, %v12889
    %v12971 = vadd.f32 %v12646, %v12890
    %v12972 = vadd.f32 %v12647, %v12891
    %v12973 = vadd.f32 %v12648, %v12892
    %v12974 = vadd.f32 %v12649, %v12893
    %v12975 = vadd.f32 %v12650, %v12894
    %v12976 = vadd.f32 %v12651, %v12895
    %v12977 = vadd.f32 %v12652, %v12896
    %v12978 = vadd.f32 %v12653, %v12897
    %v12979 = vadd.f32 %v12654, %v12898
    %v12980 = vadd.f32 %v12655, %v12899
    %v12981 = vadd.f32 %v12656, %v12900
    %v12982 = vadd.f32 %v12657, %v12901
    %v12983 = vadd.f32 %v12658, %v12902
    %v12984 = vadd.f32 %v12659, %v12903
    %v12985 = vadd.f32 %v12660, %v12904
    %v12986 = vadd.f32 %v12661, %v12905
    %v12987 = vadd.f32 %v12662, %v12906
    %v12988 = vadd.f32 %v12663, %v12907
    %v12989 = vadd.f32 %v12664, %v12908
    %v12990 = vadd.f32 %v12665, %v12909
    %v12991 = vadd.f32 %v12666, %v12910
    %v12992 = vadd.f32 %v12667, %v12911
    %v12993 = vadd.f32 %v12668, %v12912
    %v12994 = vadd.f32 %v12669, %v12913
    %v12995 = vadd.f32 %v12670, %v12914
    %v12996 = vadd.f32 %v12671, %v12915
    %v12997 = vadd.f32 %v12672, %v12916
    %v12998 = vadd.f32 %v12673, %v12917
    %v12999 = vadd.f32 %v12674, %v12918
    %v13000 = vadd.f32 %v12675, %v12919
    %v13001 = vadd.f32 %v12676, %v12920
    %v13002 = vadd.f32 %v12677, %v12921
    %v13003 = vadd.f32 %v12678, %v12922
    %v13004 = vadd.f32 %v12679, %v12923
    %v13005 = vadd.f32 %v12680, %v12924
    %v13006 = vadd.f32 %v12681, %v12925
    %v13007 = vadd.f32 %v12682, %v12926
    %v13008 = vadd.f32 %v12683, %v12927
    %v13009 = vadd.f32 %v12684, %v12928
    %v13010 = vadd.f32 %v12685, %v12929
    %v13011 = vadd.f32 %v12686, %v12930
    %v13012 = vadd.f32 %v12687, %v12931
    %v13013 = vadd.f32 %v12688, %v12932
    %v13014 = vadd.f32 %v12689, %v12933
    %v13015 = vadd.f32 %v12690, %v12934
    %v13016 = vadd.f32 %v12691, %v12935
    %v13017 = vadd.f32 %v12692, %v12936
    %v13018 = vadd.f32 %v12693, %v12937
    %v13019 = vadd.f32 %v12694, %v12938
    %v13020 = vadd.f32 %v12695, %v12939
    %v13021 = vadd.f32 %v12696, %v12940
    %v13022 = vadd.f32 %v12697, %v12941
    %v13023 = vadd.f32 %v12698, %v12942
    %v13024 = vadd.f32 %v12699, %v12943
    %v13025 = vadd.f32 %v12700, %v12944
    %v13026 = vadd.f32 %v12701, %v12945
    %v13027 = vadd.f32 %v12702, %v12946
    %v13028 = vadd.f32 %v12703, %v12947
    %v13029 = vadd.f32 %v12704, %v12948
    %v13030 = vadd.f32 %v12705, %v12949
    %v13031 = vadd.f32 %v12706, %v12950
    %v13032 = vadd.f32 %v12707, %v12951
    %v13033 = vadd.f32 %v12708, %v12952
    %v13034 = vadd.f32 %v12709, %v12953
    %v13035 = vadd.f32 %v12710, %v12954
    %v13036 = vadd.f32 %v12711, %v12955
    %v13037 = vperm.slane %v110, 0
    %v13038 = vadd.f32 %v12956, %v13037
    %v13039 = vadd.f32 %v12957, %v13037
    %v13040 = vadd.f32 %v12958, %v13037
    %v13041 = vadd.f32 %v12959, %v13037
    %v13042 = vadd.f32 %v12960, %v13037
    %v13043 = vadd.f32 %v12961, %v13037
    %v13044 = vadd.f32 %v12962, %v13037
    %v13045 = vadd.f32 %v12963, %v13037
    %v13046 = vadd.f32 %v12964, %v13037
    %v13047 = vadd.f32 %v12965, %v13037
    %v13048 = vadd.f32 %v12966, %v13037
    %v13049 = vadd.f32 %v12967, %v13037
    %v13050 = vadd.f32 %v12968, %v13037
    %v13051 = vadd.f32 %v12969, %v13037
    %v13052 = vadd.f32 %v12970, %v13037
    %v13053 = vadd.f32 %v12971, %v13037
    %v13054 = vadd.f32 %v12972, %v13037
    %v13055 = vadd.f32 %v12973, %v13037
    %v13056 = vadd.f32 %v12974, %v13037
    %v13057 = vadd.f32 %v12975, %v13037
    %v13058 = vadd.f32 %v12976, %v13037
    %v13059 = vadd.f32 %v12977, %v13037
    %v13060 = vadd.f32 %v12978, %v13037
    %v13061 = vadd.f32 %v12979, %v13037
    %v13062 = vadd.f32 %v12980, %v13037
    %v13063 = vadd.f32 %v12981, %v13037
    %v13064 = vadd.f32 %v12982, %v13037
    %v13065 = vadd.f32 %v12983, %v13037
    %v13066 = vadd.f32 %v12984, %v13037
    %v13067 = vadd.f32 %v12985, %v13037
    %v13068 = vadd.f32 %v12986, %v13037
    %v13069 = vadd.f32 %v12987, %v13037
    %v13070 = vadd.f32 %v12988, %v13037
    %v13071 = vadd.f32 %v12989, %v13037
    %v13072 = vadd.f32 %v12990, %v13037
    %v13073 = vadd.f32 %v12991, %v13037
    %v13074 = vadd.f32 %v12992, %v13037
    %v13075 = vadd.f32 %v12993, %v13037
    %v13076 = vadd.f32 %v12994, %v13037
    %v13077 = vadd.f32 %v12995, %v13037
    %v13078 = vadd.f32 %v12996, %v13037
    %v13079 = vadd.f32 %v12997, %v13037
    %v13080 = vadd.f32 %v12998, %v13037
    %v13081 = vadd.f32 %v12999, %v13037
    %v13082 = vadd.f32 %v13000, %v13037
    %v13083 = vadd.f32 %v13001, %v13037
    %v13084 = vadd.f32 %v13002, %v13037
    %v13085 = vadd.f32 %v13003, %v13037
    %v13086 = vadd.f32 %v13004, %v13037
    %v13087 = vadd.f32 %v13005, %v13037
    %v13088 = vadd.f32 %v13006, %v13037
    %v13089 = vadd.f32 %v13007, %v13037
    %v13090 = vadd.f32 %v13008, %v13037
    %v13091 = vadd.f32 %v13009, %v13037
    %v13092 = vadd.f32 %v13010, %v13037
    %v13093 = vadd.f32 %v13011, %v13037
    %v13094 = vadd.f32 %v13012, %v13037
    %v13095 = vadd.f32 %v13013, %v13037
    %v13096 = vadd.f32 %v13014, %v13037
    %v13097 = vadd.f32 %v13015, %v13037
    %v13098 = vadd.f32 %v13016, %v13037
    %v13099 = vadd.f32 %v13017, %v13037
    %v13100 = vadd.f32 %v13018, %v13037
    %v13101 = vadd.f32 %v13019, %v13037
    %v13102 = vadd.f32 %v13020, %v13037
    %v13103 = vadd.f32 %v13021, %v13037
    %v13104 = vadd.f32 %v13022, %v13037
    %v13105 = vadd.f32 %v13023, %v13037
    %v13106 = vadd.f32 %v13024, %v13037
    %v13107 = vadd.f32 %v13025, %v13037
    %v13108 = vadd.f32 %v13026, %v13037
    %v13109 = vadd.f32 %v13027, %v13037
    %v13110 = vadd.f32 %v13028, %v13037
    %v13111 = vadd.f32 %v13029, %v13037
    %v13112 = vadd.f32 %v13030, %v13037
    %v13113 = vadd.f32 %v13031, %v13037
    %v13114 = vadd.f32 %v13032, %v13037
    %v13115 = vadd.f32 %v13033, %v13037
    %v13116 = vadd.f32 %v13034, %v13037
    %v13117 = vadd.f32 %v13035, %v13037
    %v13118 = vadd.f32 %v13036, %v13037
    %v13119 = vmax.f32 %v13038, 0.0
    %v13120 = vmax.f32 %v13039, 0.0
    %v13121 = vmax.f32 %v13040, 0.0
    %v13122 = vmax.f32 %v13041, 0.0
    %v13123 = vmax.f32 %v13042, 0.0
    %v13124 = vmax.f32 %v13043, 0.0
    %v13125 = vmax.f32 %v13044, 0.0
    %v13126 = vmax.f32 %v13045, 0.0
    %v13127 = vmax.f32 %v13046, 0.0
    %v13128 = vmax.f32 %v13047, 0.0
    %v13129 = vmax.f32 %v13048, 0.0
    %v13130 = vmax.f32 %v13049, 0.0
    %v13131 = vmax.f32 %v13050, 0.0
    %v13132 = vmax.f32 %v13051, 0.0
    %v13133 = vmax.f32 %v13052, 0.0
    %v13134 = vmax.f32 %v13053, 0.0
    %v13135 = vmax.f32 %v13054, 0.0
    %v13136 = vmax.f32 %v13055, 0.0
    %v13137 = vmax.f32 %v13056, 0.0
    %v13138 = vmax.f32 %v13057, 0.0
    %v13139 = vmax.f32 %v13058, 0.0
    %v13140 = vmax.f32 %v13059, 0.0
    %v13141 = vmax.f32 %v13060, 0.0
    %v13142 = vmax.f32 %v13061, 0.0
    %v13143 = vmax.f32 %v13062, 0.0
    %v13144 = vmax.f32 %v13063, 0.0
    %v13145 = vmax.f32 %v13064, 0.0
    %v13146 = vmax.f32 %v13065, 0.0
    %v13147 = vmax.f32 %v13066, 0.0
    %v13148 = vmax.f32 %v13067, 0.0
    %v13149 = vmax.f32 %v13068, 0.0
    %v13150 = vmax.f32 %v13069, 0.0
    %v13151 = vmax.f32 %v13070, 0.0
    %v13152 = vmax.f32 %v13071, 0.0
    %v13153 = vmax.f32 %v13072, 0.0
    %v13154 = vmax.f32 %v13073, 0.0
    %v13155 = vmax.f32 %v13074, 0.0
    %v13156 = vmax.f32 %v13075, 0.0
    %v13157 = vmax.f32 %v13076, 0.0
    %v13158 = vmax.f32 %v13077, 0.0
    %v13159 = vmax.f32 %v13078, 0.0
    %v13160 = vmax.f32 %v13079, 0.0
    %v13161 = vmax.f32 %v13080, 0.0
    %v13162 = vmax.f32 %v13081, 0.0
    %v13163 = vmax.f32 %v13082, 0.0
    %v13164 = vmax.f32 %v13083, 0.0
    %v13165 = vmax.f32 %v13084, 0.0
    %v13166 = vmax.f32 %v13085, 0.0
    %v13167 = vmax.f32 %v13086, 0.0
    %v13168 = vmax.f32 %v13087, 0.0
    %v13169 = vmax.f32 %v13088, 0.0
    %v13170 = vmax.f32 %v13089, 0.0
    %v13171 = vmax.f32 %v13090, 0.0
    %v13172 = vmax.f32 %v13091, 0.0
    %v13173 = vmax.f32 %v13092, 0.0
    %v13174 = vmax.f32 %v13093, 0.0
    %v13175 = vmax.f32 %v13094, 0.0
    %v13176 = vmax.f32 %v13095, 0.0
    %v13177 = vmax.f32 %v13096, 0.0
    %v13178 = vmax.f32 %v13097, 0.0
    %v13179 = vmax.f32 %v13098, 0.0
    %v13180 = vmax.f32 %v13099, 0.0
    %v13181 = vmax.f32 %v13100, 0.0
    %v13182 = vmax.f32 %v13101, 0.0
    %v13183 = vmax.f32 %v13102, 0.0
    %v13184 = vmax.f32 %v13103, 0.0
    %v13185 = vmax.f32 %v13104, 0.0
    %v13186 = vmax.f32 %v13105, 0.0
    %v13187 = vmax.f32 %v13106, 0.0
    %v13188 = vmax.f32 %v13107, 0.0
    %v13189 = vmax.f32 %v13108, 0.0
    %v13190 = vmax.f32 %v13109, 0.0
    %v13191 = vmax.f32 %v13110, 0.0
    %v13192 = vmax.f32 %v13111, 0.0
    %v13193 = vmax.f32 %v13112, 0.0
    %v13194 = vmax.f32 %v13113, 0.0
    %v13195 = vmax.f32 %v13114, 0.0
    %v13196 = vmax.f32 %v13115, 0.0
    %v13197 = vmax.f32 %v13116, 0.0
    %v13198 = vmax.f32 %v13117, 0.0
    %v13199 = vmax.f32 %v13118, 0.0
    %13200 = vst [vmem:[#allocation3] sm:$0xff] %v13119
    %13201 = vst [vmem:[#allocation3 + $0x8] sm:$0xff] %v13120
    %13202 = vst [vmem:[#allocation3 + $0x10] sm:$0xff] %v13121
    %13203 = vst [vmem:[#allocation3 + $0x18] sm:$0xff] %v13122
    %13204 = vst [vmem:[#allocation3 + $0x20] sm:$0xff] %v13123
    %13205 = vst [vmem:[#allocation3 + $0x28] sm:$0xff] %v13124
    %13206 = vst [vmem:[#allocation3 + $0x30] sm:$0xff] %v13125
    %13207 = vst [vmem:[#allocation3 + $0x38] sm:$0xff] %v13126
    %13208 = vst [vmem:[#allocation3 + $0x40] sm:$0xff] %v13127
    %13209 = vst [vmem:[#allocation3 + $0x48] sm:$0xff] %v13128
    %13210 = vst [vmem:[#allocation3 + $0x50] sm:$0xff] %v13129
    %13211 = vst [vmem:[#allocation3 + $0x58] sm:$0xff] %v13130
    %13212 = vst [vmem:[#allocation3 + $0x60] sm:$0xff] %v13131
    %13213 = vst [vmem:[#allocation3 + $0x68] sm:$0xff] %v13132
    %13214 = vst [vmem:[#allocation3 + $0x70] sm:$0xff] %v13133
    %13215 = vst [vmem:[#allocation3 + $0x78] sm:$0xff] %v13134
    %13216 = vst [vmem:[#allocation3 + $0x80] sm:$0xff] %v13135
    %13217 = vst [vmem:[#allocation3 + $0x88] sm:$0xff] %v13136
    %13218 = vst [vmem:[#allocation3 + $0x90] sm:$0xff] %v13137
    %13219 = vst [vmem:[#allocation3 + $0x98] sm:$0xff] %v13138
    %13220 = vst [vmem:[#allocation3 + $0xa0] sm:$0xff] %v13139
    %13221 = vst [vmem:[#allocation3 + $0xa8] sm:$0xff] %v13140
    %13222 = vst [vmem:[#allocation3 + $0xb0] sm:$0xff] %v13141
    %13223 = vst [vmem:[#allocation3 + $0xb8] sm:$0xff] %v13142
    %13224 = vst [vmem:[#allocation3 + $0xc0] sm:$0xff] %v13143
    %13225 = vst [vmem:[#allocation3 + $0xc8] sm:$0xff] %v13144
    %13226 = vst [vmem:[#allocation3 + $0xd0] sm:$0xff] %v13145
    %13227 = vst [vmem:[#allocation3 + $0xd8] sm:$0xff] %v13146
    %13228 = vst [vmem:[#allocation3 + $0xe0] sm:$0xff] %v13147
    %13229 = vst [vmem:[#allocation3 + $0xe8] sm:$0xff] %v13148
    %13230 = vst [vmem:[#allocation3 + $0xf0] sm:$0xff] %v13149
    %13231 = vst [vmem:[#allocation3 + $0xf8] sm:$0xff] %v13150
    %13232 = vst [vmem:[#allocation3 + $0x100] sm:$0xff] %v13151
    %13233 = vst [vmem:[#allocation3 + $0x108] sm:$0xff] %v13152
    %13234 = vst [vmem:[#allocation3 + $0x110] sm:$0xff] %v13153
    %13235 = vst [vmem:[#allocation3 + $0x118] sm:$0xff] %v13154
    %13236 = vst [vmem:[#allocation3 + $0x120] sm:$0xff] %v13155
    %13237 = vst [vmem:[#allocation3 + $0x128] sm:$0xff] %v13156
    %13238 = vst [vmem:[#allocation3 + $0x130] sm:$0xff] %v13157
    %13239 = vst [vmem:[#allocation3 + $0x138] sm:$0xff] %v13158
    %13240 = vst [vmem:[#allocation3 + $0x140] sm:$0xff] %v13159
    %13241 = vst [vmem:[#allocation3 + $0x148] sm:$0xff] %v13160
    %13242 = vst [vmem:[#allocation3 + $0x150] sm:$0xff] %v13161
    %13243 = vst [vmem:[#allocation3 + $0x158] sm:$0xff] %v13162
    %13244 = vst [vmem:[#allocation3 + $0x160] sm:$0xff] %v13163
    %13245 = vst [vmem:[#allocation3 + $0x168] sm:$0xff] %v13164
    %13246 = vst [vmem:[#allocation3 + $0x170] sm:$0xff] %v13165
    %13247 = vst [vmem:[#allocation3 + $0x178] sm:$0xff] %v13166
    %13248 = vst [vmem:[#allocation3 + $0x180] sm:$0xff] %v13167
    %13249 = vst [vmem:[#allocation3 + $0x188] sm:$0xff] %v13168
    %13250 = vst [vmem:[#allocation3 + $0x190] sm:$0xff] %v13169
    %13251 = vst [vmem:[#allocation3 + $0x198] sm:$0xff] %v13170
    %13252 = vst [vmem:[#allocation3 + $0x1a0] sm:$0xff] %v13171
    %13253 = vst [vmem:[#allocation3 + $0x1a8] sm:$0xff] %v13172
    %13254 = vst [vmem:[#allocation3 + $0x1b0] sm:$0xff] %v13173
    %13255 = vst [vmem:[#allocation3 + $0x1b8] sm:$0xff] %v13174
    %13256 = vst [vmem:[#allocation3 + $0x1c0] sm:$0xff] %v13175
    %13257 = vst [vmem:[#allocation3 + $0x1c8] sm:$0xff] %v13176
    %13258 = vst [vmem:[#allocation3 + $0x1d0] sm:$0xff] %v13177
    %13259 = vst [vmem:[#allocation3 + $0x1d8] sm:$0xff] %v13178
    %13260 = vst [vmem:[#allocation3 + $0x1e0] sm:$0xff] %v13179
    %13261 = vst [vmem:[#allocation3 + $0x1e8] sm:$0xff] %v13180
    %13262 = vst [vmem:[#allocation3 + $0x1f0] sm:$0xff] %v13181
    %13263 = vst [vmem:[#allocation3 + $0x1f8] sm:$0xff] %v13182
    %13264 = vst [vmem:[#allocation3 + $0x200] sm:$0xff] %v13183
    %13265 = vst [vmem:[#allocation3 + $0x208] sm:$0xff] %v13184
    %13266 = vst [vmem:[#allocation3 + $0x210] sm:$0xff] %v13185
    %13267 = vst [vmem:[#allocation3 + $0x218] sm:$0xff] %v13186
    %13268 = vst [vmem:[#allocation3 + $0x220] sm:$0xff] %v13187
    %13269 = vst [vmem:[#allocation3 + $0x228] sm:$0xff] %v13188
    %13270 = vst [vmem:[#allocation3 + $0x230] sm:$0xff] %v13189
    %13271 = vst [vmem:[#allocation3 + $0x238] sm:$0xff] %v13190
    %13272 = vst [vmem:[#allocation3 + $0x240] sm:$0xff] %v13191
    %13273 = vst [vmem:[#allocation3 + $0x248] sm:$0xff] %v13192
    %13274 = vst [vmem:[#allocation3 + $0x250] sm:$0xff] %v13193
    %13275 = vst [vmem:[#allocation3 + $0x258] sm:$0xff] %v13194
    %13276 = vst [vmem:[#allocation3 + $0x260] sm:$0xff] %v13195
    %13277 = vst [vmem:[#allocation3 + $0x268] sm:$0xff] %v13196
    %13278 = vst [vmem:[#allocation3 + $0x270] sm:$0xff] %v13197
    %13279 = vst [vmem:[#allocation3 + $0x278] sm:$0xff] %v13198
    %13280 = vst [vmem:[#allocation3 + $0x280] sm:$0xff] %v13199
    // Predicated region
    $region26: #{tpu_custom_call.1} parent=1 // pred_check
      _
    $region27: #{tpu_custom_call.1} parent=1 // pred_check_branch
      %13282 = sbr.rel (0) target = $region29
    $region28: #{tpu_custom_call.1} parent=1 // pred_region
      %13284 = vsyncadd [#allocation4], 0
      %s13285 = sshll.u32 [#allocation3], 4
      %s13286 = int_to_ptr.vmem [resolvable:$true] %s13285
      %s13287 = sshll.u32 %s6, 4
      %s13288 = int_to_ptr.hbm [resolvable:$true] %s13287
      %13293 = dma.vmem_to_hbm [thread:$0]  %s13286, 10368, %s13288, [#allocation4], 128, 128, 8
    $region29: #{tpu_custom_call.1} parent=1 // pred_fallthru
      _
    // Predicated region
    $region30: #{tpu_custom_call.1} parent=1 // pred_check
      _
    $region31: #{tpu_custom_call.1} parent=1 // pred_check_branch
      %13295 = sbr.rel (0) target = $region33
    $region32: #{tpu_custom_call.1} parent=1 // pred_region
      %13297 = dma.done [#allocation4], 10368
    $region33: #{tpu_custom_call.1} parent=1 // pred_fallthru
      _
    %13298 = vsyncpa [#allocation4], 1

</llo_original>
